<compile_context>
chip_gen: v7x
topology: tpu7x:2x2x1
jax: 0.10.0
libtpu: 0.0.40
codegen_flags: <defaults>
</compile_context>

<pallas_src>
import functools

import numpy as np
import jax
import jax.numpy as jnp
from jax import lax
from jax.experimental import pallas as pl
from jax.experimental.pallas import tpu as pltpu

LEAKY_SLOPE = 0.1          # nn.LeakyReLU(negative_slope=0.1) in the reference
LN_EPS = 1e-5              # nn.LayerNorm default eps
F32 = jnp.float32
BF16 = jnp.bfloat16

# v7x has 64 MiB VMEM per TensorCore -> keep the scoped limit below that.
_VMEM_LIMIT = 48 * 1024 * 1024
_PARAMS_B = pltpu.CompilerParams(dimension_semantics=("parallel",),
                                 vmem_limit_bytes=_VMEM_LIMIT)
_PARAMS_BL = pltpu.CompilerParams(dimension_semantics=("parallel", "arbitrary"),
                                  vmem_limit_bytes=_VMEM_LIMIT)
_PARAMS_ONE = pltpu.CompilerParams(vmem_limit_bytes=_VMEM_LIMIT)


# --------------------------------------------------------------------------
# BlockSpec helpers
# --------------------------------------------------------------------------
def _b_spec(shape):
    """grid=(B,): one batch element per step."""
    nd = len(shape)
    return pl.BlockSpec((1,) + tuple(shape[1:]),
                        lambda b, _n=nd: (b,) + (0,) * (_n - 1))


def _rep_spec(a):
    """grid=(B,): whole array, same block every step (resident weights)."""
    nd = a.ndim
    return pl.BlockSpec(a.shape, lambda b, _n=nd: (0,) * _n)


def _bl_batch_spec(shape):
    """grid=(B, L): block over batch, constant over the layer axis."""
    nd = len(shape)
    return pl.BlockSpec((1,) + tuple(shape[1:]),
                        lambda b, l, _n=nd: (b,) + (0,) * (_n - 1))


def _bl_layer_spec(a):
    """grid=(B, L): stacked (L, ...) weights streamed along the layer axis."""
    nd = a.ndim
    return pl.BlockSpec((1,) + tuple(a.shape[1:]),
                        lambda b, l, _n=nd: (l,) + (0,) * (_n - 1))


# --------------------------------------------------------------------------
# In-kernel math helpers
# --------------------------------------------------------------------------
def _leaky_relu(x):
    return jnp.where(x >= 0, x, LEAKY_SLOPE * x)


def _layernorm(x, g, b):
    mu = jnp.mean(x, axis=-1, keepdims=True)
    var = jnp.mean(jnp.square(x - mu), axis=-1, keepdims=True)
    return (x - mu) * lax.rsqrt(var + LN_EPS) * g + b


def _mm(a, w, b):
    """(a @ w) + b with bf16 MXU inputs and f32 accumulation."""
    return jnp.dot(a.astype(BF16), w, preferred_element_type=F32) + b.astype(F32)


# --------------------------------------------------------------------------
# Kernel 1: Linear(4,E) projection + length emb + cls rows + early ResBlocks
# --------------------------------------------------------------------------
def _embed_early_kernel(*refs, layer_arity):
    x_in_ref, pw_ref, le_ref, cls_ref = refs[:4]
    o_ref = refs[-1]
    # K=4 underutilizes the MXU but is negligible; fusing removes a launch and
    # an HBM round trip of the (B, S, E) activation.
    y = jnp.dot(x_in_ref[0].astype(F32), pw_ref[...].astype(F32),
                preferred_element_type=F32) + le_ref[...].astype(F32)    # (S, E)
    # cls/reg token rows are written in-kernel (no host-side concatenate).
    x = jnp.concatenate([cls_ref[...].astype(F32), y], axis=0)          # (T, E)
    idx = 4
    for n in layer_arity:                       # fused early ResidualBlocks
        g1, bt1, w1, b1, g2, bt2, w2, b2 = refs[idx:idx + 8]
        h = _leaky_relu(_layernorm(x, g1[...].astype(F32), bt1[...].astype(F32)))
        h = _mm(h, w1[...], b1[...])
        h = _leaky_relu(_layernorm(h, g2[...].astype(F32), bt2[...].astype(F32)))
        h = _mm(h, w2[...], b2[...])
        if n == 10:                             # projection bypass (fin != fout)
            wb, bb = refs[idx + 8], refs[idx + 9]
            x = h + _mm(x, wb[...], bb[...])
        else:                                   # identity bypass
            x = h + x
        idx += n
    o_ref[0] = x.astype(o_ref.dtype)


def embed_and_early(x_in, prep):
    B, S, _ = x_in.shape
    T = S + prep["cls"].shape[0]
    I = prep["early"][-1]["w2"].shape[1]
    args = [x_in, prep["proj_w"], prep["length_emb"], prep["cls"]]
    arity = []
    for p in prep["early"]:
        blk = [p["ln1_g"], p["ln1_b"], p["w1"], p["b1"],
               p["ln2_g"], p["ln2_b"], p["w2"], p["b2"]]
        if p["wb"] is not None:
            blk += [p["wb"], p["bb"]]
        arity.append(len(blk))
        args += blk
    in_specs = [_b_spec(x_in.shape)] + [_rep_spec(a) for a in args[1:]]
    return pl.pallas_call(
        functools.partial(_embed_early_kernel, layer_arity=tuple(arity)),
        grid=(B,),
        in_specs=in_specs,
        out_specs=_b_spec((B, T, I)),
        out_shape=jax.ShapeDtypeStruct((B, T, I), F32),
        compiler_params=_PARAMS_B,
    )(*args)


# --------------------------------------------------------------------------
# Kernel 2: fused transformer stack, grid=(B, L), activation carried in VMEM
# --------------------------------------------------------------------------
def _tsfm_stack_kernel(x_ref, g1, bt1, wqkv, bqkv, wo, bo, g2, bt2,
                       wf1, bf1, wf2, bf2, o_ref, x_sc, *, num_heads):
    l = pl.program_id(1)

    @pl.when(l == 0)
    def _():                                    # load activation carry for this batch elem
        x_sc[...] = x_ref[0].astype(F32)

    x = x_sc[...]                               # (T, I) f32
    T, I = x.shape
    H = num_heads
    dh = I // H

    # ---- attention: log(T)/sqrt(dh) q scaling pre-folded into wqkv/bqkv ----
    y = _layernorm(x, g1[0].astype(F32), bt1[0].astype(F32))
    qkv = _mm(y, wqkv[0], bqkv[0])              # (T, 3*I), de-padded fused QKV
    q, k, v = qkv[:, :I], qkv[:, I:2 * I], qkv[:, 2 * I:]
    # head-major (H, T, dh) via static lane slices + leading-axis stack
    qh = jnp.stack([q[:, h * dh:(h + 1) * dh] for h in range(H)], 0).astype(BF16)
    kh = jnp.stack([k[:, h * dh:(h + 1) * dh] for h in range(H)], 0).astype(BF16)
    vh = jnp.stack([v[:, h * dh:(h + 1) * dh] for h in range(H)], 0).astype(BF16)
    # single batched dots over the head axis: scores (H,T,T), PV (H,T,dh)
    s = lax.dot_general(qh, kh, (((2,), (2,)), ((0,), (0,))),
                        preferred_element_type=F32)
    s = s - jnp.max(s, axis=-1, keepdims=True)
    e = jnp.exp(s)
    prob = e * pl.reciprocal(jnp.sum(e, axis=-1, keepdims=True), approx=True)
    ohd = lax.dot_general(prob.astype(BF16), vh, (((2,), (1,)), ((0,), (0,))),
                          preferred_element_type=F32)
    attn = jnp.concatenate([ohd[h] for h in range(H)], axis=-1)          # (T, I)
    x = x + _mm(attn, wo[0], bo[0])             # ONE dense out-projection matmul

    # ---- SwiGLU FFN: the (T, 2*TH) intermediate never leaves VMEM ----
    y2 = _layernorm(x, g2[0].astype(F32), bt2[0].astype(F32))
    hdn = _mm(y2, wf1[0], bf1[0])               # (T, 2*TH)
    half = hdn.shape[-1] // 2
    x1, x2 = hdn[:, :half], hdn[:, half:]
    x = x + _mm(x1 * jax.nn.sigmoid(x1) * x2, wf2[0], bf2[0])

    x_sc[...] = x                               # carry to layer l+1

    @pl.when(l == pl.num_programs(1) - 1)
    def _():                                    # only the pred/cls token is consumed
        o_ref[0] = x[0:1, :].astype(o_ref.dtype)


def transformer_stack(x, stk, num_heads):
    B, T, I = x.shape
    L = stk["wqkv"].shape[0]
    names = ("ln1_g", "ln1_b", "wqkv", "bqkv", "wo", "bo",
             "ln2_g", "ln2_b", "wf1", "bf1", "wf2", "bf2")
    args = [x] + [stk[n] for n in names]
    in_specs = [_bl_batch_spec(x.shape)] + [_bl_layer_spec(stk[n]) for n in names]
    return pl.pallas_call(
        functools.partial(_tsfm_stack_kernel, num_heads=num_heads),
        grid=(B, L),
        in_specs=in_specs,
        out_specs=_bl_batch_spec((B, 1, I)),
        out_shape=jax.ShapeDtypeStruct((B, 1, I), F32),
        scratch_shapes=[pltpu.VMEM((T, I), F32)],
        compiler_params=_PARAMS_BL,
    )(*args)


# --------------------------------------------------------------------------
# Kernel 3: fused output ResidualBlocks (use_norm=False) + Linear head
# --------------------------------------------------------------------------
def _out_head_kernel(*refs, layer_arity):
    y_ref = refs[0]
    o_ref = refs[-1]
    x = y_ref[...][:, 0, :].astype(F32)         # (B, I) pred-token features
    idx = 1
    for n in layer_arity:
        w1, b1, w2, b2 = refs[idx:idx + 4]
        h = _mm(_leaky_relu(x), w1[...], b1[...])
        h = _mm(_leaky_relu(h), w2[...], b2[...])
        if n == 6:
            wb, bb = refs[idx + 4], refs[idx + 5]
            x = h + _mm(x, wb[...], bb[...])
        else:
            x = h + x
        idx += n
    hw, hb = refs[idx], refs[idx + 1]
    # TODO(synk): output lane width = output_dim (<128) -> masked store; negligible here.
    o_ref[...] = _mm(x, hw[...], hb[...]).astype(o_ref.dtype)


def out_blocks_and_head(y, prep):
    B = y.shape[0]
    O = prep["head_w"].shape[1]
    args = [y]
    arity = []
    for p in prep["out_blocks"]:
        blk = [p["w1"], p["b1"], p["w2"], p["b2"]]
        if p["wb"] is not None:
            blk += [p["wb"], p["bb"]]
        arity.append(len(blk))
        args += blk
    args += [prep["head_w"], prep["head_b"]]
    return pl.pallas_call(
        functools.partial(_out_head_kernel, layer_arity=tuple(arity)),
        in_specs=[pl.BlockSpec(memory_space=pltpu.MemorySpace.VMEM) for _ in args],
        out_specs=pl.BlockSpec(memory_space=pltpu.MemorySpace.VMEM),
        out_shape=jax.ShapeDtypeStruct((B, O), F32),
        compiler_params=_PARAMS_ONE,
    )(*args)


# --------------------------------------------------------------------------
# Forward pass (3 pallas_calls)
# --------------------------------------------------------------------------
def deepmsn_forward(prep, x_in, *, num_heads):
    x = embed_and_early(x_in, prep)                       # (B, T, I)
    y = transformer_stack(x, prep["tsfm"], num_heads)     # (B, 1, I)
    return out_blocks_and_head(y, prep)                   # (B, output_dim)


# --------------------------------------------------------------------------
# One-time weight prep (outside jit): bf16 cast, de-padded QKV fusion with the
# log(T)/sqrt(dh) scale folded in, per-layer stacking for the fused stack.
# --------------------------------------------------------------------------
def prepare_params(params, cfg, seq_len):
    I = cfg["internal_emb_dim"]
    H = cfg["num_heads"]
    dh = I // H
    n_cls = cfg["num_reg_tok"] + 1
    T = seq_len + n_cls
    # PyTorch: attn(log(T) * ln_x, ln_x, ln_x); MHA scales q by 1/sqrt(dh).
    # q = ((log(T)*y) @ Wq + bq) / sqrt(dh)  =>  fold log(T)/sqrt(dh) into Wq and
    # only 1/sqrt(dh) into bq (log(T) multiplies the input, not the bias).
    q_scale = float(np.log(T)) / float(np.sqrt(dh))
    b_scale = 1.0 / float(np.sqrt(dh))

    def bf(w):
        return w.astype(BF16)

    def prep_res(p):
        q = dict(p)
        q["w1"] = bf(p["w1"])
        q["w2"] = bf(p["w2"])
        if p["wb"] is not None:
            q["wb"] = bf(p["wb"])
        return q

    def prep_tsfm(p):
        wqkv = jnp.concatenate([p["wq"] * q_scale, p["wk"], p["wv"]], axis=1)  # (I, 3I)
        bqkv = jnp.concatenate([p["bq"] * b_scale, p["bk"], p["bv"]], axis=1)  # (1, 3I)
        return {"ln1_g": p["ln1_g"], "ln1_b": p["ln1_b"],
                "wqkv": bf(wqkv), "bqkv": bqkv,
                "wo": bf(p["wo"]), "bo": p["bo"],
                "ln2_g": p["ln2_g"], "ln2_b": p["ln2_b"],
                "wf1": bf(p["wf1"]), "bf1": p["bf1"],
                "wf2": bf(p["wf2"]), "bf2": p["bf2"]}

    layers = [prep_tsfm(p) for p in params["tsfm"]]
    stk = {k: jnp.stack([lay[k] for lay in layers], axis=0) for k in layers[0]}

    return {
        "proj_w": params["proj_w"],                                   # stays f32
        "length_emb": params["length_embedding"][0, :seq_len, :],     # (S, E)
        "cls": params["cls_token"][0],                                # (n_cls, E)
        "early": [prep_res(p) for p in params["early"]],
        "tsfm": stk,
        "out_blocks": [prep_res(p) for p in params["out_blocks"]],
        "head_w": bf(params["head_w"]),
        "head_b": params["head_b"],
    }


# --------------------------------------------------------------------------
# Deterministic parameter init (shapes follow DeepMSN.__init__)
# --------------------------------------------------------------------------
def init_params(key, cfg):
    E = cfg["embed_dim"]
    I = cfg["internal_emb_dim"]
    Hh = cfg["early_hidden_dim"]
    TH = cfg["tsfm_hidden_dim"]
    O = cfg["output_dim"]
    keys = iter(jax.random.split(key, 512))
    nk = lambda: next(keys)

    def lin(fin, fout):
        w = (jax.random.normal(nk(), (fin, fout), F32) / np.sqrt(fin)).astype(F32)
        b = (jax.random.normal(nk(), (1, fout), F32) * 0.02).astype(F32)
        return w, b

    def ln_p(d):
        return jnp.ones((1, d), F32), jnp.zeros((1, d), F32)

    params = {}
    params["proj_w"] = (jax.random.normal(nk(), (4, E), F32) / np.sqrt(4.0)).astype(F32)
    params["length_embedding"] = (
        jax.random.normal(nk(), (1, cfg["max_len"], E), F32) / np.sqrt(E)).astype(F32)
    params["cls_token"] = (
        jax.random.normal(nk(), (1, cfg["num_reg_tok"] + 1, E), F32) / np.sqrt(E)).astype(F32)

    def res_norm(fin, fout, fhid):
        p = {}
        p["ln1_g"], p["ln1_b"] = ln_p(fin)
        p["w1"], p["b1"] = lin(fin, fhid)
        p["ln2_g"], p["ln2_b"] = ln_p(fhid)
        p["w2"], p["b2"] = lin(fhid, fout)
        if fin != fout:
            p["wb"], p["bb"] = lin(fin, fout)
        else:
            p["wb"], p["bb"] = None, None
        return p

    def res_plain(fin, fout, fhid):
        p = {}
        p["w1"], p["b1"] = lin(fin, fhid)
        p["w2"], p["b2"] = lin(fhid, fout)
        if fin != fout:
            p["wb"], p["bb"] = lin(fin, fout)
        else:
            p["wb"], p["bb"] = None, None
        return p

    params["early"] = [res_norm(E, I, Hh)] + [
        res_norm(I, I, Hh) for _ in range(cfg["num_early_lyr"] - 1)]

    def tsfm_layer():
        p = {}
        p["ln1_g"], p["ln1_b"] = ln_p(I)
        p["wq"], p["bq"] = lin(I, I)
        p["wk"], p["bk"] = lin(I, I)
        p["wv"], p["bv"] = lin(I, I)
        p["wo"], p["bo"] = lin(I, I)
        p["ln2_g"], p["ln2_b"] = ln_p(I)
        p["wf1"], p["bf1"] = lin(I, 2 * TH)
        p["wf2"], p["bf2"] = lin(TH, I)
        return p

    params["tsfm"] = [tsfm_layer() for _ in range(cfg["num_tsfm_layers"])]
    params["out_blocks"] = [res_plain(I, TH, TH)] + [
        res_plain(TH, TH, TH) for _ in range(cfg["num_early_lyr"] - 1)]
    params["head_w"], params["head_b"] = lin(TH, O)
    return params


# --------------------------------------------------------------------------
if __name__ == "__main__":
    # output_dim corresponds to len(config['dataset']['data_path']); use 3.
    # num_tsfm_layers reduced from the default 6 to 2 to keep the demo small.
    cfg = dict(embed_dim=128, internal_emb_dim=256, early_hidden_dim=256,
               num_early_lyr=2, tsfm_hidden_dim=512, num_tsfm_layers=2,
               num_heads=8, num_reg_tok=1, output_dim=3, max_len=500)

    key = jax.random.PRNGKey(0)
    pkey, xkey = jax.random.split(key)
    params = init_params(pkey, cfg)

    B, S = 2, 8
    x_in = jax.random.normal(xkey, (B, S, 4), F32)   # (N, L, C=4) one-hot-like input

    prep = prepare_params(params, cfg, seq_len=S)    # one-time weight prep (outside jit)
    fwd = jax.jit(functools.partial(deepmsn_forward, num_heads=cfg["num_heads"]))
    out = fwd(prep, x_in)
    jax.block_until_ready(out)
    assert out.shape == (B, cfg["output_dim"]), out.shape
    assert bool(jnp.all(jnp.isfinite(out)))
    print("KERNEL_OK")
</pallas_src>

<mosaic_0001>
module attributes {stable_mosaic.version = 11 : i64} {
  func.func @_tsfm_stack_kernel(%arg0: i32, %arg1: i32, %arg2: memref<1x10x256xf32, #tpu.memory_space<vmem>>, %arg3: memref<1x1x256xf32, #tpu.memory_space<vmem>>, %arg4: memref<1x1x256xf32, #tpu.memory_space<vmem>>, %arg5: memref<1x256x768xbf16, #tpu.memory_space<vmem>>, %arg6: memref<1x1x768xf32, #tpu.memory_space<vmem>>, %arg7: memref<1x256x256xbf16, #tpu.memory_space<vmem>>, %arg8: memref<1x1x256xf32, #tpu.memory_space<vmem>>, %arg9: memref<1x1x256xf32, #tpu.memory_space<vmem>>, %arg10: memref<1x1x256xf32, #tpu.memory_space<vmem>>, %arg11: memref<1x256x1024xbf16, #tpu.memory_space<vmem>>, %arg12: memref<1x1x1024xf32, #tpu.memory_space<vmem>>, %arg13: memref<1x512x256xbf16, #tpu.memory_space<vmem>>, %arg14: memref<1x1x256xf32, #tpu.memory_space<vmem>>, %arg15: memref<1x1x256xf32, #tpu.memory_space<vmem>>, %arg16: memref<10x256xf32, #tpu.memory_space<vmem>>) attributes {dimension_semantics = [#tpu.dimension_semantics<parallel>, #tpu.dimension_semantics<arbitrary>], iteration_bounds = array<i64: 2, 2>, scalar_prefetch = 0 : i64, scratch_operands = 1 : i64, tpu.core_type = #tpu.core_type<tc>, window_params = [{transform_indices = @transform_0, window_bounds = array<i64: 1, 10, 256>}, {transform_indices = @transform_1, window_bounds = array<i64: 1, 1, 256>}, {transform_indices = @transform_2, window_bounds = array<i64: 1, 1, 256>}, {transform_indices = @transform_3, window_bounds = array<i64: 1, 256, 768>}, {transform_indices = @transform_4, window_bounds = array<i64: 1, 1, 768>}, {transform_indices = @transform_5, window_bounds = array<i64: 1, 256, 256>}, {transform_indices = @transform_6, window_bounds = array<i64: 1, 1, 256>}, {transform_indices = @transform_7, window_bounds = array<i64: 1, 1, 256>}, {transform_indices = @transform_8, window_bounds = array<i64: 1, 1, 256>}, {transform_indices = @transform_9, window_bounds = array<i64: 1, 256, 1024>}, {transform_indices = @transform_10, window_bounds = array<i64: 1, 1, 1024>}, {transform_indices = @transform_11, window_bounds = array<i64: 1, 512, 256>}, {transform_indices = @transform_12, window_bounds = array<i64: 1, 1, 256>}, {transform_indices = @transform_13, window_bounds = array<i64: 1, 1, 256>}]} {
    %c0_i32 = arith.constant 0 : i32
    %0 = arith.cmpi eq, %arg1, %c0_i32 : i32
    %1 = arith.extui %0 : i1 to i32
    %c0_i32_0 = arith.constant 0 : i32
    %2 = arith.cmpi ne, %1, %c0_i32_0 : i32
    scf.if %2 {
      %c0_59 = arith.constant 0 : index
      %c0_60 = arith.constant 0 : index
      %c0_61 = arith.constant 0 : index
      %190 = vector.load %arg2[%c0_59, %c0_60, %c0_61] : memref<1x10x256xf32, #tpu.memory_space<vmem>>, vector<1x10x256xf32>
      %191 = vector.shape_cast %190 : vector<1x10x256xf32> to vector<10x256xf32>
      %c0_62 = arith.constant 0 : index
      %c0_63 = arith.constant 0 : index
      %192 = vector.load %arg16[%c0_62, %c0_63] : memref<10x256xf32, #tpu.memory_space<vmem>>, vector<10x256xf32>
      tpu.vector_store %arg16[%c0_62, %c0_63], %191 {strides = array<i32>} : memref<10x256xf32, #tpu.memory_space<vmem>>, vector<10x256xf32>,
    } else {
    }
    %c0 = arith.constant 0 : index
    %c0_1 = arith.constant 0 : index
    %3 = vector.load %arg16[%c0, %c0_1] : memref<10x256xf32, #tpu.memory_space<vmem>>, vector<10x256xf32>
    %c0_2 = arith.constant 0 : index
    %c0_3 = arith.constant 0 : index
    %c0_4 = arith.constant 0 : index
    %4 = vector.load %arg3[%c0_2, %c0_3, %c0_4] : memref<1x1x256xf32, #tpu.memory_space<vmem>>, vector<1x1x256xf32>
    %5 = vector.shape_cast %4 : vector<1x1x256xf32> to vector<1x256xf32>
    %c0_5 = arith.constant 0 : index
    %c0_6 = arith.constant 0 : index
    %c0_7 = arith.constant 0 : index
    %6 = vector.load %arg4[%c0_5, %c0_6, %c0_7] : memref<1x1x256xf32, #tpu.memory_space<vmem>>, vector<1x1x256xf32>
    %7 = vector.shape_cast %6 : vector<1x1x256xf32> to vector<1x256xf32>
    %cst = arith.constant dense<0.000000e+00> : vector<10xf32>
    %8 = vector.multi_reduction <add>, %3, %cst [1] : vector<10x256xf32> to vector<10xf32>
    %9 = vector.shape_cast %8 : vector<10xf32> to vector<10x1xf32>
    %cst_8 = arith.constant 2.560000e+02 : f32
    %10 = vector.broadcast %cst_8 : f32 to vector<10x1xf32>
    %11 = arith.divf %9, %10 : vector<10x1xf32>
    %12 = vector.broadcast %11 : vector<10x1xf32> to vector<10x256xf32>
    %13 = arith.subf %3, %12 : vector<10x256xf32>
    %14 = arith.mulf %13, %13 : vector<10x256xf32>
    %cst_9 = arith.constant dense<0.000000e+00> : vector<10xf32>
    %15 = vector.multi_reduction <add>, %14, %cst_9 [1] : vector<10x256xf32> to vector<10xf32>
    %16 = vector.shape_cast %15 : vector<10xf32> to vector<10x1xf32>
    %cst_10 = arith.constant 2.560000e+02 : f32
    %17 = vector.broadcast %cst_10 : f32 to vector<10x1xf32>
    %18 = arith.divf %16, %17 : vector<10x1xf32>
    %19 = vector.broadcast %11 : vector<10x1xf32> to vector<10x256xf32>
    %20 = arith.subf %3, %19 : vector<10x256xf32>
    %cst_11 = arith.constant 9.99999974E-6 : f32
    %21 = vector.broadcast %cst_11 : f32 to vector<10x1xf32>
    %22 = arith.addf %18, %21 : vector<10x1xf32>
    %23 = math.rsqrt %22 : vector<10x1xf32>
    %24 = vector.broadcast %23 : vector<10x1xf32> to vector<10x256xf32>
    %25 = arith.mulf %20, %24 : vector<10x256xf32>
    %26 = vector.broadcast %5 : vector<1x256xf32> to vector<10x256xf32>
    %27 = arith.mulf %25, %26 : vector<10x256xf32>
    %28 = vector.broadcast %7 : vector<1x256xf32> to vector<10x256xf32>
    %29 = arith.addf %27, %28 : vector<10x256xf32>
    %c0_12 = arith.constant 0 : index
    %c0_13 = arith.constant 0 : index
    %c0_14 = arith.constant 0 : index
    %30 = vector.load %arg5[%c0_12, %c0_13, %c0_14] : memref<1x256x768xbf16, #tpu.memory_space<vmem>>, vector<1x256x768xbf16>
    %31 = vector.shape_cast %30 : vector<1x256x768xbf16> to vector<256x768xbf16>
    %c0_15 = arith.constant 0 : index
    %c0_16 = arith.constant 0 : index
    %c0_17 = arith.constant 0 : index
    %32 = vector.load %arg6[%c0_15, %c0_16, %c0_17] : memref<1x1x768xf32, #tpu.memory_space<vmem>>, vector<1x1x768xf32>
    %33 = vector.shape_cast %32 : vector<1x1x768xf32> to vector<1x768xf32>
    %34 = arith.truncf %29 : vector<10x256xf32> to vector<10x256xbf16>
    %cst_18 = arith.constant dense<0.000000e+00> : vector<10x768xf32>
    %35 = tpu.matmul %34, %31, %cst_18 {dimension_numbers = #tpu.dot_dimension_numbers<[1], [0], [0], [1], [0, 0, 1, 1], [], []>} : vector<10x256xbf16>, vector<256x768xbf16>, vector<10x768xf32> -> vector<10x768xf32>
    %36 = vector.broadcast %33 : vector<1x768xf32> to vector<10x768xf32>
    %37 = arith.addf %35, %36 : vector<10x768xf32>
    %38 = vector.extract_strided_slice %37 {offsets = [0, 0], sizes = [10, 256], strides = [1, 1]} : vector<10x768xf32> to vector<10x256xf32>
    %39 = vector.extract_strided_slice %37 {offsets = [0, 256], sizes = [10, 256], strides = [1, 1]} : vector<10x768xf32> to vector<10x256xf32>
    %40 = vector.extract_strided_slice %37 {offsets = [0, 512], sizes = [10, 256], strides = [1, 1]} : vector<10x768xf32> to vector<10x256xf32>
    %41 = vector.extract_strided_slice %38 {offsets = [0, 0], sizes = [10, 32], strides = [1, 1]} : vector<10x256xf32> to vector<10x32xf32>
    %42 = vector.extract_strided_slice %38 {offsets = [0, 32], sizes = [10, 32], strides = [1, 1]} : vector<10x256xf32> to vector<10x32xf32>
    %43 = vector.extract_strided_slice %38 {offsets = [0, 64], sizes = [10, 32], strides = [1, 1]} : vector<10x256xf32> to vector<10x32xf32>
    %44 = vector.extract_strided_slice %38 {offsets = [0, 96], sizes = [10, 32], strides = [1, 1]} : vector<10x256xf32> to vector<10x32xf32>
    %45 = vector.extract_strided_slice %38 {offsets = [0, 128], sizes = [10, 32], strides = [1, 1]} : vector<10x256xf32> to vector<10x32xf32>
    %46 = vector.extract_strided_slice %38 {offsets = [0, 160], sizes = [10, 32], strides = [1, 1]} : vector<10x256xf32> to vector<10x32xf32>
    %47 = vector.extract_strided_slice %38 {offsets = [0, 192], sizes = [10, 32], strides = [1, 1]} : vector<10x256xf32> to vector<10x32xf32>
    %48 = vector.extract_strided_slice %38 {offsets = [0, 224], sizes = [10, 32], strides = [1, 1]} : vector<10x256xf32> to vector<10x32xf32>
    %49 = vector.shape_cast %41 : vector<10x32xf32> to vector<1x10x32xf32>
    %50 = vector.shape_cast %42 : vector<10x32xf32> to vector<1x10x32xf32>
    %51 = vector.shape_cast %43 : vector<10x32xf32> to vector<1x10x32xf32>
    %52 = vector.shape_cast %44 : vector<10x32xf32> to vector<1x10x32xf32>
    %53 = vector.shape_cast %45 : vector<10x32xf32> to vector<1x10x32xf32>
    %54 = vector.shape_cast %46 : vector<10x32xf32> to vector<1x10x32xf32>
    %55 = vector.shape_cast %47 : vector<10x32xf32> to vector<1x10x32xf32>
    %56 = vector.shape_cast %48 : vector<10x32xf32> to vector<1x10x32xf32>
    %57 = tpu.concatenate %49, %50, %51, %52, %53, %54, %55, %56 in 0 : vector<1x10x32xf32>, vector<1x10x32xf32>, vector<1x10x32xf32>, vector<1x10x32xf32>, vector<1x10x32xf32>, vector<1x10x32xf32>, vector<1x10x32xf32>, vector<1x10x32xf32> -> vector<8x10x32xf32>
    %58 = arith.truncf %57 : vector<8x10x32xf32> to vector<8x10x32xbf16>
    %59 = vector.extract_strided_slice %39 {offsets = [0, 0], sizes = [10, 32], strides = [1, 1]} : vector<10x256xf32> to vector<10x32xf32>
    %60 = vector.extract_strided_slice %39 {offsets = [0, 32], sizes = [10, 32], strides = [1, 1]} : vector<10x256xf32> to vector<10x32xf32>
    %61 = vector.extract_strided_slice %39 {offsets = [0, 64], sizes = [10, 32], strides = [1, 1]} : vector<10x256xf32> to vector<10x32xf32>
    %62 = vector.extract_strided_slice %39 {offsets = [0, 96], sizes = [10, 32], strides = [1, 1]} : vector<10x256xf32> to vector<10x32xf32>
    %63 = vector.extract_strided_slice %39 {offsets = [0, 128], sizes = [10, 32], strides = [1, 1]} : vector<10x256xf32> to vector<10x32xf32>
    %64 = vector.extract_strided_slice %39 {offsets = [0, 160], sizes = [10, 32], strides = [1, 1]} : vector<10x256xf32> to vector<10x32xf32>
    %65 = vector.extract_strided_slice %39 {offsets = [0, 192], sizes = [10, 32], strides = [1, 1]} : vector<10x256xf32> to vector<10x32xf32>
    %66 = vector.extract_strided_slice %39 {offsets = [0, 224], sizes = [10, 32], strides = [1, 1]} : vector<10x256xf32> to vector<10x32xf32>
    %67 = vector.shape_cast %59 : vector<10x32xf32> to vector<1x10x32xf32>
    %68 = vector.shape_cast %60 : vector<10x32xf32> to vector<1x10x32xf32>
    %69 = vector.shape_cast %61 : vector<10x32xf32> to vector<1x10x32xf32>
    %70 = vector.shape_cast %62 : vector<10x32xf32> to vector<1x10x32xf32>
    %71 = vector.shape_cast %63 : vector<10x32xf32> to vector<1x10x32xf32>
    %72 = vector.shape_cast %64 : vector<10x32xf32> to vector<1x10x32xf32>
    %73 = vector.shape_cast %65 : vector<10x32xf32> to vector<1x10x32xf32>
    %74 = vector.shape_cast %66 : vector<10x32xf32> to vector<1x10x32xf32>
    %75 = tpu.concatenate %67, %68, %69, %70, %71, %72, %73, %74 in 0 : vector<1x10x32xf32>, vector<1x10x32xf32>, vector<1x10x32xf32>, vector<1x10x32xf32>, vector<1x10x32xf32>, vector<1x10x32xf32>, vector<1x10x32xf32>, vector<1x10x32xf32> -> vector<8x10x32xf32>
    %76 = arith.truncf %75 : vector<8x10x32xf32> to vector<8x10x32xbf16>
    %77 = vector.extract_strided_slice %40 {offsets = [0, 0], sizes = [10, 32], strides = [1, 1]} : vector<10x256xf32> to vector<10x32xf32>
    %78 = vector.extract_strided_slice %40 {offsets = [0, 32], sizes = [10, 32], strides = [1, 1]} : vector<10x256xf32> to vector<10x32xf32>
    %79 = vector.extract_strided_slice %40 {offsets = [0, 64], sizes = [10, 32], strides = [1, 1]} : vector<10x256xf32> to vector<10x32xf32>
    %80 = vector.extract_strided_slice %40 {offsets = [0, 96], sizes = [10, 32], strides = [1, 1]} : vector<10x256xf32> to vector<10x32xf32>
    %81 = vector.extract_strided_slice %40 {offsets = [0, 128], sizes = [10, 32], strides = [1, 1]} : vector<10x256xf32> to vector<10x32xf32>
    %82 = vector.extract_strided_slice %40 {offsets = [0, 160], sizes = [10, 32], strides = [1, 1]} : vector<10x256xf32> to vector<10x32xf32>
    %83 = vector.extract_strided_slice %40 {offsets = [0, 192], sizes = [10, 32], strides = [1, 1]} : vector<10x256xf32> to vector<10x32xf32>
    %84 = vector.extract_strided_slice %40 {offsets = [0, 224], sizes = [10, 32], strides = [1, 1]} : vector<10x256xf32> to vector<10x32xf32>
    %85 = vector.shape_cast %77 : vector<10x32xf32> to vector<1x10x32xf32>
    %86 = vector.shape_cast %78 : vector<10x32xf32> to vector<1x10x32xf32>
    %87 = vector.shape_cast %79 : vector<10x32xf32> to vector<1x10x32xf32>
    %88 = vector.shape_cast %80 : vector<10x32xf32> to vector<1x10x32xf32>
    %89 = vector.shape_cast %81 : vector<10x32xf32> to vector<1x10x32xf32>
    %90 = vector.shape_cast %82 : vector<10x32xf32> to vector<1x10x32xf32>
    %91 = vector.shape_cast %83 : vector<10x32xf32> to vector<1x10x32xf32>
    %92 = vector.shape_cast %84 : vector<10x32xf32> to vector<1x10x32xf32>
    %93 = tpu.concatenate %85, %86, %87, %88, %89, %90, %91, %92 in 0 : vector<1x10x32xf32>, vector<1x10x32xf32>, vector<1x10x32xf32>, vector<1x10x32xf32>, vector<1x10x32xf32>, vector<1x10x32xf32>, vector<1x10x32xf32>, vector<1x10x32xf32> -> vector<8x10x32xf32>
    %94 = arith.truncf %93 : vector<8x10x32xf32> to vector<8x10x32xbf16>
    %cst_19 = arith.constant dense<0.000000e+00> : vector<8x10x10xf32>
    %95 = tpu.matmul %58, %76, %cst_19 {dimension_numbers = #tpu.dot_dimension_numbers<[2], [2], [1], [1], [0, 0, 0, 1, 1, 1], [0], [0]>} : vector<8x10x32xbf16>, vector<8x10x32xbf16>, vector<8x10x10xf32> -> vector<8x10x10xf32>
    %cst_20 = arith.constant dense<0xFF800000> : vector<8x10xf32>
    %96 = vector.multi_reduction <maximumf>, %95, %cst_20 [2] : vector<8x10x10xf32> to vector<8x10xf32>
    %97 = vector.shape_cast %96 : vector<8x10xf32> to vector<8x10x1xf32>
    %98 = vector.broadcast %97 : vector<8x10x1xf32> to vector<8x10x10xf32>
    %99 = arith.subf %95, %98 : vector<8x10x10xf32>
    %100 = math.exp %99 : vector<8x10x10xf32>
    %cst_21 = arith.constant dense<0.000000e+00> : vector<8x10xf32>
    %101 = vector.multi_reduction <add>, %100, %cst_21 [2] : vector<8x10x10xf32> to vector<8x10xf32>
    %102 = vector.shape_cast %101 : vector<8x10xf32> to vector<8x10x1xf32>
    %103 = tpu.reciprocal %102 {approx = true} : vector<8x10x1xf32> -> vector<8x10x1xf32>
    %104 = vector.broadcast %103 : vector<8x10x1xf32> to vector<8x10x10xf32>
    %105 = arith.mulf %100, %104 : vector<8x10x10xf32>
    %106 = arith.truncf %105 : vector<8x10x10xf32> to vector<8x10x10xbf16>
    %cst_22 = arith.constant dense<0.000000e+00> : vector<8x10x32xf32>
    %107 = tpu.matmul %106, %94, %cst_22 {dimension_numbers = #tpu.dot_dimension_numbers<[2], [1], [1], [2], [0, 0, 0, 1, 1, 2], [0], [0]>} : vector<8x10x10xbf16>, vector<8x10x32xbf16>, vector<8x10x32xf32> -> vector<8x10x32xf32>
    %108 = vector.extract_strided_slice %107 {offsets = [0, 0, 0], sizes = [1, 10, 32], strides = [1, 1, 1]} : vector<8x10x32xf32> to vector<1x10x32xf32>
    %109 = vector.shape_cast %108 : vector<1x10x32xf32> to vector<10x32xf32>
    %110 = vector.extract_strided_slice %107 {offsets = [1, 0, 0], sizes = [1, 10, 32], strides = [1, 1, 1]} : vector<8x10x32xf32> to vector<1x10x32xf32>
    %111 = vector.shape_cast %110 : vector<1x10x32xf32> to vector<10x32xf32>
    %112 = vector.extract_strided_slice %107 {offsets = [2, 0, 0], sizes = [1, 10, 32], strides = [1, 1, 1]} : vector<8x10x32xf32> to vector<1x10x32xf32>
    %113 = vector.shape_cast %112 : vector<1x10x32xf32> to vector<10x32xf32>
    %114 = vector.extract_strided_slice %107 {offsets = [3, 0, 0], sizes = [1, 10, 32], strides = [1, 1, 1]} : vector<8x10x32xf32> to vector<1x10x32xf32>
    %115 = vector.shape_cast %114 : vector<1x10x32xf32> to vector<10x32xf32>
    %116 = vector.extract_strided_slice %107 {offsets = [4, 0, 0], sizes = [1, 10, 32], strides = [1, 1, 1]} : vector<8x10x32xf32> to vector<1x10x32xf32>
    %117 = vector.shape_cast %116 : vector<1x10x32xf32> to vector<10x32xf32>
    %118 = vector.extract_strided_slice %107 {offsets = [5, 0, 0], sizes = [1, 10, 32], strides = [1, 1, 1]} : vector<8x10x32xf32> to vector<1x10x32xf32>
    %119 = vector.shape_cast %118 : vector<1x10x32xf32> to vector<10x32xf32>
    %120 = vector.extract_strided_slice %107 {offsets = [6, 0, 0], sizes = [1, 10, 32], strides = [1, 1, 1]} : vector<8x10x32xf32> to vector<1x10x32xf32>
    %121 = vector.shape_cast %120 : vector<1x10x32xf32> to vector<10x32xf32>
    %122 = vector.extract_strided_slice %107 {offsets = [7, 0, 0], sizes = [1, 10, 32], strides = [1, 1, 1]} : vector<8x10x32xf32> to vector<1x10x32xf32>
    %123 = vector.shape_cast %122 : vector<1x10x32xf32> to vector<10x32xf32>
    %124 = tpu.concatenate %109, %111, %113, %115, %117, %119, %121, %123 in 1 : vector<10x32xf32>, vector<10x32xf32>, vector<10x32xf32>, vector<10x32xf32>, vector<10x32xf32>, vector<10x32xf32>, vector<10x32xf32>, vector<10x32xf32> -> vector<10x256xf32>
    %c0_23 = arith.constant 0 : index
    %c0_24 = arith.constant 0 : index
    %c0_25 = arith.constant 0 : index
    %125 = vector.load %arg7[%c0_23, %c0_24, %c0_25] : memref<1x256x256xbf16, #tpu.memory_space<vmem>>, vector<1x256x256xbf16>
    %126 = vector.shape_cast %125 : vector<1x256x256xbf16> to vector<256x256xbf16>
    %c0_26 = arith.constant 0 : index
    %c0_27 = arith.constant 0 : index
    %c0_28 = arith.constant 0 : index
    %127 = vector.load %arg8[%c0_26, %c0_27, %c0_28] : memref<1x1x256xf32, #tpu.memory_space<vmem>>, vector<1x1x256xf32>
    %128 = vector.shape_cast %127 : vector<1x1x256xf32> to vector<1x256xf32>
    %129 = arith.truncf %124 : vector<10x256xf32> to vector<10x256xbf16>
    %cst_29 = arith.constant dense<0.000000e+00> : vector<10x256xf32>
    %130 = tpu.matmul %129, %126, %cst_29 {dimension_numbers = #tpu.dot_dimension_numbers<[1], [0], [0], [1], [0, 0, 1, 1], [], []>} : vector<10x256xbf16>, vector<256x256xbf16>, vector<10x256xf32> -> vector<10x256xf32>
    %131 = vector.broadcast %128 : vector<1x256xf32> to vector<10x256xf32>
    %132 = arith.addf %130, %131 : vector<10x256xf32>
    %133 = arith.addf %3, %132 : vector<10x256xf32>
    %c0_30 = arith.constant 0 : index
    %c0_31 = arith.constant 0 : index
    %c0_32 = arith.constant 0 : index
    %134 = vector.load %arg9[%c0_30, %c0_31, %c0_32] : memref<1x1x256xf32, #tpu.memory_space<vmem>>, vector<1x1x256xf32>
    %135 = vector.shape_cast %134 : vector<1x1x256xf32> to vector<1x256xf32>
    %c0_33 = arith.constant 0 : index
    %c0_34 = arith.constant 0 : index
    %c0_35 = arith.constant 0 : index
    %136 = vector.load %arg10[%c0_33, %c0_34, %c0_35] : memref<1x1x256xf32, #tpu.memory_space<vmem>>, vector<1x1x256xf32>
    %137 = vector.shape_cast %136 : vector<1x1x256xf32> to vector<1x256xf32>
    %cst_36 = arith.constant dense<0.000000e+00> : vector<10xf32>
    %138 = vector.multi_reduction <add>, %133, %cst_36 [1] : vector<10x256xf32> to vector<10xf32>
    %139 = vector.shape_cast %138 : vector<10xf32> to vector<10x1xf32>
    %cst_37 = arith.constant 2.560000e+02 : f32
    %140 = vector.broadcast %cst_37 : f32 to vector<10x1xf32>
    %141 = arith.divf %139, %140 : vector<10x1xf32>
    %142 = vector.broadcast %141 : vector<10x1xf32> to vector<10x256xf32>
    %143 = arith.subf %133, %142 : vector<10x256xf32>
    %144 = arith.mulf %143, %143 : vector<10x256xf32>
    %cst_38 = arith.constant dense<0.000000e+00> : vector<10xf32>
    %145 = vector.multi_reduction <add>, %144, %cst_38 [1] : vector<10x256xf32> to vector<10xf32>
    %146 = vector.shape_cast %145 : vector<10xf32> to vector<10x1xf32>
    %cst_39 = arith.constant 2.560000e+02 : f32
    %147 = vector.broadcast %cst_39 : f32 to vector<10x1xf32>
    %148 = arith.divf %146, %147 : vector<10x1xf32>
    %149 = vector.broadcast %141 : vector<10x1xf32> to vector<10x256xf32>
    %150 = arith.subf %133, %149 : vector<10x256xf32>
    %cst_40 = arith.constant 9.99999974E-6 : f32
    %151 = vector.broadcast %cst_40 : f32 to vector<10x1xf32>
    %152 = arith.addf %148, %151 : vector<10x1xf32>
    %153 = math.rsqrt %152 : vector<10x1xf32>
    %154 = vector.broadcast %153 : vector<10x1xf32> to vector<10x256xf32>
    %155 = arith.mulf %150, %154 : vector<10x256xf32>
    %156 = vector.broadcast %135 : vector<1x256xf32> to vector<10x256xf32>
    %157 = arith.mulf %155, %156 : vector<10x256xf32>
    %158 = vector.broadcast %137 : vector<1x256xf32> to vector<10x256xf32>
    %159 = arith.addf %157, %158 : vector<10x256xf32>
    %c0_41 = arith.constant 0 : index
    %c0_42 = arith.constant 0 : index
    %c0_43 = arith.constant 0 : index
    %160 = vector.load %arg11[%c0_41, %c0_42, %c0_43] : memref<1x256x1024xbf16, #tpu.memory_space<vmem>>, vector<1x256x1024xbf16>
    %161 = vector.shape_cast %160 : vector<1x256x1024xbf16> to vector<256x1024xbf16>
    %c0_44 = arith.constant 0 : index
    %c0_45 = arith.constant 0 : index
    %c0_46 = arith.constant 0 : index
    %162 = vector.load %arg12[%c0_44, %c0_45, %c0_46] : memref<1x1x1024xf32, #tpu.memory_space<vmem>>, vector<1x1x1024xf32>
    %163 = vector.shape_cast %162 : vector<1x1x1024xf32> to vector<1x1024xf32>
    %164 = arith.truncf %159 : vector<10x256xf32> to vector<10x256xbf16>
    %cst_47 = arith.constant dense<0.000000e+00> : vector<10x1024xf32>
    %165 = tpu.matmul %164, %161, %cst_47 {dimension_numbers = #tpu.dot_dimension_numbers<[1], [0], [0], [1], [0, 0, 1, 1], [], []>} : vector<10x256xbf16>, vector<256x1024xbf16>, vector<10x1024xf32> -> vector<10x1024xf32>
    %166 = vector.broadcast %163 : vector<1x1024xf32> to vector<10x1024xf32>
    %167 = arith.addf %165, %166 : vector<10x1024xf32>
    %168 = vector.extract_strided_slice %167 {offsets = [0, 0], sizes = [10, 512], strides = [1, 1]} : vector<10x1024xf32> to vector<10x512xf32>
    %169 = vector.extract_strided_slice %167 {offsets = [0, 512], sizes = [10, 512], strides = [1, 1]} : vector<10x1024xf32> to vector<10x512xf32>
    %170 = arith.negf %168 : vector<10x512xf32>
    %171 = math.exp %170 : vector<10x512xf32>
    %cst_48 = arith.constant 1.000000e+00 : f32
    %172 = vector.broadcast %cst_48 : f32 to vector<10x512xf32>
    %173 = arith.addf %172, %171 : vector<10x512xf32>
    %174 = arith.divf %172, %173 : vector<10x512xf32>
    %175 = arith.mulf %168, %174 : vector<10x512xf32>
    %176 = arith.mulf %175, %169 : vector<10x512xf32>
    %c0_49 = arith.constant 0 : index
    %c0_50 = arith.constant 0 : index
    %c0_51 = arith.constant 0 : index
    %177 = vector.load %arg13[%c0_49, %c0_50, %c0_51] : memref<1x512x256xbf16, #tpu.memory_space<vmem>>, vector<1x512x256xbf16>
    %178 = vector.shape_cast %177 : vector<1x512x256xbf16> to vector<512x256xbf16>
    %c0_52 = arith.constant 0 : index
    %c0_53 = arith.constant 0 : index
    %c0_54 = arith.constant 0 : index
    %179 = vector.load %arg14[%c0_52, %c0_53, %c0_54] : memref<1x1x256xf32, #tpu.memory_space<vmem>>, vector<1x1x256xf32>
    %180 = vector.shape_cast %179 : vector<1x1x256xf32> to vector<1x256xf32>
    %181 = arith.truncf %176 : vector<10x512xf32> to vector<10x512xbf16>
    %cst_55 = arith.constant dense<0.000000e+00> : vector<10x256xf32>
    %182 = tpu.matmul %181, %178, %cst_55 {dimension_numbers = #tpu.dot_dimension_numbers<[1], [0], [0], [1], [0, 0, 1, 1], [], []>} : vector<10x512xbf16>, vector<512x256xbf16>, vector<10x256xf32> -> vector<10x256xf32>
    %183 = vector.broadcast %180 : vector<1x256xf32> to vector<10x256xf32>
    %184 = arith.addf %182, %183 : vector<10x256xf32>
    %185 = arith.addf %133, %184 : vector<10x256xf32>
    %c0_56 = arith.constant 0 : index
    %c0_57 = arith.constant 0 : index
    %186 = vector.load %arg16[%c0_56, %c0_57] : memref<10x256xf32, #tpu.memory_space<vmem>>, vector<10x256xf32>
    tpu.vector_store %arg16[%c0_56, %c0_57], %185 {strides = array<i32>} : memref<10x256xf32, #tpu.memory_space<vmem>>, vector<10x256xf32>,
    %c1_i32 = arith.constant 1 : i32
    %187 = arith.cmpi eq, %arg1, %c1_i32 : i32
    %188 = arith.extui %187 : i1 to i32
    %c0_i32_58 = arith.constant 0 : i32
    %189 = arith.cmpi ne, %188, %c0_i32_58 : i32
    scf.if %189 {
      %190 = vector.extract_strided_slice %185 {offsets = [0, 0], sizes = [1, 256], strides = [1, 1]} : vector<10x256xf32> to vector<1x256xf32>
      %c0_59 = arith.constant 0 : index
      %c0_60 = arith.constant 0 : index
      %c0_61 = arith.constant 0 : index
      %191 = vector.load %arg15[%c0_59, %c0_60, %c0_61] : memref<1x1x256xf32, #tpu.memory_space<vmem>>, vector<1x1x256xf32>
      %192 = vector.shape_cast %191 : vector<1x1x256xf32> to vector<1x256xf32>
      %193 = vector.shape_cast %190 : vector<1x256xf32> to vector<1x1x256xf32>
      tpu.vector_store %arg15[%c0_59, %c0_60, %c0_61], %193 {strides = array<i32>} : memref<1x1x256xf32, #tpu.memory_space<vmem>>, vector<1x1x256xf32>,
    } else {
    }
    return
  }
  func.func @transform_0(%arg0: i32, %arg1: i32) -> (i32, i32, i32) {
    %c0_i32 = arith.constant 0 : i32
    %c0_i32_0 = arith.constant 0 : i32
    %c0_i32_1 = arith.constant 0 : i32
    return %arg0, %c0_i32, %c0_i32_0 : i32, i32, i32
  }
  func.func @transform_1(%arg0: i32, %arg1: i32) -> (i32, i32, i32) {
    %c0_i32 = arith.constant 0 : i32
    %c0_i32_0 = arith.constant 0 : i32
    %c0_i32_1 = arith.constant 0 : i32
    return %arg1, %c0_i32, %c0_i32_0 : i32, i32, i32
  }
  func.func @transform_2(%arg0: i32, %arg1: i32) -> (i32, i32, i32) {
    %c0_i32 = arith.constant 0 : i32
    %c0_i32_0 = arith.constant 0 : i32
    %c0_i32_1 = arith.constant 0 : i32
    return %arg1, %c0_i32, %c0_i32_0 : i32, i32, i32
  }
  func.func @transform_3(%arg0: i32, %arg1: i32) -> (i32, i32, i32) {
    %c0_i32 = arith.constant 0 : i32
    %c0_i32_0 = arith.constant 0 : i32
    %c0_i32_1 = arith.constant 0 : i32
    return %arg1, %c0_i32, %c0_i32_0 : i32, i32, i32
  }
  func.func @transform_4(%arg0: i32, %arg1: i32) -> (i32, i32, i32) {
    %c0_i32 = arith.constant 0 : i32
    %c0_i32_0 = arith.constant 0 : i32
    %c0_i32_1 = arith.constant 0 : i32
    return %arg1, %c0_i32, %c0_i32_0 : i32, i32, i32
  }
  func.func @transform_5(%arg0: i32, %arg1: i32) -> (i32, i32, i32) {
    %c0_i32 = arith.constant 0 : i32
    %c0_i32_0 = arith.constant 0 : i32
    %c0_i32_1 = arith.constant 0 : i32
    return %arg1, %c0_i32, %c0_i32_0 : i32, i32, i32
  }
  func.func @transform_6(%arg0: i32, %arg1: i32) -> (i32, i32, i32) {
    %c0_i32 = arith.constant 0 : i32
    %c0_i32_0 = arith.constant 0 : i32
    %c0_i32_1 = arith.constant 0 : i32
    return %arg1, %c0_i32, %c0_i32_0 : i32, i32, i32
  }
  func.func @transform_7(%arg0: i32, %arg1: i32) -> (i32, i32, i32) {
    %c0_i32 = arith.constant 0 : i32
    %c0_i32_0 = arith.constant 0 : i32
    %c0_i32_1 = arith.constant 0 : i32
    return %arg1, %c0_i32, %c0_i32_0 : i32, i32, i32
  }
  func.func @transform_8(%arg0: i32, %arg1: i32) -> (i32, i32, i32) {
    %c0_i32 = arith.constant 0 : i32
    %c0_i32_0 = arith.constant 0 : i32
    %c0_i32_1 = arith.constant 0 : i32
    return %arg1, %c0_i32, %c0_i32_0 : i32, i32, i32
  }
  func.func @transform_9(%arg0: i32, %arg1: i32) -> (i32, i32, i32) {
    %c0_i32 = arith.constant 0 : i32
    %c0_i32_0 = arith.constant 0 : i32
    %c0_i32_1 = arith.constant 0 : i32
    return %arg1, %c0_i32, %c0_i32_0 : i32, i32, i32
  }
  func.func @transform_10(%arg0: i32, %arg1: i32) -> (i32, i32, i32) {
    %c0_i32 = arith.constant 0 : i32
    %c0_i32_0 = arith.constant 0 : i32
    %c0_i32_1 = arith.constant 0 : i32
    return %arg1, %c0_i32, %c0_i32_0 : i32, i32, i32
  }
  func.func @transform_11(%arg0: i32, %arg1: i32) -> (i32, i32, i32) {
    %c0_i32 = arith.constant 0 : i32
    %c0_i32_0 = arith.constant 0 : i32
    %c0_i32_1 = arith.constant 0 : i32
    return %arg1, %c0_i32, %c0_i32_0 : i32, i32, i32
  }
  func.func @transform_12(%arg0: i32, %arg1: i32) -> (i32, i32, i32) {
    %c0_i32 = arith.constant 0 : i32
    %c0_i32_0 = arith.constant 0 : i32
    %c0_i32_1 = arith.constant 0 : i32
    return %arg1, %c0_i32, %c0_i32_0 : i32, i32, i32
  }
  func.func @transform_13(%arg0: i32, %arg1: i32) -> (i32, i32, i32) {
    %c0_i32 = arith.constant 0 : i32
    %c0_i32_0 = arith.constant 0 : i32
    %c0_i32_1 = arith.constant 0 : i32
    return %arg0, %c0_i32, %c0_i32_0 : i32, i32, i32
  }
}

module attributes {stable_mosaic.version = 11 : i64} {
  func.func @_embed_early_kernel(%arg0: i32, %arg1: memref<1x8x4xf32, #tpu.memory_space<vmem>>, %arg2: memref<4x128xf32, #tpu.memory_space<vmem>>, %arg3: memref<8x128xf32, #tpu.memory_space<vmem>>, %arg4: memref<2x128xf32, #tpu.memory_space<vmem>>, %arg5: memref<1x128xf32, #tpu.memory_space<vmem>>, %arg6: memref<1x128xf32, #tpu.memory_space<vmem>>, %arg7: memref<128x256xbf16, #tpu.memory_space<vmem>>, %arg8: memref<1x256xf32, #tpu.memory_space<vmem>>, %arg9: memref<1x256xf32, #tpu.memory_space<vmem>>, %arg10: memref<1x256xf32, #tpu.memory_space<vmem>>, %arg11: memref<256x256xbf16, #tpu.memory_space<vmem>>, %arg12: memref<1x256xf32, #tpu.memory_space<vmem>>, %arg13: memref<128x256xbf16, #tpu.memory_space<vmem>>, %arg14: memref<1x256xf32, #tpu.memory_space<vmem>>, %arg15: memref<1x256xf32, #tpu.memory_space<vmem>>, %arg16: memref<1x256xf32, #tpu.memory_space<vmem>>, %arg17: memref<256x256xbf16, #tpu.memory_space<vmem>>, %arg18: memref<1x256xf32, #tpu.memory_space<vmem>>, %arg19: memref<1x256xf32, #tpu.memory_space<vmem>>, %arg20: memref<1x256xf32, #tpu.memory_space<vmem>>, %arg21: memref<256x256xbf16, #tpu.memory_space<vmem>>, %arg22: memref<1x256xf32, #tpu.memory_space<vmem>>, %arg23: memref<1x10x256xf32, #tpu.memory_space<vmem>>) attributes {dimension_semantics = [#tpu.dimension_semantics<parallel>], iteration_bounds = array<i64: 2>, scalar_prefetch = 0 : i64, scratch_operands = 0 : i64, tpu.core_type = #tpu.core_type<tc>, window_params = [{transform_indices = @transform_0, window_bounds = array<i64: 1, 8, 4>}, {pipeline_mode = #tpu.pipeline_mode<synchronous>, transform_indices = @transform_1, window_bounds = array<i64: 4, 128>}, {pipeline_mode = #tpu.pipeline_mode<synchronous>, transform_indices = @transform_2, window_bounds = array<i64: 8, 128>}, {pipeline_mode = #tpu.pipeline_mode<synchronous>, transform_indices = @transform_3, window_bounds = array<i64: 2, 128>}, {pipeline_mode = #tpu.pipeline_mode<synchronous>, transform_indices = @transform_4, window_bounds = array<i64: 1, 128>}, {pipeline_mode = #tpu.pipeline_mode<synchronous>, transform_indices = @transform_5, window_bounds = array<i64: 1, 128>}, {pipeline_mode = #tpu.pipeline_mode<synchronous>, transform_indices = @transform_6, window_bounds = array<i64: 128, 256>}, {pipeline_mode = #tpu.pipeline_mode<synchronous>, transform_indices = @transform_7, window_bounds = array<i64: 1, 256>}, {pipeline_mode = #tpu.pipeline_mode<synchronous>, transform_indices = @transform_8, window_bounds = array<i64: 1, 256>}, {pipeline_mode = #tpu.pipeline_mode<synchronous>, transform_indices = @transform_9, window_bounds = array<i64: 1, 256>}, {pipeline_mode = #tpu.pipeline_mode<synchronous>, transform_indices = @transform_10, window_bounds = array<i64: 256, 256>}, {pipeline_mode = #tpu.pipeline_mode<synchronous>, transform_indices = @transform_11, window_bounds = array<i64: 1, 256>}, {pipeline_mode = #tpu.pipeline_mode<synchronous>, transform_indices = @transform_12, window_bounds = array<i64: 128, 256>}, {pipeline_mode = #tpu.pipeline_mode<synchronous>, transform_indices = @transform_13, window_bounds = array<i64: 1, 256>}, {pipeline_mode = #tpu.pipeline_mode<synchronous>, transform_indices = @transform_14, window_bounds = array<i64: 1, 256>}, {pipeline_mode = #tpu.pipeline_mode<synchronous>, transform_indices = @transform_15, window_bounds = array<i64: 1, 256>}, {pipeline_mode = #tpu.pipeline_mode<synchronous>, transform_indices = @transform_16, window_bounds = array<i64: 256, 256>}, {pipeline_mode = #tpu.pipeline_mode<synchronous>, transform_indices = @transform_17, window_bounds = array<i64: 1, 256>}, {pipeline_mode = #tpu.pipeline_mode<synchronous>, transform_indices = @transform_18, window_bounds = array<i64: 1, 256>}, {pipeline_mode = #tpu.pipeline_mode<synchronous>, transform_indices = @transform_19, window_bounds = array<i64: 1, 256>}, {pipeline_mode = #tpu.pipeline_mode<synchronous>, transform_indices = @transform_20, window_bounds = array<i64: 256, 256>}, {pipeline_mode = #tpu.pipeline_mode<synchronous>, transform_indices = @transform_21, window_bounds = array<i64: 1, 256>}, {transform_indices = @transform_22, window_bounds = array<i64: 1, 10, 256>}]} {
    %c0 = arith.constant 0 : index
    %c0_0 = arith.constant 0 : index
    %c0_1 = arith.constant 0 : index
    %0 = vector.load %arg1[%c0, %c0_0, %c0_1] : memref<1x8x4xf32, #tpu.memory_space<vmem>>, vector<1x8x4xf32>
    %1 = vector.shape_cast %0 : vector<1x8x4xf32> to vector<8x4xf32>
    %c0_2 = arith.constant 0 : index
    %c0_3 = arith.constant 0 : index
    %2 = vector.load %arg2[%c0_2, %c0_3] : memref<4x128xf32, #tpu.memory_space<vmem>>, vector<4x128xf32>
    %cst = arith.constant dense<0.000000e+00> : vector<8x128xf32>
    %3 = tpu.matmul %1, %2, %cst {dimension_numbers = #tpu.dot_dimension_numbers<[1], [0], [0], [1], [0, 0, 1, 1], [], []>} : vector<8x4xf32>, vector<4x128xf32>, vector<8x128xf32> -> vector<8x128xf32>
    %c0_4 = arith.constant 0 : index
    %c0_5 = arith.constant 0 : index
    %4 = vector.load %arg3[%c0_4, %c0_5] : memref<8x128xf32, #tpu.memory_space<vmem>>, vector<8x128xf32>
    %5 = arith.addf %3, %4 : vector<8x128xf32>
    %c0_6 = arith.constant 0 : index
    %c0_7 = arith.constant 0 : index
    %6 = vector.load %arg4[%c0_6, %c0_7] : memref<2x128xf32, #tpu.memory_space<vmem>>, vector<2x128xf32>
    %7 = tpu.concatenate %6, %5 in 0 : vector<2x128xf32>, vector<8x128xf32> -> vector<10x128xf32>
    %c0_8 = arith.constant 0 : index
    %c0_9 = arith.constant 0 : index
    %8 = vector.load %arg5[%c0_8, %c0_9] : memref<1x128xf32, #tpu.memory_space<vmem>>, vector<1x128xf32>
    %c0_10 = arith.constant 0 : index
    %c0_11 = arith.constant 0 : index
    %9 = vector.load %arg6[%c0_10, %c0_11] : memref<1x128xf32, #tpu.memory_space<vmem>>, vector<1x128xf32>
    %cst_12 = arith.constant dense<0.000000e+00> : vector<10xf32>
    %10 = vector.multi_reduction <add>, %7, %cst_12 [1] : vector<10x128xf32> to vector<10xf32>
    %11 = vector.shape_cast %10 : vector<10xf32> to vector<10x1xf32>
    %cst_13 = arith.constant 1.280000e+02 : f32
    %12 = vector.broadcast %cst_13 : f32 to vector<10x1xf32>
    %13 = arith.divf %11, %12 : vector<10x1xf32>
    %14 = vector.broadcast %13 : vector<10x1xf32> to vector<10x128xf32>
    %15 = arith.subf %7, %14 : vector<10x128xf32>
    %16 = arith.mulf %15, %15 : vector<10x128xf32>
    %cst_14 = arith.constant dense<0.000000e+00> : vector<10xf32>
    %17 = vector.multi_reduction <add>, %16, %cst_14 [1] : vector<10x128xf32> to vector<10xf32>
    %18 = vector.shape_cast %17 : vector<10xf32> to vector<10x1xf32>
    %cst_15 = arith.constant 1.280000e+02 : f32
    %19 = vector.broadcast %cst_15 : f32 to vector<10x1xf32>
    %20 = arith.divf %18, %19 : vector<10x1xf32>
    %21 = vector.broadcast %13 : vector<10x1xf32> to vector<10x128xf32>
    %22 = arith.subf %7, %21 : vector<10x128xf32>
    %cst_16 = arith.constant 9.99999974E-6 : f32
    %23 = vector.broadcast %cst_16 : f32 to vector<10x1xf32>
    %24 = arith.addf %20, %23 : vector<10x1xf32>
    %25 = math.rsqrt %24 : vector<10x1xf32>
    %26 = vector.broadcast %25 : vector<10x1xf32> to vector<10x128xf32>
    %27 = arith.mulf %22, %26 : vector<10x128xf32>
    %28 = vector.broadcast %8 : vector<1x128xf32> to vector<10x128xf32>
    %29 = arith.mulf %27, %28 : vector<10x128xf32>
    %30 = vector.broadcast %9 : vector<1x128xf32> to vector<10x128xf32>
    %31 = arith.addf %29, %30 : vector<10x128xf32>
    %cst_17 = arith.constant 0.000000e+00 : f32
    %32 = vector.broadcast %cst_17 : f32 to vector<10x128xf32>
    %33 = arith.cmpf oge, %31, %32 : vector<10x128xf32>
    %cst_18 = arith.constant 1.000000e-01 : f32
    %34 = vector.broadcast %cst_18 : f32 to vector<10x128xf32>
    %35 = arith.mulf %34, %31 : vector<10x128xf32>
    %36 = arith.select %33, %31, %35 : vector<10x128xi1>, vector<10x128xf32>
    %c0_19 = arith.constant 0 : index
    %c0_20 = arith.constant 0 : index
    %37 = vector.load %arg7[%c0_19, %c0_20] : memref<128x256xbf16, #tpu.memory_space<vmem>>, vector<128x256xbf16>
    %c0_21 = arith.constant 0 : index
    %c0_22 = arith.constant 0 : index
    %38 = vector.load %arg8[%c0_21, %c0_22] : memref<1x256xf32, #tpu.memory_space<vmem>>, vector<1x256xf32>
    %39 = arith.truncf %36 : vector<10x128xf32> to vector<10x128xbf16>
    %cst_23 = arith.constant dense<0.000000e+00> : vector<10x256xf32>
    %40 = tpu.matmul %39, %37, %cst_23 {dimension_numbers = #tpu.dot_dimension_numbers<[1], [0], [0], [1], [0, 0, 1, 1], [], []>} : vector<10x128xbf16>, vector<128x256xbf16>, vector<10x256xf32> -> vector<10x256xf32>
    %41 = vector.broadcast %38 : vector<1x256xf32> to vector<10x256xf32>
    %42 = arith.addf %40, %41 : vector<10x256xf32>
    %c0_24 = arith.constant 0 : index
    %c0_25 = arith.constant 0 : index
    %43 = vector.load %arg9[%c0_24, %c0_25] : memref<1x256xf32, #tpu.memory_space<vmem>>, vector<1x256xf32>
    %c0_26 = arith.constant 0 : index
    %c0_27 = arith.constant 0 : index
    %44 = vector.load %arg10[%c0_26, %c0_27] : memref<1x256xf32, #tpu.memory_space<vmem>>, vector<1x256xf32>
    %cst_28 = arith.constant dense<0.000000e+00> : vector<10xf32>
    %45 = vector.multi_reduction <add>, %42, %cst_28 [1] : vector<10x256xf32> to vector<10xf32>
    %46 = vector.shape_cast %45 : vector<10xf32> to vector<10x1xf32>
    %cst_29 = arith.constant 2.560000e+02 : f32
    %47 = vector.broadcast %cst_29 : f32 to vector<10x1xf32>
    %48 = arith.divf %46, %47 : vector<10x1xf32>
    %49 = vector.broadcast %48 : vector<10x1xf32> to vector<10x256xf32>
    %50 = arith.subf %42, %49 : vector<10x256xf32>
    %51 = arith.mulf %50, %50 : vector<10x256xf32>
    %cst_30 = arith.constant dense<0.000000e+00> : vector<10xf32>
    %52 = vector.multi_reduction <add>, %51, %cst_30 [1] : vector<10x256xf32> to vector<10xf32>
    %53 = vector.shape_cast %52 : vector<10xf32> to vector<10x1xf32>
    %cst_31 = arith.constant 2.560000e+02 : f32
    %54 = vector.broadcast %cst_31 : f32 to vector<10x1xf32>
    %55 = arith.divf %53, %54 : vector<10x1xf32>
    %56 = vector.broadcast %48 : vector<10x1xf32> to vector<10x256xf32>
    %57 = arith.subf %42, %56 : vector<10x256xf32>
    %cst_32 = arith.constant 9.99999974E-6 : f32
    %58 = vector.broadcast %cst_32 : f32 to vector<10x1xf32>
    %59 = arith.addf %55, %58 : vector<10x1xf32>
    %60 = math.rsqrt %59 : vector<10x1xf32>
    %61 = vector.broadcast %60 : vector<10x1xf32> to vector<10x256xf32>
    %62 = arith.mulf %57, %61 : vector<10x256xf32>
    %63 = vector.broadcast %43 : vector<1x256xf32> to vector<10x256xf32>
    %64 = arith.mulf %62, %63 : vector<10x256xf32>
    %65 = vector.broadcast %44 : vector<1x256xf32> to vector<10x256xf32>
    %66 = arith.addf %64, %65 : vector<10x256xf32>
    %cst_33 = arith.constant 0.000000e+00 : f32
    %67 = vector.broadcast %cst_33 : f32 to vector<10x256xf32>
    %68 = arith.cmpf oge, %66, %67 : vector<10x256xf32>
    %cst_34 = arith.constant 1.000000e-01 : f32
    %69 = vector.broadcast %cst_34 : f32 to vector<10x256xf32>
    %70 = arith.mulf %69, %66 : vector<10x256xf32>
    %71 = arith.select %68, %66, %70 : vector<10x256xi1>, vector<10x256xf32>
    %c0_35 = arith.constant 0 : index
    %c0_36 = arith.constant 0 : index
    %72 = vector.load %arg11[%c0_35, %c0_36] : memref<256x256xbf16, #tpu.memory_space<vmem>>, vector<256x256xbf16>
    %c0_37 = arith.constant 0 : index
    %c0_38 = arith.constant 0 : index
    %73 = vector.load %arg12[%c0_37, %c0_38] : memref<1x256xf32, #tpu.memory_space<vmem>>, vector<1x256xf32>
    %74 = arith.truncf %71 : vector<10x256xf32> to vector<10x256xbf16>
    %cst_39 = arith.constant dense<0.000000e+00> : vector<10x256xf32>
    %75 = tpu.matmul %74, %72, %cst_39 {dimension_numbers = #tpu.dot_dimension_numbers<[1], [0], [0], [1], [0, 0, 1, 1], [], []>} : vector<10x256xbf16>, vector<256x256xbf16>, vector<10x256xf32> -> vector<10x256xf32>
    %76 = vector.broadcast %73 : vector<1x256xf32> to vector<10x256xf32>
    %77 = arith.addf %75, %76 : vector<10x256xf32>
    %c0_40 = arith.constant 0 : index
    %c0_41 = arith.constant 0 : index
    %78 = vector.load %arg13[%c0_40, %c0_41] : memref<128x256xbf16, #tpu.memory_space<vmem>>, vector<128x256xbf16>
    %c0_42 = arith.constant 0 : index
    %c0_43 = arith.constant 0 : index
    %79 = vector.load %arg14[%c0_42, %c0_43] : memref<1x256xf32, #tpu.memory_space<vmem>>, vector<1x256xf32>
    %80 = arith.truncf %7 : vector<10x128xf32> to vector<10x128xbf16>
    %cst_44 = arith.constant dense<0.000000e+00> : vector<10x256xf32>
    %81 = tpu.matmul %80, %78, %cst_44 {dimension_numbers = #tpu.dot_dimension_numbers<[1], [0], [0], [1], [0, 0, 1, 1], [], []>} : vector<10x128xbf16>, vector<128x256xbf16>, vector<10x256xf32> -> vector<10x256xf32>
    %82 = vector.broadcast %79 : vector<1x256xf32> to vector<10x256xf32>
    %83 = arith.addf %81, %82 : vector<10x256xf32>
    %84 = arith.addf %77, %83 : vector<10x256xf32>
    %c0_45 = arith.constant 0 : index
    %c0_46 = arith.constant 0 : index
    %85 = vector.load %arg15[%c0_45, %c0_46] : memref<1x256xf32, #tpu.memory_space<vmem>>, vector<1x256xf32>
    %c0_47 = arith.constant 0 : index
    %c0_48 = arith.constant 0 : index
    %86 = vector.load %arg16[%c0_47, %c0_48] : memref<1x256xf32, #tpu.memory_space<vmem>>, vector<1x256xf32>
    %cst_49 = arith.constant dense<0.000000e+00> : vector<10xf32>
    %87 = vector.multi_reduction <add>, %84, %cst_49 [1] : vector<10x256xf32> to vector<10xf32>
    %88 = vector.shape_cast %87 : vector<10xf32> to vector<10x1xf32>
    %cst_50 = arith.constant 2.560000e+02 : f32
    %89 = vector.broadcast %cst_50 : f32 to vector<10x1xf32>
    %90 = arith.divf %88, %89 : vector<10x1xf32>
    %91 = vector.broadcast %90 : vector<10x1xf32> to vector<10x256xf32>
    %92 = arith.subf %84, %91 : vector<10x256xf32>
    %93 = arith.mulf %92, %92 : vector<10x256xf32>
    %cst_51 = arith.constant dense<0.000000e+00> : vector<10xf32>
    %94 = vector.multi_reduction <add>, %93, %cst_51 [1] : vector<10x256xf32> to vector<10xf32>
    %95 = vector.shape_cast %94 : vector<10xf32> to vector<10x1xf32>
    %cst_52 = arith.constant 2.560000e+02 : f32
    %96 = vector.broadcast %cst_52 : f32 to vector<10x1xf32>
    %97 = arith.divf %95, %96 : vector<10x1xf32>
    %98 = vector.broadcast %90 : vector<10x1xf32> to vector<10x256xf32>
    %99 = arith.subf %84, %98 : vector<10x256xf32>
    %cst_53 = arith.constant 9.99999974E-6 : f32
    %100 = vector.broadcast %cst_53 : f32 to vector<10x1xf32>
    %101 = arith.addf %97, %100 : vector<10x1xf32>
    %102 = math.rsqrt %101 : vector<10x1xf32>
    %103 = vector.broadcast %102 : vector<10x1xf32> to vector<10x256xf32>
    %104 = arith.mulf %99, %103 : vector<10x256xf32>
    %105 = vector.broadcast %85 : vector<1x256xf32> to vector<10x256xf32>
    %106 = arith.mulf %104, %105 : vector<10x256xf32>
    %107 = vector.broadcast %86 : vector<1x256xf32> to vector<10x256xf32>
    %108 = arith.addf %106, %107 : vector<10x256xf32>
    %cst_54 = arith.constant 0.000000e+00 : f32
    %109 = vector.broadcast %cst_54 : f32 to vector<10x256xf32>
    %110 = arith.cmpf oge, %108, %109 : vector<10x256xf32>
    %cst_55 = arith.constant 1.000000e-01 : f32
    %111 = vector.broadcast %cst_55 : f32 to vector<10x256xf32>
    %112 = arith.mulf %111, %108 : vector<10x256xf32>
    %113 = arith.select %110, %108, %112 : vector<10x256xi1>, vector<10x256xf32>
    %c0_56 = arith.constant 0 : index
    %c0_57 = arith.constant 0 : index
    %114 = vector.load %arg17[%c0_56, %c0_57] : memref<256x256xbf16, #tpu.memory_space<vmem>>, vector<256x256xbf16>
    %c0_58 = arith.constant 0 : index
    %c0_59 = arith.constant 0 : index
    %115 = vector.load %arg18[%c0_58, %c0_59] : memref<1x256xf32, #tpu.memory_space<vmem>>, vector<1x256xf32>
    %116 = arith.truncf %113 : vector<10x256xf32> to vector<10x256xbf16>
    %cst_60 = arith.constant dense<0.000000e+00> : vector<10x256xf32>
    %117 = tpu.matmul %116, %114, %cst_60 {dimension_numbers = #tpu.dot_dimension_numbers<[1], [0], [0], [1], [0, 0, 1, 1], [], []>} : vector<10x256xbf16>, vector<256x256xbf16>, vector<10x256xf32> -> vector<10x256xf32>
    %118 = vector.broadcast %115 : vector<1x256xf32> to vector<10x256xf32>
    %119 = arith.addf %117, %118 : vector<10x256xf32>
    %c0_61 = arith.constant 0 : index
    %c0_62 = arith.constant 0 : index
    %120 = vector.load %arg19[%c0_61, %c0_62] : memref<1x256xf32, #tpu.memory_space<vmem>>, vector<1x256xf32>
    %c0_63 = arith.constant 0 : index
    %c0_64 = arith.constant 0 : index
    %121 = vector.load %arg20[%c0_63, %c0_64] : memref<1x256xf32, #tpu.memory_space<vmem>>, vector<1x256xf32>
    %cst_65 = arith.constant dense<0.000000e+00> : vector<10xf32>
    %122 = vector.multi_reduction <add>, %119, %cst_65 [1] : vector<10x256xf32> to vector<10xf32>
    %123 = vector.shape_cast %122 : vector<10xf32> to vector<10x1xf32>
    %cst_66 = arith.constant 2.560000e+02 : f32
    %124 = vector.broadcast %cst_66 : f32 to vector<10x1xf32>
    %125 = arith.divf %123, %124 : vector<10x1xf32>
    %126 = vector.broadcast %125 : vector<10x1xf32> to vector<10x256xf32>
    %127 = arith.subf %119, %126 : vector<10x256xf32>
    %128 = arith.mulf %127, %127 : vector<10x256xf32>
    %cst_67 = arith.constant dense<0.000000e+00> : vector<10xf32>
    %129 = vector.multi_reduction <add>, %128, %cst_67 [1] : vector<10x256xf32> to vector<10xf32>
    %130 = vector.shape_cast %129 : vector<10xf32> to vector<10x1xf32>
    %cst_68 = arith.constant 2.560000e+02 : f32
    %131 = vector.broadcast %cst_68 : f32 to vector<10x1xf32>
    %132 = arith.divf %130, %131 : vector<10x1xf32>
    %133 = vector.broadcast %125 : vector<10x1xf32> to vector<10x256xf32>
    %134 = arith.subf %119, %133 : vector<10x256xf32>
    %cst_69 = arith.constant 9.99999974E-6 : f32
    %135 = vector.broadcast %cst_69 : f32 to vector<10x1xf32>
    %136 = arith.addf %132, %135 : vector<10x1xf32>
    %137 = math.rsqrt %136 : vector<10x1xf32>
    %138 = vector.broadcast %137 : vector<10x1xf32> to vector<10x256xf32>
    %139 = arith.mulf %134, %138 : vector<10x256xf32>
    %140 = vector.broadcast %120 : vector<1x256xf32> to vector<10x256xf32>
    %141 = arith.mulf %139, %140 : vector<10x256xf32>
    %142 = vector.broadcast %121 : vector<1x256xf32> to vector<10x256xf32>
    %143 = arith.addf %141, %142 : vector<10x256xf32>
    %cst_70 = arith.constant 0.000000e+00 : f32
    %144 = vector.broadcast %cst_70 : f32 to vector<10x256xf32>
    %145 = arith.cmpf oge, %143, %144 : vector<10x256xf32>
    %cst_71 = arith.constant 1.000000e-01 : f32
    %146 = vector.broadcast %cst_71 : f32 to vector<10x256xf32>
    %147 = arith.mulf %146, %143 : vector<10x256xf32>
    %148 = arith.select %145, %143, %147 : vector<10x256xi1>, vector<10x256xf32>
    %c0_72 = arith.constant 0 : index
    %c0_73 = arith.constant 0 : index
    %149 = vector.load %arg21[%c0_72, %c0_73] : memref<256x256xbf16, #tpu.memory_space<vmem>>, vector<256x256xbf16>
    %c0_74 = arith.constant 0 : index
    %c0_75 = arith.constant 0 : index
    %150 = vector.load %arg22[%c0_74, %c0_75] : memref<1x256xf32, #tpu.memory_space<vmem>>, vector<1x256xf32>
    %151 = arith.truncf %148 : vector<10x256xf32> to vector<10x256xbf16>
    %cst_76 = arith.constant dense<0.000000e+00> : vector<10x256xf32>
    %152 = tpu.matmul %151, %149, %cst_76 {dimension_numbers = #tpu.dot_dimension_numbers<[1], [0], [0], [1], [0, 0, 1, 1], [], []>} : vector<10x256xbf16>, vector<256x256xbf16>, vector<10x256xf32> -> vector<10x256xf32>
    %153 = vector.broadcast %150 : vector<1x256xf32> to vector<10x256xf32>
    %154 = arith.addf %152, %153 : vector<10x256xf32>
    %155 = arith.addf %154, %84 : vector<10x256xf32>
    %c0_77 = arith.constant 0 : index
    %c0_78 = arith.constant 0 : index
    %c0_79 = arith.constant 0 : index
    %156 = vector.load %arg23[%c0_77, %c0_78, %c0_79] : memref<1x10x256xf32, #tpu.memory_space<vmem>>, vector<1x10x256xf32>
    %157 = vector.shape_cast %156 : vector<1x10x256xf32> to vector<10x256xf32>
    %158 = vector.shape_cast %155 : vector<10x256xf32> to vector<1x10x256xf32>
    tpu.vector_store %arg23[%c0_77, %c0_78, %c0_79], %158 {strides = array<i32>} : memref<1x10x256xf32, #tpu.memory_space<vmem>>, vector<1x10x256xf32>,
    return
  }
  func.func @transform_0(%arg0: i32) -> (i32, i32, i32) {
    %c0_i32 = arith.constant 0 : i32
    %c0_i32_0 = arith.constant 0 : i32
    %c0_i32_1 = arith.constant 0 : i32
    return %arg0, %c0_i32, %c0_i32_0 : i32, i32, i32
  }
  func.func @transform_1(%arg0: i32) -> (i32, i32) {
    %c0_i32 = arith.constant 0 : i32
    %c0_i32_0 = arith.constant 0 : i32
    %c0_i32_1 = arith.constant 0 : i32
    return %c0_i32, %c0_i32_0 : i32, i32
  }
  func.func @transform_2(%arg0: i32) -> (i32, i32) {
    %c0_i32 = arith.constant 0 : i32
    %c0_i32_0 = arith.constant 0 : i32
    %c0_i32_1 = arith.constant 0 : i32
    return %c0_i32, %c0_i32_0 : i32, i32
  }
  func.func @transform_3(%arg0: i32) -> (i32, i32) {
    %c0_i32 = arith.constant 0 : i32
    %c0_i32_0 = arith.constant 0 : i32
    %c0_i32_1 = arith.constant 0 : i32
    return %c0_i32, %c0_i32_0 : i32, i32
  }
  func.func @transform_4(%arg0: i32) -> (i32, i32) {
    %c0_i32 = arith.constant 0 : i32
    %c0_i32_0 = arith.constant 0 : i32
    %c0_i32_1 = arith.constant 0 : i32
    return %c0_i32, %c0_i32_0 : i32, i32
  }
  func.func @transform_5(%arg0: i32) -> (i32, i32) {
    %c0_i32 = arith.constant 0 : i32
    %c0_i32_0 = arith.constant 0 : i32
    %c0_i32_1 = arith.constant 0 : i32
    return %c0_i32, %c0_i32_0 : i32, i32
  }
  func.func @transform_6(%arg0: i32) -> (i32, i32) {
    %c0_i32 = arith.constant 0 : i32
    %c0_i32_0 = arith.constant 0 : i32
    %c0_i32_1 = arith.constant 0 : i32
    return %c0_i32, %c0_i32_0 : i32, i32
  }
  func.func @transform_7(%arg0: i32) -> (i32, i32) {
    %c0_i32 = arith.constant 0 : i32
    %c0_i32_0 = arith.constant 0 : i32
    %c0_i32_1 = arith.constant 0 : i32
    return %c0_i32, %c0_i32_0 : i32, i32
  }
  func.func @transform_8(%arg0: i32) -> (i32, i32) {
    %c0_i32 = arith.constant 0 : i32
    %c0_i32_0 = arith.constant 0 : i32
    %c0_i32_1 = arith.constant 0 : i32
    return %c0_i32, %c0_i32_0 : i32, i32
  }
  func.func @transform_9(%arg0: i32) -> (i32, i32) {
    %c0_i32 = arith.constant 0 : i32
    %c0_i32_0 = arith.constant 0 : i32
    %c0_i32_1 = arith.constant 0 : i32
    return %c0_i32, %c0_i32_0 : i32, i32
  }
  func.func @transform_10(%arg0: i32) -> (i32, i32) {
    %c0_i32 = arith.constant 0 : i32
    %c0_i32_0 = arith.constant 0 : i32
    %c0_i32_1 = arith.constant 0 : i32
    return %c0_i32, %c0_i32_0 : i32, i32
  }
  func.func @transform_11(%arg0: i32) -> (i32, i32) {
    %c0_i32 = arith.constant 0 : i32
    %c0_i32_0 = arith.constant 0 : i32
    %c0_i32_1 = arith.constant 0 : i32
    return %c0_i32, %c0_i32_0 : i32, i32
  }
  func.func @transform_12(%arg0: i32) -> (i32, i32) {
    %c0_i32 = arith.constant 0 : i32
    %c0_i32_0 = arith.constant 0 : i32
    %c0_i32_1 = arith.constant 0 : i32
    return %c0_i32, %c0_i32_0 : i32, i32
  }
  func.func @transform_13(%arg0: i32) -> (i32, i32) {
    %c0_i32 = arith.constant 0 : i32
    %c0_i32_0 = arith.constant 0 : i32
    %c0_i32_1 = arith.constant 0 : i32
    return %c0_i32, %c0_i32_0 : i32, i32
  }
  func.func @transform_14(%arg0: i32) -> (i32, i32) {
    %c0_i32 = arith.constant 0 : i32
    %c0_i32_0 = arith.constant 0 : i32
    %c0_i32_1 = arith.constant 0 : i32
    return %c0_i32, %c0_i32_0 : i32, i32
  }
  func.func @transform_15(%arg0: i32) -> (i32, i32) {
    %c0_i32 = arith.constant 0 : i32
    %c0_i32_0 = arith.constant 0 : i32
    %c0_i32_1 = arith.constant 0 : i32
    return %c0_i32, %c0_i32_0 : i32, i32
  }
  func.func @transform_16(%arg0: i32) -> (i32, i32) {
    %c0_i32 = arith.constant 0 : i32
    %c0_i32_0 = arith.constant 0 : i32
    %c0_i32_1 = arith.constant 0 : i32
    return %c0_i32, %c0_i32_0 : i32, i32
  }
  func.func @transform_17(%arg0: i32) -> (i32, i32) {
    %c0_i32 = arith.constant 0 : i32
    %c0_i32_0 = arith.constant 0 : i32
    %c0_i32_1 = arith.constant 0 : i32
    return %c0_i32, %c0_i32_0 : i32, i32
  }
  func.func @transform_18(%arg0: i32) -> (i32, i32) {
    %c0_i32 = arith.constant 0 : i32
    %c0_i32_0 = arith.constant 0 : i32
    %c0_i32_1 = arith.constant 0 : i32
    return %c0_i32, %c0_i32_0 : i32, i32
  }
  func.func @transform_19(%arg0: i32) -> (i32, i32) {
    %c0_i32 = arith.constant 0 : i32
    %c0_i32_0 = arith.constant 0 : i32
    %c0_i32_1 = arith.constant 0 : i32
    return %c0_i32, %c0_i32_0 : i32, i32
  }
  func.func @transform_20(%arg0: i32) -> (i32, i32) {
    %c0_i32 = arith.constant 0 : i32
    %c0_i32_0 = arith.constant 0 : i32
    %c0_i32_1 = arith.constant 0 : i32
    return %c0_i32, %c0_i32_0 : i32, i32
  }
  func.func @transform_21(%arg0: i32) -> (i32, i32) {
    %c0_i32 = arith.constant 0 : i32
    %c0_i32_0 = arith.constant 0 : i32
    %c0_i32_1 = arith.constant 0 : i32
    return %c0_i32, %c0_i32_0 : i32, i32
  }
  func.func @transform_22(%arg0: i32) -> (i32, i32, i32) {
    %c0_i32 = arith.constant 0 : i32
    %c0_i32_0 = arith.constant 0 : i32
    %c0_i32_1 = arith.constant 0 : i32
    return %arg0, %c0_i32, %c0_i32_0 : i32, i32, i32
  }
}

module attributes {stable_mosaic.version = 11 : i64} {
  func.func @_out_head_kernel(%arg0: memref<2x1x256xf32, #tpu.memory_space<vmem>>, %arg1: memref<256x512xbf16, #tpu.memory_space<vmem>>, %arg2: memref<1x512xf32, #tpu.memory_space<vmem>>, %arg3: memref<512x512xbf16, #tpu.memory_space<vmem>>, %arg4: memref<1x512xf32, #tpu.memory_space<vmem>>, %arg5: memref<256x512xbf16, #tpu.memory_space<vmem>>, %arg6: memref<1x512xf32, #tpu.memory_space<vmem>>, %arg7: memref<512x512xbf16, #tpu.memory_space<vmem>>, %arg8: memref<1x512xf32, #tpu.memory_space<vmem>>, %arg9: memref<512x512xbf16, #tpu.memory_space<vmem>>, %arg10: memref<1x512xf32, #tpu.memory_space<vmem>>, %arg11: memref<512x3xbf16, #tpu.memory_space<vmem>>, %arg12: memref<1x3xf32, #tpu.memory_space<vmem>>, %arg13: memref<2x3xf32, #tpu.memory_space<vmem>>) attributes {dimension_semantics = [], scalar_prefetch = 0 : i64, scratch_operands = 0 : i64, tpu.core_type = #tpu.core_type<tc>} {
    %c0 = arith.constant 0 : index
    %c0_0 = arith.constant 0 : index
    %c0_1 = arith.constant 0 : index
    %0 = vector.load %arg0[%c0, %c0_0, %c0_1] : memref<2x1x256xf32, #tpu.memory_space<vmem>>, vector<2x1x256xf32>
    %1 = vector.shape_cast %0 : vector<2x1x256xf32> to vector<2x256xf32>
    %cst = arith.constant 0.000000e+00 : f32
    %2 = vector.broadcast %cst : f32 to vector<2x256xf32>
    %3 = arith.cmpf oge, %1, %2 : vector<2x256xf32>
    %cst_2 = arith.constant 1.000000e-01 : f32
    %4 = vector.broadcast %cst_2 : f32 to vector<2x256xf32>
    %5 = arith.mulf %4, %1 : vector<2x256xf32>
    %6 = arith.select %3, %1, %5 : vector<2x256xi1>, vector<2x256xf32>
    %c0_3 = arith.constant 0 : index
    %c0_4 = arith.constant 0 : index
    %7 = vector.load %arg1[%c0_3, %c0_4] : memref<256x512xbf16, #tpu.memory_space<vmem>>, vector<256x512xbf16>
    %c0_5 = arith.constant 0 : index
    %c0_6 = arith.constant 0 : index
    %8 = vector.load %arg2[%c0_5, %c0_6] : memref<1x512xf32, #tpu.memory_space<vmem>>, vector<1x512xf32>
    %9 = arith.truncf %6 : vector<2x256xf32> to vector<2x256xbf16>
    %cst_7 = arith.constant dense<0.000000e+00> : vector<2x512xf32>
    %10 = tpu.matmul %9, %7, %cst_7 {dimension_numbers = #tpu.dot_dimension_numbers<[1], [0], [0], [1], [0, 0, 1, 1], [], []>} : vector<2x256xbf16>, vector<256x512xbf16>, vector<2x512xf32> -> vector<2x512xf32>
    %11 = vector.broadcast %8 : vector<1x512xf32> to vector<2x512xf32>
    %12 = arith.addf %10, %11 : vector<2x512xf32>
    %cst_8 = arith.constant 0.000000e+00 : f32
    %13 = vector.broadcast %cst_8 : f32 to vector<2x512xf32>
    %14 = arith.cmpf oge, %12, %13 : vector<2x512xf32>
    %cst_9 = arith.constant 1.000000e-01 : f32
    %15 = vector.broadcast %cst_9 : f32 to vector<2x512xf32>
    %16 = arith.mulf %15, %12 : vector<2x512xf32>
    %17 = arith.select %14, %12, %16 : vector<2x512xi1>, vector<2x512xf32>
    %c0_10 = arith.constant 0 : index
    %c0_11 = arith.constant 0 : index
    %18 = vector.load %arg3[%c0_10, %c0_11] : memref<512x512xbf16, #tpu.memory_space<vmem>>, vector<512x512xbf16>
    %c0_12 = arith.constant 0 : index
    %c0_13 = arith.constant 0 : index
    %19 = vector.load %arg4[%c0_12, %c0_13] : memref<1x512xf32, #tpu.memory_space<vmem>>, vector<1x512xf32>
    %20 = arith.truncf %17 : vector<2x512xf32> to vector<2x512xbf16>
    %cst_14 = arith.constant dense<0.000000e+00> : vector<2x512xf32>
    %21 = tpu.matmul %20, %18, %cst_14 {dimension_numbers = #tpu.dot_dimension_numbers<[1], [0], [0], [1], [0, 0, 1, 1], [], []>} : vector<2x512xbf16>, vector<512x512xbf16>, vector<2x512xf32> -> vector<2x512xf32>
    %22 = vector.broadcast %19 : vector<1x512xf32> to vector<2x512xf32>
    %23 = arith.addf %21, %22 : vector<2x512xf32>
    %c0_15 = arith.constant 0 : index
    %c0_16 = arith.constant 0 : index
    %24 = vector.load %arg5[%c0_15, %c0_16] : memref<256x512xbf16, #tpu.memory_space<vmem>>, vector<256x512xbf16>
    %c0_17 = arith.constant 0 : index
    %c0_18 = arith.constant 0 : index
    %25 = vector.load %arg6[%c0_17, %c0_18] : memref<1x512xf32, #tpu.memory_space<vmem>>, vector<1x512xf32>
    %26 = arith.truncf %1 : vector<2x256xf32> to vector<2x256xbf16>
    %cst_19 = arith.constant dense<0.000000e+00> : vector<2x512xf32>
    %27 = tpu.matmul %26, %24, %cst_19 {dimension_numbers = #tpu.dot_dimension_numbers<[1], [0], [0], [1], [0, 0, 1, 1], [], []>} : vector<2x256xbf16>, vector<256x512xbf16>, vector<2x512xf32> -> vector<2x512xf32>
    %28 = vector.broadcast %25 : vector<1x512xf32> to vector<2x512xf32>
    %29 = arith.addf %27, %28 : vector<2x512xf32>
    %30 = arith.addf %23, %29 : vector<2x512xf32>
    %cst_20 = arith.constant 0.000000e+00 : f32
    %31 = vector.broadcast %cst_20 : f32 to vector<2x512xf32>
    %32 = arith.cmpf oge, %30, %31 : vector<2x512xf32>
    %cst_21 = arith.constant 1.000000e-01 : f32
    %33 = vector.broadcast %cst_21 : f32 to vector<2x512xf32>
    %34 = arith.mulf %33, %30 : vector<2x512xf32>
    %35 = arith.select %32, %30, %34 : vector<2x512xi1>, vector<2x512xf32>
    %c0_22 = arith.constant 0 : index
    %c0_23 = arith.constant 0 : index
    %36 = vector.load %arg7[%c0_22, %c0_23] : memref<512x512xbf16, #tpu.memory_space<vmem>>, vector<512x512xbf16>
    %c0_24 = arith.constant 0 : index
    %c0_25 = arith.constant 0 : index
    %37 = vector.load %arg8[%c0_24, %c0_25] : memref<1x512xf32, #tpu.memory_space<vmem>>, vector<1x512xf32>
    %38 = arith.truncf %35 : vector<2x512xf32> to vector<2x512xbf16>
    %cst_26 = arith.constant dense<0.000000e+00> : vector<2x512xf32>
    %39 = tpu.matmul %38, %36, %cst_26 {dimension_numbers = #tpu.dot_dimension_numbers<[1], [0], [0], [1], [0, 0, 1, 1], [], []>} : vector<2x512xbf16>, vector<512x512xbf16>, vector<2x512xf32> -> vector<2x512xf32>
    %40 = vector.broadcast %37 : vector<1x512xf32> to vector<2x512xf32>
    %41 = arith.addf %39, %40 : vector<2x512xf32>
    %cst_27 = arith.constant 0.000000e+00 : f32
    %42 = vector.broadcast %cst_27 : f32 to vector<2x512xf32>
    %43 = arith.cmpf oge, %41, %42 : vector<2x512xf32>
    %cst_28 = arith.constant 1.000000e-01 : f32
    %44 = vector.broadcast %cst_28 : f32 to vector<2x512xf32>
    %45 = arith.mulf %44, %41 : vector<2x512xf32>
    %46 = arith.select %43, %41, %45 : vector<2x512xi1>, vector<2x512xf32>
    %c0_29 = arith.constant 0 : index
    %c0_30 = arith.constant 0 : index
    %47 = vector.load %arg9[%c0_29, %c0_30] : memref<512x512xbf16, #tpu.memory_space<vmem>>, vector<512x512xbf16>
    %c0_31 = arith.constant 0 : index
    %c0_32 = arith.constant 0 : index
    %48 = vector.load %arg10[%c0_31, %c0_32] : memref<1x512xf32, #tpu.memory_space<vmem>>, vector<1x512xf32>
    %49 = arith.truncf %46 : vector<2x512xf32> to vector<2x512xbf16>
    %cst_33 = arith.constant dense<0.000000e+00> : vector<2x512xf32>
    %50 = tpu.matmul %49, %47, %cst_33 {dimension_numbers = #tpu.dot_dimension_numbers<[1], [0], [0], [1], [0, 0, 1, 1], [], []>} : vector<2x512xbf16>, vector<512x512xbf16>, vector<2x512xf32> -> vector<2x512xf32>
    %51 = vector.broadcast %48 : vector<1x512xf32> to vector<2x512xf32>
    %52 = arith.addf %50, %51 : vector<2x512xf32>
    %53 = arith.addf %52, %30 : vector<2x512xf32>
    %c0_34 = arith.constant 0 : index
    %c0_35 = arith.constant 0 : index
    %54 = vector.load %arg11[%c0_34, %c0_35] : memref<512x3xbf16, #tpu.memory_space<vmem>>, vector<512x3xbf16>
    %c0_36 = arith.constant 0 : index
    %c0_37 = arith.constant 0 : index
    %55 = vector.load %arg12[%c0_36, %c0_37] : memref<1x3xf32, #tpu.memory_space<vmem>>, vector<1x3xf32>
    %56 = arith.truncf %53 : vector<2x512xf32> to vector<2x512xbf16>
    %cst_38 = arith.constant dense<0.000000e+00> : vector<2x3xf32>
    %57 = tpu.matmul %56, %54, %cst_38 {dimension_numbers = #tpu.dot_dimension_numbers<[1], [0], [0], [1], [0, 0, 1, 1], [], []>} : vector<2x512xbf16>, vector<512x3xbf16>, vector<2x3xf32> -> vector<2x3xf32>
    %58 = vector.broadcast %55 : vector<1x3xf32> to vector<2x3xf32>
    %59 = arith.addf %57, %58 : vector<2x3xf32>
    %c0_39 = arith.constant 0 : index
    %c0_40 = arith.constant 0 : index
    %60 = vector.load %arg13[%c0_39, %c0_40] : memref<2x3xf32, #tpu.memory_space<vmem>>, vector<2x3xf32>
    tpu.vector_store %arg13[%c0_39, %c0_40], %59 {strides = array<i32>} : memref<2x3xf32, #tpu.memory_space<vmem>>, vector<2x3xf32>,
    return
  }
}

</mosaic_0001>

<llo_original>
// kernel: deepmsn_forward.3
$region0: #{deepmsn_forward.3}
  #allocation0 [shape = 'u32[]', space=smem, size = 0x4, offset = 0x4, fixed_abs, tag = 'smem constant byte address 0x4 - core index']
  #allocation1 [shape = 'u32[144,128]{1,0:T(1,128)}', space=vmem, size = 0x12000, scoped, tag = 'internal scratch']
  %s0 = inlined_call_operand.vmem [shape: f32[2,8,4], index: 0, kind: input, shape index: {}]
  %s1 = inlined_call_operand.hbm [shape: f32[4,128], index: 1, kind: input, shape index: {}]
  %s2 = inlined_call_operand.hbm [shape: f32[8,128], index: 2, kind: input, shape index: {}]
  %s3 = inlined_call_operand.hbm [shape: f32[2,128], index: 3, kind: input, shape index: {}]
  %s4 = inlined_call_operand.hbm [shape: f32[1,128], index: 4, kind: input, shape index: {}]
  %s5 = inlined_call_operand.hbm [shape: f32[1,128], index: 5, kind: input, shape index: {}]
  %s6 = inlined_call_operand.hbm [shape: bf16[128,256], index: 6, kind: input, shape index: {}]
  %s7 = inlined_call_operand.hbm [shape: f32[1,256], index: 7, kind: input, shape index: {}]
  %s8 = inlined_call_operand.hbm [shape: f32[1,256], index: 8, kind: input, shape index: {}]
  %s9 = inlined_call_operand.hbm [shape: f32[1,256], index: 9, kind: input, shape index: {}]
  %s10 = inlined_call_operand.hbm [shape: bf16[256,256], index: 10, kind: input, shape index: {}]
  %s11 = inlined_call_operand.hbm [shape: f32[1,256], index: 11, kind: input, shape index: {}]
  %s12 = inlined_call_operand.hbm [shape: bf16[128,256], index: 12, kind: input, shape index: {}]
  %s13 = inlined_call_operand.hbm [shape: f32[1,256], index: 13, kind: input, shape index: {}]
  %s14 = inlined_call_operand.hbm [shape: f32[1,256], index: 14, kind: input, shape index: {}]
  %s15 = inlined_call_operand.hbm [shape: f32[1,256], index: 15, kind: input, shape index: {}]
  %s16 = inlined_call_operand.hbm [shape: bf16[256,256], index: 16, kind: input, shape index: {}]
  %s17 = inlined_call_operand.hbm [shape: f32[1,256], index: 17, kind: input, shape index: {}]
  %s18 = inlined_call_operand.hbm [shape: f32[1,256], index: 18, kind: input, shape index: {}]
  %s19 = inlined_call_operand.hbm [shape: f32[1,256], index: 19, kind: input, shape index: {}]
  %s20 = inlined_call_operand.hbm [shape: bf16[256,256], index: 20, kind: input, shape index: {}]
  %s21 = inlined_call_operand.hbm [shape: f32[1,256], index: 21, kind: input, shape index: {}]
  %s22 = inlined_call_operand.vmem [shape: f32[2,10,256], index: 22, kind: output, shape index: {}]
  %s23 = sld [smem:[#allocation0]]
  $region205: #{deepmsn_forward.3} parent=0
    _
  %s25 = ssub.s32 1, %s23
  %s26 = scalar_select 0, %s25, %s23
  $region1: #{deepmsn_forward.3} parent=0
    #allocation2 [shape = 'u8[2048]{0}', space=vmem, size = 0x800, scoped, tag = 'input window, operand 1, single buffered']
    #allocation3 [shape = 's32[2]{0}', space=sflag, size = 0x8, scoped, tag = 'scoped memory for deepmsn_forward.3']
    #allocation4 [shape = 'u8[4096]{0}', space=vmem, size = 0x1000, scoped, tag = 'input window, operand 2, single buffered']
    #allocation5 [shape = 's32[1]{0}', space=sflag, size = 0x4, scoped, tag = 'scoped memory for deepmsn_forward.3']
    #allocation6 [shape = 'u8[1024]{0}', space=vmem, size = 0x400, scoped, tag = 'input window, operand 3, single buffered']
    #allocation7 [shape = 'u8[512]{0}', space=vmem, size = 0x400, scoped, tag = 'input window, operand 4, single buffered']
    #allocation8 [shape = 's32[1]{0}', space=sflag, size = 0x4, scoped, tag = 'scoped memory for deepmsn_forward.3']
    #allocation9 [shape = 'u8[512]{0}', space=vmem, size = 0x400, scoped, tag = 'input window, operand 5, single buffered']
    #allocation10 [shape = 'u8[65536]{0}', space=vmem, size = 0x10000, scoped, tag = 'input window, operand 6, single buffered']
    #allocation11 [shape = 's32[1]{0}', space=sflag, size = 0x4, scoped, tag = 'scoped memory for deepmsn_forward.3']
    #allocation12 [shape = 'u8[1024]{0}', space=vmem, size = 0x400, scoped, tag = 'input window, operand 7, single buffered']
    #allocation13 [shape = 'u8[1024]{0}', space=vmem, size = 0x400, scoped, tag = 'input window, operand 8, single buffered']
    #allocation14 [shape = 's32[1]{0}', space=sflag, size = 0x4, scoped, tag = 'scoped memory for deepmsn_forward.3']
    #allocation15 [shape = 'u8[1024]{0}', space=vmem, size = 0x400, scoped, tag = 'input window, operand 9, single buffered']
    #allocation16 [shape = 'u8[131072]{0}', space=vmem, size = 0x20000, scoped, tag = 'input window, operand 10, single buffered']
    #allocation17 [shape = 's32[1]{0}', space=sflag, size = 0x4, scoped, tag = 'scoped memory for deepmsn_forward.3']
    #allocation18 [shape = 'u8[1024]{0}', space=vmem, size = 0x400, scoped, tag = 'input window, operand 11, single buffered']
    #allocation19 [shape = 'u8[65536]{0}', space=vmem, size = 0x10000, scoped, tag = 'input window, operand 12, single buffered']
    #allocation20 [shape = 's32[1]{0}', space=sflag, size = 0x4, scoped, tag = 'scoped memory for deepmsn_forward.3']
    #allocation21 [shape = 'u8[1024]{0}', space=vmem, size = 0x400, scoped, tag = 'input window, operand 13, single buffered']
    #allocation22 [shape = 'u8[1024]{0}', space=vmem, size = 0x400, scoped, tag = 'input window, operand 14, single buffered']
    #allocation23 [shape = 's32[1]{0}', space=sflag, size = 0x4, scoped, tag = 'scoped memory for deepmsn_forward.3']
    #allocation24 [shape = 'u8[1024]{0}', space=vmem, size = 0x400, scoped, tag = 'input window, operand 15, single buffered']
    #allocation25 [shape = 'u8[131072]{0}', space=vmem, size = 0x20000, scoped, tag = 'input window, operand 16, single buffered']
    #allocation26 [shape = 's32[1]{0}', space=sflag, size = 0x4, scoped, tag = 'scoped memory for deepmsn_forward.3']
    #allocation27 [shape = 'u8[1024]{0}', space=vmem, size = 0x400, scoped, tag = 'input window, operand 17, single buffered']
    #allocation28 [shape = 'u8[1024]{0}', space=vmem, size = 0x400, scoped, tag = 'input window, operand 18, single buffered']
    #allocation29 [shape = 's32[1]{0}', space=sflag, size = 0x4, scoped, tag = 'scoped memory for deepmsn_forward.3']
    #allocation30 [shape = 'u8[1024]{0}', space=vmem, size = 0x400, scoped, tag = 'input window, operand 19, single buffered']
    #allocation31 [shape = 'u8[131072]{0}', space=vmem, size = 0x20000, scoped, tag = 'input window, operand 20, single buffered']
    #allocation32 [shape = 's32[1]{0}', space=sflag, size = 0x4, scoped, tag = 'scoped memory for deepmsn_forward.3']
    #allocation33 [shape = 'u8[1024]{0}', space=vmem, size = 0x400, scoped, tag = 'input window, operand 21, single buffered']
    %27 = vsyncpa [#allocation3], 0
    %28 = vsyncpa [#allocation5], 0
    %29 = vsyncpa [#allocation8], 0
    %30 = vsyncpa [#allocation11], 0
    %31 = vsyncpa [#allocation14], 0
    %32 = vsyncpa [#allocation17], 0
    %33 = vsyncpa [#allocation20], 0
    %34 = vsyncpa [#allocation23], 0
    %35 = vsyncpa [#allocation26], 0
    %36 = vsyncpa [#allocation29], 0
    %37 = vsyncpa [#allocation32], 0
    loop: start=0, step=1, limit=4
    $region2: #{deepmsn_forward.3} parent=1 // loop_pre_header
      _
    $region3: #{deepmsn_forward.3} parent=1 // loop_header
      %s39 = sphi 0, %s43
      %p40 = scmp.ge.s32.totalorder %s39, 4
      %s49 = sphi 0, %s51
      %s52 = sphi 0, %s49
      %s53 = sphi 0, %s52
      %s69 = sphi 0, %s53
      %s73 = sphi 0, %s73
      %s75 = sphi 0, %s73
      %s76 = sphi 0, %s75
      %s90 = sphi 0, %s76
      %s94 = sphi 0, %s94
      %s96 = sphi 0, %s94
      %s97 = sphi 0, %s96
      %s111 = sphi 0, %s97
      %s115 = sphi 0, %s115
      %s117 = sphi 0, %s115
      %s118 = sphi 0, %s117
      %s132 = sphi 0, %s118
      %s136 = sphi 0, %s136
      %s138 = sphi 0, %s136
      %s139 = sphi 0, %s138
      %s153 = sphi 0, %s139
      %s157 = sphi 0, %s157
      %s159 = sphi 0, %s157
      %s160 = sphi 0, %s159
      %s174 = sphi 0, %s160
      %s178 = sphi 0, %s178
      %s180 = sphi 0, %s178
      %s181 = sphi 0, %s180
      %s195 = sphi 0, %s181
      %s199 = sphi 0, %s199
      %s201 = sphi 0, %s199
      %s202 = sphi 0, %s201
      %s216 = sphi 0, %s202
      %s220 = sphi 0, %s220
      %s222 = sphi 0, %s220
      %s223 = sphi 0, %s222
      %s237 = sphi 0, %s223
      %s241 = sphi 0, %s241
      %s243 = sphi 0, %s241
      %s244 = sphi 0, %s243
      %s258 = sphi 0, %s244
      %s262 = sphi 0, %s262
      %s264 = sphi 0, %s262
      %s265 = sphi 0, %s264
      %s279 = sphi 0, %s265
      %s283 = sphi 0, %s283
      %s285 = sphi 0, %s283
      %s286 = sphi 0, %s285
      %s300 = sphi 0, %s286
      %s304 = sphi 0, %s304
      %s306 = sphi 0, %s304
      %s307 = sphi 0, %s306
      %s321 = sphi 0, %s307
      %s325 = sphi 0, %s325
      %s327 = sphi 0, %s325
      %s328 = sphi 0, %s327
      %s342 = sphi 0, %s328
      %s346 = sphi 0, %s346
      %s348 = sphi 0, %s346
      %s349 = sphi 0, %s348
      %s363 = sphi 0, %s349
      %s367 = sphi 0, %s367
      %s369 = sphi 0, %s367
      %s370 = sphi 0, %s369
      %s384 = sphi 0, %s370
      %s388 = sphi 0, %s388
      %s390 = sphi 0, %s388
      %s391 = sphi 0, %s390
      %s405 = sphi 0, %s391
      %s409 = sphi 0, %s409
      %s411 = sphi 0, %s409
      %s412 = sphi 0, %s411
      %s426 = sphi 0, %s412
      %s430 = sphi 0, %s430
      %s432 = sphi 0, %s430
      %s433 = sphi 0, %s432
      %s447 = sphi 0, %s433
      %s451 = sphi 0, %s451
      %s453 = sphi 0, %s451
      %s454 = sphi 0, %s453
      %s468 = sphi 0, %s454
      %s472 = sphi 0, %s472
      %s474 = sphi 0, %s472
      %s475 = sphi 0, %s474
      %s489 = sphi 0, %s475
      %s493 = sphi 0, %s493
      %s495 = sphi 0, %s493
      %s496 = sphi 0, %s495
      %s510 = sphi 0, %s496
      %s516 = sphi 0, %s518
      %s519 = sphi 0, %s516
      %s520 = sphi 0, %s519
      %s536 = sphi 0, %s520
    $region4: #{deepmsn_forward.3} parent=1 // loop_header_branch
      %42 = sbr.rel (%p40) target = $region8
    $region5: #{deepmsn_forward.3} parent=1 // loop_body
      %s44 = ssub.s32 %s39, 1
      %s45 = ssub.s32 %s39, 2
      %s46 = sadd.s32 %s39, 1
      %s47 = ssub.s32 %s39, %s46
      %p48 = scmp.eq.s32.totalorder %s47, 0
      %s50 = sadd.s32 %s49, 1
      %s51 = scalar_select %p48, %s49, %s50
      %p54 = pneg %p48
      %p55 = scmp.eq.s32.totalorder %s39, 1
      %p56 = por %p54, %p55
      %p57 = scmp.ne.s32.totalorder %s49, %s52
      %p58 = scmp.eq.s32.totalorder %s39, 0
      %p59 = por %p57, %p58
      %p60 = scmp.ne.s32.totalorder %s49, %s52
      %p61 = scmp.eq.s32.totalorder %s44, 1
      %p62 = por %p60, %p61
      %p63 = scmp.ne.s32.totalorder %s52, %s53
      %p64 = scmp.eq.s32.totalorder %s44, 0
      %p65 = por %p63, %p64
      %p66 = scmp.ne.s32.totalorder %s52, %s53
      %p67 = scmp.eq.s32.totalorder %s45, 1
      %p68 = por %p66, %p67
      %p70 = scmp.ne.s32.totalorder %s53, %s69
      %p71 = scmp.eq.s32.totalorder %s45, 0
      %p72 = por %p70, %p71
      %s74 = sadd.s32 %s73, 1
      %p77 = scmp.eq.s32.totalorder %s39, 1
      %p78 = scmp.ne.s32.totalorder %s73, %s75
      %p79 = scmp.eq.s32.totalorder %s39, 0
      %p80 = por %p78, %p79
      %p81 = scmp.ne.s32.totalorder %s73, %s75
      %p82 = scmp.eq.s32.totalorder %s44, 1
      %p83 = por %p81, %p82
      %p84 = scmp.ne.s32.totalorder %s75, %s76
      %p85 = scmp.eq.s32.totalorder %s44, 0
      %p86 = por %p84, %p85
      %p87 = scmp.ne.s32.totalorder %s75, %s76
      %p88 = scmp.eq.s32.totalorder %s45, 1
      %p89 = por %p87, %p88
      %p91 = scmp.ne.s32.totalorder %s76, %s90
      %p92 = scmp.eq.s32.totalorder %s45, 0
      %p93 = por %p91, %p92
      %s95 = sadd.s32 %s94, 1
      %p98 = scmp.eq.s32.totalorder %s39, 1
      %p99 = scmp.ne.s32.totalorder %s94, %s96
      %p100 = scmp.eq.s32.totalorder %s39, 0
      %p101 = por %p99, %p100
      %p102 = scmp.ne.s32.totalorder %s94, %s96
      %p103 = scmp.eq.s32.totalorder %s44, 1
      %p104 = por %p102, %p103
      %p105 = scmp.ne.s32.totalorder %s96, %s97
      %p106 = scmp.eq.s32.totalorder %s44, 0
      %p107 = por %p105, %p106
      %p108 = scmp.ne.s32.totalorder %s96, %s97
      %p109 = scmp.eq.s32.totalorder %s45, 1
      %p110 = por %p108, %p109
      %p112 = scmp.ne.s32.totalorder %s97, %s111
      %p113 = scmp.eq.s32.totalorder %s45, 0
      %p114 = por %p112, %p113
      %s116 = sadd.s32 %s115, 1
      %p119 = scmp.eq.s32.totalorder %s39, 1
      %p120 = scmp.ne.s32.totalorder %s115, %s117
      %p121 = scmp.eq.s32.totalorder %s39, 0
      %p122 = por %p120, %p121
      %p123 = scmp.ne.s32.totalorder %s115, %s117
      %p124 = scmp.eq.s32.totalorder %s44, 1
      %p125 = por %p123, %p124
      %p126 = scmp.ne.s32.totalorder %s117, %s118
      %p127 = scmp.eq.s32.totalorder %s44, 0
      %p128 = por %p126, %p127
      %p129 = scmp.ne.s32.totalorder %s117, %s118
      %p130 = scmp.eq.s32.totalorder %s45, 1
      %p131 = por %p129, %p130
      %p133 = scmp.ne.s32.totalorder %s118, %s132
      %p134 = scmp.eq.s32.totalorder %s45, 0
      %p135 = por %p133, %p134
      %s137 = sadd.s32 %s136, 1
      %p140 = scmp.eq.s32.totalorder %s39, 1
      %p141 = scmp.ne.s32.totalorder %s136, %s138
      %p142 = scmp.eq.s32.totalorder %s39, 0
      %p143 = por %p141, %p142
      %p144 = scmp.ne.s32.totalorder %s136, %s138
      %p145 = scmp.eq.s32.totalorder %s44, 1
      %p146 = por %p144, %p145
      %p147 = scmp.ne.s32.totalorder %s138, %s139
      %p148 = scmp.eq.s32.totalorder %s44, 0
      %p149 = por %p147, %p148
      %p150 = scmp.ne.s32.totalorder %s138, %s139
      %p151 = scmp.eq.s32.totalorder %s45, 1
      %p152 = por %p150, %p151
      %p154 = scmp.ne.s32.totalorder %s139, %s153
      %p155 = scmp.eq.s32.totalorder %s45, 0
      %p156 = por %p154, %p155
      %s158 = sadd.s32 %s157, 1
      %p161 = scmp.eq.s32.totalorder %s39, 1
      %p162 = scmp.ne.s32.totalorder %s157, %s159
      %p163 = scmp.eq.s32.totalorder %s39, 0
      %p164 = por %p162, %p163
      %p165 = scmp.ne.s32.totalorder %s157, %s159
      %p166 = scmp.eq.s32.totalorder %s44, 1
      %p167 = por %p165, %p166
      %p168 = scmp.ne.s32.totalorder %s159, %s160
      %p169 = scmp.eq.s32.totalorder %s44, 0
      %p170 = por %p168, %p169
      %p171 = scmp.ne.s32.totalorder %s159, %s160
      %p172 = scmp.eq.s32.totalorder %s45, 1
      %p173 = por %p171, %p172
      %p175 = scmp.ne.s32.totalorder %s160, %s174
      %p176 = scmp.eq.s32.totalorder %s45, 0
      %p177 = por %p175, %p176
      %s179 = sadd.s32 %s178, 1
      %p182 = scmp.eq.s32.totalorder %s39, 1
      %p183 = scmp.ne.s32.totalorder %s178, %s180
      %p184 = scmp.eq.s32.totalorder %s39, 0
      %p185 = por %p183, %p184
      %p186 = scmp.ne.s32.totalorder %s178, %s180
      %p187 = scmp.eq.s32.totalorder %s44, 1
      %p188 = por %p186, %p187
      %p189 = scmp.ne.s32.totalorder %s180, %s181
      %p190 = scmp.eq.s32.totalorder %s44, 0
      %p191 = por %p189, %p190
      %p192 = scmp.ne.s32.totalorder %s180, %s181
      %p193 = scmp.eq.s32.totalorder %s45, 1
      %p194 = por %p192, %p193
      %p196 = scmp.ne.s32.totalorder %s181, %s195
      %p197 = scmp.eq.s32.totalorder %s45, 0
      %p198 = por %p196, %p197
      %s200 = sadd.s32 %s199, 1
      %p203 = scmp.eq.s32.totalorder %s39, 1
      %p204 = scmp.ne.s32.totalorder %s199, %s201
      %p205 = scmp.eq.s32.totalorder %s39, 0
      %p206 = por %p204, %p205
      %p207 = scmp.ne.s32.totalorder %s199, %s201
      %p208 = scmp.eq.s32.totalorder %s44, 1
      %p209 = por %p207, %p208
      %p210 = scmp.ne.s32.totalorder %s201, %s202
      %p211 = scmp.eq.s32.totalorder %s44, 0
      %p212 = por %p210, %p211
      %p213 = scmp.ne.s32.totalorder %s201, %s202
      %p214 = scmp.eq.s32.totalorder %s45, 1
      %p215 = por %p213, %p214
      %p217 = scmp.ne.s32.totalorder %s202, %s216
      %p218 = scmp.eq.s32.totalorder %s45, 0
      %p219 = por %p217, %p218
      %s221 = sadd.s32 %s220, 1
      %p224 = scmp.eq.s32.totalorder %s39, 1
      %p225 = scmp.ne.s32.totalorder %s220, %s222
      %p226 = scmp.eq.s32.totalorder %s39, 0
      %p227 = por %p225, %p226
      %p228 = scmp.ne.s32.totalorder %s220, %s222
      %p229 = scmp.eq.s32.totalorder %s44, 1
      %p230 = por %p228, %p229
      %p231 = scmp.ne.s32.totalorder %s222, %s223
      %p232 = scmp.eq.s32.totalorder %s44, 0
      %p233 = por %p231, %p232
      %p234 = scmp.ne.s32.totalorder %s222, %s223
      %p235 = scmp.eq.s32.totalorder %s45, 1
      %p236 = por %p234, %p235
      %p238 = scmp.ne.s32.totalorder %s223, %s237
      %p239 = scmp.eq.s32.totalorder %s45, 0
      %p240 = por %p238, %p239
      %s242 = sadd.s32 %s241, 1
      %p245 = scmp.eq.s32.totalorder %s39, 1
      %p246 = scmp.ne.s32.totalorder %s241, %s243
      %p247 = scmp.eq.s32.totalorder %s39, 0
      %p248 = por %p246, %p247
      %p249 = scmp.ne.s32.totalorder %s241, %s243
      %p250 = scmp.eq.s32.totalorder %s44, 1
      %p251 = por %p249, %p250
      %p252 = scmp.ne.s32.totalorder %s243, %s244
      %p253 = scmp.eq.s32.totalorder %s44, 0
      %p254 = por %p252, %p253
      %p255 = scmp.ne.s32.totalorder %s243, %s244
      %p256 = scmp.eq.s32.totalorder %s45, 1
      %p257 = por %p255, %p256
      %p259 = scmp.ne.s32.totalorder %s244, %s258
      %p260 = scmp.eq.s32.totalorder %s45, 0
      %p261 = por %p259, %p260
      %s263 = sadd.s32 %s262, 1
      %p266 = scmp.eq.s32.totalorder %s39, 1
      %p267 = scmp.ne.s32.totalorder %s262, %s264
      %p268 = scmp.eq.s32.totalorder %s39, 0
      %p269 = por %p267, %p268
      %p270 = scmp.ne.s32.totalorder %s262, %s264
      %p271 = scmp.eq.s32.totalorder %s44, 1
      %p272 = por %p270, %p271
      %p273 = scmp.ne.s32.totalorder %s264, %s265
      %p274 = scmp.eq.s32.totalorder %s44, 0
      %p275 = por %p273, %p274
      %p276 = scmp.ne.s32.totalorder %s264, %s265
      %p277 = scmp.eq.s32.totalorder %s45, 1
      %p278 = por %p276, %p277
      %p280 = scmp.ne.s32.totalorder %s265, %s279
      %p281 = scmp.eq.s32.totalorder %s45, 0
      %p282 = por %p280, %p281
      %s284 = sadd.s32 %s283, 1
      %p287 = scmp.eq.s32.totalorder %s39, 1
      %p288 = scmp.ne.s32.totalorder %s283, %s285
      %p289 = scmp.eq.s32.totalorder %s39, 0
      %p290 = por %p288, %p289
      %p291 = scmp.ne.s32.totalorder %s283, %s285
      %p292 = scmp.eq.s32.totalorder %s44, 1
      %p293 = por %p291, %p292
      %p294 = scmp.ne.s32.totalorder %s285, %s286
      %p295 = scmp.eq.s32.totalorder %s44, 0
      %p296 = por %p294, %p295
      %p297 = scmp.ne.s32.totalorder %s285, %s286
      %p298 = scmp.eq.s32.totalorder %s45, 1
      %p299 = por %p297, %p298
      %p301 = scmp.ne.s32.totalorder %s286, %s300
      %p302 = scmp.eq.s32.totalorder %s45, 0
      %p303 = por %p301, %p302
      %s305 = sadd.s32 %s304, 1
      %p308 = scmp.eq.s32.totalorder %s39, 1
      %p309 = scmp.ne.s32.totalorder %s304, %s306
      %p310 = scmp.eq.s32.totalorder %s39, 0
      %p311 = por %p309, %p310
      %p312 = scmp.ne.s32.totalorder %s304, %s306
      %p313 = scmp.eq.s32.totalorder %s44, 1
      %p314 = por %p312, %p313
      %p315 = scmp.ne.s32.totalorder %s306, %s307
      %p316 = scmp.eq.s32.totalorder %s44, 0
      %p317 = por %p315, %p316
      %p318 = scmp.ne.s32.totalorder %s306, %s307
      %p319 = scmp.eq.s32.totalorder %s45, 1
      %p320 = por %p318, %p319
      %p322 = scmp.ne.s32.totalorder %s307, %s321
      %p323 = scmp.eq.s32.totalorder %s45, 0
      %p324 = por %p322, %p323
      %s326 = sadd.s32 %s325, 1
      %p329 = scmp.eq.s32.totalorder %s39, 1
      %p330 = scmp.ne.s32.totalorder %s325, %s327
      %p331 = scmp.eq.s32.totalorder %s39, 0
      %p332 = por %p330, %p331
      %p333 = scmp.ne.s32.totalorder %s325, %s327
      %p334 = scmp.eq.s32.totalorder %s44, 1
      %p335 = por %p333, %p334
      %p336 = scmp.ne.s32.totalorder %s327, %s328
      %p337 = scmp.eq.s32.totalorder %s44, 0
      %p338 = por %p336, %p337
      %p339 = scmp.ne.s32.totalorder %s327, %s328
      %p340 = scmp.eq.s32.totalorder %s45, 1
      %p341 = por %p339, %p340
      %p343 = scmp.ne.s32.totalorder %s328, %s342
      %p344 = scmp.eq.s32.totalorder %s45, 0
      %p345 = por %p343, %p344
      %s347 = sadd.s32 %s346, 1
      %p350 = scmp.eq.s32.totalorder %s39, 1
      %p351 = scmp.ne.s32.totalorder %s346, %s348
      %p352 = scmp.eq.s32.totalorder %s39, 0
      %p353 = por %p351, %p352
      %p354 = scmp.ne.s32.totalorder %s346, %s348
      %p355 = scmp.eq.s32.totalorder %s44, 1
      %p356 = por %p354, %p355
      %p357 = scmp.ne.s32.totalorder %s348, %s349
      %p358 = scmp.eq.s32.totalorder %s44, 0
      %p359 = por %p357, %p358
      %p360 = scmp.ne.s32.totalorder %s348, %s349
      %p361 = scmp.eq.s32.totalorder %s45, 1
      %p362 = por %p360, %p361
      %p364 = scmp.ne.s32.totalorder %s349, %s363
      %p365 = scmp.eq.s32.totalorder %s45, 0
      %p366 = por %p364, %p365
      %s368 = sadd.s32 %s367, 1
      %p371 = scmp.eq.s32.totalorder %s39, 1
      %p372 = scmp.ne.s32.totalorder %s367, %s369
      %p373 = scmp.eq.s32.totalorder %s39, 0
      %p374 = por %p372, %p373
      %p375 = scmp.ne.s32.totalorder %s367, %s369
      %p376 = scmp.eq.s32.totalorder %s44, 1
      %p377 = por %p375, %p376
      %p378 = scmp.ne.s32.totalorder %s369, %s370
      %p379 = scmp.eq.s32.totalorder %s44, 0
      %p380 = por %p378, %p379
      %p381 = scmp.ne.s32.totalorder %s369, %s370
      %p382 = scmp.eq.s32.totalorder %s45, 1
      %p383 = por %p381, %p382
      %p385 = scmp.ne.s32.totalorder %s370, %s384
      %p386 = scmp.eq.s32.totalorder %s45, 0
      %p387 = por %p385, %p386
      %s389 = sadd.s32 %s388, 1
      %p392 = scmp.eq.s32.totalorder %s39, 1
      %p393 = scmp.ne.s32.totalorder %s388, %s390
      %p394 = scmp.eq.s32.totalorder %s39, 0
      %p395 = por %p393, %p394
      %p396 = scmp.ne.s32.totalorder %s388, %s390
      %p397 = scmp.eq.s32.totalorder %s44, 1
      %p398 = por %p396, %p397
      %p399 = scmp.ne.s32.totalorder %s390, %s391
      %p400 = scmp.eq.s32.totalorder %s44, 0
      %p401 = por %p399, %p400
      %p402 = scmp.ne.s32.totalorder %s390, %s391
      %p403 = scmp.eq.s32.totalorder %s45, 1
      %p404 = por %p402, %p403
      %p406 = scmp.ne.s32.totalorder %s391, %s405
      %p407 = scmp.eq.s32.totalorder %s45, 0
      %p408 = por %p406, %p407
      %s410 = sadd.s32 %s409, 1
      %p413 = scmp.eq.s32.totalorder %s39, 1
      %p414 = scmp.ne.s32.totalorder %s409, %s411
      %p415 = scmp.eq.s32.totalorder %s39, 0
      %p416 = por %p414, %p415
      %p417 = scmp.ne.s32.totalorder %s409, %s411
      %p418 = scmp.eq.s32.totalorder %s44, 1
      %p419 = por %p417, %p418
      %p420 = scmp.ne.s32.totalorder %s411, %s412
      %p421 = scmp.eq.s32.totalorder %s44, 0
      %p422 = por %p420, %p421
      %p423 = scmp.ne.s32.totalorder %s411, %s412
      %p424 = scmp.eq.s32.totalorder %s45, 1
      %p425 = por %p423, %p424
      %p427 = scmp.ne.s32.totalorder %s412, %s426
      %p428 = scmp.eq.s32.totalorder %s45, 0
      %p429 = por %p427, %p428
      %s431 = sadd.s32 %s430, 1
      %p434 = scmp.eq.s32.totalorder %s39, 1
      %p435 = scmp.ne.s32.totalorder %s430, %s432
      %p436 = scmp.eq.s32.totalorder %s39, 0
      %p437 = por %p435, %p436
      %p438 = scmp.ne.s32.totalorder %s430, %s432
      %p439 = scmp.eq.s32.totalorder %s44, 1
      %p440 = por %p438, %p439
      %p441 = scmp.ne.s32.totalorder %s432, %s433
      %p442 = scmp.eq.s32.totalorder %s44, 0
      %p443 = por %p441, %p442
      %p444 = scmp.ne.s32.totalorder %s432, %s433
      %p445 = scmp.eq.s32.totalorder %s45, 1
      %p446 = por %p444, %p445
      %p448 = scmp.ne.s32.totalorder %s433, %s447
      %p449 = scmp.eq.s32.totalorder %s45, 0
      %p450 = por %p448, %p449
      %s452 = sadd.s32 %s451, 1
      %p455 = scmp.eq.s32.totalorder %s39, 1
      %p456 = scmp.ne.s32.totalorder %s451, %s453
      %p457 = scmp.eq.s32.totalorder %s39, 0
      %p458 = por %p456, %p457
      %p459 = scmp.ne.s32.totalorder %s451, %s453
      %p460 = scmp.eq.s32.totalorder %s44, 1
      %p461 = por %p459, %p460
      %p462 = scmp.ne.s32.totalorder %s453, %s454
      %p463 = scmp.eq.s32.totalorder %s44, 0
      %p464 = por %p462, %p463
      %p465 = scmp.ne.s32.totalorder %s453, %s454
      %p466 = scmp.eq.s32.totalorder %s45, 1
      %p467 = por %p465, %p466
      %p469 = scmp.ne.s32.totalorder %s454, %s468
      %p470 = scmp.eq.s32.totalorder %s45, 0
      %p471 = por %p469, %p470
      %s473 = sadd.s32 %s472, 1
      %p476 = scmp.eq.s32.totalorder %s39, 1
      %p477 = scmp.ne.s32.totalorder %s472, %s474
      %p478 = scmp.eq.s32.totalorder %s39, 0
      %p479 = por %p477, %p478
      %p480 = scmp.ne.s32.totalorder %s472, %s474
      %p481 = scmp.eq.s32.totalorder %s44, 1
      %p482 = por %p480, %p481
      %p483 = scmp.ne.s32.totalorder %s474, %s475
      %p484 = scmp.eq.s32.totalorder %s44, 0
      %p485 = por %p483, %p484
      %p486 = scmp.ne.s32.totalorder %s474, %s475
      %p487 = scmp.eq.s32.totalorder %s45, 1
      %p488 = por %p486, %p487
      %p490 = scmp.ne.s32.totalorder %s475, %s489
      %p491 = scmp.eq.s32.totalorder %s45, 0
      %p492 = por %p490, %p491
      %s494 = sadd.s32 %s493, 1
      %p497 = scmp.eq.s32.totalorder %s39, 1
      %p498 = scmp.ne.s32.totalorder %s493, %s495
      %p499 = scmp.eq.s32.totalorder %s39, 0
      %p500 = por %p498, %p499
      %p501 = scmp.ne.s32.totalorder %s493, %s495
      %p502 = scmp.eq.s32.totalorder %s44, 1
      %p503 = por %p501, %p502
      %p504 = scmp.ne.s32.totalorder %s495, %s496
      %p505 = scmp.eq.s32.totalorder %s44, 0
      %p506 = por %p504, %p505
      %p507 = scmp.ne.s32.totalorder %s495, %s496
      %p508 = scmp.eq.s32.totalorder %s45, 1
      %p509 = por %p507, %p508
      %p511 = scmp.ne.s32.totalorder %s496, %s510
      %p512 = scmp.eq.s32.totalorder %s45, 0
      %p513 = por %p511, %p512
      %s514 = ssub.s32 %s39, %s46
      %p515 = scmp.eq.s32.totalorder %s514, 0
      %s517 = sadd.s32 %s516, 1
      %s518 = scalar_select %p515, %s516, %s517
      %p521 = pneg %p515
      %p522 = scmp.eq.s32.totalorder %s39, 1
      %p523 = por %p521, %p522
      %p524 = scmp.ne.s32.totalorder %s516, %s519
      %p525 = scmp.eq.s32.totalorder %s39, 0
      %p526 = por %p524, %p525
      %p527 = scmp.ne.s32.totalorder %s516, %s519
      %p528 = scmp.eq.s32.totalorder %s44, 1
      %p529 = por %p527, %p528
      %p530 = scmp.ne.s32.totalorder %s519, %s520
      %p531 = scmp.eq.s32.totalorder %s44, 0
      %p532 = por %p530, %p531
      %p533 = scmp.ne.s32.totalorder %s519, %s520
      %p534 = scmp.eq.s32.totalorder %s45, 1
      %p535 = por %p533, %p534
      %p537 = scmp.ne.s32.totalorder %s520, %s536
      %p538 = scmp.eq.s32.totalorder %s45, 0
      %p539 = por %p537, %p538
      %p540 = scmp.le.s32.totalorder 1, %s39
      %p541 = scmp.lt.s32.totalorder %s39, 3
      %p542 = pnand %p540, %p541
      %p543 = pneg %p542
      // Predicated region
      $region9: #{deepmsn_forward.3} parent=5 // pred_check
        _
      $region10: #{deepmsn_forward.3} parent=5 // pred_check_branch
        %545 = sbr.rel (%p542) target = $region12
      $region11: #{deepmsn_forward.3} parent=5 // pred_region
        %s546 = ssub.s32 %s39, 1
        // Predicated region
        $region13: #{deepmsn_forward.3} parent=11 // pred_check
          %p547 = pneg %p86
        $region14: #{deepmsn_forward.3} parent=11 // pred_check_branch
          %549 = sbr.rel (%p547) target = $region16
        $region15: #{deepmsn_forward.3} parent=11 // pred_region
          %s551 = ssub.s32 64, 64
          %552 = vsyncadd [#allocation3], %s551
          %s554 = sshll.u32 [#allocation2], 4
          %s555 = int_to_ptr.vmem [resolvable:$true] %s554
          %557 = dma.hbm_to_vmem [thread:$0]  %s1, 64, %s555, [#allocation3]
        $region16: #{deepmsn_forward.3} parent=11 // pred_fallthru
          _
        // Predicated region
        $region17: #{deepmsn_forward.3} parent=11 // pred_check
          %p558 = pneg %p107
        $region18: #{deepmsn_forward.3} parent=11 // pred_check_branch
          %560 = sbr.rel (%p558) target = $region20
        $region19: #{deepmsn_forward.3} parent=11 // pred_region
          %s562 = ssub.s32 128, 128
          %563 = vsyncadd [#allocation5], %s562
          %s565 = sshll.u32 [#allocation4], 4
          %s566 = int_to_ptr.vmem [resolvable:$true] %s565
          %568 = dma.hbm_to_vmem [thread:$0]  %s2, 128, %s566, [#allocation5]
        $region20: #{deepmsn_forward.3} parent=11 // pred_fallthru
          _
        // Predicated region
        $region21: #{deepmsn_forward.3} parent=11 // pred_check
          %p569 = pneg %p128
        $region22: #{deepmsn_forward.3} parent=11 // pred_check_branch
          %571 = sbr.rel (%p569) target = $region24
        $region23: #{deepmsn_forward.3} parent=11 // pred_region
          %s573 = ssub.s32 32, 32
          %574 = vsyncadd [#allocation5], %s573
          %s576 = sshll.u32 [#allocation6], 4
          %s577 = int_to_ptr.vmem [resolvable:$true] %s576
          %579 = dma.hbm_to_vmem [thread:$0]  %s3, 32, %s577, [#allocation5]
        $region24: #{deepmsn_forward.3} parent=11 // pred_fallthru
          _
        // Predicated region
        $region25: #{deepmsn_forward.3} parent=11 // pred_check
          %p580 = pneg %p149
        $region26: #{deepmsn_forward.3} parent=11 // pred_check_branch
          %582 = sbr.rel (%p580) target = $region28
        $region27: #{deepmsn_forward.3} parent=11 // pred_region
          %s584 = ssub.s32 16, 16
          %585 = vsyncadd [#allocation8], %s584
          %s587 = sshll.u32 [#allocation7], 4
          %s588 = int_to_ptr.vmem [resolvable:$true] %s587
          %590 = dma.hbm_to_vmem [thread:$0]  %s4, 16, %s588, [#allocation8]
        $region28: #{deepmsn_forward.3} parent=11 // pred_fallthru
          _
        // Predicated region
        $region29: #{deepmsn_forward.3} parent=11 // pred_check
          %p591 = pneg %p170
        $region30: #{deepmsn_forward.3} parent=11 // pred_check_branch
          %593 = sbr.rel (%p591) target = $region32
        $region31: #{deepmsn_forward.3} parent=11 // pred_region
          %s595 = ssub.s32 16, 16
          %596 = vsyncadd [#allocation8], %s595
          %s598 = sshll.u32 [#allocation9], 4
          %s599 = int_to_ptr.vmem [resolvable:$true] %s598
          %601 = dma.hbm_to_vmem [thread:$0]  %s5, 16, %s599, [#allocation8]
        $region32: #{deepmsn_forward.3} parent=11 // pred_fallthru
          _
        // Predicated region
        $region33: #{deepmsn_forward.3} parent=11 // pred_check
          %p602 = pneg %p191
        $region34: #{deepmsn_forward.3} parent=11 // pred_check_branch
          %604 = sbr.rel (%p602) target = $region36
        $region35: #{deepmsn_forward.3} parent=11 // pred_region
          %s606 = ssub.s32 2048, 2048
          %607 = vsyncadd [#allocation11], %s606
          %s608 = sshll.u32 [#allocation10], 4
          %s609 = int_to_ptr.vmem [resolvable:$true] %s608
          %614 = dma.hbm_to_vmem [thread:$0]  %s6, 2048, %s609, [#allocation11], 128, 128, 8
        $region36: #{deepmsn_forward.3} parent=11 // pred_fallthru
          _
        // Predicated region
        $region37: #{deepmsn_forward.3} parent=11 // pred_check
          %p615 = pneg %p212
        $region38: #{deepmsn_forward.3} parent=11 // pred_check_branch
          %617 = sbr.rel (%p615) target = $region40
        $region39: #{deepmsn_forward.3} parent=11 // pred_region
          %s619 = ssub.s32 32, 32
          %620 = vsyncadd [#allocation11], %s619
          %s622 = sshll.u32 [#allocation12], 4
          %s623 = int_to_ptr.vmem [resolvable:$true] %s622
          %625 = dma.hbm_to_vmem [thread:$0]  %s7, 32, %s623, [#allocation11]
        $region40: #{deepmsn_forward.3} parent=11 // pred_fallthru
          _
        // Predicated region
        $region41: #{deepmsn_forward.3} parent=11 // pred_check
          %p626 = pneg %p233
        $region42: #{deepmsn_forward.3} parent=11 // pred_check_branch
          %628 = sbr.rel (%p626) target = $region44
        $region43: #{deepmsn_forward.3} parent=11 // pred_region
          %s630 = ssub.s32 32, 32
          %631 = vsyncadd [#allocation14], %s630
          %s633 = sshll.u32 [#allocation13], 4
          %s634 = int_to_ptr.vmem [resolvable:$true] %s633
          %636 = dma.hbm_to_vmem [thread:$0]  %s8, 32, %s634, [#allocation14]
        $region44: #{deepmsn_forward.3} parent=11 // pred_fallthru
          _
        // Predicated region
        $region45: #{deepmsn_forward.3} parent=11 // pred_check
          %p637 = pneg %p254
        $region46: #{deepmsn_forward.3} parent=11 // pred_check_branch
          %639 = sbr.rel (%p637) target = $region48
        $region47: #{deepmsn_forward.3} parent=11 // pred_region
          %s641 = ssub.s32 32, 32
          %642 = vsyncadd [#allocation14], %s641
          %s644 = sshll.u32 [#allocation15], 4
          %s645 = int_to_ptr.vmem [resolvable:$true] %s644
          %647 = dma.hbm_to_vmem [thread:$0]  %s9, 32, %s645, [#allocation14]
        $region48: #{deepmsn_forward.3} parent=11 // pred_fallthru
          _
        // Predicated region
        $region49: #{deepmsn_forward.3} parent=11 // pred_check
          %p648 = pneg %p275
        $region50: #{deepmsn_forward.3} parent=11 // pred_check_branch
          %650 = sbr.rel (%p648) target = $region52
        $region51: #{deepmsn_forward.3} parent=11 // pred_region
          %s652 = ssub.s32 4096, 4096
          %653 = vsyncadd [#allocation17], %s652
          %s654 = sshll.u32 [#allocation16], 4
          %s655 = int_to_ptr.vmem [resolvable:$true] %s654
          %660 = dma.hbm_to_vmem [thread:$0]  %s10, 4096, %s655, [#allocation17], 128, 128, 8
        $region52: #{deepmsn_forward.3} parent=11 // pred_fallthru
          _
        // Predicated region
        $region53: #{deepmsn_forward.3} parent=11 // pred_check
          %p661 = pneg %p296
        $region54: #{deepmsn_forward.3} parent=11 // pred_check_branch
          %663 = sbr.rel (%p661) target = $region56
        $region55: #{deepmsn_forward.3} parent=11 // pred_region
          %s665 = ssub.s32 32, 32
          %666 = vsyncadd [#allocation17], %s665
          %s668 = sshll.u32 [#allocation18], 4
          %s669 = int_to_ptr.vmem [resolvable:$true] %s668
          %671 = dma.hbm_to_vmem [thread:$0]  %s11, 32, %s669, [#allocation17]
        $region56: #{deepmsn_forward.3} parent=11 // pred_fallthru
          _
        // Predicated region
        $region57: #{deepmsn_forward.3} parent=11 // pred_check
          %p672 = pneg %p317
        $region58: #{deepmsn_forward.3} parent=11 // pred_check_branch
          %674 = sbr.rel (%p672) target = $region60
        $region59: #{deepmsn_forward.3} parent=11 // pred_region
          %s676 = ssub.s32 2048, 2048
          %677 = vsyncadd [#allocation20], %s676
          %s678 = sshll.u32 [#allocation19], 4
          %s679 = int_to_ptr.vmem [resolvable:$true] %s678
          %684 = dma.hbm_to_vmem [thread:$0]  %s12, 2048, %s679, [#allocation20], 128, 128, 8
        $region60: #{deepmsn_forward.3} parent=11 // pred_fallthru
          _
        // Predicated region
        $region61: #{deepmsn_forward.3} parent=11 // pred_check
          %p685 = pneg %p338
        $region62: #{deepmsn_forward.3} parent=11 // pred_check_branch
          %687 = sbr.rel (%p685) target = $region64
        $region63: #{deepmsn_forward.3} parent=11 // pred_region
          %s689 = ssub.s32 32, 32
          %690 = vsyncadd [#allocation20], %s689
          %s692 = sshll.u32 [#allocation21], 4
          %s693 = int_to_ptr.vmem [resolvable:$true] %s692
          %695 = dma.hbm_to_vmem [thread:$0]  %s13, 32, %s693, [#allocation20]
        $region64: #{deepmsn_forward.3} parent=11 // pred_fallthru
          _
        // Predicated region
        $region65: #{deepmsn_forward.3} parent=11 // pred_check
          %p696 = pneg %p359
        $region66: #{deepmsn_forward.3} parent=11 // pred_check_branch
          %698 = sbr.rel (%p696) target = $region68
        $region67: #{deepmsn_forward.3} parent=11 // pred_region
          %s700 = ssub.s32 32, 32
          %701 = vsyncadd [#allocation23], %s700
          %s703 = sshll.u32 [#allocation22], 4
          %s704 = int_to_ptr.vmem [resolvable:$true] %s703
          %706 = dma.hbm_to_vmem [thread:$0]  %s14, 32, %s704, [#allocation23]
        $region68: #{deepmsn_forward.3} parent=11 // pred_fallthru
          _
        // Predicated region
        $region69: #{deepmsn_forward.3} parent=11 // pred_check
          %p707 = pneg %p380
        $region70: #{deepmsn_forward.3} parent=11 // pred_check_branch
          %709 = sbr.rel (%p707) target = $region72
        $region71: #{deepmsn_forward.3} parent=11 // pred_region
          %s711 = ssub.s32 32, 32
          %712 = vsyncadd [#allocation23], %s711
          %s714 = sshll.u32 [#allocation24], 4
          %s715 = int_to_ptr.vmem [resolvable:$true] %s714
          %717 = dma.hbm_to_vmem [thread:$0]  %s15, 32, %s715, [#allocation23]
        $region72: #{deepmsn_forward.3} parent=11 // pred_fallthru
          _
        // Predicated region
        $region73: #{deepmsn_forward.3} parent=11 // pred_check
          %p718 = pneg %p401
        $region74: #{deepmsn_forward.3} parent=11 // pred_check_branch
          %720 = sbr.rel (%p718) target = $region76
        $region75: #{deepmsn_forward.3} parent=11 // pred_region
          %s722 = ssub.s32 4096, 4096
          %723 = vsyncadd [#allocation26], %s722
          %s724 = sshll.u32 [#allocation25], 4
          %s725 = int_to_ptr.vmem [resolvable:$true] %s724
          %730 = dma.hbm_to_vmem [thread:$0]  %s16, 4096, %s725, [#allocation26], 128, 128, 8
        $region76: #{deepmsn_forward.3} parent=11 // pred_fallthru
          _
        // Predicated region
        $region77: #{deepmsn_forward.3} parent=11 // pred_check
          %p731 = pneg %p422
        $region78: #{deepmsn_forward.3} parent=11 // pred_check_branch
          %733 = sbr.rel (%p731) target = $region80
        $region79: #{deepmsn_forward.3} parent=11 // pred_region
          %s735 = ssub.s32 32, 32
          %736 = vsyncadd [#allocation26], %s735
          %s738 = sshll.u32 [#allocation27], 4
          %s739 = int_to_ptr.vmem [resolvable:$true] %s738
          %741 = dma.hbm_to_vmem [thread:$0]  %s17, 32, %s739, [#allocation26]
        $region80: #{deepmsn_forward.3} parent=11 // pred_fallthru
          _
        // Predicated region
        $region81: #{deepmsn_forward.3} parent=11 // pred_check
          %p742 = pneg %p443
        $region82: #{deepmsn_forward.3} parent=11 // pred_check_branch
          %744 = sbr.rel (%p742) target = $region84
        $region83: #{deepmsn_forward.3} parent=11 // pred_region
          %s746 = ssub.s32 32, 32
          %747 = vsyncadd [#allocation29], %s746
          %s749 = sshll.u32 [#allocation28], 4
          %s750 = int_to_ptr.vmem [resolvable:$true] %s749
          %752 = dma.hbm_to_vmem [thread:$0]  %s18, 32, %s750, [#allocation29]
        $region84: #{deepmsn_forward.3} parent=11 // pred_fallthru
          _
        // Predicated region
        $region85: #{deepmsn_forward.3} parent=11 // pred_check
          %p753 = pneg %p464
        $region86: #{deepmsn_forward.3} parent=11 // pred_check_branch
          %755 = sbr.rel (%p753) target = $region88
        $region87: #{deepmsn_forward.3} parent=11 // pred_region
          %s757 = ssub.s32 32, 32
          %758 = vsyncadd [#allocation29], %s757
          %s760 = sshll.u32 [#allocation30], 4
          %s761 = int_to_ptr.vmem [resolvable:$true] %s760
          %763 = dma.hbm_to_vmem [thread:$0]  %s19, 32, %s761, [#allocation29]
        $region88: #{deepmsn_forward.3} parent=11 // pred_fallthru
          _
        // Predicated region
        $region89: #{deepmsn_forward.3} parent=11 // pred_check
          %p764 = pneg %p485
        $region90: #{deepmsn_forward.3} parent=11 // pred_check_branch
          %766 = sbr.rel (%p764) target = $region92
        $region91: #{deepmsn_forward.3} parent=11 // pred_region
          %s768 = ssub.s32 4096, 4096
          %769 = vsyncadd [#allocation32], %s768
          %s770 = sshll.u32 [#allocation31], 4
          %s771 = int_to_ptr.vmem [resolvable:$true] %s770
          %776 = dma.hbm_to_vmem [thread:$0]  %s20, 4096, %s771, [#allocation32], 128, 128, 8
        $region92: #{deepmsn_forward.3} parent=11 // pred_fallthru
          _
        // Predicated region
        $region93: #{deepmsn_forward.3} parent=11 // pred_check
          %p777 = pneg %p506
        $region94: #{deepmsn_forward.3} parent=11 // pred_check_branch
          %779 = sbr.rel (%p777) target = $region96
        $region95: #{deepmsn_forward.3} parent=11 // pred_region
          %s781 = ssub.s32 32, 32
          %782 = vsyncadd [#allocation32], %s781
          %s784 = sshll.u32 [#allocation33], 4
          %s785 = int_to_ptr.vmem [resolvable:$true] %s784
          %787 = dma.hbm_to_vmem [thread:$0]  %s21, 32, %s785, [#allocation32]
        $region96: #{deepmsn_forward.3} parent=11 // pred_fallthru
          _
      $region12: #{deepmsn_forward.3} parent=5 // pred_fallthru
        _
      %p788 = scmp.lt.s32.totalorder %s39, 2
      // Predicated region
      $region97: #{deepmsn_forward.3} parent=5 // pred_check
        %p789 = pneg %p788
      $region98: #{deepmsn_forward.3} parent=5 // pred_check_branch
        %791 = sbr.rel (%p789) target = $region100
      $region99: #{deepmsn_forward.3} parent=5 // pred_region
        // Predicated region
        $region101: #{deepmsn_forward.3} parent=99 // pred_check
          %p792 = pneg %p59
        $region102: #{deepmsn_forward.3} parent=99 // pred_check_branch
          %794 = sbr.rel (%p792) target = $region104
        $region103: #{deepmsn_forward.3} parent=99 // pred_region
          %p795 = scmp.lt.s32.totalorder %s39, 1
          %s796 = scalar_select %p795, %s39, 1
          %s797 = smul.addr %s796, 8
          %s798 = scalar_lea.vmem %s0, %s797
        $region104: #{deepmsn_forward.3} parent=99 // pred_fallthru
          _
      $region100: #{deepmsn_forward.3} parent=5 // pred_fallthru
        _
      %p799 = scmp.le.s32.totalorder 1, %s39
      %p800 = scmp.lt.s32.totalorder %s39, 3
      %p801 = pnand %p799, %p800
      %p802 = pneg %p801
      // Predicated region
      $region105: #{deepmsn_forward.3} parent=5 // pred_check
        _
      $region106: #{deepmsn_forward.3} parent=5 // pred_check_branch
        %804 = sbr.rel (%p801) target = $region108
      $region107: #{deepmsn_forward.3} parent=5 // pred_region
        %s805 = ssub.s32 %s39, 1
        // Predicated region
        $region109: #{deepmsn_forward.3} parent=107 // pred_check
          %p806 = pneg %p86
        $region110: #{deepmsn_forward.3} parent=107 // pred_check_branch
          %808 = sbr.rel (%p806) target = $region112
        $region111: #{deepmsn_forward.3} parent=107 // pred_region
          %809 = dma.done [#allocation3], 64
        $region112: #{deepmsn_forward.3} parent=107 // pred_fallthru
          _
        // Predicated region
        $region113: #{deepmsn_forward.3} parent=107 // pred_check
          %p810 = pneg %p107
        $region114: #{deepmsn_forward.3} parent=107 // pred_check_branch
          %812 = sbr.rel (%p810) target = $region116
        $region115: #{deepmsn_forward.3} parent=107 // pred_region
          %813 = dma.done [#allocation5], 128
        $region116: #{deepmsn_forward.3} parent=107 // pred_fallthru
          _
        // Predicated region
        $region117: #{deepmsn_forward.3} parent=107 // pred_check
          %p814 = pneg %p128
        $region118: #{deepmsn_forward.3} parent=107 // pred_check_branch
          %816 = sbr.rel (%p814) target = $region120
        $region119: #{deepmsn_forward.3} parent=107 // pred_region
          %817 = dma.done [#allocation5], 32
        $region120: #{deepmsn_forward.3} parent=107 // pred_fallthru
          _
        // Predicated region
        $region121: #{deepmsn_forward.3} parent=107 // pred_check
          %p818 = pneg %p149
        $region122: #{deepmsn_forward.3} parent=107 // pred_check_branch
          %820 = sbr.rel (%p818) target = $region124
        $region123: #{deepmsn_forward.3} parent=107 // pred_region
          %821 = dma.done [#allocation8], 16
        $region124: #{deepmsn_forward.3} parent=107 // pred_fallthru
          _
        // Predicated region
        $region125: #{deepmsn_forward.3} parent=107 // pred_check
          %p822 = pneg %p170
        $region126: #{deepmsn_forward.3} parent=107 // pred_check_branch
          %824 = sbr.rel (%p822) target = $region128
        $region127: #{deepmsn_forward.3} parent=107 // pred_region
          %825 = dma.done [#allocation8], 16
        $region128: #{deepmsn_forward.3} parent=107 // pred_fallthru
          _
        // Predicated region
        $region129: #{deepmsn_forward.3} parent=107 // pred_check
          %p826 = pneg %p191
        $region130: #{deepmsn_forward.3} parent=107 // pred_check_branch
          %828 = sbr.rel (%p826) target = $region132
        $region131: #{deepmsn_forward.3} parent=107 // pred_region
          %829 = dma.done [#allocation11], 2048
        $region132: #{deepmsn_forward.3} parent=107 // pred_fallthru
          _
        // Predicated region
        $region133: #{deepmsn_forward.3} parent=107 // pred_check
          %p830 = pneg %p212
        $region134: #{deepmsn_forward.3} parent=107 // pred_check_branch
          %832 = sbr.rel (%p830) target = $region136
        $region135: #{deepmsn_forward.3} parent=107 // pred_region
          %833 = dma.done [#allocation11], 32
        $region136: #{deepmsn_forward.3} parent=107 // pred_fallthru
          _
        // Predicated region
        $region137: #{deepmsn_forward.3} parent=107 // pred_check
          %p834 = pneg %p233
        $region138: #{deepmsn_forward.3} parent=107 // pred_check_branch
          %836 = sbr.rel (%p834) target = $region140
        $region139: #{deepmsn_forward.3} parent=107 // pred_region
          %837 = dma.done [#allocation14], 32
        $region140: #{deepmsn_forward.3} parent=107 // pred_fallthru
          _
        // Predicated region
        $region141: #{deepmsn_forward.3} parent=107 // pred_check
          %p838 = pneg %p254
        $region142: #{deepmsn_forward.3} parent=107 // pred_check_branch
          %840 = sbr.rel (%p838) target = $region144
        $region143: #{deepmsn_forward.3} parent=107 // pred_region
          %841 = dma.done [#allocation14], 32
        $region144: #{deepmsn_forward.3} parent=107 // pred_fallthru
          _
        // Predicated region
        $region145: #{deepmsn_forward.3} parent=107 // pred_check
          %p842 = pneg %p275
        $region146: #{deepmsn_forward.3} parent=107 // pred_check_branch
          %844 = sbr.rel (%p842) target = $region148
        $region147: #{deepmsn_forward.3} parent=107 // pred_region
          %845 = dma.done [#allocation17], 4096
        $region148: #{deepmsn_forward.3} parent=107 // pred_fallthru
          _
        // Predicated region
        $region149: #{deepmsn_forward.3} parent=107 // pred_check
          %p846 = pneg %p296
        $region150: #{deepmsn_forward.3} parent=107 // pred_check_branch
          %848 = sbr.rel (%p846) target = $region152
        $region151: #{deepmsn_forward.3} parent=107 // pred_region
          %849 = dma.done [#allocation17], 32
        $region152: #{deepmsn_forward.3} parent=107 // pred_fallthru
          _
        // Predicated region
        $region153: #{deepmsn_forward.3} parent=107 // pred_check
          %p850 = pneg %p317
        $region154: #{deepmsn_forward.3} parent=107 // pred_check_branch
          %852 = sbr.rel (%p850) target = $region156
        $region155: #{deepmsn_forward.3} parent=107 // pred_region
          %853 = dma.done [#allocation20], 2048
        $region156: #{deepmsn_forward.3} parent=107 // pred_fallthru
          _
        // Predicated region
        $region157: #{deepmsn_forward.3} parent=107 // pred_check
          %p854 = pneg %p338
        $region158: #{deepmsn_forward.3} parent=107 // pred_check_branch
          %856 = sbr.rel (%p854) target = $region160
        $region159: #{deepmsn_forward.3} parent=107 // pred_region
          %857 = dma.done [#allocation20], 32
        $region160: #{deepmsn_forward.3} parent=107 // pred_fallthru
          _
        // Predicated region
        $region161: #{deepmsn_forward.3} parent=107 // pred_check
          %p858 = pneg %p359
        $region162: #{deepmsn_forward.3} parent=107 // pred_check_branch
          %860 = sbr.rel (%p858) target = $region164
        $region163: #{deepmsn_forward.3} parent=107 // pred_region
          %861 = dma.done [#allocation23], 32
        $region164: #{deepmsn_forward.3} parent=107 // pred_fallthru
          _
        // Predicated region
        $region165: #{deepmsn_forward.3} parent=107 // pred_check
          %p862 = pneg %p380
        $region166: #{deepmsn_forward.3} parent=107 // pred_check_branch
          %864 = sbr.rel (%p862) target = $region168
        $region167: #{deepmsn_forward.3} parent=107 // pred_region
          %865 = dma.done [#allocation23], 32
        $region168: #{deepmsn_forward.3} parent=107 // pred_fallthru
          _
        // Predicated region
        $region169: #{deepmsn_forward.3} parent=107 // pred_check
          %p866 = pneg %p401
        $region170: #{deepmsn_forward.3} parent=107 // pred_check_branch
          %868 = sbr.rel (%p866) target = $region172
        $region171: #{deepmsn_forward.3} parent=107 // pred_region
          %869 = dma.done [#allocation26], 4096
        $region172: #{deepmsn_forward.3} parent=107 // pred_fallthru
          _
        // Predicated region
        $region173: #{deepmsn_forward.3} parent=107 // pred_check
          %p870 = pneg %p422
        $region174: #{deepmsn_forward.3} parent=107 // pred_check_branch
          %872 = sbr.rel (%p870) target = $region176
        $region175: #{deepmsn_forward.3} parent=107 // pred_region
          %873 = dma.done [#allocation26], 32
        $region176: #{deepmsn_forward.3} parent=107 // pred_fallthru
          _
        // Predicated region
        $region177: #{deepmsn_forward.3} parent=107 // pred_check
          %p874 = pneg %p443
        $region178: #{deepmsn_forward.3} parent=107 // pred_check_branch
          %876 = sbr.rel (%p874) target = $region180
        $region179: #{deepmsn_forward.3} parent=107 // pred_region
          %877 = dma.done [#allocation29], 32
        $region180: #{deepmsn_forward.3} parent=107 // pred_fallthru
          _
        // Predicated region
        $region181: #{deepmsn_forward.3} parent=107 // pred_check
          %p878 = pneg %p464
        $region182: #{deepmsn_forward.3} parent=107 // pred_check_branch
          %880 = sbr.rel (%p878) target = $region184
        $region183: #{deepmsn_forward.3} parent=107 // pred_region
          %881 = dma.done [#allocation29], 32
        $region184: #{deepmsn_forward.3} parent=107 // pred_fallthru
          _
        // Predicated region
        $region185: #{deepmsn_forward.3} parent=107 // pred_check
          %p882 = pneg %p485
        $region186: #{deepmsn_forward.3} parent=107 // pred_check_branch
          %884 = sbr.rel (%p882) target = $region188
        $region187: #{deepmsn_forward.3} parent=107 // pred_region
          %885 = dma.done [#allocation32], 4096
        $region188: #{deepmsn_forward.3} parent=107 // pred_fallthru
          _
        // Predicated region
        $region189: #{deepmsn_forward.3} parent=107 // pred_check
          %p886 = pneg %p506
        $region190: #{deepmsn_forward.3} parent=107 // pred_check_branch
          %888 = sbr.rel (%p886) target = $region192
        $region191: #{deepmsn_forward.3} parent=107 // pred_region
          %889 = dma.done [#allocation32], 32
        $region192: #{deepmsn_forward.3} parent=107 // pred_fallthru
          _
        %p890 = scmp.lt.s32.totalorder %s44, 1
        %s891 = scalar_select %p890, %s44, 1
        %s892 = smul.addr %s891, 8
        %s893 = scalar_lea.vmem %s0, %s892
        %p894 = pneg %p65
        %p895 = pneg %p62
        %p896 = pneg %p86
        %p897 = pneg %p83
        %p898 = pneg %p107
        %p899 = pneg %p104
        %p900 = pneg %p128
        %p901 = pneg %p125
        %p902 = pneg %p149
        %p903 = pneg %p146
        %p904 = pneg %p170
        %p905 = pneg %p167
        %p906 = pneg %p191
        %p907 = pneg %p188
        %p908 = pneg %p212
        %p909 = pneg %p209
        %p910 = pneg %p233
        %p911 = pneg %p230
        %p912 = pneg %p254
        %p913 = pneg %p251
        %p914 = pneg %p275
        %p915 = pneg %p272
        %p916 = pneg %p296
        %p917 = pneg %p293
        %p918 = pneg %p317
        %p919 = pneg %p314
        %p920 = pneg %p338
        %p921 = pneg %p335
        %p922 = pneg %p359
        %p923 = pneg %p356
        %p924 = pneg %p380
        %p925 = pneg %p377
        %p926 = pneg %p401
        %p927 = pneg %p398
        %p928 = pneg %p422
        %p929 = pneg %p419
        %p930 = pneg %p443
        %p931 = pneg %p440
        %p932 = pneg %p464
        %p933 = pneg %p461
        %p934 = pneg %p485
        %p935 = pneg %p482
        %p936 = pneg %p506
        %p937 = pneg %p503
        %p938 = pneg %p532
        %p939 = pneg %p529
        %p940 = scmp.lt.s32.totalorder %s44, 1
        %s941 = scalar_select %p940, %s44, 1
        %s942 = smul.addr %s941, 4
        %s943 = smul.addr %s942, 8
        %s944 = scalar_lea.vmem %s22, %s943
        %p945 = scmp.lt.s32.totalorder %s44, 1
        %s946 = scalar_select %p945, %s44, 1
        %s947 = smul.addr %s946, 8
        %s948 = scalar_lea.vmem %s0, %s947
        %p949 = scmp.lt.s32.totalorder %s44, 1
        %s950 = scalar_select %p949, %s44, 1
        %s951 = smul.addr %s950, 4
        %s952 = smul.addr %s951, 8
        %s953 = scalar_lea.vmem %s22, %s952
        %v955 = vld [vmem:[%s948] sm:$0xff]
        %v956 = vld [vmem:[#allocation2] sm:$0xf]
        %v957 = vld [vmem:[#allocation4] sm:$0xff]
        %vm958 = vcmask 31744
        %v960 = vsel %vm958, %v955, 0
        %vm962 = vcmask 1043456
        %v964 = vsel %vm962, %v956, 0
        %966 = vmatprep.subr.mxu0 0.0
        %967 = vmatpush1.msra.mxu0 %v964
        %968 = vmatprep.subr.mxu0 0.0
        %969 = vmatpush1.msra.mxu0 0.0
        %970 = vmatprep.subr.mxu0 0.0
        %971 = vmatpush1.msra.mxu0 0.0
        %972 = vmatprep.subr.mxu0 0.0
        %973 = vmatpush1.msra.mxu0 0.0
        %974 = vmatprep.subr.mxu0 0.0
        %975 = vmatpush1.msra.mxu0 0.0
        %976 = vmatprep.subr.mxu0 0.0
        %977 = vmatpush1.msra.mxu0 0.0
        %978 = vmatprep.subr.mxu0 0.0
        %979 = vmatpush1.msra.mxu0 0.0
        %980 = vmatprep.subr.mxu0 0.0
        %981 = vmatpush1.msra.mxu0 0.0
        %982 = vmatprep.subr.mxu0 0.0
        %983 = vmatpush1.msra.mxu0 0.0
        %984 = vmatprep.subr.mxu0 0.0
        %985 = vmatpush1.msra.mxu0 0.0
        %986 = vmatprep.subr.mxu0 0.0
        %987 = vmatpush1.msra.mxu0 0.0
        %988 = vmatprep.subr.mxu0 0.0
        %989 = vmatpush1.msra.mxu0 0.0
        %990 = vmatprep.subr.mxu0 0.0
        %991 = vmatpush1.msra.mxu0 0.0
        %992 = vmatprep.subr.mxu0 0.0
        %993 = vmatpush1.msra.mxu0 0.0
        %994 = vmatprep.subr.mxu0 0.0
        %995 = vmatpush1.msra.mxu0 0.0
        %996 = vmatprep.subr.mxu0 0.0
        %997 = vmatpush1.msra.mxu0 0.0
        %998 = vmatprep.subr.mxu0 0.0
        %999 = vmatpush1.msra.mxu0 0.0
        %1000 = vmatprep.subr.mxu0 0.0
        %1001 = vmatpush1.msra.mxu0 0.0
        %1002 = vmatprep.subr.mxu0 0.0
        %1003 = vmatpush1.msra.mxu0 0.0
        %1004 = vmatprep.subr.mxu0 0.0
        %1005 = vmatpush1.msra.mxu0 0.0
        %1006 = vmatprep.subr.mxu0 0.0
        %1007 = vmatpush1.msra.mxu0 0.0
        %1008 = vmatprep.subr.mxu0 0.0
        %1009 = vmatpush1.msra.mxu0 0.0
        %1010 = vmatprep.subr.mxu0 0.0
        %1011 = vmatpush1.msra.mxu0 0.0
        %1012 = vmatprep.subr.mxu0 0.0
        %1013 = vmatpush1.msra.mxu0 0.0
        %1014 = vmatprep.subr.mxu0 0.0
        %1015 = vmatpush1.msra.mxu0 0.0
        %1016 = vmatprep.subr.mxu0 0.0
        %1017 = vmatpush1.msra.mxu0 0.0
        %1018 = vmatprep.subr.mxu0 0.0
        %1019 = vmatpush1.msra.mxu0 0.0
        %1020 = vmatprep.subr.mxu0 0.0
        %1021 = vmatpush1.msra.mxu0 0.0
        %1022 = vmatprep.subr.mxu0 0.0
        %1023 = vmatpush1.msra.mxu0 0.0
        %1024 = vmatprep.subr.mxu0 0.0
        %1025 = vmatpush1.msra.mxu0 0.0
        %1026 = vmatprep.subr.mxu0 0.0
        %1027 = vmatpush1.msra.mxu0 0.0
        %1028 = vmatprep.subr.mxu0 0.0
        %1029 = vmatpush1.msra.mxu0 0.0
        %1030 = vmatprep.mubr.f32.mxu0 0.0
        %1031 = vmatmul.mubr.f32.gmra.mrb[0].mxu0 %v960
        %v1032 = vpop.f32.mrb[0].mxu0
        %v1033 = vadd.f32 %v957, %v1032
        %v1034 = vpop.f32.mrb[0].mxu0
        %1035 = vdwg.mxu0
        %v1036 = vld [vmem:[#allocation6] sm:$0x3]
        %v1038 = vrot.slane %v1033, 6
        %vm1040 = vcmask 1041408
        %v1041 = vsel %vm1040, %v1036, %v1038
        %v1042 = vld [vmem:[#allocation7] sm:$0x1]
        %v1043 = vld [vmem:[#allocation9] sm:$0x1]
        %1044 = vadd.xlane.f32.xlu0 %v1041
        %v1045 = vpop.xlane.xlu0 %1044
        %v1046 = vsel %vm1040, %v1038, 0.0
        %1047 = vadd.xlane.f32.xlu0 %v1046
        %v1048 = vpop.xlane.xlu0 %1047
        %v1049 = vrcp.pop 128.0
        %v1050 = vmul.f32 %v1045, %v1049
        %v1051 = vmul.f32 %v1048, %v1049
        %v1052 = vsub.f32 %v1041, %v1050
        %v1053 = vsub.f32 %v1038, %v1051
        %v1054 = vmul.f32 %v1052, %v1052
        %v1055 = vmul.f32 %v1053, %v1053
        %1056 = vadd.xlane.f32.xlu0 %v1054
        %v1057 = vpop.xlane.xlu0 %1056
        %v1058 = vsel %vm1040, %v1055, 0.0
        %1059 = vadd.xlane.f32.xlu0 %v1058
        %v1060 = vpop.xlane.xlu0 %1059
        %v1061 = vmul.f32 %v1057, %v1049
        %v1062 = vmul.f32 %v1060, %v1049
        %v1063 = vadd.f32 %v1061, 1e-05
        %v1064 = vadd.f32 %v1062, 1e-05
        %v1065 = vrsqrt.pop %v1063
        %v1066 = vrsqrt.pop %v1064
        %v1067 = vmul.f32 %v1052, %v1065
        %v1068 = vmul.f32 %v1053, %v1066
        %v1070 = vlaneseq
        %v1071 = vshrl.u32 %v1070, 7
        %v1072 = vsub.s32 0, %v1071
        %v1073 = vrot.slane %v1042, %v1072
        %v1075 = vmul.f32 %v1067, %v1073
        %v1076 = vmul.f32 %v1068, %v1073
        %v1078 = vlaneseq
        %v1079 = vshrl.u32 %v1078, 7
        %v1080 = vsub.s32 0, %v1079
        %v1081 = vrot.slane %v1043, %v1080
        %v1083 = vadd.f32 %v1075, %v1081
        %v1084 = vadd.f32 %v1076, %v1081
        %vm1085 = vcmp.ge.f32.partialorder %v1083, 0.0
        %vm1086 = vcmp.ge.f32.partialorder %v1084, 0.0
        %v1087 = vmul.f32 %v1083, 0.1
        %v1088 = vmul.f32 %v1084, 0.1
        %v1089 = vsel %vm1085, %v1083, %v1087
        %v1090 = vsel %vm1086, %v1084, %v1088
        %v1091 = vld [vmem:[#allocation10] sm:$0xff]
        %v1092 = vld [vmem:[#allocation10 + $0x8] sm:$0xff]
        %v1093 = vld [vmem:[#allocation10 + $0x10] sm:$0xff]
        %v1094 = vld [vmem:[#allocation10 + $0x18] sm:$0xff]
        %v1095 = vld [vmem:[#allocation10 + $0x20] sm:$0xff]
        %v1096 = vld [vmem:[#allocation10 + $0x28] sm:$0xff]
        %v1097 = vld [vmem:[#allocation10 + $0x30] sm:$0xff]
        %v1098 = vld [vmem:[#allocation10 + $0x38] sm:$0xff]
        %v1099 = vld [vmem:[#allocation10 + $0x40] sm:$0xff]
        %v1100 = vld [vmem:[#allocation10 + $0x48] sm:$0xff]
        %v1101 = vld [vmem:[#allocation10 + $0x50] sm:$0xff]
        %v1102 = vld [vmem:[#allocation10 + $0x58] sm:$0xff]
        %v1103 = vld [vmem:[#allocation10 + $0x60] sm:$0xff]
        %v1104 = vld [vmem:[#allocation10 + $0x68] sm:$0xff]
        %v1105 = vld [vmem:[#allocation10 + $0x70] sm:$0xff]
        %v1106 = vld [vmem:[#allocation10 + $0x78] sm:$0xff]
        %v1107 = vld [vmem:[#allocation12] sm:$0x3]
        %v1108 = vpack.c.bf16 %v1090, %v1089
        %v1110 = vlaneseq
        %v1111 = vshrl.u32 %v1110, 7
        %v1112 = vsub.s32 0, %v1111
        %v1113 = vrot.slane %v1107, %v1112
        %v1114 = vlaneseq
        %v1115 = vshrl.u32 %v1114, 7
        %v1116 = vsub.s32 1, %v1115
        %v1117 = vrot.slane %v1107, %v1116
        %v1136 = vunpack.c.l.b16 %v1091
        %v1137 = vunpack.c.h.b16 %v1091
        %v1138 = vunpack.c.l.b16 %v1092
        %v1139 = vunpack.c.h.b16 %v1092
        %v1140 = vunpack.c.l.b16 %v1093
        %v1141 = vunpack.c.h.b16 %v1093
        %v1142 = vunpack.c.l.b16 %v1094
        %v1143 = vunpack.c.h.b16 %v1094
        %v1144 = vunpack.c.l.b16 %v1095
        %v1145 = vunpack.c.h.b16 %v1095
        %v1146 = vunpack.c.l.b16 %v1096
        %v1147 = vunpack.c.h.b16 %v1096
        %v1148 = vunpack.c.l.b16 %v1097
        %v1149 = vunpack.c.h.b16 %v1097
        %v1150 = vunpack.c.l.b16 %v1098
        %v1151 = vunpack.c.h.b16 %v1098
        %v1152 = vunpack.c.l.b16 %v1099
        %v1153 = vunpack.c.h.b16 %v1099
        %v1154 = vunpack.c.l.b16 %v1100
        %v1155 = vunpack.c.h.b16 %v1100
        %v1156 = vunpack.c.l.b16 %v1101
        %v1157 = vunpack.c.h.b16 %v1101
        %v1158 = vunpack.c.l.b16 %v1102
        %v1159 = vunpack.c.h.b16 %v1102
        %v1160 = vunpack.c.l.b16 %v1103
        %v1161 = vunpack.c.h.b16 %v1103
        %v1162 = vunpack.c.l.b16 %v1104
        %v1163 = vunpack.c.h.b16 %v1104
        %v1164 = vunpack.c.l.b16 %v1105
        %v1165 = vunpack.c.h.b16 %v1105
        %v1166 = vunpack.c.l.b16 %v1106
        %v1167 = vunpack.c.h.b16 %v1106
        %v1168 = vpack.c.b16 %v1138, %v1136
        %v1169 = vpack.c.b16 %v1139, %v1137
        %v1170 = vpack.c.b16 %v1142, %v1140
        %v1171 = vpack.c.b16 %v1143, %v1141
        %v1172 = vpack.c.b16 %v1146, %v1144
        %v1173 = vpack.c.b16 %v1147, %v1145
        %v1174 = vpack.c.b16 %v1150, %v1148
        %v1175 = vpack.c.b16 %v1151, %v1149
        %v1176 = vpack.c.b16 %v1154, %v1152
        %v1177 = vpack.c.b16 %v1155, %v1153
        %v1178 = vpack.c.b16 %v1158, %v1156
        %v1179 = vpack.c.b16 %v1159, %v1157
        %v1180 = vpack.c.b16 %v1162, %v1160
        %v1181 = vpack.c.b16 %v1163, %v1161
        %v1182 = vpack.c.b16 %v1166, %v1164
        %v1183 = vpack.c.b16 %v1167, %v1165
        %1200 = vmatprep.subr.bf16.mxu0 %v1169
        %1201 = vmatpush1.bf16.msra.mxu0 %v1168
        %1202 = vmatprep.subr.bf16.mxu0 %v1171
        %1203 = vmatpush1.bf16.msra.mxu0 %v1170
        %1204 = vmatprep.subr.bf16.mxu0 %v1173
        %1205 = vmatpush1.bf16.msra.mxu0 %v1172
        %1206 = vmatprep.subr.bf16.mxu0 %v1175
        %1207 = vmatpush1.bf16.msra.mxu0 %v1174
        %1208 = vmatprep.subr.bf16.mxu0 %v1177
        %1209 = vmatpush1.bf16.msra.mxu0 %v1176
        %1210 = vmatprep.subr.bf16.mxu0 %v1179
        %1211 = vmatpush1.bf16.msra.mxu0 %v1178
        %1212 = vmatprep.subr.bf16.mxu0 %v1181
        %1213 = vmatpush1.bf16.msra.mxu0 %v1180
        %1214 = vmatprep.subr.bf16.mxu0 %v1183
        %1215 = vmatpush1.bf16.msra.mxu0 %v1182
        %1216 = vmatprep.subr.bf16.mxu0 0
        %1217 = vmatpush1.bf16.msra.mxu0 0
        %1218 = vmatprep.subr.bf16.mxu0 0
        %1219 = vmatpush1.bf16.msra.mxu0 0
        %1220 = vmatprep.subr.bf16.mxu0 0
        %1221 = vmatpush1.bf16.msra.mxu0 0
        %1222 = vmatprep.subr.bf16.mxu0 0
        %1223 = vmatpush1.bf16.msra.mxu0 0
        %1224 = vmatprep.subr.bf16.mxu0 0
        %1225 = vmatpush1.bf16.msra.mxu0 0
        %1226 = vmatprep.subr.bf16.mxu0 0
        %1227 = vmatpush1.bf16.msra.mxu0 0
        %1228 = vmatprep.subr.bf16.mxu0 0
        %1229 = vmatpush1.bf16.msra.mxu0 0
        %1230 = vmatprep.subr.bf16.mxu0 0
        %1231 = vmatpush1.bf16.msra.mxu0 0
        %1232 = vmatprep.mubr.bf16.mxu0 0
        %1233 = vmatmul.mubr.bf16.gmra.mrb[0].mxu0 %v1108
        %v1234 = vpop.f32.mrb[0].mxu0
        %v1235 = vadd.f32 %v1113, %v1234
        %v1236 = vpop.f32.mrb[0].mxu0
        %v1237 = vadd.f32 %v1117, %v1236
        %v1238 = vpop.f32.mrb[0].mxu0
        %v1239 = vadd.f32 %v1113, %v1238
        %v1240 = vpop.f32.mrb[0].mxu0
        %v1241 = vadd.f32 %v1117, %v1240
        %1242 = vdwg.mxu0
        %v1243 = vld [vmem:[#allocation13] sm:$0x3]
        %v1244 = vld [vmem:[#allocation15] sm:$0x3]
        %v1245 = vadd.f32 %v1235, %v1237
        %1246 = vadd.xlane.f32.xlu0 %v1245
        %v1247 = vpop.xlane.xlu0 %1246
        %v1248 = vsel %vm1040, %v1239, 0.0
        %v1249 = vsel %vm1040, %v1241, 0.0
        %v1250 = vadd.f32 %v1248, %v1249
        %1251 = vadd.xlane.f32.xlu0 %v1250
        %v1252 = vpop.xlane.xlu0 %1251
        %v1253 = vrcp.pop 256.0
        %v1254 = vmul.f32 %v1247, %v1253
        %v1255 = vmul.f32 %v1252, %v1253
        %v1256 = vsub.f32 %v1235, %v1254
        %v1257 = vsub.f32 %v1237, %v1254
        %v1258 = vsub.f32 %v1239, %v1255
        %v1259 = vsub.f32 %v1241, %v1255
        %v1260 = vmul.f32 %v1256, %v1256
        %v1261 = vmul.f32 %v1257, %v1257
        %v1262 = vmul.f32 %v1258, %v1258
        %v1263 = vmul.f32 %v1259, %v1259
        %v1264 = vadd.f32 %v1260, %v1261
        %1265 = vadd.xlane.f32.xlu0 %v1264
        %v1266 = vpop.xlane.xlu0 %1265
        %v1267 = vsel %vm1040, %v1262, 0.0
        %v1268 = vsel %vm1040, %v1263, 0.0
        %v1269 = vadd.f32 %v1267, %v1268
        %1270 = vadd.xlane.f32.xlu0 %v1269
        %v1271 = vpop.xlane.xlu0 %1270
        %v1272 = vmul.f32 %v1266, %v1253
        %v1273 = vmul.f32 %v1271, %v1253
        %v1274 = vadd.f32 %v1272, 1e-05
        %v1275 = vadd.f32 %v1273, 1e-05
        %v1276 = vrsqrt.pop %v1274
        %v1277 = vrsqrt.pop %v1275
        %v1278 = vmul.f32 %v1256, %v1276
        %v1279 = vmul.f32 %v1257, %v1276
        %v1280 = vmul.f32 %v1258, %v1277
        %v1281 = vmul.f32 %v1259, %v1277
        %v1283 = vlaneseq
        %v1284 = vshrl.u32 %v1283, 7
        %v1285 = vsub.s32 0, %v1284
        %v1286 = vrot.slane %v1243, %v1285
        %v1287 = vlaneseq
        %v1288 = vshrl.u32 %v1287, 7
        %v1289 = vsub.s32 1, %v1288
        %v1290 = vrot.slane %v1243, %v1289
        %v1293 = vmul.f32 %v1278, %v1286
        %v1294 = vmul.f32 %v1279, %v1290
        %v1295 = vmul.f32 %v1280, %v1286
        %v1296 = vmul.f32 %v1281, %v1290
        %v1298 = vlaneseq
        %v1299 = vshrl.u32 %v1298, 7
        %v1300 = vsub.s32 0, %v1299
        %v1301 = vrot.slane %v1244, %v1300
        %v1302 = vlaneseq
        %v1303 = vshrl.u32 %v1302, 7
        %v1304 = vsub.s32 1, %v1303
        %v1305 = vrot.slane %v1244, %v1304
        %v1308 = vadd.f32 %v1293, %v1301
        %v1309 = vadd.f32 %v1294, %v1305
        %v1310 = vadd.f32 %v1295, %v1301
        %v1311 = vadd.f32 %v1296, %v1305
        %vm1312 = vcmp.ge.f32.partialorder %v1308, 0.0
        %vm1313 = vcmp.ge.f32.partialorder %v1309, 0.0
        %vm1314 = vcmp.ge.f32.partialorder %v1310, 0.0
        %vm1315 = vcmp.ge.f32.partialorder %v1311, 0.0
        %v1316 = vmul.f32 %v1308, 0.1
        %v1317 = vmul.f32 %v1309, 0.1
        %v1318 = vmul.f32 %v1310, 0.1
        %v1319 = vmul.f32 %v1311, 0.1
        %v1320 = vsel %vm1312, %v1308, %v1316
        %v1321 = vsel %vm1313, %v1309, %v1317
        %v1322 = vsel %vm1314, %v1310, %v1318
        %v1323 = vsel %vm1315, %v1311, %v1319
        %v1324 = vld [vmem:[#allocation16] sm:$0xff]
        %v1325 = vld [vmem:[#allocation16 + $0x8] sm:$0xff]
        %v1326 = vld [vmem:[#allocation16 + $0x10] sm:$0xff]
        %v1327 = vld [vmem:[#allocation16 + $0x18] sm:$0xff]
        %v1328 = vld [vmem:[#allocation16 + $0x20] sm:$0xff]
        %v1329 = vld [vmem:[#allocation16 + $0x28] sm:$0xff]
        %v1330 = vld [vmem:[#allocation16 + $0x30] sm:$0xff]
        %v1331 = vld [vmem:[#allocation16 + $0x38] sm:$0xff]
        %v1332 = vld [vmem:[#allocation16 + $0x40] sm:$0xff]
        %v1333 = vld [vmem:[#allocation16 + $0x48] sm:$0xff]
        %v1334 = vld [vmem:[#allocation16 + $0x50] sm:$0xff]
        %v1335 = vld [vmem:[#allocation16 + $0x58] sm:$0xff]
        %v1336 = vld [vmem:[#allocation16 + $0x60] sm:$0xff]
        %v1337 = vld [vmem:[#allocation16 + $0x68] sm:$0xff]
        %v1338 = vld [vmem:[#allocation16 + $0x70] sm:$0xff]
        %v1339 = vld [vmem:[#allocation16 + $0x78] sm:$0xff]
        %v1340 = vld [vmem:[#allocation16 + $0x80] sm:$0xff]
        %v1341 = vld [vmem:[#allocation16 + $0x88] sm:$0xff]
        %v1342 = vld [vmem:[#allocation16 + $0x90] sm:$0xff]
        %v1343 = vld [vmem:[#allocation16 + $0x98] sm:$0xff]
        %v1344 = vld [vmem:[#allocation16 + $0xa0] sm:$0xff]
        %v1345 = vld [vmem:[#allocation16 + $0xa8] sm:$0xff]
        %v1346 = vld [vmem:[#allocation16 + $0xb0] sm:$0xff]
        %v1347 = vld [vmem:[#allocation16 + $0xb8] sm:$0xff]
        %v1348 = vld [vmem:[#allocation16 + $0xc0] sm:$0xff]
        %v1349 = vld [vmem:[#allocation16 + $0xc8] sm:$0xff]
        %v1350 = vld [vmem:[#allocation16 + $0xd0] sm:$0xff]
        %v1351 = vld [vmem:[#allocation16 + $0xd8] sm:$0xff]
        %v1352 = vld [vmem:[#allocation16 + $0xe0] sm:$0xff]
        %v1353 = vld [vmem:[#allocation16 + $0xe8] sm:$0xff]
        %v1354 = vld [vmem:[#allocation16 + $0xf0] sm:$0xff]
        %v1355 = vld [vmem:[#allocation16 + $0xf8] sm:$0xff]
        %v1356 = vld [vmem:[#allocation18] sm:$0x3]
        %v1357 = vpack.c.bf16 %v1322, %v1320
        %v1358 = vpack.c.bf16 %v1323, %v1321
        %v1360 = vlaneseq
        %v1361 = vshrl.u32 %v1360, 7
        %v1362 = vsub.s32 0, %v1361
        %v1363 = vrot.slane %v1356, %v1362
        %v1364 = vlaneseq
        %v1365 = vshrl.u32 %v1364, 7
        %v1366 = vsub.s32 1, %v1365
        %v1367 = vrot.slane %v1356, %v1366
        %v1402 = vunpack.c.l.b16 %v1324
        %v1403 = vunpack.c.h.b16 %v1324
        %v1404 = vunpack.c.l.b16 %v1325
        %v1405 = vunpack.c.h.b16 %v1325
        %v1406 = vunpack.c.l.b16 %v1326
        %v1407 = vunpack.c.h.b16 %v1326
        %v1408 = vunpack.c.l.b16 %v1327
        %v1409 = vunpack.c.h.b16 %v1327
        %v1410 = vunpack.c.l.b16 %v1328
        %v1411 = vunpack.c.h.b16 %v1328
        %v1412 = vunpack.c.l.b16 %v1329
        %v1413 = vunpack.c.h.b16 %v1329
        %v1414 = vunpack.c.l.b16 %v1330
        %v1415 = vunpack.c.h.b16 %v1330
        %v1416 = vunpack.c.l.b16 %v1331
        %v1417 = vunpack.c.h.b16 %v1331
        %v1418 = vunpack.c.l.b16 %v1332
        %v1419 = vunpack.c.h.b16 %v1332
        %v1420 = vunpack.c.l.b16 %v1333
        %v1421 = vunpack.c.h.b16 %v1333
        %v1422 = vunpack.c.l.b16 %v1334
        %v1423 = vunpack.c.h.b16 %v1334
        %v1424 = vunpack.c.l.b16 %v1335
        %v1425 = vunpack.c.h.b16 %v1335
        %v1426 = vunpack.c.l.b16 %v1336
        %v1427 = vunpack.c.h.b16 %v1336
        %v1428 = vunpack.c.l.b16 %v1337
        %v1429 = vunpack.c.h.b16 %v1337
        %v1430 = vunpack.c.l.b16 %v1338
        %v1431 = vunpack.c.h.b16 %v1338
        %v1432 = vunpack.c.l.b16 %v1339
        %v1433 = vunpack.c.h.b16 %v1339
        %v1434 = vunpack.c.l.b16 %v1340
        %v1435 = vunpack.c.h.b16 %v1340
        %v1436 = vunpack.c.l.b16 %v1341
        %v1437 = vunpack.c.h.b16 %v1341
        %v1438 = vunpack.c.l.b16 %v1342
        %v1439 = vunpack.c.h.b16 %v1342
        %v1440 = vunpack.c.l.b16 %v1343
        %v1441 = vunpack.c.h.b16 %v1343
        %v1442 = vunpack.c.l.b16 %v1344
        %v1443 = vunpack.c.h.b16 %v1344
        %v1444 = vunpack.c.l.b16 %v1345
        %v1445 = vunpack.c.h.b16 %v1345
        %v1446 = vunpack.c.l.b16 %v1346
        %v1447 = vunpack.c.h.b16 %v1346
        %v1448 = vunpack.c.l.b16 %v1347
        %v1449 = vunpack.c.h.b16 %v1347
        %v1450 = vunpack.c.l.b16 %v1348
        %v1451 = vunpack.c.h.b16 %v1348
        %v1452 = vunpack.c.l.b16 %v1349
        %v1453 = vunpack.c.h.b16 %v1349
        %v1454 = vunpack.c.l.b16 %v1350
        %v1455 = vunpack.c.h.b16 %v1350
        %v1456 = vunpack.c.l.b16 %v1351
        %v1457 = vunpack.c.h.b16 %v1351
        %v1458 = vunpack.c.l.b16 %v1352
        %v1459 = vunpack.c.h.b16 %v1352
        %v1460 = vunpack.c.l.b16 %v1353
        %v1461 = vunpack.c.h.b16 %v1353
        %v1462 = vunpack.c.l.b16 %v1354
        %v1463 = vunpack.c.h.b16 %v1354
        %v1464 = vunpack.c.l.b16 %v1355
        %v1465 = vunpack.c.h.b16 %v1355
        %v1466 = vpack.c.b16 %v1404, %v1402
        %v1467 = vpack.c.b16 %v1405, %v1403
        %v1468 = vpack.c.b16 %v1408, %v1406
        %v1469 = vpack.c.b16 %v1409, %v1407
        %v1470 = vpack.c.b16 %v1412, %v1410
        %v1471 = vpack.c.b16 %v1413, %v1411
        %v1472 = vpack.c.b16 %v1416, %v1414
        %v1473 = vpack.c.b16 %v1417, %v1415
        %v1474 = vpack.c.b16 %v1420, %v1418
        %v1475 = vpack.c.b16 %v1421, %v1419
        %v1476 = vpack.c.b16 %v1424, %v1422
        %v1477 = vpack.c.b16 %v1425, %v1423
        %v1478 = vpack.c.b16 %v1428, %v1426
        %v1479 = vpack.c.b16 %v1429, %v1427
        %v1480 = vpack.c.b16 %v1432, %v1430
        %v1481 = vpack.c.b16 %v1433, %v1431
        %v1482 = vpack.c.b16 %v1436, %v1434
        %v1483 = vpack.c.b16 %v1437, %v1435
        %v1484 = vpack.c.b16 %v1440, %v1438
        %v1485 = vpack.c.b16 %v1441, %v1439
        %v1486 = vpack.c.b16 %v1444, %v1442
        %v1487 = vpack.c.b16 %v1445, %v1443
        %v1488 = vpack.c.b16 %v1448, %v1446
        %v1489 = vpack.c.b16 %v1449, %v1447
        %v1490 = vpack.c.b16 %v1452, %v1450
        %v1491 = vpack.c.b16 %v1453, %v1451
        %v1492 = vpack.c.b16 %v1456, %v1454
        %v1493 = vpack.c.b16 %v1457, %v1455
        %v1494 = vpack.c.b16 %v1460, %v1458
        %v1495 = vpack.c.b16 %v1461, %v1459
        %v1496 = vpack.c.b16 %v1464, %v1462
        %v1497 = vpack.c.b16 %v1465, %v1463
        %1530 = vmatprep.subr.bf16.mxu0 %v1467
        %1531 = vmatpush1.bf16.msra.mxu0 %v1466
        %1532 = vmatprep.subr.bf16.mxu0 %v1469
        %1533 = vmatpush1.bf16.msra.mxu0 %v1468
        %1534 = vmatprep.subr.bf16.mxu0 %v1471
        %1535 = vmatpush1.bf16.msra.mxu0 %v1470
        %1536 = vmatprep.subr.bf16.mxu0 %v1473
        %1537 = vmatpush1.bf16.msra.mxu0 %v1472
        %1538 = vmatprep.subr.bf16.mxu0 %v1475
        %1539 = vmatpush1.bf16.msra.mxu0 %v1474
        %1540 = vmatprep.subr.bf16.mxu0 %v1477
        %1541 = vmatpush1.bf16.msra.mxu0 %v1476
        %1542 = vmatprep.subr.bf16.mxu0 %v1479
        %1543 = vmatpush1.bf16.msra.mxu0 %v1478
        %1544 = vmatprep.subr.bf16.mxu0 %v1481
        %1545 = vmatpush1.bf16.msra.mxu0 %v1480
        %1546 = vmatprep.subr.bf16.mxu0 %v1483
        %1547 = vmatpush1.bf16.msra.mxu0 %v1482
        %1548 = vmatprep.subr.bf16.mxu0 %v1485
        %1549 = vmatpush1.bf16.msra.mxu0 %v1484
        %1550 = vmatprep.subr.bf16.mxu0 %v1487
        %1551 = vmatpush1.bf16.msra.mxu0 %v1486
        %1552 = vmatprep.subr.bf16.mxu0 %v1489
        %1553 = vmatpush1.bf16.msra.mxu0 %v1488
        %1554 = vmatprep.subr.bf16.mxu0 %v1491
        %1555 = vmatpush1.bf16.msra.mxu0 %v1490
        %1556 = vmatprep.subr.bf16.mxu0 %v1493
        %1557 = vmatpush1.bf16.msra.mxu0 %v1492
        %1558 = vmatprep.subr.bf16.mxu0 %v1495
        %1559 = vmatpush1.bf16.msra.mxu0 %v1494
        %1560 = vmatprep.subr.bf16.mxu0 %v1497
        %1561 = vmatpush1.bf16.msra.mxu0 %v1496
        %1562 = vmatprep.mubr.bf16.mxu0 %v1358
        %1563 = vmatmul.mubr.bf16.gmra.mrb[0].mxu0 %v1357
        %v1564 = vpop.f32.mrb[0].mxu0
        %v1565 = vadd.f32 %v1363, %v1564
        %v1566 = vpop.f32.mrb[0].mxu0
        %v1567 = vadd.f32 %v1367, %v1566
        %v1568 = vpop.f32.mrb[0].mxu0
        %v1569 = vadd.f32 %v1363, %v1568
        %v1570 = vpop.f32.mrb[0].mxu0
        %v1571 = vadd.f32 %v1367, %v1570
        %1572 = vdwg.mxu0
        %v1573 = vld [vmem:[#allocation19] sm:$0xff]
        %v1574 = vld [vmem:[#allocation19 + $0x8] sm:$0xff]
        %v1575 = vld [vmem:[#allocation19 + $0x10] sm:$0xff]
        %v1576 = vld [vmem:[#allocation19 + $0x18] sm:$0xff]
        %v1577 = vld [vmem:[#allocation19 + $0x20] sm:$0xff]
        %v1578 = vld [vmem:[#allocation19 + $0x28] sm:$0xff]
        %v1579 = vld [vmem:[#allocation19 + $0x30] sm:$0xff]
        %v1580 = vld [vmem:[#allocation19 + $0x38] sm:$0xff]
        %v1581 = vld [vmem:[#allocation19 + $0x40] sm:$0xff]
        %v1582 = vld [vmem:[#allocation19 + $0x48] sm:$0xff]
        %v1583 = vld [vmem:[#allocation19 + $0x50] sm:$0xff]
        %v1584 = vld [vmem:[#allocation19 + $0x58] sm:$0xff]
        %v1585 = vld [vmem:[#allocation19 + $0x60] sm:$0xff]
        %v1586 = vld [vmem:[#allocation19 + $0x68] sm:$0xff]
        %v1587 = vld [vmem:[#allocation19 + $0x70] sm:$0xff]
        %v1588 = vld [vmem:[#allocation19 + $0x78] sm:$0xff]
        %v1589 = vld [vmem:[#allocation21] sm:$0x3]
        %v1590 = vpack.c.bf16 %v1038, %v1041
        %v1592 = vlaneseq
        %v1593 = vshrl.u32 %v1592, 7
        %v1594 = vsub.s32 0, %v1593
        %v1595 = vrot.slane %v1589, %v1594
        %v1596 = vlaneseq
        %v1597 = vshrl.u32 %v1596, 7
        %v1598 = vsub.s32 1, %v1597
        %v1599 = vrot.slane %v1589, %v1598
        %v1618 = vunpack.c.l.b16 %v1573
        %v1619 = vunpack.c.h.b16 %v1573
        %v1620 = vunpack.c.l.b16 %v1574
        %v1621 = vunpack.c.h.b16 %v1574
        %v1622 = vunpack.c.l.b16 %v1575
        %v1623 = vunpack.c.h.b16 %v1575
        %v1624 = vunpack.c.l.b16 %v1576
        %v1625 = vunpack.c.h.b16 %v1576
        %v1626 = vunpack.c.l.b16 %v1577
        %v1627 = vunpack.c.h.b16 %v1577
        %v1628 = vunpack.c.l.b16 %v1578
        %v1629 = vunpack.c.h.b16 %v1578
        %v1630 = vunpack.c.l.b16 %v1579
        %v1631 = vunpack.c.h.b16 %v1579
        %v1632 = vunpack.c.l.b16 %v1580
        %v1633 = vunpack.c.h.b16 %v1580
        %v1634 = vunpack.c.l.b16 %v1581
        %v1635 = vunpack.c.h.b16 %v1581
        %v1636 = vunpack.c.l.b16 %v1582
        %v1637 = vunpack.c.h.b16 %v1582
        %v1638 = vunpack.c.l.b16 %v1583
        %v1639 = vunpack.c.h.b16 %v1583
        %v1640 = vunpack.c.l.b16 %v1584
        %v1641 = vunpack.c.h.b16 %v1584
        %v1642 = vunpack.c.l.b16 %v1585
        %v1643 = vunpack.c.h.b16 %v1585
        %v1644 = vunpack.c.l.b16 %v1586
        %v1645 = vunpack.c.h.b16 %v1586
        %v1646 = vunpack.c.l.b16 %v1587
        %v1647 = vunpack.c.h.b16 %v1587
        %v1648 = vunpack.c.l.b16 %v1588
        %v1649 = vunpack.c.h.b16 %v1588
        %v1650 = vpack.c.b16 %v1620, %v1618
        %v1651 = vpack.c.b16 %v1621, %v1619
        %v1652 = vpack.c.b16 %v1624, %v1622
        %v1653 = vpack.c.b16 %v1625, %v1623
        %v1654 = vpack.c.b16 %v1628, %v1626
        %v1655 = vpack.c.b16 %v1629, %v1627
        %v1656 = vpack.c.b16 %v1632, %v1630
        %v1657 = vpack.c.b16 %v1633, %v1631
        %v1658 = vpack.c.b16 %v1636, %v1634
        %v1659 = vpack.c.b16 %v1637, %v1635
        %v1660 = vpack.c.b16 %v1640, %v1638
        %v1661 = vpack.c.b16 %v1641, %v1639
        %v1662 = vpack.c.b16 %v1644, %v1642
        %v1663 = vpack.c.b16 %v1645, %v1643
        %v1664 = vpack.c.b16 %v1648, %v1646
        %v1665 = vpack.c.b16 %v1649, %v1647
        %1682 = vmatprep.subr.bf16.mxu0 %v1651
        %1683 = vmatpush1.bf16.msra.mxu0 %v1650
        %1684 = vmatprep.subr.bf16.mxu0 %v1653
        %1685 = vmatpush1.bf16.msra.mxu0 %v1652
        %1686 = vmatprep.subr.bf16.mxu0 %v1655
        %1687 = vmatpush1.bf16.msra.mxu0 %v1654
        %1688 = vmatprep.subr.bf16.mxu0 %v1657
        %1689 = vmatpush1.bf16.msra.mxu0 %v1656
        %1690 = vmatprep.subr.bf16.mxu0 %v1659
        %1691 = vmatpush1.bf16.msra.mxu0 %v1658
        %1692 = vmatprep.subr.bf16.mxu0 %v1661
        %1693 = vmatpush1.bf16.msra.mxu0 %v1660
        %1694 = vmatprep.subr.bf16.mxu0 %v1663
        %1695 = vmatpush1.bf16.msra.mxu0 %v1662
        %1696 = vmatprep.subr.bf16.mxu0 %v1665
        %1697 = vmatpush1.bf16.msra.mxu0 %v1664
        %1698 = vmatprep.subr.bf16.mxu0 0
        %1699 = vmatpush1.bf16.msra.mxu0 0
        %1700 = vmatprep.subr.bf16.mxu0 0
        %1701 = vmatpush1.bf16.msra.mxu0 0
        %1702 = vmatprep.subr.bf16.mxu0 0
        %1703 = vmatpush1.bf16.msra.mxu0 0
        %1704 = vmatprep.subr.bf16.mxu0 0
        %1705 = vmatpush1.bf16.msra.mxu0 0
        %1706 = vmatprep.subr.bf16.mxu0 0
        %1707 = vmatpush1.bf16.msra.mxu0 0
        %1708 = vmatprep.subr.bf16.mxu0 0
        %1709 = vmatpush1.bf16.msra.mxu0 0
        %1710 = vmatprep.subr.bf16.mxu0 0
        %1711 = vmatpush1.bf16.msra.mxu0 0
        %1712 = vmatprep.subr.bf16.mxu0 0
        %1713 = vmatpush1.bf16.msra.mxu0 0
        %1714 = vmatprep.mubr.bf16.mxu0 0
        %1715 = vmatmul.mubr.bf16.gmra.mrb[0].mxu0 %v1590
        %v1716 = vpop.f32.mrb[0].mxu0
        %v1717 = vadd.f32 %v1595, %v1716
        %v1718 = vpop.f32.mrb[0].mxu0
        %v1719 = vadd.f32 %v1599, %v1718
        %v1720 = vpop.f32.mrb[0].mxu0
        %v1721 = vadd.f32 %v1595, %v1720
        %v1722 = vpop.f32.mrb[0].mxu0
        %v1723 = vadd.f32 %v1599, %v1722
        %1724 = vdwg.mxu0
        %v1725 = vadd.f32 %v1565, %v1717
        %v1726 = vadd.f32 %v1567, %v1719
        %v1727 = vadd.f32 %v1569, %v1721
        %v1728 = vadd.f32 %v1571, %v1723
        %v1729 = vld [vmem:[#allocation22] sm:$0x3]
        %v1730 = vld [vmem:[#allocation24] sm:$0x3]
        %v1731 = vadd.f32 %v1725, %v1726
        %1732 = vadd.xlane.f32.xlu0 %v1731
        %v1733 = vpop.xlane.xlu0 %1732
        %v1734 = vsel %vm1040, %v1727, 0.0
        %v1735 = vsel %vm1040, %v1728, 0.0
        %v1736 = vadd.f32 %v1734, %v1735
        %1737 = vadd.xlane.f32.xlu0 %v1736
        %v1738 = vpop.xlane.xlu0 %1737
        %v1739 = vmul.f32 %v1733, %v1253
        %v1740 = vmul.f32 %v1738, %v1253
        %v1741 = vsub.f32 %v1725, %v1739
        %v1742 = vsub.f32 %v1726, %v1739
        %v1743 = vsub.f32 %v1727, %v1740
        %v1744 = vsub.f32 %v1728, %v1740
        %v1745 = vmul.f32 %v1741, %v1741
        %v1746 = vmul.f32 %v1742, %v1742
        %v1747 = vmul.f32 %v1743, %v1743
        %v1748 = vmul.f32 %v1744, %v1744
        %v1749 = vadd.f32 %v1745, %v1746
        %1750 = vadd.xlane.f32.xlu0 %v1749
        %v1751 = vpop.xlane.xlu0 %1750
        %v1752 = vsel %vm1040, %v1747, 0.0
        %v1753 = vsel %vm1040, %v1748, 0.0
        %v1754 = vadd.f32 %v1752, %v1753
        %1755 = vadd.xlane.f32.xlu0 %v1754
        %v1756 = vpop.xlane.xlu0 %1755
        %v1757 = vmul.f32 %v1751, %v1253
        %v1758 = vmul.f32 %v1756, %v1253
        %v1759 = vadd.f32 %v1757, 1e-05
        %v1760 = vadd.f32 %v1758, 1e-05
        %v1761 = vrsqrt.pop %v1759
        %v1762 = vrsqrt.pop %v1760
        %v1763 = vmul.f32 %v1741, %v1761
        %v1764 = vmul.f32 %v1742, %v1761
        %v1765 = vmul.f32 %v1743, %v1762
        %v1766 = vmul.f32 %v1744, %v1762
        %v1768 = vlaneseq
        %v1769 = vshrl.u32 %v1768, 7
        %v1770 = vsub.s32 0, %v1769
        %v1771 = vrot.slane %v1729, %v1770
        %v1772 = vlaneseq
        %v1773 = vshrl.u32 %v1772, 7
        %v1774 = vsub.s32 1, %v1773
        %v1775 = vrot.slane %v1729, %v1774
        %v1778 = vmul.f32 %v1763, %v1771
        %v1779 = vmul.f32 %v1764, %v1775
        %v1780 = vmul.f32 %v1765, %v1771
        %v1781 = vmul.f32 %v1766, %v1775
        %v1783 = vlaneseq
        %v1784 = vshrl.u32 %v1783, 7
        %v1785 = vsub.s32 0, %v1784
        %v1786 = vrot.slane %v1730, %v1785
        %v1787 = vlaneseq
        %v1788 = vshrl.u32 %v1787, 7
        %v1789 = vsub.s32 1, %v1788
        %v1790 = vrot.slane %v1730, %v1789
        %v1793 = vadd.f32 %v1778, %v1786
        %v1794 = vadd.f32 %v1779, %v1790
        %v1795 = vadd.f32 %v1780, %v1786
        %v1796 = vadd.f32 %v1781, %v1790
        %vm1797 = vcmp.ge.f32.partialorder %v1793, 0.0
        %vm1798 = vcmp.ge.f32.partialorder %v1794, 0.0
        %vm1799 = vcmp.ge.f32.partialorder %v1795, 0.0
        %vm1800 = vcmp.ge.f32.partialorder %v1796, 0.0
        %v1801 = vmul.f32 %v1793, 0.1
        %v1802 = vmul.f32 %v1794, 0.1
        %v1803 = vmul.f32 %v1795, 0.1
        %v1804 = vmul.f32 %v1796, 0.1
        %v1805 = vsel %vm1797, %v1793, %v1801
        %v1806 = vsel %vm1798, %v1794, %v1802
        %v1807 = vsel %vm1799, %v1795, %v1803
        %v1808 = vsel %vm1800, %v1796, %v1804
        %v1809 = vld [vmem:[#allocation25] sm:$0xff]
        %v1810 = vld [vmem:[#allocation25 + $0x8] sm:$0xff]
        %v1811 = vld [vmem:[#allocation25 + $0x10] sm:$0xff]
        %v1812 = vld [vmem:[#allocation25 + $0x18] sm:$0xff]
        %v1813 = vld [vmem:[#allocation25 + $0x20] sm:$0xff]
        %v1814 = vld [vmem:[#allocation25 + $0x28] sm:$0xff]
        %v1815 = vld [vmem:[#allocation25 + $0x30] sm:$0xff]
        %v1816 = vld [vmem:[#allocation25 + $0x38] sm:$0xff]
        %v1817 = vld [vmem:[#allocation25 + $0x40] sm:$0xff]
        %v1818 = vld [vmem:[#allocation25 + $0x48] sm:$0xff]
        %v1819 = vld [vmem:[#allocation25 + $0x50] sm:$0xff]
        %v1820 = vld [vmem:[#allocation25 + $0x58] sm:$0xff]
        %v1821 = vld [vmem:[#allocation25 + $0x60] sm:$0xff]
        %v1822 = vld [vmem:[#allocation25 + $0x68] sm:$0xff]
        %v1823 = vld [vmem:[#allocation25 + $0x70] sm:$0xff]
        %v1824 = vld [vmem:[#allocation25 + $0x78] sm:$0xff]
        %v1825 = vld [vmem:[#allocation25 + $0x80] sm:$0xff]
        %v1826 = vld [vmem:[#allocation25 + $0x88] sm:$0xff]
        %v1827 = vld [vmem:[#allocation25 + $0x90] sm:$0xff]
        %v1828 = vld [vmem:[#allocation25 + $0x98] sm:$0xff]
        %v1829 = vld [vmem:[#allocation25 + $0xa0] sm:$0xff]
        %v1830 = vld [vmem:[#allocation25 + $0xa8] sm:$0xff]
        %v1831 = vld [vmem:[#allocation25 + $0xb0] sm:$0xff]
        %v1832 = vld [vmem:[#allocation25 + $0xb8] sm:$0xff]
        %v1833 = vld [vmem:[#allocation25 + $0xc0] sm:$0xff]
        %v1834 = vld [vmem:[#allocation25 + $0xc8] sm:$0xff]
        %v1835 = vld [vmem:[#allocation25 + $0xd0] sm:$0xff]
        %v1836 = vld [vmem:[#allocation25 + $0xd8] sm:$0xff]
        %v1837 = vld [vmem:[#allocation25 + $0xe0] sm:$0xff]
        %v1838 = vld [vmem:[#allocation25 + $0xe8] sm:$0xff]
        %v1839 = vld [vmem:[#allocation25 + $0xf0] sm:$0xff]
        %v1840 = vld [vmem:[#allocation25 + $0xf8] sm:$0xff]
        %v1841 = vld [vmem:[#allocation27] sm:$0x3]
        %v1842 = vpack.c.bf16 %v1807, %v1805
        %v1843 = vpack.c.bf16 %v1808, %v1806
        %v1845 = vlaneseq
        %v1846 = vshrl.u32 %v1845, 7
        %v1847 = vsub.s32 0, %v1846
        %v1848 = vrot.slane %v1841, %v1847
        %v1849 = vlaneseq
        %v1850 = vshrl.u32 %v1849, 7
        %v1851 = vsub.s32 1, %v1850
        %v1852 = vrot.slane %v1841, %v1851
        %v1887 = vunpack.c.l.b16 %v1809
        %v1888 = vunpack.c.h.b16 %v1809
        %v1889 = vunpack.c.l.b16 %v1810
        %v1890 = vunpack.c.h.b16 %v1810
        %v1891 = vunpack.c.l.b16 %v1811
        %v1892 = vunpack.c.h.b16 %v1811
        %v1893 = vunpack.c.l.b16 %v1812
        %v1894 = vunpack.c.h.b16 %v1812
        %v1895 = vunpack.c.l.b16 %v1813
        %v1896 = vunpack.c.h.b16 %v1813
        %v1897 = vunpack.c.l.b16 %v1814
        %v1898 = vunpack.c.h.b16 %v1814
        %v1899 = vunpack.c.l.b16 %v1815
        %v1900 = vunpack.c.h.b16 %v1815
        %v1901 = vunpack.c.l.b16 %v1816
        %v1902 = vunpack.c.h.b16 %v1816
        %v1903 = vunpack.c.l.b16 %v1817
        %v1904 = vunpack.c.h.b16 %v1817
        %v1905 = vunpack.c.l.b16 %v1818
        %v1906 = vunpack.c.h.b16 %v1818
        %v1907 = vunpack.c.l.b16 %v1819
        %v1908 = vunpack.c.h.b16 %v1819
        %v1909 = vunpack.c.l.b16 %v1820
        %v1910 = vunpack.c.h.b16 %v1820
        %v1911 = vunpack.c.l.b16 %v1821
        %v1912 = vunpack.c.h.b16 %v1821
        %v1913 = vunpack.c.l.b16 %v1822
        %v1914 = vunpack.c.h.b16 %v1822
        %v1915 = vunpack.c.l.b16 %v1823
        %v1916 = vunpack.c.h.b16 %v1823
        %v1917 = vunpack.c.l.b16 %v1824
        %v1918 = vunpack.c.h.b16 %v1824
        %v1919 = vunpack.c.l.b16 %v1825
        %v1920 = vunpack.c.h.b16 %v1825
        %v1921 = vunpack.c.l.b16 %v1826
        %v1922 = vunpack.c.h.b16 %v1826
        %v1923 = vunpack.c.l.b16 %v1827
        %v1924 = vunpack.c.h.b16 %v1827
        %v1925 = vunpack.c.l.b16 %v1828
        %v1926 = vunpack.c.h.b16 %v1828
        %v1927 = vunpack.c.l.b16 %v1829
        %v1928 = vunpack.c.h.b16 %v1829
        %v1929 = vunpack.c.l.b16 %v1830
        %v1930 = vunpack.c.h.b16 %v1830
        %v1931 = vunpack.c.l.b16 %v1831
        %v1932 = vunpack.c.h.b16 %v1831
        %v1933 = vunpack.c.l.b16 %v1832
        %v1934 = vunpack.c.h.b16 %v1832
        %v1935 = vunpack.c.l.b16 %v1833
        %v1936 = vunpack.c.h.b16 %v1833
        %v1937 = vunpack.c.l.b16 %v1834
        %v1938 = vunpack.c.h.b16 %v1834
        %v1939 = vunpack.c.l.b16 %v1835
        %v1940 = vunpack.c.h.b16 %v1835
        %v1941 = vunpack.c.l.b16 %v1836
        %v1942 = vunpack.c.h.b16 %v1836
        %v1943 = vunpack.c.l.b16 %v1837
        %v1944 = vunpack.c.h.b16 %v1837
        %v1945 = vunpack.c.l.b16 %v1838
        %v1946 = vunpack.c.h.b16 %v1838
        %v1947 = vunpack.c.l.b16 %v1839
        %v1948 = vunpack.c.h.b16 %v1839
        %v1949 = vunpack.c.l.b16 %v1840
        %v1950 = vunpack.c.h.b16 %v1840
        %v1951 = vpack.c.b16 %v1889, %v1887
        %v1952 = vpack.c.b16 %v1890, %v1888
        %v1953 = vpack.c.b16 %v1893, %v1891
        %v1954 = vpack.c.b16 %v1894, %v1892
        %v1955 = vpack.c.b16 %v1897, %v1895
        %v1956 = vpack.c.b16 %v1898, %v1896
        %v1957 = vpack.c.b16 %v1901, %v1899
        %v1958 = vpack.c.b16 %v1902, %v1900
        %v1959 = vpack.c.b16 %v1905, %v1903
        %v1960 = vpack.c.b16 %v1906, %v1904
        %v1961 = vpack.c.b16 %v1909, %v1907
        %v1962 = vpack.c.b16 %v1910, %v1908
        %v1963 = vpack.c.b16 %v1913, %v1911
        %v1964 = vpack.c.b16 %v1914, %v1912
        %v1965 = vpack.c.b16 %v1917, %v1915
        %v1966 = vpack.c.b16 %v1918, %v1916
        %v1967 = vpack.c.b16 %v1921, %v1919
        %v1968 = vpack.c.b16 %v1922, %v1920
        %v1969 = vpack.c.b16 %v1925, %v1923
        %v1970 = vpack.c.b16 %v1926, %v1924
        %v1971 = vpack.c.b16 %v1929, %v1927
        %v1972 = vpack.c.b16 %v1930, %v1928
        %v1973 = vpack.c.b16 %v1933, %v1931
        %v1974 = vpack.c.b16 %v1934, %v1932
        %v1975 = vpack.c.b16 %v1937, %v1935
        %v1976 = vpack.c.b16 %v1938, %v1936
        %v1977 = vpack.c.b16 %v1941, %v1939
        %v1978 = vpack.c.b16 %v1942, %v1940
        %v1979 = vpack.c.b16 %v1945, %v1943
        %v1980 = vpack.c.b16 %v1946, %v1944
        %v1981 = vpack.c.b16 %v1949, %v1947
        %v1982 = vpack.c.b16 %v1950, %v1948
        %2015 = vmatprep.subr.bf16.mxu0 %v1952
        %2016 = vmatpush1.bf16.msra.mxu0 %v1951
        %2017 = vmatprep.subr.bf16.mxu0 %v1954
        %2018 = vmatpush1.bf16.msra.mxu0 %v1953
        %2019 = vmatprep.subr.bf16.mxu0 %v1956
        %2020 = vmatpush1.bf16.msra.mxu0 %v1955
        %2021 = vmatprep.subr.bf16.mxu0 %v1958
        %2022 = vmatpush1.bf16.msra.mxu0 %v1957
        %2023 = vmatprep.subr.bf16.mxu0 %v1960
        %2024 = vmatpush1.bf16.msra.mxu0 %v1959
        %2025 = vmatprep.subr.bf16.mxu0 %v1962
        %2026 = vmatpush1.bf16.msra.mxu0 %v1961
        %2027 = vmatprep.subr.bf16.mxu0 %v1964
        %2028 = vmatpush1.bf16.msra.mxu0 %v1963
        %2029 = vmatprep.subr.bf16.mxu0 %v1966
        %2030 = vmatpush1.bf16.msra.mxu0 %v1965
        %2031 = vmatprep.subr.bf16.mxu0 %v1968
        %2032 = vmatpush1.bf16.msra.mxu0 %v1967
        %2033 = vmatprep.subr.bf16.mxu0 %v1970
        %2034 = vmatpush1.bf16.msra.mxu0 %v1969
        %2035 = vmatprep.subr.bf16.mxu0 %v1972
        %2036 = vmatpush1.bf16.msra.mxu0 %v1971
        %2037 = vmatprep.subr.bf16.mxu0 %v1974
        %2038 = vmatpush1.bf16.msra.mxu0 %v1973
        %2039 = vmatprep.subr.bf16.mxu0 %v1976
        %2040 = vmatpush1.bf16.msra.mxu0 %v1975
        %2041 = vmatprep.subr.bf16.mxu0 %v1978
        %2042 = vmatpush1.bf16.msra.mxu0 %v1977
        %2043 = vmatprep.subr.bf16.mxu0 %v1980
        %2044 = vmatpush1.bf16.msra.mxu0 %v1979
        %2045 = vmatprep.subr.bf16.mxu0 %v1982
        %2046 = vmatpush1.bf16.msra.mxu0 %v1981
        %2047 = vmatprep.mubr.bf16.mxu0 %v1843
        %2048 = vmatmul.mubr.bf16.gmra.mrb[0].mxu0 %v1842
        %v2049 = vpop.f32.mrb[0].mxu0
        %v2050 = vadd.f32 %v1848, %v2049
        %v2051 = vpop.f32.mrb[0].mxu0
        %v2052 = vadd.f32 %v1852, %v2051
        %v2053 = vpop.f32.mrb[0].mxu0
        %v2054 = vadd.f32 %v1848, %v2053
        %v2055 = vpop.f32.mrb[0].mxu0
        %v2056 = vadd.f32 %v1852, %v2055
        %2057 = vdwg.mxu0
        %v2058 = vld [vmem:[#allocation28] sm:$0x3]
        %v2059 = vld [vmem:[#allocation30] sm:$0x3]
        %v2060 = vadd.f32 %v2050, %v2052
        %2061 = vadd.xlane.f32.xlu0 %v2060
        %v2062 = vpop.xlane.xlu0 %2061
        %v2063 = vsel %vm1040, %v2054, 0.0
        %v2064 = vsel %vm1040, %v2056, 0.0
        %v2065 = vadd.f32 %v2063, %v2064
        %2066 = vadd.xlane.f32.xlu0 %v2065
        %v2067 = vpop.xlane.xlu0 %2066
        %v2068 = vmul.f32 %v2062, %v1253
        %v2069 = vmul.f32 %v2067, %v1253
        %v2070 = vsub.f32 %v2050, %v2068
        %v2071 = vsub.f32 %v2052, %v2068
        %v2072 = vsub.f32 %v2054, %v2069
        %v2073 = vsub.f32 %v2056, %v2069
        %v2074 = vmul.f32 %v2070, %v2070
        %v2075 = vmul.f32 %v2071, %v2071
        %v2076 = vmul.f32 %v2072, %v2072
        %v2077 = vmul.f32 %v2073, %v2073
        %v2078 = vadd.f32 %v2074, %v2075
        %2079 = vadd.xlane.f32.xlu0 %v2078
        %v2080 = vpop.xlane.xlu0 %2079
        %v2081 = vsel %vm1040, %v2076, 0.0
        %v2082 = vsel %vm1040, %v2077, 0.0
        %v2083 = vadd.f32 %v2081, %v2082
        %2084 = vadd.xlane.f32.xlu0 %v2083
        %v2085 = vpop.xlane.xlu0 %2084
        %v2086 = vmul.f32 %v2080, %v1253
        %v2087 = vmul.f32 %v2085, %v1253
        %v2088 = vadd.f32 %v2086, 1e-05
        %v2089 = vadd.f32 %v2087, 1e-05
        %v2090 = vrsqrt.pop %v2088
        %v2091 = vrsqrt.pop %v2089
        %v2092 = vmul.f32 %v2070, %v2090
        %v2093 = vmul.f32 %v2071, %v2090
        %v2094 = vmul.f32 %v2072, %v2091
        %v2095 = vmul.f32 %v2073, %v2091
        %v2097 = vlaneseq
        %v2098 = vshrl.u32 %v2097, 7
        %v2099 = vsub.s32 0, %v2098
        %v2100 = vrot.slane %v2058, %v2099
        %v2101 = vlaneseq
        %v2102 = vshrl.u32 %v2101, 7
        %v2103 = vsub.s32 1, %v2102
        %v2104 = vrot.slane %v2058, %v2103
        %v2107 = vmul.f32 %v2092, %v2100
        %v2108 = vmul.f32 %v2093, %v2104
        %v2109 = vmul.f32 %v2094, %v2100
        %v2110 = vmul.f32 %v2095, %v2104
        %v2112 = vlaneseq
        %v2113 = vshrl.u32 %v2112, 7
        %v2114 = vsub.s32 0, %v2113
        %v2115 = vrot.slane %v2059, %v2114
        %v2116 = vlaneseq
        %v2117 = vshrl.u32 %v2116, 7
        %v2118 = vsub.s32 1, %v2117
        %v2119 = vrot.slane %v2059, %v2118
        %v2122 = vadd.f32 %v2107, %v2115
        %v2123 = vadd.f32 %v2108, %v2119
        %v2124 = vadd.f32 %v2109, %v2115
        %v2125 = vadd.f32 %v2110, %v2119
        %vm2126 = vcmp.ge.f32.partialorder %v2122, 0.0
        %vm2127 = vcmp.ge.f32.partialorder %v2123, 0.0
        %vm2128 = vcmp.ge.f32.partialorder %v2124, 0.0
        %vm2129 = vcmp.ge.f32.partialorder %v2125, 0.0
        %v2130 = vmul.f32 %v2122, 0.1
        %v2131 = vmul.f32 %v2123, 0.1
        %v2132 = vmul.f32 %v2124, 0.1
        %v2133 = vmul.f32 %v2125, 0.1
        %v2134 = vsel %vm2126, %v2122, %v2130
        %v2135 = vsel %vm2127, %v2123, %v2131
        %v2136 = vsel %vm2128, %v2124, %v2132
        %v2137 = vsel %vm2129, %v2125, %v2133
        %v2138 = vld [vmem:[#allocation31] sm:$0xff]
        %v2139 = vld [vmem:[#allocation31 + $0x8] sm:$0xff]
        %v2140 = vld [vmem:[#allocation31 + $0x10] sm:$0xff]
        %v2141 = vld [vmem:[#allocation31 + $0x18] sm:$0xff]
        %v2142 = vld [vmem:[#allocation31 + $0x20] sm:$0xff]
        %v2143 = vld [vmem:[#allocation31 + $0x28] sm:$0xff]
        %v2144 = vld [vmem:[#allocation31 + $0x30] sm:$0xff]
        %v2145 = vld [vmem:[#allocation31 + $0x38] sm:$0xff]
        %v2146 = vld [vmem:[#allocation31 + $0x40] sm:$0xff]
        %v2147 = vld [vmem:[#allocation31 + $0x48] sm:$0xff]
        %v2148 = vld [vmem:[#allocation31 + $0x50] sm:$0xff]
        %v2149 = vld [vmem:[#allocation31 + $0x58] sm:$0xff]
        %v2150 = vld [vmem:[#allocation31 + $0x60] sm:$0xff]
        %v2151 = vld [vmem:[#allocation31 + $0x68] sm:$0xff]
        %v2152 = vld [vmem:[#allocation31 + $0x70] sm:$0xff]
        %v2153 = vld [vmem:[#allocation31 + $0x78] sm:$0xff]
        %v2154 = vld [vmem:[#allocation31 + $0x80] sm:$0xff]
        %v2155 = vld [vmem:[#allocation31 + $0x88] sm:$0xff]
        %v2156 = vld [vmem:[#allocation31 + $0x90] sm:$0xff]
        %v2157 = vld [vmem:[#allocation31 + $0x98] sm:$0xff]
        %v2158 = vld [vmem:[#allocation31 + $0xa0] sm:$0xff]
        %v2159 = vld [vmem:[#allocation31 + $0xa8] sm:$0xff]
        %v2160 = vld [vmem:[#allocation31 + $0xb0] sm:$0xff]
        %v2161 = vld [vmem:[#allocation31 + $0xb8] sm:$0xff]
        %v2162 = vld [vmem:[#allocation31 + $0xc0] sm:$0xff]
        %v2163 = vld [vmem:[#allocation31 + $0xc8] sm:$0xff]
        %v2164 = vld [vmem:[#allocation31 + $0xd0] sm:$0xff]
        %v2165 = vld [vmem:[#allocation31 + $0xd8] sm:$0xff]
        %v2166 = vld [vmem:[#allocation31 + $0xe0] sm:$0xff]
        %v2167 = vld [vmem:[#allocation31 + $0xe8] sm:$0xff]
        %v2168 = vld [vmem:[#allocation31 + $0xf0] sm:$0xff]
        %v2169 = vld [vmem:[#allocation31 + $0xf8] sm:$0xff]
        %v2170 = vld [vmem:[#allocation33] sm:$0x3]
        %v2171 = vpack.c.bf16 %v2136, %v2134
        %v2172 = vpack.c.bf16 %v2137, %v2135
        %v2174 = vlaneseq
        %v2175 = vshrl.u32 %v2174, 7
        %v2176 = vsub.s32 0, %v2175
        %v2177 = vrot.slane %v2170, %v2176
        %v2178 = vlaneseq
        %v2179 = vshrl.u32 %v2178, 7
        %v2180 = vsub.s32 1, %v2179
        %v2181 = vrot.slane %v2170, %v2180
        %v2216 = vunpack.c.l.b16 %v2138
        %v2217 = vunpack.c.h.b16 %v2138
        %v2218 = vunpack.c.l.b16 %v2139
        %v2219 = vunpack.c.h.b16 %v2139
        %v2220 = vunpack.c.l.b16 %v2140
        %v2221 = vunpack.c.h.b16 %v2140
        %v2222 = vunpack.c.l.b16 %v2141
        %v2223 = vunpack.c.h.b16 %v2141
        %v2224 = vunpack.c.l.b16 %v2142
        %v2225 = vunpack.c.h.b16 %v2142
        %v2226 = vunpack.c.l.b16 %v2143
        %v2227 = vunpack.c.h.b16 %v2143
        %v2228 = vunpack.c.l.b16 %v2144
        %v2229 = vunpack.c.h.b16 %v2144
        %v2230 = vunpack.c.l.b16 %v2145
        %v2231 = vunpack.c.h.b16 %v2145
        %v2232 = vunpack.c.l.b16 %v2146
        %v2233 = vunpack.c.h.b16 %v2146
        %v2234 = vunpack.c.l.b16 %v2147
        %v2235 = vunpack.c.h.b16 %v2147
        %v2236 = vunpack.c.l.b16 %v2148
        %v2237 = vunpack.c.h.b16 %v2148
        %v2238 = vunpack.c.l.b16 %v2149
        %v2239 = vunpack.c.h.b16 %v2149
        %v2240 = vunpack.c.l.b16 %v2150
        %v2241 = vunpack.c.h.b16 %v2150
        %v2242 = vunpack.c.l.b16 %v2151
        %v2243 = vunpack.c.h.b16 %v2151
        %v2244 = vunpack.c.l.b16 %v2152
        %v2245 = vunpack.c.h.b16 %v2152
        %v2246 = vunpack.c.l.b16 %v2153
        %v2247 = vunpack.c.h.b16 %v2153
        %v2248 = vunpack.c.l.b16 %v2154
        %v2249 = vunpack.c.h.b16 %v2154
        %v2250 = vunpack.c.l.b16 %v2155
        %v2251 = vunpack.c.h.b16 %v2155
        %v2252 = vunpack.c.l.b16 %v2156
        %v2253 = vunpack.c.h.b16 %v2156
        %v2254 = vunpack.c.l.b16 %v2157
        %v2255 = vunpack.c.h.b16 %v2157
        %v2256 = vunpack.c.l.b16 %v2158
        %v2257 = vunpack.c.h.b16 %v2158
        %v2258 = vunpack.c.l.b16 %v2159
        %v2259 = vunpack.c.h.b16 %v2159
        %v2260 = vunpack.c.l.b16 %v2160
        %v2261 = vunpack.c.h.b16 %v2160
        %v2262 = vunpack.c.l.b16 %v2161
        %v2263 = vunpack.c.h.b16 %v2161
        %v2264 = vunpack.c.l.b16 %v2162
        %v2265 = vunpack.c.h.b16 %v2162
        %v2266 = vunpack.c.l.b16 %v2163
        %v2267 = vunpack.c.h.b16 %v2163
        %v2268 = vunpack.c.l.b16 %v2164
        %v2269 = vunpack.c.h.b16 %v2164
        %v2270 = vunpack.c.l.b16 %v2165
        %v2271 = vunpack.c.h.b16 %v2165
        %v2272 = vunpack.c.l.b16 %v2166
        %v2273 = vunpack.c.h.b16 %v2166
        %v2274 = vunpack.c.l.b16 %v2167
        %v2275 = vunpack.c.h.b16 %v2167
        %v2276 = vunpack.c.l.b16 %v2168
        %v2277 = vunpack.c.h.b16 %v2168
        %v2278 = vunpack.c.l.b16 %v2169
        %v2279 = vunpack.c.h.b16 %v2169
        %v2280 = vpack.c.b16 %v2218, %v2216
        %v2281 = vpack.c.b16 %v2219, %v2217
        %v2282 = vpack.c.b16 %v2222, %v2220
        %v2283 = vpack.c.b16 %v2223, %v2221
        %v2284 = vpack.c.b16 %v2226, %v2224
        %v2285 = vpack.c.b16 %v2227, %v2225
        %v2286 = vpack.c.b16 %v2230, %v2228
        %v2287 = vpack.c.b16 %v2231, %v2229
        %v2288 = vpack.c.b16 %v2234, %v2232
        %v2289 = vpack.c.b16 %v2235, %v2233
        %v2290 = vpack.c.b16 %v2238, %v2236
        %v2291 = vpack.c.b16 %v2239, %v2237
        %v2292 = vpack.c.b16 %v2242, %v2240
        %v2293 = vpack.c.b16 %v2243, %v2241
        %v2294 = vpack.c.b16 %v2246, %v2244
        %v2295 = vpack.c.b16 %v2247, %v2245
        %v2296 = vpack.c.b16 %v2250, %v2248
        %v2297 = vpack.c.b16 %v2251, %v2249
        %v2298 = vpack.c.b16 %v2254, %v2252
        %v2299 = vpack.c.b16 %v2255, %v2253
        %v2300 = vpack.c.b16 %v2258, %v2256
        %v2301 = vpack.c.b16 %v2259, %v2257
        %v2302 = vpack.c.b16 %v2262, %v2260
        %v2303 = vpack.c.b16 %v2263, %v2261
        %v2304 = vpack.c.b16 %v2266, %v2264
        %v2305 = vpack.c.b16 %v2267, %v2265
        %v2306 = vpack.c.b16 %v2270, %v2268
        %v2307 = vpack.c.b16 %v2271, %v2269
        %v2308 = vpack.c.b16 %v2274, %v2272
        %v2309 = vpack.c.b16 %v2275, %v2273
        %v2310 = vpack.c.b16 %v2278, %v2276
        %v2311 = vpack.c.b16 %v2279, %v2277
        %2344 = vmatprep.subr.bf16.mxu0 %v2281
        %2345 = vmatpush1.bf16.msra.mxu0 %v2280
        %2346 = vmatprep.subr.bf16.mxu0 %v2283
        %2347 = vmatpush1.bf16.msra.mxu0 %v2282
        %2348 = vmatprep.subr.bf16.mxu0 %v2285
        %2349 = vmatpush1.bf16.msra.mxu0 %v2284
        %2350 = vmatprep.subr.bf16.mxu0 %v2287
        %2351 = vmatpush1.bf16.msra.mxu0 %v2286
        %2352 = vmatprep.subr.bf16.mxu0 %v2289
        %2353 = vmatpush1.bf16.msra.mxu0 %v2288
        %2354 = vmatprep.subr.bf16.mxu0 %v2291
        %2355 = vmatpush1.bf16.msra.mxu0 %v2290
        %2356 = vmatprep.subr.bf16.mxu0 %v2293
        %2357 = vmatpush1.bf16.msra.mxu0 %v2292
        %2358 = vmatprep.subr.bf16.mxu0 %v2295
        %2359 = vmatpush1.bf16.msra.mxu0 %v2294
        %2360 = vmatprep.subr.bf16.mxu0 %v2297
        %2361 = vmatpush1.bf16.msra.mxu0 %v2296
        %2362 = vmatprep.subr.bf16.mxu0 %v2299
        %2363 = vmatpush1.bf16.msra.mxu0 %v2298
        %2364 = vmatprep.subr.bf16.mxu0 %v2301
        %2365 = vmatpush1.bf16.msra.mxu0 %v2300
        %2366 = vmatprep.subr.bf16.mxu0 %v2303
        %2367 = vmatpush1.bf16.msra.mxu0 %v2302
        %2368 = vmatprep.subr.bf16.mxu0 %v2305
        %2369 = vmatpush1.bf16.msra.mxu0 %v2304
        %2370 = vmatprep.subr.bf16.mxu0 %v2307
        %2371 = vmatpush1.bf16.msra.mxu0 %v2306
        %2372 = vmatprep.subr.bf16.mxu0 %v2309
        %2373 = vmatpush1.bf16.msra.mxu0 %v2308
        %2374 = vmatprep.subr.bf16.mxu0 %v2311
        %2375 = vmatpush1.bf16.msra.mxu0 %v2310
        %2376 = vmatprep.mubr.bf16.mxu0 %v2172
        %2377 = vmatmul.mubr.bf16.gmra.mrb[0].mxu0 %v2171
        %v2378 = vpop.f32.mrb[0].mxu0
        %v2379 = vadd.f32 %v2177, %v2378
        %v2380 = vpop.f32.mrb[0].mxu0
        %v2381 = vadd.f32 %v2181, %v2380
        %v2382 = vpop.f32.mrb[0].mxu0
        %v2383 = vadd.f32 %v2177, %v2382
        %v2384 = vpop.f32.mrb[0].mxu0
        %v2385 = vadd.f32 %v2181, %v2384
        %2386 = vdwg.mxu0
        %v2387 = vadd.f32 %v2379, %v1725
        %v2388 = vadd.f32 %v2381, %v1726
        %v2389 = vadd.f32 %v2383, %v1727
        %v2390 = vadd.f32 %v2385, %v1728
        %2391 = vst [vmem:[%s953] sm:$0xff] %v2387
        %2392 = vst [vmem:[%s953 + $0x8] sm:$0xff] %v2388
        %2393 = vst [vmem:[%s953 + $0x10] sm:$0x3] %v2389
        %2394 = vst [vmem:[%s953 + $0x18] sm:$0x3] %v2390
        %p2395 = scmp.lt.s32.totalorder %s44, 1
        %s2396 = scalar_select %p2395, %s44, 1
        %s2397 = smul.addr %s2396, 4
        %s2398 = smul.addr %s2397, 8
        %s2399 = scalar_lea.vmem %s22, %s2398
        // Predicated region
        $region193: #{deepmsn_forward.3} parent=107 // pred_check
          %p2400 = pneg %p529
        $region194: #{deepmsn_forward.3} parent=107 // pred_check_branch
          %2402 = sbr.rel (%p2400) target = $region196
        $region195: #{deepmsn_forward.3} parent=107 // pred_region
          _
        $region196: #{deepmsn_forward.3} parent=107 // pred_fallthru
          _
      $region108: #{deepmsn_forward.3} parent=5 // pred_fallthru
        _
      %p2403 = scmp.le.s32.totalorder 2, %s39
      // Predicated region
      $region197: #{deepmsn_forward.3} parent=5 // pred_check
        %p2404 = pneg %p2403
      $region198: #{deepmsn_forward.3} parent=5 // pred_check_branch
        %2406 = sbr.rel (%p2404) target = $region200
      $region199: #{deepmsn_forward.3} parent=5 // pred_region
        %s2407 = ssub.s32 %s39, 2
        // Predicated region
        $region201: #{deepmsn_forward.3} parent=199 // pred_check
          %p2408 = pneg %p535
        $region202: #{deepmsn_forward.3} parent=199 // pred_check_branch
          %2410 = sbr.rel (%p2408) target = $region204
        $region203: #{deepmsn_forward.3} parent=199 // pred_region
          %p2411 = scmp.lt.s32.totalorder %s45, 1
          %s2412 = scalar_select %p2411, %s45, 1
          %s2413 = smul.addr %s2412, 4
          %s2414 = smul.addr %s2413, 8
          %s2415 = scalar_lea.vmem %s22, %s2414
        $region204: #{deepmsn_forward.3} parent=199 // pred_fallthru
          _
      $region200: #{deepmsn_forward.3} parent=5 // pred_fallthru
        _
    $region6: #{deepmsn_forward.3} parent=1 // loop_footer
      %s43 = sadd.s32 1, %s39
    $region7: #{deepmsn_forward.3} parent=1 // loop_footer_branch
      %38 = sbr.rel target = $region3
    $region8: #{deepmsn_forward.3} parent=1 // loop_exit
      _
    %2416 = vsyncpa [#allocation3], 1
    %s2417 = scalar_lea.sflag [#allocation3], 1
    %2418 = vsyncpa %s2417, 1
    %2419 = vsyncpa [#allocation5], 1
    %2420 = vsyncpa [#allocation8], 1
    %2421 = vsyncpa [#allocation11], 1
    %2422 = vsyncpa [#allocation14], 1
    %2423 = vsyncpa [#allocation17], 1
    %2424 = vsyncpa [#allocation20], 1
    %2425 = vsyncpa [#allocation23], 1
    %2426 = vsyncpa [#allocation26], 1
    %2427 = vsyncpa [#allocation29], 1
    %2428 = vsyncpa [#allocation32], 1

// kernel: deepmsn_forward.4
$region0: #{deepmsn_forward.4}
  #allocation0 [shape = 'u32[]', space=smem, size = 0x4, offset = 0x4, fixed_abs, tag = 'smem constant byte address 0x4 - core index']
  #allocation1 [shape = 'u32[144,128]{1,0:T(1,128)}', space=vmem, size = 0x12000, scoped, tag = 'internal scratch']
  #allocation2 [shape = 'f32[10,256]{1,0:T(8,128)}', space=vmem, size = 0x4000, scoped, tag = 'scratch operand']
  %s0 = inlined_call_operand.vmem [shape: f32[2,10,256], index: 0, kind: input, shape index: {}]
  %s1 = inlined_call_operand.vmem [shape: f32[2,1,256], index: 1, kind: input, shape index: {}]
  %s2 = inlined_call_operand.vmem [shape: f32[2,1,256], index: 2, kind: input, shape index: {}]
  %s3 = inlined_call_operand.hbm [shape: bf16[2,256,768], index: 3, kind: input, shape index: {}]
  %s4 = inlined_call_operand.vmem [shape: f32[2,1,768], index: 4, kind: input, shape index: {}]
  %s5 = inlined_call_operand.hbm [shape: bf16[2,256,256], index: 5, kind: input, shape index: {}]
  %s6 = inlined_call_operand.vmem [shape: f32[2,1,256], index: 6, kind: input, shape index: {}]
  %s7 = inlined_call_operand.vmem [shape: f32[2,1,256], index: 7, kind: input, shape index: {}]
  %s8 = inlined_call_operand.vmem [shape: f32[2,1,256], index: 8, kind: input, shape index: {}]
  %s9 = inlined_call_operand.hbm [shape: bf16[2,256,1024], index: 9, kind: input, shape index: {}]
  %s10 = inlined_call_operand.vmem [shape: f32[2,1,1024], index: 10, kind: input, shape index: {}]
  %s11 = inlined_call_operand.vmem [shape: bf16[2,512,256], index: 11, kind: input, shape index: {}]
  %s12 = inlined_call_operand.vmem [shape: f32[2,1,256], index: 12, kind: input, shape index: {}]
  %s13 = inlined_call_operand.vmem [shape: f32[2,1,256], index: 13, kind: output, shape index: {}]
  %s14 = sld [smem:[#allocation0]]
  $region105: #{deepmsn_forward.4} parent=0
    _
  %s16 = ssub.s32 1, %s14
  %s17 = scalar_select 0, %s16, %s14
  $region1: #{deepmsn_forward.4} parent=0
    #allocation3 [shape = 'u8[786432]{0}', space=vmem, size = 0xc0000, scoped, tag = 'input window, operand 3']
    #allocation4 [shape = 's32[2]{0}', space=sflag, size = 0x8, scoped, tag = 'scoped memory for deepmsn_forward.4']
    #allocation5 [shape = 'u8[262144]{0}', space=vmem, size = 0x40000, scoped, tag = 'input window, operand 5']
    #allocation6 [shape = 's32[2]{0}', space=sflag, size = 0x8, scoped, tag = 'scoped memory for deepmsn_forward.4']
    #allocation7 [shape = 'u8[1048576]{0}', space=vmem, size = 0x100000, scoped, tag = 'input window, operand 9']
    %18 = vsyncpa [#allocation4], 0
    %s19 = scalar_lea.sflag [#allocation4], 1
    %20 = vsyncpa %s19, 0
    %21 = vsyncpa [#allocation6], 0
    %s22 = scalar_lea.sflag [#allocation6], 1
    %23 = vsyncpa %s22, 0
    loop: start=0, step=1, limit=6
    $region2: #{deepmsn_forward.4} parent=1 // loop_pre_header
      _
    $region3: #{deepmsn_forward.4} parent=1 // loop_header
      %s25 = sphi 0, %s29
      %p26 = scmp.ge.s32.totalorder %s25, 6
      %s32 = sphi 0, %s44
      %s33 = sphi 0, %s40
      %s34 = sphi 0, %s32
      %s35 = sphi 0, %s33
      %s36 = sphi 0, %s34
      %s37 = sphi 0, %s35
      %s47 = sphi 0, %s49
      %s50 = sphi 0, %s47
      %s51 = sphi 0, %s50
      %s67 = sphi 0, %s51
      %s73 = sphi 0, %s75
      %s76 = sphi 0, %s73
      %s77 = sphi 0, %s76
      %s93 = sphi 0, %s77
      %s99 = sphi 0, %s101
      %s102 = sphi 0, %s99
      %s103 = sphi 0, %s102
      %s119 = sphi 0, %s103
      %s125 = sphi 0, %s127
      %s128 = sphi 0, %s125
      %s129 = sphi 0, %s128
      %s145 = sphi 0, %s129
      %s151 = sphi 0, %s153
      %s154 = sphi 0, %s151
      %s155 = sphi 0, %s154
      %s171 = sphi 0, %s155
      %s177 = sphi 0, %s179
      %s180 = sphi 0, %s177
      %s181 = sphi 0, %s180
      %s197 = sphi 0, %s181
      %s203 = sphi 0, %s205
      %s206 = sphi 0, %s203
      %s207 = sphi 0, %s206
      %s223 = sphi 0, %s207
      %s229 = sphi 0, %s231
      %s232 = sphi 0, %s229
      %s233 = sphi 0, %s232
      %s249 = sphi 0, %s233
      %s255 = sphi 0, %s257
      %s258 = sphi 0, %s255
      %s259 = sphi 0, %s258
      %s275 = sphi 0, %s259
      %s281 = sphi 0, %s283
      %s284 = sphi 0, %s281
      %s285 = sphi 0, %s284
      %s301 = sphi 0, %s285
      %s307 = sphi 0, %s309
      %s310 = sphi 0, %s307
      %s311 = sphi 0, %s310
      %s327 = sphi 0, %s311
      %s333 = sphi 0, %s335
      %s336 = sphi 0, %s333
      %s337 = sphi 0, %s336
      %s353 = sphi 0, %s337
      %s359 = sphi 0, %s361
      %s362 = sphi 0, %s359
      %s363 = sphi 0, %s362
      %s379 = sphi 0, %s363
      %s385 = sphi 0, %s387
      %s388 = sphi 0, %s385
      %s389 = sphi 0, %s388
      %s405 = sphi 0, %s389
    $region4: #{deepmsn_forward.4} parent=1 // loop_header_branch
      %28 = sbr.rel (%p26) target = $region8
    $region5: #{deepmsn_forward.4} parent=1 // loop_body
      %s30 = ssub.s32 %s25, 1
      %s31 = ssub.s32 %s25, 2
      %s38 = sadd.s32 1, %s33
      %p39 = scmp.ge.s32.totalorder %s38, 2
      %s40 = scalar_select %p39, 0, %s38
      %s41 = sadd.s32 1, %s32
      %s42 = scalar_select %p39, %s41, %s32
      %p43 = scmp.ge.s32.totalorder %s42, 2
      %s44 = scalar_select %p43, 0, %s42
      %s45 = ssub.s32 %s32, %s44
      %p46 = scmp.eq.s32.totalorder %s45, 0
      %s48 = sadd.s32 %s47, 1
      %s49 = scalar_select %p46, %s47, %s48
      %p52 = pneg %p46
      %p53 = scmp.eq.s32.totalorder %s25, 3
      %p54 = por %p52, %p53
      %p55 = scmp.ne.s32.totalorder %s47, %s50
      %p56 = scmp.eq.s32.totalorder %s25, 0
      %p57 = por %p55, %p56
      %p58 = scmp.ne.s32.totalorder %s47, %s50
      %p59 = scmp.eq.s32.totalorder %s30, 3
      %p60 = por %p58, %p59
      %p61 = scmp.ne.s32.totalorder %s50, %s51
      %p62 = scmp.eq.s32.totalorder %s30, 0
      %p63 = por %p61, %p62
      %p64 = scmp.ne.s32.totalorder %s50, %s51
      %p65 = scmp.eq.s32.totalorder %s31, 3
      %p66 = por %p64, %p65
      %p68 = scmp.ne.s32.totalorder %s51, %s67
      %p69 = scmp.eq.s32.totalorder %s31, 0
      %p70 = por %p68, %p69
      %s71 = ssub.s32 %s33, %s40
      %p72 = scmp.eq.s32.totalorder %s71, 0
      %s74 = sadd.s32 %s73, 1
      %s75 = scalar_select %p72, %s73, %s74
      %p78 = pneg %p72
      %p79 = scmp.eq.s32.totalorder %s25, 3
      %p80 = por %p78, %p79
      %p81 = scmp.ne.s32.totalorder %s73, %s76
      %p82 = scmp.eq.s32.totalorder %s25, 0
      %p83 = por %p81, %p82
      %p84 = scmp.ne.s32.totalorder %s73, %s76
      %p85 = scmp.eq.s32.totalorder %s30, 3
      %p86 = por %p84, %p85
      %p87 = scmp.ne.s32.totalorder %s76, %s77
      %p88 = scmp.eq.s32.totalorder %s30, 0
      %p89 = por %p87, %p88
      %p90 = scmp.ne.s32.totalorder %s76, %s77
      %p91 = scmp.eq.s32.totalorder %s31, 3
      %p92 = por %p90, %p91
      %p94 = scmp.ne.s32.totalorder %s77, %s93
      %p95 = scmp.eq.s32.totalorder %s31, 0
      %p96 = por %p94, %p95
      %s97 = ssub.s32 %s33, %s40
      %p98 = scmp.eq.s32.totalorder %s97, 0
      %s100 = sadd.s32 %s99, 1
      %s101 = scalar_select %p98, %s99, %s100
      %p104 = pneg %p98
      %p105 = scmp.eq.s32.totalorder %s25, 3
      %p106 = por %p104, %p105
      %p107 = scmp.ne.s32.totalorder %s99, %s102
      %p108 = scmp.eq.s32.totalorder %s25, 0
      %p109 = por %p107, %p108
      %p110 = scmp.ne.s32.totalorder %s99, %s102
      %p111 = scmp.eq.s32.totalorder %s30, 3
      %p112 = por %p110, %p111
      %p113 = scmp.ne.s32.totalorder %s102, %s103
      %p114 = scmp.eq.s32.totalorder %s30, 0
      %p115 = por %p113, %p114
      %p116 = scmp.ne.s32.totalorder %s102, %s103
      %p117 = scmp.eq.s32.totalorder %s31, 3
      %p118 = por %p116, %p117
      %p120 = scmp.ne.s32.totalorder %s103, %s119
      %p121 = scmp.eq.s32.totalorder %s31, 0
      %p122 = por %p120, %p121
      %s123 = ssub.s32 %s33, %s40
      %p124 = scmp.eq.s32.totalorder %s123, 0
      %s126 = sadd.s32 %s125, 1
      %s127 = scalar_select %p124, %s125, %s126
      %p130 = pneg %p124
      %p131 = scmp.eq.s32.totalorder %s25, 3
      %p132 = por %p130, %p131
      %p133 = scmp.ne.s32.totalorder %s125, %s128
      %p134 = scmp.eq.s32.totalorder %s25, 0
      %p135 = por %p133, %p134
      %p136 = scmp.ne.s32.totalorder %s125, %s128
      %p137 = scmp.eq.s32.totalorder %s30, 3
      %p138 = por %p136, %p137
      %p139 = scmp.ne.s32.totalorder %s128, %s129
      %p140 = scmp.eq.s32.totalorder %s30, 0
      %p141 = por %p139, %p140
      %p142 = scmp.ne.s32.totalorder %s128, %s129
      %p143 = scmp.eq.s32.totalorder %s31, 3
      %p144 = por %p142, %p143
      %p146 = scmp.ne.s32.totalorder %s129, %s145
      %p147 = scmp.eq.s32.totalorder %s31, 0
      %p148 = por %p146, %p147
      %s149 = ssub.s32 %s33, %s40
      %p150 = scmp.eq.s32.totalorder %s149, 0
      %s152 = sadd.s32 %s151, 1
      %s153 = scalar_select %p150, %s151, %s152
      %p156 = pneg %p150
      %p157 = scmp.eq.s32.totalorder %s25, 3
      %p158 = por %p156, %p157
      %p159 = scmp.ne.s32.totalorder %s151, %s154
      %p160 = scmp.eq.s32.totalorder %s25, 0
      %p161 = por %p159, %p160
      %p162 = scmp.ne.s32.totalorder %s151, %s154
      %p163 = scmp.eq.s32.totalorder %s30, 3
      %p164 = por %p162, %p163
      %p165 = scmp.ne.s32.totalorder %s154, %s155
      %p166 = scmp.eq.s32.totalorder %s30, 0
      %p167 = por %p165, %p166
      %p168 = scmp.ne.s32.totalorder %s154, %s155
      %p169 = scmp.eq.s32.totalorder %s31, 3
      %p170 = por %p168, %p169
      %p172 = scmp.ne.s32.totalorder %s155, %s171
      %p173 = scmp.eq.s32.totalorder %s31, 0
      %p174 = por %p172, %p173
      %s175 = ssub.s32 %s33, %s40
      %p176 = scmp.eq.s32.totalorder %s175, 0
      %s178 = sadd.s32 %s177, 1
      %s179 = scalar_select %p176, %s177, %s178
      %p182 = pneg %p176
      %p183 = scmp.eq.s32.totalorder %s25, 3
      %p184 = por %p182, %p183
      %p185 = scmp.ne.s32.totalorder %s177, %s180
      %p186 = scmp.eq.s32.totalorder %s25, 0
      %p187 = por %p185, %p186
      %p188 = scmp.ne.s32.totalorder %s177, %s180
      %p189 = scmp.eq.s32.totalorder %s30, 3
      %p190 = por %p188, %p189
      %p191 = scmp.ne.s32.totalorder %s180, %s181
      %p192 = scmp.eq.s32.totalorder %s30, 0
      %p193 = por %p191, %p192
      %p194 = scmp.ne.s32.totalorder %s180, %s181
      %p195 = scmp.eq.s32.totalorder %s31, 3
      %p196 = por %p194, %p195
      %p198 = scmp.ne.s32.totalorder %s181, %s197
      %p199 = scmp.eq.s32.totalorder %s31, 0
      %p200 = por %p198, %p199
      %s201 = ssub.s32 %s33, %s40
      %p202 = scmp.eq.s32.totalorder %s201, 0
      %s204 = sadd.s32 %s203, 1
      %s205 = scalar_select %p202, %s203, %s204
      %p208 = pneg %p202
      %p209 = scmp.eq.s32.totalorder %s25, 3
      %p210 = por %p208, %p209
      %p211 = scmp.ne.s32.totalorder %s203, %s206
      %p212 = scmp.eq.s32.totalorder %s25, 0
      %p213 = por %p211, %p212
      %p214 = scmp.ne.s32.totalorder %s203, %s206
      %p215 = scmp.eq.s32.totalorder %s30, 3
      %p216 = por %p214, %p215
      %p217 = scmp.ne.s32.totalorder %s206, %s207
      %p218 = scmp.eq.s32.totalorder %s30, 0
      %p219 = por %p217, %p218
      %p220 = scmp.ne.s32.totalorder %s206, %s207
      %p221 = scmp.eq.s32.totalorder %s31, 3
      %p222 = por %p220, %p221
      %p224 = scmp.ne.s32.totalorder %s207, %s223
      %p225 = scmp.eq.s32.totalorder %s31, 0
      %p226 = por %p224, %p225
      %s227 = ssub.s32 %s33, %s40
      %p228 = scmp.eq.s32.totalorder %s227, 0
      %s230 = sadd.s32 %s229, 1
      %s231 = scalar_select %p228, %s229, %s230
      %p234 = pneg %p228
      %p235 = scmp.eq.s32.totalorder %s25, 3
      %p236 = por %p234, %p235
      %p237 = scmp.ne.s32.totalorder %s229, %s232
      %p238 = scmp.eq.s32.totalorder %s25, 0
      %p239 = por %p237, %p238
      %p240 = scmp.ne.s32.totalorder %s229, %s232
      %p241 = scmp.eq.s32.totalorder %s30, 3
      %p242 = por %p240, %p241
      %p243 = scmp.ne.s32.totalorder %s232, %s233
      %p244 = scmp.eq.s32.totalorder %s30, 0
      %p245 = por %p243, %p244
      %p246 = scmp.ne.s32.totalorder %s232, %s233
      %p247 = scmp.eq.s32.totalorder %s31, 3
      %p248 = por %p246, %p247
      %p250 = scmp.ne.s32.totalorder %s233, %s249
      %p251 = scmp.eq.s32.totalorder %s31, 0
      %p252 = por %p250, %p251
      %s253 = ssub.s32 %s33, %s40
      %p254 = scmp.eq.s32.totalorder %s253, 0
      %s256 = sadd.s32 %s255, 1
      %s257 = scalar_select %p254, %s255, %s256
      %p260 = pneg %p254
      %p261 = scmp.eq.s32.totalorder %s25, 3
      %p262 = por %p260, %p261
      %p263 = scmp.ne.s32.totalorder %s255, %s258
      %p264 = scmp.eq.s32.totalorder %s25, 0
      %p265 = por %p263, %p264
      %p266 = scmp.ne.s32.totalorder %s255, %s258
      %p267 = scmp.eq.s32.totalorder %s30, 3
      %p268 = por %p266, %p267
      %p269 = scmp.ne.s32.totalorder %s258, %s259
      %p270 = scmp.eq.s32.totalorder %s30, 0
      %p271 = por %p269, %p270
      %p272 = scmp.ne.s32.totalorder %s258, %s259
      %p273 = scmp.eq.s32.totalorder %s31, 3
      %p274 = por %p272, %p273
      %p276 = scmp.ne.s32.totalorder %s259, %s275
      %p277 = scmp.eq.s32.totalorder %s31, 0
      %p278 = por %p276, %p277
      %s279 = ssub.s32 %s33, %s40
      %p280 = scmp.eq.s32.totalorder %s279, 0
      %s282 = sadd.s32 %s281, 1
      %s283 = scalar_select %p280, %s281, %s282
      %p286 = pneg %p280
      %p287 = scmp.eq.s32.totalorder %s25, 3
      %p288 = por %p286, %p287
      %p289 = scmp.ne.s32.totalorder %s281, %s284
      %p290 = scmp.eq.s32.totalorder %s25, 0
      %p291 = por %p289, %p290
      %p292 = scmp.ne.s32.totalorder %s281, %s284
      %p293 = scmp.eq.s32.totalorder %s30, 3
      %p294 = por %p292, %p293
      %p295 = scmp.ne.s32.totalorder %s284, %s285
      %p296 = scmp.eq.s32.totalorder %s30, 0
      %p297 = por %p295, %p296
      %p298 = scmp.ne.s32.totalorder %s284, %s285
      %p299 = scmp.eq.s32.totalorder %s31, 3
      %p300 = por %p298, %p299
      %p302 = scmp.ne.s32.totalorder %s285, %s301
      %p303 = scmp.eq.s32.totalorder %s31, 0
      %p304 = por %p302, %p303
      %s305 = ssub.s32 %s33, %s40
      %p306 = scmp.eq.s32.totalorder %s305, 0
      %s308 = sadd.s32 %s307, 1
      %s309 = scalar_select %p306, %s307, %s308
      %p312 = pneg %p306
      %p313 = scmp.eq.s32.totalorder %s25, 3
      %p314 = por %p312, %p313
      %p315 = scmp.ne.s32.totalorder %s307, %s310
      %p316 = scmp.eq.s32.totalorder %s25, 0
      %p317 = por %p315, %p316
      %p318 = scmp.ne.s32.totalorder %s307, %s310
      %p319 = scmp.eq.s32.totalorder %s30, 3
      %p320 = por %p318, %p319
      %p321 = scmp.ne.s32.totalorder %s310, %s311
      %p322 = scmp.eq.s32.totalorder %s30, 0
      %p323 = por %p321, %p322
      %p324 = scmp.ne.s32.totalorder %s310, %s311
      %p325 = scmp.eq.s32.totalorder %s31, 3
      %p326 = por %p324, %p325
      %p328 = scmp.ne.s32.totalorder %s311, %s327
      %p329 = scmp.eq.s32.totalorder %s31, 0
      %p330 = por %p328, %p329
      %s331 = ssub.s32 %s33, %s40
      %p332 = scmp.eq.s32.totalorder %s331, 0
      %s334 = sadd.s32 %s333, 1
      %s335 = scalar_select %p332, %s333, %s334
      %p338 = pneg %p332
      %p339 = scmp.eq.s32.totalorder %s25, 3
      %p340 = por %p338, %p339
      %p341 = scmp.ne.s32.totalorder %s333, %s336
      %p342 = scmp.eq.s32.totalorder %s25, 0
      %p343 = por %p341, %p342
      %p344 = scmp.ne.s32.totalorder %s333, %s336
      %p345 = scmp.eq.s32.totalorder %s30, 3
      %p346 = por %p344, %p345
      %p347 = scmp.ne.s32.totalorder %s336, %s337
      %p348 = scmp.eq.s32.totalorder %s30, 0
      %p349 = por %p347, %p348
      %p350 = scmp.ne.s32.totalorder %s336, %s337
      %p351 = scmp.eq.s32.totalorder %s31, 3
      %p352 = por %p350, %p351
      %p354 = scmp.ne.s32.totalorder %s337, %s353
      %p355 = scmp.eq.s32.totalorder %s31, 0
      %p356 = por %p354, %p355
      %s357 = ssub.s32 %s33, %s40
      %p358 = scmp.eq.s32.totalorder %s357, 0
      %s360 = sadd.s32 %s359, 1
      %s361 = scalar_select %p358, %s359, %s360
      %p364 = pneg %p358
      %p365 = scmp.eq.s32.totalorder %s25, 3
      %p366 = por %p364, %p365
      %p367 = scmp.ne.s32.totalorder %s359, %s362
      %p368 = scmp.eq.s32.totalorder %s25, 0
      %p369 = por %p367, %p368
      %p370 = scmp.ne.s32.totalorder %s359, %s362
      %p371 = scmp.eq.s32.totalorder %s30, 3
      %p372 = por %p370, %p371
      %p373 = scmp.ne.s32.totalorder %s362, %s363
      %p374 = scmp.eq.s32.totalorder %s30, 0
      %p375 = por %p373, %p374
      %p376 = scmp.ne.s32.totalorder %s362, %s363
      %p377 = scmp.eq.s32.totalorder %s31, 3
      %p378 = por %p376, %p377
      %p380 = scmp.ne.s32.totalorder %s363, %s379
      %p381 = scmp.eq.s32.totalorder %s31, 0
      %p382 = por %p380, %p381
      %s383 = ssub.s32 %s32, %s44
      %p384 = scmp.eq.s32.totalorder %s383, 0
      %s386 = sadd.s32 %s385, 1
      %s387 = scalar_select %p384, %s385, %s386
      %p390 = pneg %p384
      %p391 = scmp.eq.s32.totalorder %s25, 3
      %p392 = por %p390, %p391
      %p393 = scmp.ne.s32.totalorder %s385, %s388
      %p394 = scmp.eq.s32.totalorder %s25, 0
      %p395 = por %p393, %p394
      %p396 = scmp.ne.s32.totalorder %s385, %s388
      %p397 = scmp.eq.s32.totalorder %s30, 3
      %p398 = por %p396, %p397
      %p399 = scmp.ne.s32.totalorder %s388, %s389
      %p400 = scmp.eq.s32.totalorder %s30, 0
      %p401 = por %p399, %p400
      %p402 = scmp.ne.s32.totalorder %s388, %s389
      %p403 = scmp.eq.s32.totalorder %s31, 3
      %p404 = por %p402, %p403
      %p406 = scmp.ne.s32.totalorder %s389, %s405
      %p407 = scmp.eq.s32.totalorder %s31, 0
      %p408 = por %p406, %p407
      %p409 = scmp.le.s32.totalorder 1, %s25
      %p410 = scmp.lt.s32.totalorder %s25, 5
      %p411 = pnand %p409, %p410
      %p412 = pneg %p411
      // Predicated region
      $region9: #{deepmsn_forward.4} parent=5 // pred_check
        _
      $region10: #{deepmsn_forward.4} parent=5 // pred_check_branch
        %414 = sbr.rel (%p411) target = $region12
      $region11: #{deepmsn_forward.4} parent=5 // pred_region
        %s415 = ssub.s32 %s25, 1
      $region12: #{deepmsn_forward.4} parent=5 // pred_fallthru
        _
      %p416 = scmp.lt.s32.totalorder %s25, 4
      // Predicated region
      $region13: #{deepmsn_forward.4} parent=5 // pred_check
        %p417 = pneg %p416
      $region14: #{deepmsn_forward.4} parent=5 // pred_check_branch
        %419 = sbr.rel (%p417) target = $region16
      $region15: #{deepmsn_forward.4} parent=5 // pred_region
        // Predicated region
        $region17: #{deepmsn_forward.4} parent=15 // pred_check
          %p420 = pneg %p57
        $region18: #{deepmsn_forward.4} parent=15 // pred_check_branch
          %422 = sbr.rel (%p420) target = $region20
        $region19: #{deepmsn_forward.4} parent=15 // pred_region
          %p423 = scmp.lt.s32.totalorder %s32, 1
          %s424 = scalar_select %p423, %s32, 1
          %s425 = smul.addr %s424, 4
          %s426 = smul.addr %s425, 8
          %s427 = scalar_lea.vmem %s0, %s426
        $region20: #{deepmsn_forward.4} parent=15 // pred_fallthru
          _
        // Predicated region
        $region21: #{deepmsn_forward.4} parent=15 // pred_check
          %p428 = pneg %p83
        $region22: #{deepmsn_forward.4} parent=15 // pred_check_branch
          %430 = sbr.rel (%p428) target = $region24
        $region23: #{deepmsn_forward.4} parent=15 // pred_region
          %p431 = scmp.lt.s32.totalorder %s33, 1
          %s432 = scalar_select %p431, %s33, 1
          %s433 = smul.addr %s432, 2
          %s434 = scalar_lea.vmem %s1, %s433
        $region24: #{deepmsn_forward.4} parent=15 // pred_fallthru
          _
        // Predicated region
        $region25: #{deepmsn_forward.4} parent=15 // pred_check
          %p435 = pneg %p109
        $region26: #{deepmsn_forward.4} parent=15 // pred_check_branch
          %437 = sbr.rel (%p435) target = $region28
        $region27: #{deepmsn_forward.4} parent=15 // pred_region
          %p438 = scmp.lt.s32.totalorder %s33, 1
          %s439 = scalar_select %p438, %s33, 1
          %s440 = smul.addr %s439, 2
          %s441 = scalar_lea.vmem %s2, %s440
        $region28: #{deepmsn_forward.4} parent=15 // pred_fallthru
          _
        // Predicated region
        $region29: #{deepmsn_forward.4} parent=15 // pred_check
          %p442 = pneg %p135
        $region30: #{deepmsn_forward.4} parent=15 // pred_check_branch
          %444 = sbr.rel (%p442) target = $region32
        $region31: #{deepmsn_forward.4} parent=15 // pred_region
          %s445 = sand.u32 %s125, 1
          %s446 = scalar_lea.sflag [#allocation4], %s445
          %s447 = sand.u32 %s125, 1
          %s448 = smul.addr %s447, 768
          %s449 = scalar_lea.vmem [#allocation3], %s448
          %s451 = ssub.s32 12288, 12288
          %452 = vsyncadd %s446, %s451
          %s453 = smul.addr %s33, 192
          %s454 = smul.addr %s453, 64
          %s455 = scalar_lea.hbm %s3, %s454
          %s456 = sshll.u32 %s449, 4
          %s457 = int_to_ptr.vmem [resolvable:$true] %s456
          %462 = dma.hbm_to_vmem [thread:$0]  %s455, 12288, %s457, %s446, 384, 384, 24
        $region32: #{deepmsn_forward.4} parent=15 // pred_fallthru
          _
        // Predicated region
        $region33: #{deepmsn_forward.4} parent=15 // pred_check
          %p463 = pneg %p161
        $region34: #{deepmsn_forward.4} parent=15 // pred_check_branch
          %465 = sbr.rel (%p463) target = $region36
        $region35: #{deepmsn_forward.4} parent=15 // pred_region
          %p466 = scmp.lt.s32.totalorder %s33, 1
          %s467 = scalar_select %p466, %s33, 1
          %s468 = smul.addr %s467, 6
          %s469 = scalar_lea.vmem %s4, %s468
        $region36: #{deepmsn_forward.4} parent=15 // pred_fallthru
          _
        // Predicated region
        $region37: #{deepmsn_forward.4} parent=15 // pred_check
          %p470 = pneg %p187
        $region38: #{deepmsn_forward.4} parent=15 // pred_check_branch
          %472 = sbr.rel (%p470) target = $region40
        $region39: #{deepmsn_forward.4} parent=15 // pred_region
          %s473 = sand.u32 %s25, 1
          %s474 = scalar_lea.sflag [#allocation6], %s473
          %s475 = sand.u32 %s177, 1
          %s476 = smul.addr %s475, 256
          %s477 = scalar_lea.vmem [#allocation5], %s476
          %s479 = ssub.s32 4096, 4096
          %480 = vsyncadd %s474, %s479
          %s481 = smul.addr %s33, 64
          %s482 = smul.addr %s481, 64
          %s483 = scalar_lea.hbm %s5, %s482
          %s484 = sshll.u32 %s477, 4
          %s485 = int_to_ptr.vmem [resolvable:$true] %s484
          %490 = dma.hbm_to_vmem [thread:$0]  %s483, 4096, %s485, %s474, 128, 128, 8
        $region40: #{deepmsn_forward.4} parent=15 // pred_fallthru
          _
        // Predicated region
        $region41: #{deepmsn_forward.4} parent=15 // pred_check
          %p491 = pneg %p213
        $region42: #{deepmsn_forward.4} parent=15 // pred_check_branch
          %493 = sbr.rel (%p491) target = $region44
        $region43: #{deepmsn_forward.4} parent=15 // pred_region
          %p494 = scmp.lt.s32.totalorder %s33, 1
          %s495 = scalar_select %p494, %s33, 1
          %s496 = smul.addr %s495, 2
          %s497 = scalar_lea.vmem %s6, %s496
        $region44: #{deepmsn_forward.4} parent=15 // pred_fallthru
          _
        // Predicated region
        $region45: #{deepmsn_forward.4} parent=15 // pred_check
          %p498 = pneg %p239
        $region46: #{deepmsn_forward.4} parent=15 // pred_check_branch
          %500 = sbr.rel (%p498) target = $region48
        $region47: #{deepmsn_forward.4} parent=15 // pred_region
          %p501 = scmp.lt.s32.totalorder %s33, 1
          %s502 = scalar_select %p501, %s33, 1
          %s503 = smul.addr %s502, 2
          %s504 = scalar_lea.vmem %s7, %s503
        $region48: #{deepmsn_forward.4} parent=15 // pred_fallthru
          _
        // Predicated region
        $region49: #{deepmsn_forward.4} parent=15 // pred_check
          %p505 = pneg %p265
        $region50: #{deepmsn_forward.4} parent=15 // pred_check_branch
          %507 = sbr.rel (%p505) target = $region52
        $region51: #{deepmsn_forward.4} parent=15 // pred_region
          %p508 = scmp.lt.s32.totalorder %s33, 1
          %s509 = scalar_select %p508, %s33, 1
          %s510 = smul.addr %s509, 2
          %s511 = scalar_lea.vmem %s8, %s510
        $region52: #{deepmsn_forward.4} parent=15 // pred_fallthru
          _
        // Predicated region
        $region53: #{deepmsn_forward.4} parent=15 // pred_check
          %p512 = pneg %p291
        $region54: #{deepmsn_forward.4} parent=15 // pred_check_branch
          %514 = sbr.rel (%p512) target = $region56
        $region55: #{deepmsn_forward.4} parent=15 // pred_region
          %s515 = sand.u32 %s25, 1
          %s516 = scalar_lea.sflag [#allocation6], %s515
          %s517 = sand.u32 %s281, 1
          %s518 = smul.addr %s517, 1024
          %s519 = scalar_lea.vmem [#allocation7], %s518
          %s521 = ssub.s32 16384, 16384
          %522 = vsyncadd %s516, %s521
          %s523 = smul.addr %s33, 256
          %s524 = smul.addr %s523, 64
          %s525 = scalar_lea.hbm %s9, %s524
          %s526 = sshll.u32 %s519, 4
          %s527 = int_to_ptr.vmem [resolvable:$true] %s526
          %532 = dma.hbm_to_vmem [thread:$0]  %s525, 16384, %s527, %s516, 512, 512, 32
        $region56: #{deepmsn_forward.4} parent=15 // pred_fallthru
          _
        // Predicated region
        $region57: #{deepmsn_forward.4} parent=15 // pred_check
          %p533 = pneg %p317
        $region58: #{deepmsn_forward.4} parent=15 // pred_check_branch
          %535 = sbr.rel (%p533) target = $region60
        $region59: #{deepmsn_forward.4} parent=15 // pred_region
          %p536 = scmp.lt.s32.totalorder %s33, 1
          %s537 = scalar_select %p536, %s33, 1
          %s538 = smul.addr %s537, 8
          %s539 = scalar_lea.vmem %s10, %s538
        $region60: #{deepmsn_forward.4} parent=15 // pred_fallthru
          _
        // Predicated region
        $region61: #{deepmsn_forward.4} parent=15 // pred_check
          %p540 = pneg %p343
        $region62: #{deepmsn_forward.4} parent=15 // pred_check_branch
          %542 = sbr.rel (%p540) target = $region64
        $region63: #{deepmsn_forward.4} parent=15 // pred_region
          %p543 = scmp.lt.s32.totalorder %s33, 1
          %s544 = scalar_select %p543, %s33, 1
          %s545 = smul.addr %s544, 128
          %s546 = smul.addr %s545, 4
          %s547 = scalar_lea.vmem %s11, %s546
        $region64: #{deepmsn_forward.4} parent=15 // pred_fallthru
          _
        // Predicated region
        $region65: #{deepmsn_forward.4} parent=15 // pred_check
          %p548 = pneg %p369
        $region66: #{deepmsn_forward.4} parent=15 // pred_check_branch
          %550 = sbr.rel (%p548) target = $region68
        $region67: #{deepmsn_forward.4} parent=15 // pred_region
          %p551 = scmp.lt.s32.totalorder %s33, 1
          %s552 = scalar_select %p551, %s33, 1
          %s553 = smul.addr %s552, 2
          %s554 = scalar_lea.vmem %s12, %s553
        $region68: #{deepmsn_forward.4} parent=15 // pred_fallthru
          _
      $region16: #{deepmsn_forward.4} parent=5 // pred_fallthru
        _
      %p555 = scmp.le.s32.totalorder 1, %s25
      %p556 = scmp.lt.s32.totalorder %s25, 5
      %p557 = pnand %p555, %p556
      %p558 = pneg %p557
      // Predicated region
      $region69: #{deepmsn_forward.4} parent=5 // pred_check
        _
      $region70: #{deepmsn_forward.4} parent=5 // pred_check_branch
        %560 = sbr.rel (%p557) target = $region72
      $region71: #{deepmsn_forward.4} parent=5 // pred_region
        %s561 = ssub.s32 %s25, 1
        %s562 = sand.u32 %s128, 1
        %s563 = scalar_lea.sflag [#allocation4], %s562
        %s564 = sand.u32 %s128, 1
        %s565 = smul.addr %s564, 768
        %s566 = scalar_lea.vmem [#allocation3], %s565
        // Predicated region
        $region73: #{deepmsn_forward.4} parent=71 // pred_check
          %p567 = pneg %p141
        $region74: #{deepmsn_forward.4} parent=71 // pred_check_branch
          %569 = sbr.rel (%p567) target = $region76
        $region75: #{deepmsn_forward.4} parent=71 // pred_region
          %570 = dma.done %s563, 12288
        $region76: #{deepmsn_forward.4} parent=71 // pred_fallthru
          _
        %s571 = sand.u32 %s30, 1
        %s572 = scalar_lea.sflag [#allocation6], %s571
        %s573 = sand.u32 %s180, 1
        %s574 = smul.addr %s573, 256
        %s575 = scalar_lea.vmem [#allocation5], %s574
        // Predicated region
        $region77: #{deepmsn_forward.4} parent=71 // pred_check
          %p576 = pneg %p193
        $region78: #{deepmsn_forward.4} parent=71 // pred_check_branch
          %578 = sbr.rel (%p576) target = $region80
        $region79: #{deepmsn_forward.4} parent=71 // pred_region
          %579 = dma.done %s572, 4096
        $region80: #{deepmsn_forward.4} parent=71 // pred_fallthru
          _
        %s580 = sand.u32 %s30, 1
        %s581 = scalar_lea.sflag [#allocation6], %s580
        %s582 = sand.u32 %s284, 1
        %s583 = smul.addr %s582, 1024
        %s584 = scalar_lea.vmem [#allocation7], %s583
        // Predicated region
        $region81: #{deepmsn_forward.4} parent=71 // pred_check
          %p585 = pneg %p297
        $region82: #{deepmsn_forward.4} parent=71 // pred_check_branch
          %587 = sbr.rel (%p585) target = $region84
        $region83: #{deepmsn_forward.4} parent=71 // pred_region
          %588 = dma.done %s581, 16384
        $region84: #{deepmsn_forward.4} parent=71 // pred_fallthru
          _
        %p589 = scmp.lt.s32.totalorder %s34, 1
        %s590 = scalar_select %p589, %s34, 1
        %s591 = smul.addr %s590, 4
        %s592 = smul.addr %s591, 8
        %s593 = scalar_lea.vmem %s0, %s592
        %p594 = pneg %p63
        %p595 = pneg %p60
        %p596 = scmp.lt.s32.totalorder %s35, 1
        %s597 = scalar_select %p596, %s35, 1
        %s598 = smul.addr %s597, 2
        %s599 = scalar_lea.vmem %s1, %s598
        %p600 = pneg %p89
        %p601 = pneg %p86
        %p602 = scmp.lt.s32.totalorder %s35, 1
        %s603 = scalar_select %p602, %s35, 1
        %s604 = smul.addr %s603, 2
        %s605 = scalar_lea.vmem %s2, %s604
        %p606 = pneg %p115
        %p607 = pneg %p112
        %s608 = sand.u32 %s128, 1
        %s609 = scalar_lea.sflag [#allocation4], %s608
        %s610 = sand.u32 %s128, 1
        %s611 = smul.addr %s610, 768
        %s612 = scalar_lea.vmem [#allocation3], %s611
        %p613 = pneg %p141
        %p614 = pneg %p138
        %p615 = scmp.lt.s32.totalorder %s35, 1
        %s616 = scalar_select %p615, %s35, 1
        %s617 = smul.addr %s616, 6
        %s618 = scalar_lea.vmem %s4, %s617
        %p619 = pneg %p167
        %p620 = pneg %p164
        %s621 = sand.u32 %s30, 1
        %s622 = scalar_lea.sflag [#allocation6], %s621
        %s623 = sand.u32 %s180, 1
        %s624 = smul.addr %s623, 256
        %s625 = scalar_lea.vmem [#allocation5], %s624
        %p626 = pneg %p193
        %p627 = pneg %p190
        %p628 = scmp.lt.s32.totalorder %s35, 1
        %s629 = scalar_select %p628, %s35, 1
        %s630 = smul.addr %s629, 2
        %s631 = scalar_lea.vmem %s6, %s630
        %p632 = pneg %p219
        %p633 = pneg %p216
        %p634 = scmp.lt.s32.totalorder %s35, 1
        %s635 = scalar_select %p634, %s35, 1
        %s636 = smul.addr %s635, 2
        %s637 = scalar_lea.vmem %s7, %s636
        %p638 = pneg %p245
        %p639 = pneg %p242
        %p640 = scmp.lt.s32.totalorder %s35, 1
        %s641 = scalar_select %p640, %s35, 1
        %s642 = smul.addr %s641, 2
        %s643 = scalar_lea.vmem %s8, %s642
        %p644 = pneg %p271
        %p645 = pneg %p268
        %s646 = sand.u32 %s30, 1
        %s647 = scalar_lea.sflag [#allocation6], %s646
        %s648 = sand.u32 %s284, 1
        %s649 = smul.addr %s648, 1024
        %s650 = scalar_lea.vmem [#allocation7], %s649
        %p651 = pneg %p297
        %p652 = pneg %p294
        %p653 = scmp.lt.s32.totalorder %s35, 1
        %s654 = scalar_select %p653, %s35, 1
        %s655 = smul.addr %s654, 8
        %s656 = scalar_lea.vmem %s10, %s655
        %p657 = pneg %p323
        %p658 = pneg %p320
        %p659 = scmp.lt.s32.totalorder %s35, 1
        %s660 = scalar_select %p659, %s35, 1
        %s661 = smul.addr %s660, 128
        %s662 = smul.addr %s661, 4
        %s663 = scalar_lea.vmem %s11, %s662
        %p664 = pneg %p349
        %p665 = pneg %p346
        %p666 = scmp.lt.s32.totalorder %s35, 1
        %s667 = scalar_select %p666, %s35, 1
        %s668 = smul.addr %s667, 2
        %s669 = scalar_lea.vmem %s12, %s668
        %p670 = pneg %p375
        %p671 = pneg %p372
        %p672 = pneg %p401
        %p673 = pneg %p398
        %p674 = scmp.lt.s32.totalorder %s34, 1
        %s675 = scalar_select %p674, %s34, 1
        %s676 = smul.addr %s675, 2
        %s677 = scalar_lea.vmem %s13, %s676
        %p678 = scmp.lt.s32.totalorder %s34, 1
        %s679 = scalar_select %p678, %s34, 1
        %s680 = smul.addr %s679, 4
        %s681 = smul.addr %s680, 8
        %s682 = scalar_lea.vmem %s0, %s681
        %p683 = scmp.lt.s32.totalorder %s35, 1
        %s684 = scalar_select %p683, %s35, 1
        %s685 = smul.addr %s684, 2
        %s686 = scalar_lea.vmem %s1, %s685
        %p687 = scmp.lt.s32.totalorder %s35, 1
        %s688 = scalar_select %p687, %s35, 1
        %s689 = smul.addr %s688, 2
        %s690 = scalar_lea.vmem %s2, %s689
        %p691 = scmp.lt.s32.totalorder %s35, 1
        %s692 = scalar_select %p691, %s35, 1
        %s693 = smul.addr %s692, 6
        %s694 = scalar_lea.vmem %s4, %s693
        %p695 = scmp.lt.s32.totalorder %s35, 1
        %s696 = scalar_select %p695, %s35, 1
        %s697 = smul.addr %s696, 2
        %s698 = scalar_lea.vmem %s6, %s697
        %p699 = scmp.lt.s32.totalorder %s35, 1
        %s700 = scalar_select %p699, %s35, 1
        %s701 = smul.addr %s700, 2
        %s702 = scalar_lea.vmem %s7, %s701
        %p703 = scmp.lt.s32.totalorder %s35, 1
        %s704 = scalar_select %p703, %s35, 1
        %s705 = smul.addr %s704, 2
        %s706 = scalar_lea.vmem %s8, %s705
        %p707 = scmp.lt.s32.totalorder %s35, 1
        %s708 = scalar_select %p707, %s35, 1
        %s709 = smul.addr %s708, 8
        %s710 = scalar_lea.vmem %s10, %s709
        %p711 = scmp.lt.s32.totalorder %s35, 1
        %s712 = scalar_select %p711, %s35, 1
        %s713 = smul.addr %s712, 128
        %s714 = smul.addr %s713, 4
        %s715 = scalar_lea.vmem %s11, %s714
        %p716 = scmp.lt.s32.totalorder %s35, 1
        %s717 = scalar_select %p716, %s35, 1
        %s718 = smul.addr %s717, 2
        %s719 = scalar_lea.vmem %s12, %s718
        %p720 = scmp.lt.s32.totalorder %s34, 1
        %s721 = scalar_select %p720, %s34, 1
        %s722 = smul.addr %s721, 2
        %s723 = scalar_lea.vmem %s13, %s722
        %p725 = scmp.eq.s32.totalorder %s35, 0
        // Predicated region
        $region85: #{deepmsn_forward.4} parent=71 // pred_check
          %p726 = pneg %p725
        $region86: #{deepmsn_forward.4} parent=71 // pred_check_branch
          %728 = sbr.rel (%p726) target = $region88
        $region87: #{deepmsn_forward.4} parent=71 // pred_region
          %v729 = vld [vmem:[%s682] sm:$0xff]
          %v730 = vld [vmem:[%s682 + $0x8] sm:$0xff]
          %v731 = vld [vmem:[%s682 + $0x10] sm:$0x3]
          %v732 = vld [vmem:[%s682 + $0x18] sm:$0x3]
          %733 = vst [vmem:[#allocation2] sm:$0xff] %v729
          %734 = vst [vmem:[#allocation2 + $0x8] sm:$0xff] %v730
          %735 = vst [vmem:[#allocation2 + $0x10] sm:$0x3] %v731
          %736 = vst [vmem:[#allocation2 + $0x18] sm:$0x3] %v732
        $region88: #{deepmsn_forward.4} parent=71 // pred_fallthru
          _
        %v737 = vld [vmem:[#allocation2] sm:$0xff]
        %v738 = vld [vmem:[#allocation2 + $0x8] sm:$0xff]
        %v739 = vld [vmem:[#allocation2 + $0x10] sm:$0x3]
        %v740 = vld [vmem:[#allocation2 + $0x18] sm:$0x3]
        %v741 = vld [vmem:[%s686] sm:$0x3]
        %v742 = vld [vmem:[%s690] sm:$0x3]
        %v743 = vadd.f32 %v737, %v738
        %744 = vadd.xlane.f32.xlu0 %v743
        %v745 = vpop.xlane.xlu0 %744
        %vm746 = vcmask 1041408
        %v747 = vsel %vm746, %v739, 0.0
        %v748 = vsel %vm746, %v740, 0.0
        %v749 = vadd.f32 %v747, %v748
        %750 = vadd.xlane.f32.xlu0 %v749
        %v751 = vpop.xlane.xlu0 %750
        %v752 = vrcp.pop 256.0
        %v753 = vmul.f32 %v745, %v752
        %v754 = vmul.f32 %v751, %v752
        %v755 = vsub.f32 %v737, %v753
        %v756 = vsub.f32 %v738, %v753
        %v757 = vsub.f32 %v739, %v754
        %v758 = vsub.f32 %v740, %v754
        %v759 = vmul.f32 %v755, %v755
        %v760 = vmul.f32 %v756, %v756
        %v761 = vmul.f32 %v757, %v757
        %v762 = vmul.f32 %v758, %v758
        %v763 = vadd.f32 %v759, %v760
        %764 = vadd.xlane.f32.xlu0 %v763
        %v765 = vpop.xlane.xlu0 %764
        %v766 = vsel %vm746, %v761, 0.0
        %v767 = vsel %vm746, %v762, 0.0
        %v768 = vadd.f32 %v766, %v767
        %769 = vadd.xlane.f32.xlu0 %v768
        %v770 = vpop.xlane.xlu0 %769
        %v771 = vmul.f32 %v765, %v752
        %v772 = vmul.f32 %v770, %v752
        %v773 = vadd.f32 %v771, 1e-05
        %v774 = vadd.f32 %v772, 1e-05
        %v775 = vrsqrt.pop %v773
        %v776 = vrsqrt.pop %v774
        %v777 = vmul.f32 %v755, %v775
        %v778 = vmul.f32 %v756, %v775
        %v779 = vmul.f32 %v757, %v776
        %v780 = vmul.f32 %v758, %v776
        %v782 = vlaneseq
        %v783 = vshrl.u32 %v782, 7
        %v784 = vsub.s32 0, %v783
        %v785 = vrot.slane %v741, %v784
        %v786 = vlaneseq
        %v787 = vshrl.u32 %v786, 7
        %v788 = vsub.s32 1, %v787
        %v789 = vrot.slane %v741, %v788
        %v792 = vmul.f32 %v777, %v785
        %v793 = vmul.f32 %v778, %v789
        %v794 = vmul.f32 %v779, %v785
        %v795 = vmul.f32 %v780, %v789
        %v797 = vlaneseq
        %v798 = vshrl.u32 %v797, 7
        %v799 = vsub.s32 0, %v798
        %v800 = vrot.slane %v742, %v799
        %v801 = vlaneseq
        %v802 = vshrl.u32 %v801, 7
        %v803 = vsub.s32 1, %v802
        %v804 = vrot.slane %v742, %v803
        %v807 = vadd.f32 %v792, %v800
        %v808 = vadd.f32 %v793, %v804
        %v809 = vadd.f32 %v794, %v800
        %v810 = vadd.f32 %v795, %v804
        %v811 = vld [vmem:[%s566] sm:$0xff]
        %v812 = vld [vmem:[%s566 + $0x8] sm:$0xff]
        %v813 = vld [vmem:[%s566 + $0x10] sm:$0xff]
        %v814 = vld [vmem:[%s566 + $0x18] sm:$0xff]
        %v815 = vld [vmem:[%s566 + $0x20] sm:$0xff]
        %v816 = vld [vmem:[%s566 + $0x28] sm:$0xff]
        %v817 = vld [vmem:[%s566 + $0x30] sm:$0xff]
        %v818 = vld [vmem:[%s566 + $0x38] sm:$0xff]
        %v819 = vld [vmem:[%s566 + $0x40] sm:$0xff]
        %v820 = vld [vmem:[%s566 + $0x48] sm:$0xff]
        %v821 = vld [vmem:[%s566 + $0x50] sm:$0xff]
        %v822 = vld [vmem:[%s566 + $0x58] sm:$0xff]
        %v823 = vld [vmem:[%s566 + $0x60] sm:$0xff]
        %v824 = vld [vmem:[%s566 + $0x68] sm:$0xff]
        %v825 = vld [vmem:[%s566 + $0x70] sm:$0xff]
        %v826 = vld [vmem:[%s566 + $0x78] sm:$0xff]
        %v827 = vld [vmem:[%s566 + $0x80] sm:$0xff]
        %v828 = vld [vmem:[%s566 + $0x88] sm:$0xff]
        %v829 = vld [vmem:[%s566 + $0x90] sm:$0xff]
        %v830 = vld [vmem:[%s566 + $0x98] sm:$0xff]
        %v831 = vld [vmem:[%s566 + $0xa0] sm:$0xff]
        %v832 = vld [vmem:[%s566 + $0xa8] sm:$0xff]
        %v833 = vld [vmem:[%s566 + $0xb0] sm:$0xff]
        %v834 = vld [vmem:[%s566 + $0xb8] sm:$0xff]
        %v835 = vld [vmem:[%s566 + $0xc0] sm:$0xff]
        %v836 = vld [vmem:[%s566 + $0xc8] sm:$0xff]
        %v837 = vld [vmem:[%s566 + $0xd0] sm:$0xff]
        %v838 = vld [vmem:[%s566 + $0xd8] sm:$0xff]
        %v839 = vld [vmem:[%s566 + $0xe0] sm:$0xff]
        %v840 = vld [vmem:[%s566 + $0xe8] sm:$0xff]
        %v841 = vld [vmem:[%s566 + $0xf0] sm:$0xff]
        %v842 = vld [vmem:[%s566 + $0xf8] sm:$0xff]
        %v843 = vld [vmem:[%s566 + $0x100] sm:$0xff]
        %v844 = vld [vmem:[%s566 + $0x108] sm:$0xff]
        %v845 = vld [vmem:[%s566 + $0x110] sm:$0xff]
        %v846 = vld [vmem:[%s566 + $0x118] sm:$0xff]
        %v847 = vld [vmem:[%s566 + $0x120] sm:$0xff]
        %v848 = vld [vmem:[%s566 + $0x128] sm:$0xff]
        %v849 = vld [vmem:[%s566 + $0x130] sm:$0xff]
        %v850 = vld [vmem:[%s566 + $0x138] sm:$0xff]
        %v851 = vld [vmem:[%s566 + $0x140] sm:$0xff]
        %v852 = vld [vmem:[%s566 + $0x148] sm:$0xff]
        %v853 = vld [vmem:[%s566 + $0x150] sm:$0xff]
        %v854 = vld [vmem:[%s566 + $0x158] sm:$0xff]
        %v855 = vld [vmem:[%s566 + $0x160] sm:$0xff]
        %v856 = vld [vmem:[%s566 + $0x168] sm:$0xff]
        %v857 = vld [vmem:[%s566 + $0x170] sm:$0xff]
        %v858 = vld [vmem:[%s566 + $0x178] sm:$0xff]
        %v859 = vld [vmem:[%s566 + $0x180] sm:$0xff]
        %v860 = vld [vmem:[%s566 + $0x188] sm:$0xff]
        %v861 = vld [vmem:[%s566 + $0x190] sm:$0xff]
        %v862 = vld [vmem:[%s566 + $0x198] sm:$0xff]
        %v863 = vld [vmem:[%s566 + $0x1a0] sm:$0xff]
        %v864 = vld [vmem:[%s566 + $0x1a8] sm:$0xff]
        %v865 = vld [vmem:[%s566 + $0x1b0] sm:$0xff]
        %v866 = vld [vmem:[%s566 + $0x1b8] sm:$0xff]
        %v867 = vld [vmem:[%s566 + $0x1c0] sm:$0xff]
        %v868 = vld [vmem:[%s566 + $0x1c8] sm:$0xff]
        %v869 = vld [vmem:[%s566 + $0x1d0] sm:$0xff]
        %v870 = vld [vmem:[%s566 + $0x1d8] sm:$0xff]
        %v871 = vld [vmem:[%s566 + $0x1e0] sm:$0xff]
        %v872 = vld [vmem:[%s566 + $0x1e8] sm:$0xff]
        %v873 = vld [vmem:[%s566 + $0x1f0] sm:$0xff]
        %v874 = vld [vmem:[%s566 + $0x1f8] sm:$0xff]
        %v875 = vld [vmem:[%s566 + $0x200] sm:$0xff]
        %v876 = vld [vmem:[%s566 + $0x208] sm:$0xff]
        %v877 = vld [vmem:[%s566 + $0x210] sm:$0xff]
        %v878 = vld [vmem:[%s566 + $0x218] sm:$0xff]
        %v879 = vld [vmem:[%s566 + $0x220] sm:$0xff]
        %v880 = vld [vmem:[%s566 + $0x228] sm:$0xff]
        %v881 = vld [vmem:[%s566 + $0x230] sm:$0xff]
        %v882 = vld [vmem:[%s566 + $0x238] sm:$0xff]
        %v883 = vld [vmem:[%s566 + $0x240] sm:$0xff]
        %v884 = vld [vmem:[%s566 + $0x248] sm:$0xff]
        %v885 = vld [vmem:[%s566 + $0x250] sm:$0xff]
        %v886 = vld [vmem:[%s566 + $0x258] sm:$0xff]
        %v887 = vld [vmem:[%s566 + $0x260] sm:$0xff]
        %v888 = vld [vmem:[%s566 + $0x268] sm:$0xff]
        %v889 = vld [vmem:[%s566 + $0x270] sm:$0xff]
        %v890 = vld [vmem:[%s566 + $0x278] sm:$0xff]
        %v891 = vld [vmem:[%s566 + $0x280] sm:$0xff]
        %v892 = vld [vmem:[%s566 + $0x288] sm:$0xff]
        %v893 = vld [vmem:[%s566 + $0x290] sm:$0xff]
        %v894 = vld [vmem:[%s566 + $0x298] sm:$0xff]
        %v895 = vld [vmem:[%s566 + $0x2a0] sm:$0xff]
        %v896 = vld [vmem:[%s566 + $0x2a8] sm:$0xff]
        %v897 = vld [vmem:[%s566 + $0x2b0] sm:$0xff]
        %v898 = vld [vmem:[%s566 + $0x2b8] sm:$0xff]
        %v899 = vld [vmem:[%s566 + $0x2c0] sm:$0xff]
        %v900 = vld [vmem:[%s566 + $0x2c8] sm:$0xff]
        %v901 = vld [vmem:[%s566 + $0x2d0] sm:$0xff]
        %v902 = vld [vmem:[%s566 + $0x2d8] sm:$0xff]
        %v903 = vld [vmem:[%s566 + $0x2e0] sm:$0xff]
        %v904 = vld [vmem:[%s566 + $0x2e8] sm:$0xff]
        %v905 = vld [vmem:[%s566 + $0x2f0] sm:$0xff]
        %v906 = vld [vmem:[%s566 + $0x2f8] sm:$0xff]
        %v907 = vld [vmem:[%s694] sm:$0x3f]
        %v908 = vpack.c.bf16 %v809, %v807
        %v909 = vpack.c.bf16 %v810, %v808
        %v911 = vlaneseq
        %v912 = vshrl.u32 %v911, 7
        %v913 = vsub.s32 0, %v912
        %v914 = vrot.slane %v907, %v913
        %v915 = vlaneseq
        %v916 = vshrl.u32 %v915, 7
        %v917 = vsub.s32 1, %v916
        %v918 = vrot.slane %v907, %v917
        %v919 = vlaneseq
        %v920 = vshrl.u32 %v919, 7
        %v921 = vsub.s32 2, %v920
        %v922 = vrot.slane %v907, %v921
        %v923 = vlaneseq
        %v924 = vshrl.u32 %v923, 7
        %v925 = vsub.s32 3, %v924
        %v926 = vrot.slane %v907, %v925
        %v927 = vlaneseq
        %v928 = vshrl.u32 %v927, 7
        %v929 = vsub.s32 4, %v928
        %v930 = vrot.slane %v907, %v929
        %v931 = vlaneseq
        %v932 = vshrl.u32 %v931, 7
        %v933 = vsub.s32 5, %v932
        %v934 = vrot.slane %v907, %v933
        %v1037 = vunpack.c.l.b16 %v811
        %v1038 = vunpack.c.h.b16 %v811
        %v1039 = vunpack.c.l.b16 %v812
        %v1040 = vunpack.c.h.b16 %v812
        %v1041 = vunpack.c.l.b16 %v813
        %v1042 = vunpack.c.h.b16 %v813
        %v1043 = vunpack.c.l.b16 %v814
        %v1044 = vunpack.c.h.b16 %v814
        %v1045 = vunpack.c.l.b16 %v815
        %v1046 = vunpack.c.h.b16 %v815
        %v1047 = vunpack.c.l.b16 %v816
        %v1048 = vunpack.c.h.b16 %v816
        %v1049 = vunpack.c.l.b16 %v817
        %v1050 = vunpack.c.h.b16 %v817
        %v1051 = vunpack.c.l.b16 %v818
        %v1052 = vunpack.c.h.b16 %v818
        %v1053 = vunpack.c.l.b16 %v819
        %v1054 = vunpack.c.h.b16 %v819
        %v1055 = vunpack.c.l.b16 %v820
        %v1056 = vunpack.c.h.b16 %v820
        %v1057 = vunpack.c.l.b16 %v821
        %v1058 = vunpack.c.h.b16 %v821
        %v1059 = vunpack.c.l.b16 %v822
        %v1060 = vunpack.c.h.b16 %v822
        %v1061 = vunpack.c.l.b16 %v823
        %v1062 = vunpack.c.h.b16 %v823
        %v1063 = vunpack.c.l.b16 %v824
        %v1064 = vunpack.c.h.b16 %v824
        %v1065 = vunpack.c.l.b16 %v825
        %v1066 = vunpack.c.h.b16 %v825
        %v1067 = vunpack.c.l.b16 %v826
        %v1068 = vunpack.c.h.b16 %v826
        %v1069 = vunpack.c.l.b16 %v827
        %v1070 = vunpack.c.h.b16 %v827
        %v1071 = vunpack.c.l.b16 %v828
        %v1072 = vunpack.c.h.b16 %v828
        %v1073 = vunpack.c.l.b16 %v829
        %v1074 = vunpack.c.h.b16 %v829
        %v1075 = vunpack.c.l.b16 %v830
        %v1076 = vunpack.c.h.b16 %v830
        %v1077 = vunpack.c.l.b16 %v831
        %v1078 = vunpack.c.h.b16 %v831
        %v1079 = vunpack.c.l.b16 %v832
        %v1080 = vunpack.c.h.b16 %v832
        %v1081 = vunpack.c.l.b16 %v833
        %v1082 = vunpack.c.h.b16 %v833
        %v1083 = vunpack.c.l.b16 %v834
        %v1084 = vunpack.c.h.b16 %v834
        %v1085 = vunpack.c.l.b16 %v835
        %v1086 = vunpack.c.h.b16 %v835
        %v1087 = vunpack.c.l.b16 %v836
        %v1088 = vunpack.c.h.b16 %v836
        %v1089 = vunpack.c.l.b16 %v837
        %v1090 = vunpack.c.h.b16 %v837
        %v1091 = vunpack.c.l.b16 %v838
        %v1092 = vunpack.c.h.b16 %v838
        %v1093 = vunpack.c.l.b16 %v839
        %v1094 = vunpack.c.h.b16 %v839
        %v1095 = vunpack.c.l.b16 %v840
        %v1096 = vunpack.c.h.b16 %v840
        %v1097 = vunpack.c.l.b16 %v841
        %v1098 = vunpack.c.h.b16 %v841
        %v1099 = vunpack.c.l.b16 %v842
        %v1100 = vunpack.c.h.b16 %v842
        %v1101 = vunpack.c.l.b16 %v843
        %v1102 = vunpack.c.h.b16 %v843
        %v1103 = vunpack.c.l.b16 %v844
        %v1104 = vunpack.c.h.b16 %v844
        %v1105 = vunpack.c.l.b16 %v845
        %v1106 = vunpack.c.h.b16 %v845
        %v1107 = vunpack.c.l.b16 %v846
        %v1108 = vunpack.c.h.b16 %v846
        %v1109 = vunpack.c.l.b16 %v847
        %v1110 = vunpack.c.h.b16 %v847
        %v1111 = vunpack.c.l.b16 %v848
        %v1112 = vunpack.c.h.b16 %v848
        %v1113 = vunpack.c.l.b16 %v849
        %v1114 = vunpack.c.h.b16 %v849
        %v1115 = vunpack.c.l.b16 %v850
        %v1116 = vunpack.c.h.b16 %v850
        %v1117 = vunpack.c.l.b16 %v851
        %v1118 = vunpack.c.h.b16 %v851
        %v1119 = vunpack.c.l.b16 %v852
        %v1120 = vunpack.c.h.b16 %v852
        %v1121 = vunpack.c.l.b16 %v853
        %v1122 = vunpack.c.h.b16 %v853
        %v1123 = vunpack.c.l.b16 %v854
        %v1124 = vunpack.c.h.b16 %v854
        %v1125 = vunpack.c.l.b16 %v855
        %v1126 = vunpack.c.h.b16 %v855
        %v1127 = vunpack.c.l.b16 %v856
        %v1128 = vunpack.c.h.b16 %v856
        %v1129 = vunpack.c.l.b16 %v857
        %v1130 = vunpack.c.h.b16 %v857
        %v1131 = vunpack.c.l.b16 %v858
        %v1132 = vunpack.c.h.b16 %v858
        %v1133 = vunpack.c.l.b16 %v859
        %v1134 = vunpack.c.h.b16 %v859
        %v1135 = vunpack.c.l.b16 %v860
        %v1136 = vunpack.c.h.b16 %v860
        %v1137 = vunpack.c.l.b16 %v861
        %v1138 = vunpack.c.h.b16 %v861
        %v1139 = vunpack.c.l.b16 %v862
        %v1140 = vunpack.c.h.b16 %v862
        %v1141 = vunpack.c.l.b16 %v863
        %v1142 = vunpack.c.h.b16 %v863
        %v1143 = vunpack.c.l.b16 %v864
        %v1144 = vunpack.c.h.b16 %v864
        %v1145 = vunpack.c.l.b16 %v865
        %v1146 = vunpack.c.h.b16 %v865
        %v1147 = vunpack.c.l.b16 %v866
        %v1148 = vunpack.c.h.b16 %v866
        %v1149 = vunpack.c.l.b16 %v867
        %v1150 = vunpack.c.h.b16 %v867
        %v1151 = vunpack.c.l.b16 %v868
        %v1152 = vunpack.c.h.b16 %v868
        %v1153 = vunpack.c.l.b16 %v869
        %v1154 = vunpack.c.h.b16 %v869
        %v1155 = vunpack.c.l.b16 %v870
        %v1156 = vunpack.c.h.b16 %v870
        %v1157 = vunpack.c.l.b16 %v871
        %v1158 = vunpack.c.h.b16 %v871
        %v1159 = vunpack.c.l.b16 %v872
        %v1160 = vunpack.c.h.b16 %v872
        %v1161 = vunpack.c.l.b16 %v873
        %v1162 = vunpack.c.h.b16 %v873
        %v1163 = vunpack.c.l.b16 %v874
        %v1164 = vunpack.c.h.b16 %v874
        %v1165 = vunpack.c.l.b16 %v875
        %v1166 = vunpack.c.h.b16 %v875
        %v1167 = vunpack.c.l.b16 %v876
        %v1168 = vunpack.c.h.b16 %v876
        %v1169 = vunpack.c.l.b16 %v877
        %v1170 = vunpack.c.h.b16 %v877
        %v1171 = vunpack.c.l.b16 %v878
        %v1172 = vunpack.c.h.b16 %v878
        %v1173 = vunpack.c.l.b16 %v879
        %v1174 = vunpack.c.h.b16 %v879
        %v1175 = vunpack.c.l.b16 %v880
        %v1176 = vunpack.c.h.b16 %v880
        %v1177 = vunpack.c.l.b16 %v881
        %v1178 = vunpack.c.h.b16 %v881
        %v1179 = vunpack.c.l.b16 %v882
        %v1180 = vunpack.c.h.b16 %v882
        %v1181 = vunpack.c.l.b16 %v883
        %v1182 = vunpack.c.h.b16 %v883
        %v1183 = vunpack.c.l.b16 %v884
        %v1184 = vunpack.c.h.b16 %v884
        %v1185 = vunpack.c.l.b16 %v885
        %v1186 = vunpack.c.h.b16 %v885
        %v1187 = vunpack.c.l.b16 %v886
        %v1188 = vunpack.c.h.b16 %v886
        %v1189 = vunpack.c.l.b16 %v887
        %v1190 = vunpack.c.h.b16 %v887
        %v1191 = vunpack.c.l.b16 %v888
        %v1192 = vunpack.c.h.b16 %v888
        %v1193 = vunpack.c.l.b16 %v889
        %v1194 = vunpack.c.h.b16 %v889
        %v1195 = vunpack.c.l.b16 %v890
        %v1196 = vunpack.c.h.b16 %v890
        %v1197 = vunpack.c.l.b16 %v891
        %v1198 = vunpack.c.h.b16 %v891
        %v1199 = vunpack.c.l.b16 %v892
        %v1200 = vunpack.c.h.b16 %v892
        %v1201 = vunpack.c.l.b16 %v893
        %v1202 = vunpack.c.h.b16 %v893
        %v1203 = vunpack.c.l.b16 %v894
        %v1204 = vunpack.c.h.b16 %v894
        %v1205 = vunpack.c.l.b16 %v895
        %v1206 = vunpack.c.h.b16 %v895
        %v1207 = vunpack.c.l.b16 %v896
        %v1208 = vunpack.c.h.b16 %v896
        %v1209 = vunpack.c.l.b16 %v897
        %v1210 = vunpack.c.h.b16 %v897
        %v1211 = vunpack.c.l.b16 %v898
        %v1212 = vunpack.c.h.b16 %v898
        %v1213 = vunpack.c.l.b16 %v899
        %v1214 = vunpack.c.h.b16 %v899
        %v1215 = vunpack.c.l.b16 %v900
        %v1216 = vunpack.c.h.b16 %v900
        %v1217 = vunpack.c.l.b16 %v901
        %v1218 = vunpack.c.h.b16 %v901
        %v1219 = vunpack.c.l.b16 %v902
        %v1220 = vunpack.c.h.b16 %v902
        %v1221 = vunpack.c.l.b16 %v903
        %v1222 = vunpack.c.h.b16 %v903
        %v1223 = vunpack.c.l.b16 %v904
        %v1224 = vunpack.c.h.b16 %v904
        %v1225 = vunpack.c.l.b16 %v905
        %v1226 = vunpack.c.h.b16 %v905
        %v1227 = vunpack.c.l.b16 %v906
        %v1228 = vunpack.c.h.b16 %v906
        %v1229 = vpack.c.b16 %v1043, %v1037
        %v1230 = vpack.c.b16 %v1044, %v1038
        %v1231 = vpack.c.b16 %v1045, %v1039
        %v1232 = vpack.c.b16 %v1046, %v1040
        %v1233 = vpack.c.b16 %v1047, %v1041
        %v1234 = vpack.c.b16 %v1048, %v1042
        %v1235 = vpack.c.b16 %v1055, %v1049
        %v1236 = vpack.c.b16 %v1056, %v1050
        %v1237 = vpack.c.b16 %v1057, %v1051
        %v1238 = vpack.c.b16 %v1058, %v1052
        %v1239 = vpack.c.b16 %v1059, %v1053
        %v1240 = vpack.c.b16 %v1060, %v1054
        %v1241 = vpack.c.b16 %v1067, %v1061
        %v1242 = vpack.c.b16 %v1068, %v1062
        %v1243 = vpack.c.b16 %v1069, %v1063
        %v1244 = vpack.c.b16 %v1070, %v1064
        %v1245 = vpack.c.b16 %v1071, %v1065
        %v1246 = vpack.c.b16 %v1072, %v1066
        %v1247 = vpack.c.b16 %v1079, %v1073
        %v1248 = vpack.c.b16 %v1080, %v1074
        %v1249 = vpack.c.b16 %v1081, %v1075
        %v1250 = vpack.c.b16 %v1082, %v1076
        %v1251 = vpack.c.b16 %v1083, %v1077
        %v1252 = vpack.c.b16 %v1084, %v1078
        %v1253 = vpack.c.b16 %v1091, %v1085
        %v1254 = vpack.c.b16 %v1092, %v1086
        %v1255 = vpack.c.b16 %v1093, %v1087
        %v1256 = vpack.c.b16 %v1094, %v1088
        %v1257 = vpack.c.b16 %v1095, %v1089
        %v1258 = vpack.c.b16 %v1096, %v1090
        %v1259 = vpack.c.b16 %v1103, %v1097
        %v1260 = vpack.c.b16 %v1104, %v1098
        %v1261 = vpack.c.b16 %v1105, %v1099
        %v1262 = vpack.c.b16 %v1106, %v1100
        %v1263 = vpack.c.b16 %v1107, %v1101
        %v1264 = vpack.c.b16 %v1108, %v1102
        %v1265 = vpack.c.b16 %v1115, %v1109
        %v1266 = vpack.c.b16 %v1116, %v1110
        %v1267 = vpack.c.b16 %v1117, %v1111
        %v1268 = vpack.c.b16 %v1118, %v1112
        %v1269 = vpack.c.b16 %v1119, %v1113
        %v1270 = vpack.c.b16 %v1120, %v1114
        %v1271 = vpack.c.b16 %v1127, %v1121
        %v1272 = vpack.c.b16 %v1128, %v1122
        %v1273 = vpack.c.b16 %v1129, %v1123
        %v1274 = vpack.c.b16 %v1130, %v1124
        %v1275 = vpack.c.b16 %v1131, %v1125
        %v1276 = vpack.c.b16 %v1132, %v1126
        %v1277 = vpack.c.b16 %v1139, %v1133
        %v1278 = vpack.c.b16 %v1140, %v1134
        %v1279 = vpack.c.b16 %v1141, %v1135
        %v1280 = vpack.c.b16 %v1142, %v1136
        %v1281 = vpack.c.b16 %v1143, %v1137
        %v1282 = vpack.c.b16 %v1144, %v1138
        %v1283 = vpack.c.b16 %v1151, %v1145
        %v1284 = vpack.c.b16 %v1152, %v1146
        %v1285 = vpack.c.b16 %v1153, %v1147
        %v1286 = vpack.c.b16 %v1154, %v1148
        %v1287 = vpack.c.b16 %v1155, %v1149
        %v1288 = vpack.c.b16 %v1156, %v1150
        %v1289 = vpack.c.b16 %v1163, %v1157
        %v1290 = vpack.c.b16 %v1164, %v1158
        %v1291 = vpack.c.b16 %v1165, %v1159
        %v1292 = vpack.c.b16 %v1166, %v1160
        %v1293 = vpack.c.b16 %v1167, %v1161
        %v1294 = vpack.c.b16 %v1168, %v1162
        %v1295 = vpack.c.b16 %v1175, %v1169
        %v1296 = vpack.c.b16 %v1176, %v1170
        %v1297 = vpack.c.b16 %v1177, %v1171
        %v1298 = vpack.c.b16 %v1178, %v1172
        %v1299 = vpack.c.b16 %v1179, %v1173
        %v1300 = vpack.c.b16 %v1180, %v1174
        %v1301 = vpack.c.b16 %v1187, %v1181
        %v1302 = vpack.c.b16 %v1188, %v1182
        %v1303 = vpack.c.b16 %v1189, %v1183
        %v1304 = vpack.c.b16 %v1190, %v1184
        %v1305 = vpack.c.b16 %v1191, %v1185
        %v1306 = vpack.c.b16 %v1192, %v1186
        %v1307 = vpack.c.b16 %v1199, %v1193
        %v1308 = vpack.c.b16 %v1200, %v1194
        %v1309 = vpack.c.b16 %v1201, %v1195
        %v1310 = vpack.c.b16 %v1202, %v1196
        %v1311 = vpack.c.b16 %v1203, %v1197
        %v1312 = vpack.c.b16 %v1204, %v1198
        %v1313 = vpack.c.b16 %v1211, %v1205
        %v1314 = vpack.c.b16 %v1212, %v1206
        %v1315 = vpack.c.b16 %v1213, %v1207
        %v1316 = vpack.c.b16 %v1214, %v1208
        %v1317 = vpack.c.b16 %v1215, %v1209
        %v1318 = vpack.c.b16 %v1216, %v1210
        %v1319 = vpack.c.b16 %v1223, %v1217
        %v1320 = vpack.c.b16 %v1224, %v1218
        %v1321 = vpack.c.b16 %v1225, %v1219
        %v1322 = vpack.c.b16 %v1226, %v1220
        %v1323 = vpack.c.b16 %v1227, %v1221
        %v1324 = vpack.c.b16 %v1228, %v1222
        %1421 = vmatprep.subr.bf16.mxu0 %v1230
        %1422 = vmatpush1.bf16.msra.mxu0 %v1229
        %1423 = vmatprep.subr.bf16.mxu0 %v1236
        %1424 = vmatpush1.bf16.msra.mxu0 %v1235
        %1425 = vmatprep.subr.bf16.mxu0 %v1242
        %1426 = vmatpush1.bf16.msra.mxu0 %v1241
        %1427 = vmatprep.subr.bf16.mxu0 %v1248
        %1428 = vmatpush1.bf16.msra.mxu0 %v1247
        %1429 = vmatprep.subr.bf16.mxu0 %v1254
        %1430 = vmatpush1.bf16.msra.mxu0 %v1253
        %1431 = vmatprep.subr.bf16.mxu0 %v1260
        %1432 = vmatpush1.bf16.msra.mxu0 %v1259
        %1433 = vmatprep.subr.bf16.mxu0 %v1266
        %1434 = vmatpush1.bf16.msra.mxu0 %v1265
        %1435 = vmatprep.subr.bf16.mxu0 %v1272
        %1436 = vmatpush1.bf16.msra.mxu0 %v1271
        %1437 = vmatprep.subr.bf16.mxu0 %v1278
        %1438 = vmatpush1.bf16.msra.mxu0 %v1277
        %1439 = vmatprep.subr.bf16.mxu0 %v1284
        %1440 = vmatpush1.bf16.msra.mxu0 %v1283
        %1441 = vmatprep.subr.bf16.mxu0 %v1290
        %1442 = vmatpush1.bf16.msra.mxu0 %v1289
        %1443 = vmatprep.subr.bf16.mxu0 %v1296
        %1444 = vmatpush1.bf16.msra.mxu0 %v1295
        %1445 = vmatprep.subr.bf16.mxu0 %v1302
        %1446 = vmatpush1.bf16.msra.mxu0 %v1301
        %1447 = vmatprep.subr.bf16.mxu0 %v1308
        %1448 = vmatpush1.bf16.msra.mxu0 %v1307
        %1449 = vmatprep.subr.bf16.mxu0 %v1314
        %1450 = vmatpush1.bf16.msra.mxu0 %v1313
        %1451 = vmatprep.subr.bf16.mxu0 %v1320
        %1452 = vmatpush1.bf16.msra.mxu0 %v1319
        %1453 = vmatprep.mubr.bf16.mxu0 %v909
        %1454 = vmatmul.mubr.bf16.gmra.mrb[0].mxu0 %v908
        %v1455 = vpop.f32.mrb[0].mxu0
        %v1456 = vadd.f32 %v914, %v1455
        %v1457 = vpop.f32.mrb[0].mxu0
        %v1458 = vadd.f32 %v918, %v1457
        %v1459 = vpop.f32.mrb[0].mxu0
        %v1460 = vadd.f32 %v914, %v1459
        %v1461 = vpop.f32.mrb[0].mxu0
        %v1462 = vadd.f32 %v918, %v1461
        %1463 = vdwg.mxu0
        %1464 = vmatprep.subr.bf16.mxu0 %v1232
        %1465 = vmatpush1.bf16.msra.mxu0 %v1231
        %1466 = vmatprep.subr.bf16.mxu0 %v1238
        %1467 = vmatpush1.bf16.msra.mxu0 %v1237
        %1468 = vmatprep.subr.bf16.mxu0 %v1244
        %1469 = vmatpush1.bf16.msra.mxu0 %v1243
        %1470 = vmatprep.subr.bf16.mxu0 %v1250
        %1471 = vmatpush1.bf16.msra.mxu0 %v1249
        %1472 = vmatprep.subr.bf16.mxu0 %v1256
        %1473 = vmatpush1.bf16.msra.mxu0 %v1255
        %1474 = vmatprep.subr.bf16.mxu0 %v1262
        %1475 = vmatpush1.bf16.msra.mxu0 %v1261
        %1476 = vmatprep.subr.bf16.mxu0 %v1268
        %1477 = vmatpush1.bf16.msra.mxu0 %v1267
        %1478 = vmatprep.subr.bf16.mxu0 %v1274
        %1479 = vmatpush1.bf16.msra.mxu0 %v1273
        %1480 = vmatprep.subr.bf16.mxu0 %v1280
        %1481 = vmatpush1.bf16.msra.mxu0 %v1279
        %1482 = vmatprep.subr.bf16.mxu0 %v1286
        %1483 = vmatpush1.bf16.msra.mxu0 %v1285
        %1484 = vmatprep.subr.bf16.mxu0 %v1292
        %1485 = vmatpush1.bf16.msra.mxu0 %v1291
        %1486 = vmatprep.subr.bf16.mxu0 %v1298
        %1487 = vmatpush1.bf16.msra.mxu0 %v1297
        %1488 = vmatprep.subr.bf16.mxu0 %v1304
        %1489 = vmatpush1.bf16.msra.mxu0 %v1303
        %1490 = vmatprep.subr.bf16.mxu0 %v1310
        %1491 = vmatpush1.bf16.msra.mxu0 %v1309
        %1492 = vmatprep.subr.bf16.mxu0 %v1316
        %1493 = vmatpush1.bf16.msra.mxu0 %v1315
        %1494 = vmatprep.subr.bf16.mxu0 %v1322
        %1495 = vmatpush1.bf16.msra.mxu0 %v1321
        %1496 = vmatprep.mubr.bf16.mxu0 %v909
        %1497 = vmatmul.mubr.bf16.gmra.mrb[0].mxu0 %v908
        %v1498 = vpop.f32.mrb[0].mxu0
        %v1499 = vadd.f32 %v922, %v1498
        %v1500 = vpop.f32.mrb[0].mxu0
        %v1501 = vadd.f32 %v926, %v1500
        %v1502 = vpop.f32.mrb[0].mxu0
        %v1503 = vadd.f32 %v922, %v1502
        %v1504 = vpop.f32.mrb[0].mxu0
        %v1505 = vadd.f32 %v926, %v1504
        %1506 = vdwg.mxu0
        %1507 = vmatprep.subr.bf16.mxu0 %v1234
        %1508 = vmatpush1.bf16.msra.mxu0 %v1233
        %1509 = vmatprep.subr.bf16.mxu0 %v1240
        %1510 = vmatpush1.bf16.msra.mxu0 %v1239
        %1511 = vmatprep.subr.bf16.mxu0 %v1246
        %1512 = vmatpush1.bf16.msra.mxu0 %v1245
        %1513 = vmatprep.subr.bf16.mxu0 %v1252
        %1514 = vmatpush1.bf16.msra.mxu0 %v1251
        %1515 = vmatprep.subr.bf16.mxu0 %v1258
        %1516 = vmatpush1.bf16.msra.mxu0 %v1257
        %1517 = vmatprep.subr.bf16.mxu0 %v1264
        %1518 = vmatpush1.bf16.msra.mxu0 %v1263
        %1519 = vmatprep.subr.bf16.mxu0 %v1270
        %1520 = vmatpush1.bf16.msra.mxu0 %v1269
        %1521 = vmatprep.subr.bf16.mxu0 %v1276
        %1522 = vmatpush1.bf16.msra.mxu0 %v1275
        %1523 = vmatprep.subr.bf16.mxu0 %v1282
        %1524 = vmatpush1.bf16.msra.mxu0 %v1281
        %1525 = vmatprep.subr.bf16.mxu0 %v1288
        %1526 = vmatpush1.bf16.msra.mxu0 %v1287
        %1527 = vmatprep.subr.bf16.mxu0 %v1294
        %1528 = vmatpush1.bf16.msra.mxu0 %v1293
        %1529 = vmatprep.subr.bf16.mxu0 %v1300
        %1530 = vmatpush1.bf16.msra.mxu0 %v1299
        %1531 = vmatprep.subr.bf16.mxu0 %v1306
        %1532 = vmatpush1.bf16.msra.mxu0 %v1305
        %1533 = vmatprep.subr.bf16.mxu0 %v1312
        %1534 = vmatpush1.bf16.msra.mxu0 %v1311
        %1535 = vmatprep.subr.bf16.mxu0 %v1318
        %1536 = vmatpush1.bf16.msra.mxu0 %v1317
        %1537 = vmatprep.subr.bf16.mxu0 %v1324
        %1538 = vmatpush1.bf16.msra.mxu0 %v1323
        %1539 = vmatprep.mubr.bf16.mxu0 %v909
        %1540 = vmatmul.mubr.bf16.gmra.mrb[0].mxu0 %v908
        %v1541 = vpop.f32.mrb[0].mxu0
        %v1542 = vadd.f32 %v930, %v1541
        %v1543 = vpop.f32.mrb[0].mxu0
        %v1544 = vadd.f32 %v934, %v1543
        %v1545 = vpop.f32.mrb[0].mxu0
        %v1546 = vadd.f32 %v930, %v1545
        %v1547 = vpop.f32.mrb[0].mxu0
        %v1548 = vadd.f32 %v934, %v1547
        %1549 = vdwg.mxu0
        %1552 = vrot.lane.b32.xlu0 %v1456, 96
        %v1553 = vpop.permute.xlu0 %1552
        %1554 = vrot.lane.b32.xlu0 %v1460, 96
        %v1555 = vpop.permute.xlu0 %1554
        %1558 = vrot.lane.b32.xlu0 %v1456, 64
        %v1559 = vpop.permute.xlu0 %1558
        %1560 = vrot.lane.b32.xlu0 %v1460, 64
        %v1561 = vpop.permute.xlu0 %1560
        %1564 = vrot.lane.b32.xlu0 %v1456, 32
        %v1565 = vpop.permute.xlu0 %1564
        %1566 = vrot.lane.b32.xlu0 %v1460, 32
        %v1567 = vpop.permute.xlu0 %1566
        %1572 = vrot.lane.b32.xlu0 %v1458, 96
        %v1573 = vpop.permute.xlu0 %1572
        %1574 = vrot.lane.b32.xlu0 %v1462, 96
        %v1575 = vpop.permute.xlu0 %1574
        %1578 = vrot.lane.b32.xlu0 %v1458, 64
        %v1579 = vpop.permute.xlu0 %1578
        %1580 = vrot.lane.b32.xlu0 %v1462, 64
        %v1581 = vpop.permute.xlu0 %1580
        %1584 = vrot.lane.b32.xlu0 %v1458, 32
        %v1585 = vpop.permute.xlu0 %1584
        %1586 = vrot.lane.b32.xlu0 %v1462, 32
        %v1587 = vpop.permute.xlu0 %1586
        %v1590 = vpack.c.bf16 %v1460, %v1456
        %v1591 = vpack.c.bf16 %v1555, %v1553
        %v1592 = vpack.c.bf16 %v1561, %v1559
        %v1593 = vpack.c.bf16 %v1567, %v1565
        %v1594 = vpack.c.bf16 %v1462, %v1458
        %v1595 = vpack.c.bf16 %v1575, %v1573
        %v1596 = vpack.c.bf16 %v1581, %v1579
        %v1597 = vpack.c.bf16 %v1587, %v1585
        %1600 = vrot.lane.b32.xlu0 %v1499, 96
        %v1601 = vpop.permute.xlu0 %1600
        %1602 = vrot.lane.b32.xlu0 %v1503, 96
        %v1603 = vpop.permute.xlu0 %1602
        %1606 = vrot.lane.b32.xlu0 %v1499, 64
        %v1607 = vpop.permute.xlu0 %1606
        %1608 = vrot.lane.b32.xlu0 %v1503, 64
        %v1609 = vpop.permute.xlu0 %1608
        %1612 = vrot.lane.b32.xlu0 %v1499, 32
        %v1613 = vpop.permute.xlu0 %1612
        %1614 = vrot.lane.b32.xlu0 %v1503, 32
        %v1615 = vpop.permute.xlu0 %1614
        %1620 = vrot.lane.b32.xlu0 %v1501, 96
        %v1621 = vpop.permute.xlu0 %1620
        %1622 = vrot.lane.b32.xlu0 %v1505, 96
        %v1623 = vpop.permute.xlu0 %1622
        %1626 = vrot.lane.b32.xlu0 %v1501, 64
        %v1627 = vpop.permute.xlu0 %1626
        %1628 = vrot.lane.b32.xlu0 %v1505, 64
        %v1629 = vpop.permute.xlu0 %1628
        %1632 = vrot.lane.b32.xlu0 %v1501, 32
        %v1633 = vpop.permute.xlu0 %1632
        %1634 = vrot.lane.b32.xlu0 %v1505, 32
        %v1635 = vpop.permute.xlu0 %1634
        %v1638 = vpack.c.bf16 %v1503, %v1499
        %v1639 = vpack.c.bf16 %v1603, %v1601
        %v1640 = vpack.c.bf16 %v1609, %v1607
        %v1641 = vpack.c.bf16 %v1615, %v1613
        %v1642 = vpack.c.bf16 %v1505, %v1501
        %v1643 = vpack.c.bf16 %v1623, %v1621
        %v1644 = vpack.c.bf16 %v1629, %v1627
        %v1645 = vpack.c.bf16 %v1635, %v1633
        %1648 = vrot.lane.b32.xlu0 %v1542, 96
        %v1649 = vpop.permute.xlu0 %1648
        %1650 = vrot.lane.b32.xlu0 %v1546, 96
        %v1651 = vpop.permute.xlu0 %1650
        %1654 = vrot.lane.b32.xlu0 %v1542, 64
        %v1655 = vpop.permute.xlu0 %1654
        %1656 = vrot.lane.b32.xlu0 %v1546, 64
        %v1657 = vpop.permute.xlu0 %1656
        %1660 = vrot.lane.b32.xlu0 %v1542, 32
        %v1661 = vpop.permute.xlu0 %1660
        %1662 = vrot.lane.b32.xlu0 %v1546, 32
        %v1663 = vpop.permute.xlu0 %1662
        %1668 = vrot.lane.b32.xlu0 %v1544, 96
        %v1669 = vpop.permute.xlu0 %1668
        %1670 = vrot.lane.b32.xlu0 %v1548, 96
        %v1671 = vpop.permute.xlu0 %1670
        %1674 = vrot.lane.b32.xlu0 %v1544, 64
        %v1675 = vpop.permute.xlu0 %1674
        %1676 = vrot.lane.b32.xlu0 %v1548, 64
        %v1677 = vpop.permute.xlu0 %1676
        %1680 = vrot.lane.b32.xlu0 %v1544, 32
        %v1681 = vpop.permute.xlu0 %1680
        %1682 = vrot.lane.b32.xlu0 %v1548, 32
        %v1683 = vpop.permute.xlu0 %1682
        %v1686 = vpack.c.bf16 %v1546, %v1542
        %v1687 = vpack.c.bf16 %v1651, %v1649
        %v1688 = vpack.c.bf16 %v1657, %v1655
        %v1689 = vpack.c.bf16 %v1663, %v1661
        %v1690 = vpack.c.bf16 %v1548, %v1544
        %v1691 = vpack.c.bf16 %v1671, %v1669
        %v1692 = vpack.c.bf16 %v1677, %v1675
        %v1693 = vpack.c.bf16 %v1683, %v1681
        %vm1694 = vcmask 261120
        %v1696 = vsel %vm1694, %v1590, 0
        %v1699 = vsel %vm1694, %v1638, 0
        %1701 = vmatprep.subr.bf16.mxu0 0
        %1702 = vmatpush1.bf16.xpose.msra.mxu0 %v1699
        %1703 = vmatprep.subr.bf16.mxu0 0
        %1704 = vmatpush1.bf16.xpose.msra.mxu0 0
        %1705 = vmatprep.subr.bf16.mxu0 0
        %1706 = vmatpush1.bf16.xpose.msra.mxu0 0
        %1707 = vmatprep.subr.bf16.mxu0 0
        %1708 = vmatpush1.bf16.xpose.msra.mxu0 0
        %1709 = vmatprep.subr.bf16.mxu0 0
        %1710 = vmatpush1.bf16.xpose.msra.mxu0 0
        %1711 = vmatprep.subr.bf16.mxu0 0
        %1712 = vmatpush1.bf16.xpose.msra.mxu0 0
        %1713 = vmatprep.subr.bf16.mxu0 0
        %1714 = vmatpush1.bf16.xpose.msra.mxu0 0
        %1715 = vmatprep.subr.bf16.mxu0 0
        %1716 = vmatpush1.bf16.xpose.msra.mxu0 0
        %1717 = vmatprep.subr.bf16.mxu0 0
        %1718 = vmatpush1.bf16.xpose.msra.mxu0 0
        %1719 = vmatprep.subr.bf16.mxu0 0
        %1720 = vmatpush1.bf16.xpose.msra.mxu0 0
        %1721 = vmatprep.subr.bf16.mxu0 0
        %1722 = vmatpush1.bf16.xpose.msra.mxu0 0
        %1723 = vmatprep.subr.bf16.mxu0 0
        %1724 = vmatpush1.bf16.xpose.msra.mxu0 0
        %1725 = vmatprep.subr.bf16.mxu0 0
        %1726 = vmatpush1.bf16.xpose.msra.mxu0 0
        %1727 = vmatprep.subr.bf16.mxu0 0
        %1728 = vmatpush1.bf16.xpose.msra.mxu0 0
        %1729 = vmatprep.subr.bf16.mxu0 0
        %1730 = vmatpush1.bf16.xpose.msra.mxu0 0
        %1731 = vmatprep.subr.bf16.mxu0 0
        %1732 = vmatpush1.bf16.xpose.msra.mxu0 0
        %1733 = vmatprep.mubr.bf16.mxu0 0
        %1734 = vmatmul.mubr.bf16.gmra.mrb[0].mxu0 %v1696
        %v1735 = vpop.f32.mrb[0].mxu0
        %v1736 = vadd.f32 0.0, %v1735
        %v1737 = vpop.f32.mrb[0].mxu0
        %v1738 = vpop.f32.mrb[0].mxu0
        %v1739 = vadd.f32 0.0, %v1738
        %v1740 = vpop.f32.mrb[0].mxu0
        %1741 = vdwg.mxu0
        %v1743 = vsel %vm1694, %v1591, 0
        %v1746 = vsel %vm1694, %v1639, 0
        %1748 = vmatprep.subr.bf16.mxu0 0
        %1749 = vmatpush1.bf16.xpose.msra.mxu0 %v1746
        %1750 = vmatprep.subr.bf16.mxu0 0
        %1751 = vmatpush1.bf16.xpose.msra.mxu0 0
        %1752 = vmatprep.subr.bf16.mxu0 0
        %1753 = vmatpush1.bf16.xpose.msra.mxu0 0
        %1754 = vmatprep.subr.bf16.mxu0 0
        %1755 = vmatpush1.bf16.xpose.msra.mxu0 0
        %1756 = vmatprep.subr.bf16.mxu0 0
        %1757 = vmatpush1.bf16.xpose.msra.mxu0 0
        %1758 = vmatprep.subr.bf16.mxu0 0
        %1759 = vmatpush1.bf16.xpose.msra.mxu0 0
        %1760 = vmatprep.subr.bf16.mxu0 0
        %1761 = vmatpush1.bf16.xpose.msra.mxu0 0
        %1762 = vmatprep.subr.bf16.mxu0 0
        %1763 = vmatpush1.bf16.xpose.msra.mxu0 0
        %1764 = vmatprep.subr.bf16.mxu0 0
        %1765 = vmatpush1.bf16.xpose.msra.mxu0 0
        %1766 = vmatprep.subr.bf16.mxu0 0
        %1767 = vmatpush1.bf16.xpose.msra.mxu0 0
        %1768 = vmatprep.subr.bf16.mxu0 0
        %1769 = vmatpush1.bf16.xpose.msra.mxu0 0
        %1770 = vmatprep.subr.bf16.mxu0 0
        %1771 = vmatpush1.bf16.xpose.msra.mxu0 0
        %1772 = vmatprep.subr.bf16.mxu0 0
        %1773 = vmatpush1.bf16.xpose.msra.mxu0 0
        %1774 = vmatprep.subr.bf16.mxu0 0
        %1775 = vmatpush1.bf16.xpose.msra.mxu0 0
        %1776 = vmatprep.subr.bf16.mxu0 0
        %1777 = vmatpush1.bf16.xpose.msra.mxu0 0
        %1778 = vmatprep.subr.bf16.mxu0 0
        %1779 = vmatpush1.bf16.xpose.msra.mxu0 0
        %1780 = vmatprep.mubr.bf16.mxu0 0
        %1781 = vmatmul.mubr.bf16.gmra.mrb[0].mxu0 %v1743
        %v1782 = vpop.f32.mrb[0].mxu0
        %v1783 = vadd.f32 0.0, %v1782
        %v1784 = vpop.f32.mrb[0].mxu0
        %v1785 = vpop.f32.mrb[0].mxu0
        %v1786 = vadd.f32 0.0, %v1785
        %v1787 = vpop.f32.mrb[0].mxu0
        %1788 = vdwg.mxu0
        %v1790 = vsel %vm1694, %v1592, 0
        %v1793 = vsel %vm1694, %v1640, 0
        %1795 = vmatprep.subr.bf16.mxu0 0
        %1796 = vmatpush1.bf16.xpose.msra.mxu0 %v1793
        %1797 = vmatprep.subr.bf16.mxu0 0
        %1798 = vmatpush1.bf16.xpose.msra.mxu0 0
        %1799 = vmatprep.subr.bf16.mxu0 0
        %1800 = vmatpush1.bf16.xpose.msra.mxu0 0
        %1801 = vmatprep.subr.bf16.mxu0 0
        %1802 = vmatpush1.bf16.xpose.msra.mxu0 0
        %1803 = vmatprep.subr.bf16.mxu0 0
        %1804 = vmatpush1.bf16.xpose.msra.mxu0 0
        %1805 = vmatprep.subr.bf16.mxu0 0
        %1806 = vmatpush1.bf16.xpose.msra.mxu0 0
        %1807 = vmatprep.subr.bf16.mxu0 0
        %1808 = vmatpush1.bf16.xpose.msra.mxu0 0
        %1809 = vmatprep.subr.bf16.mxu0 0
        %1810 = vmatpush1.bf16.xpose.msra.mxu0 0
        %1811 = vmatprep.subr.bf16.mxu0 0
        %1812 = vmatpush1.bf16.xpose.msra.mxu0 0
        %1813 = vmatprep.subr.bf16.mxu0 0
        %1814 = vmatpush1.bf16.xpose.msra.mxu0 0
        %1815 = vmatprep.subr.bf16.mxu0 0
        %1816 = vmatpush1.bf16.xpose.msra.mxu0 0
        %1817 = vmatprep.subr.bf16.mxu0 0
        %1818 = vmatpush1.bf16.xpose.msra.mxu0 0
        %1819 = vmatprep.subr.bf16.mxu0 0
        %1820 = vmatpush1.bf16.xpose.msra.mxu0 0
        %1821 = vmatprep.subr.bf16.mxu0 0
        %1822 = vmatpush1.bf16.xpose.msra.mxu0 0
        %1823 = vmatprep.subr.bf16.mxu0 0
        %1824 = vmatpush1.bf16.xpose.msra.mxu0 0
        %1825 = vmatprep.subr.bf16.mxu0 0
        %1826 = vmatpush1.bf16.xpose.msra.mxu0 0
        %1827 = vmatprep.mubr.bf16.mxu0 0
        %1828 = vmatmul.mubr.bf16.gmra.mrb[0].mxu0 %v1790
        %v1829 = vpop.f32.mrb[0].mxu0
        %v1830 = vadd.f32 0.0, %v1829
        %v1831 = vpop.f32.mrb[0].mxu0
        %v1832 = vpop.f32.mrb[0].mxu0
        %v1833 = vadd.f32 0.0, %v1832
        %v1834 = vpop.f32.mrb[0].mxu0
        %1835 = vdwg.mxu0
        %v1837 = vsel %vm1694, %v1593, 0
        %v1840 = vsel %vm1694, %v1641, 0
        %1842 = vmatprep.subr.bf16.mxu0 0
        %1843 = vmatpush1.bf16.xpose.msra.mxu0 %v1840
        %1844 = vmatprep.subr.bf16.mxu0 0
        %1845 = vmatpush1.bf16.xpose.msra.mxu0 0
        %1846 = vmatprep.subr.bf16.mxu0 0
        %1847 = vmatpush1.bf16.xpose.msra.mxu0 0
        %1848 = vmatprep.subr.bf16.mxu0 0
        %1849 = vmatpush1.bf16.xpose.msra.mxu0 0
        %1850 = vmatprep.subr.bf16.mxu0 0
        %1851 = vmatpush1.bf16.xpose.msra.mxu0 0
        %1852 = vmatprep.subr.bf16.mxu0 0
        %1853 = vmatpush1.bf16.xpose.msra.mxu0 0
        %1854 = vmatprep.subr.bf16.mxu0 0
        %1855 = vmatpush1.bf16.xpose.msra.mxu0 0
        %1856 = vmatprep.subr.bf16.mxu0 0
        %1857 = vmatpush1.bf16.xpose.msra.mxu0 0
        %1858 = vmatprep.subr.bf16.mxu0 0
        %1859 = vmatpush1.bf16.xpose.msra.mxu0 0
        %1860 = vmatprep.subr.bf16.mxu0 0
        %1861 = vmatpush1.bf16.xpose.msra.mxu0 0
        %1862 = vmatprep.subr.bf16.mxu0 0
        %1863 = vmatpush1.bf16.xpose.msra.mxu0 0
        %1864 = vmatprep.subr.bf16.mxu0 0
        %1865 = vmatpush1.bf16.xpose.msra.mxu0 0
        %1866 = vmatprep.subr.bf16.mxu0 0
        %1867 = vmatpush1.bf16.xpose.msra.mxu0 0
        %1868 = vmatprep.subr.bf16.mxu0 0
        %1869 = vmatpush1.bf16.xpose.msra.mxu0 0
        %1870 = vmatprep.subr.bf16.mxu0 0
        %1871 = vmatpush1.bf16.xpose.msra.mxu0 0
        %1872 = vmatprep.subr.bf16.mxu0 0
        %1873 = vmatpush1.bf16.xpose.msra.mxu0 0
        %1874 = vmatprep.mubr.bf16.mxu0 0
        %1875 = vmatmul.mubr.bf16.gmra.mrb[0].mxu0 %v1837
        %v1876 = vpop.f32.mrb[0].mxu0
        %v1877 = vadd.f32 0.0, %v1876
        %v1878 = vpop.f32.mrb[0].mxu0
        %v1879 = vpop.f32.mrb[0].mxu0
        %v1880 = vadd.f32 0.0, %v1879
        %v1881 = vpop.f32.mrb[0].mxu0
        %1882 = vdwg.mxu0
        %v1884 = vsel %vm1694, %v1594, 0
        %v1887 = vsel %vm1694, %v1642, 0
        %1889 = vmatprep.subr.bf16.mxu0 0
        %1890 = vmatpush1.bf16.xpose.msra.mxu0 %v1887
        %1891 = vmatprep.subr.bf16.mxu0 0
        %1892 = vmatpush1.bf16.xpose.msra.mxu0 0
        %1893 = vmatprep.subr.bf16.mxu0 0
        %1894 = vmatpush1.bf16.xpose.msra.mxu0 0
        %1895 = vmatprep.subr.bf16.mxu0 0
        %1896 = vmatpush1.bf16.xpose.msra.mxu0 0
        %1897 = vmatprep.subr.bf16.mxu0 0
        %1898 = vmatpush1.bf16.xpose.msra.mxu0 0
        %1899 = vmatprep.subr.bf16.mxu0 0
        %1900 = vmatpush1.bf16.xpose.msra.mxu0 0
        %1901 = vmatprep.subr.bf16.mxu0 0
        %1902 = vmatpush1.bf16.xpose.msra.mxu0 0
        %1903 = vmatprep.subr.bf16.mxu0 0
        %1904 = vmatpush1.bf16.xpose.msra.mxu0 0
        %1905 = vmatprep.subr.bf16.mxu0 0
        %1906 = vmatpush1.bf16.xpose.msra.mxu0 0
        %1907 = vmatprep.subr.bf16.mxu0 0
        %1908 = vmatpush1.bf16.xpose.msra.mxu0 0
        %1909 = vmatprep.subr.bf16.mxu0 0
        %1910 = vmatpush1.bf16.xpose.msra.mxu0 0
        %1911 = vmatprep.subr.bf16.mxu0 0
        %1912 = vmatpush1.bf16.xpose.msra.mxu0 0
        %1913 = vmatprep.subr.bf16.mxu0 0
        %1914 = vmatpush1.bf16.xpose.msra.mxu0 0
        %1915 = vmatprep.subr.bf16.mxu0 0
        %1916 = vmatpush1.bf16.xpose.msra.mxu0 0
        %1917 = vmatprep.subr.bf16.mxu0 0
        %1918 = vmatpush1.bf16.xpose.msra.mxu0 0
        %1919 = vmatprep.subr.bf16.mxu0 0
        %1920 = vmatpush1.bf16.xpose.msra.mxu0 0
        %1921 = vmatprep.mubr.bf16.mxu0 0
        %1922 = vmatmul.mubr.bf16.gmra.mrb[0].mxu0 %v1884
        %v1923 = vpop.f32.mrb[0].mxu0
        %v1924 = vadd.f32 0.0, %v1923
        %v1925 = vpop.f32.mrb[0].mxu0
        %v1926 = vpop.f32.mrb[0].mxu0
        %v1927 = vadd.f32 0.0, %v1926
        %v1928 = vpop.f32.mrb[0].mxu0
        %1929 = vdwg.mxu0
        %v1931 = vsel %vm1694, %v1595, 0
        %v1934 = vsel %vm1694, %v1643, 0
        %1936 = vmatprep.subr.bf16.mxu0 0
        %1937 = vmatpush1.bf16.xpose.msra.mxu0 %v1934
        %1938 = vmatprep.subr.bf16.mxu0 0
        %1939 = vmatpush1.bf16.xpose.msra.mxu0 0
        %1940 = vmatprep.subr.bf16.mxu0 0
        %1941 = vmatpush1.bf16.xpose.msra.mxu0 0
        %1942 = vmatprep.subr.bf16.mxu0 0
        %1943 = vmatpush1.bf16.xpose.msra.mxu0 0
        %1944 = vmatprep.subr.bf16.mxu0 0
        %1945 = vmatpush1.bf16.xpose.msra.mxu0 0
        %1946 = vmatprep.subr.bf16.mxu0 0
        %1947 = vmatpush1.bf16.xpose.msra.mxu0 0
        %1948 = vmatprep.subr.bf16.mxu0 0
        %1949 = vmatpush1.bf16.xpose.msra.mxu0 0
        %1950 = vmatprep.subr.bf16.mxu0 0
        %1951 = vmatpush1.bf16.xpose.msra.mxu0 0
        %1952 = vmatprep.subr.bf16.mxu0 0
        %1953 = vmatpush1.bf16.xpose.msra.mxu0 0
        %1954 = vmatprep.subr.bf16.mxu0 0
        %1955 = vmatpush1.bf16.xpose.msra.mxu0 0
        %1956 = vmatprep.subr.bf16.mxu0 0
        %1957 = vmatpush1.bf16.xpose.msra.mxu0 0
        %1958 = vmatprep.subr.bf16.mxu0 0
        %1959 = vmatpush1.bf16.xpose.msra.mxu0 0
        %1960 = vmatprep.subr.bf16.mxu0 0
        %1961 = vmatpush1.bf16.xpose.msra.mxu0 0
        %1962 = vmatprep.subr.bf16.mxu0 0
        %1963 = vmatpush1.bf16.xpose.msra.mxu0 0
        %1964 = vmatprep.subr.bf16.mxu0 0
        %1965 = vmatpush1.bf16.xpose.msra.mxu0 0
        %1966 = vmatprep.subr.bf16.mxu0 0
        %1967 = vmatpush1.bf16.xpose.msra.mxu0 0
        %1968 = vmatprep.mubr.bf16.mxu0 0
        %1969 = vmatmul.mubr.bf16.gmra.mrb[0].mxu0 %v1931
        %v1970 = vpop.f32.mrb[0].mxu0
        %v1971 = vadd.f32 0.0, %v1970
        %v1972 = vpop.f32.mrb[0].mxu0
        %v1973 = vpop.f32.mrb[0].mxu0
        %v1974 = vadd.f32 0.0, %v1973
        %v1975 = vpop.f32.mrb[0].mxu0
        %1976 = vdwg.mxu0
        %v1978 = vsel %vm1694, %v1596, 0
        %v1981 = vsel %vm1694, %v1644, 0
        %1983 = vmatprep.subr.bf16.mxu0 0
        %1984 = vmatpush1.bf16.xpose.msra.mxu0 %v1981
        %1985 = vmatprep.subr.bf16.mxu0 0
        %1986 = vmatpush1.bf16.xpose.msra.mxu0 0
        %1987 = vmatprep.subr.bf16.mxu0 0
        %1988 = vmatpush1.bf16.xpose.msra.mxu0 0
        %1989 = vmatprep.subr.bf16.mxu0 0
        %1990 = vmatpush1.bf16.xpose.msra.mxu0 0
        %1991 = vmatprep.subr.bf16.mxu0 0
        %1992 = vmatpush1.bf16.xpose.msra.mxu0 0
        %1993 = vmatprep.subr.bf16.mxu0 0
        %1994 = vmatpush1.bf16.xpose.msra.mxu0 0
        %1995 = vmatprep.subr.bf16.mxu0 0
        %1996 = vmatpush1.bf16.xpose.msra.mxu0 0
        %1997 = vmatprep.subr.bf16.mxu0 0
        %1998 = vmatpush1.bf16.xpose.msra.mxu0 0
        %1999 = vmatprep.subr.bf16.mxu0 0
        %2000 = vmatpush1.bf16.xpose.msra.mxu0 0
        %2001 = vmatprep.subr.bf16.mxu0 0
        %2002 = vmatpush1.bf16.xpose.msra.mxu0 0
        %2003 = vmatprep.subr.bf16.mxu0 0
        %2004 = vmatpush1.bf16.xpose.msra.mxu0 0
        %2005 = vmatprep.subr.bf16.mxu0 0
        %2006 = vmatpush1.bf16.xpose.msra.mxu0 0
        %2007 = vmatprep.subr.bf16.mxu0 0
        %2008 = vmatpush1.bf16.xpose.msra.mxu0 0
        %2009 = vmatprep.subr.bf16.mxu0 0
        %2010 = vmatpush1.bf16.xpose.msra.mxu0 0
        %2011 = vmatprep.subr.bf16.mxu0 0
        %2012 = vmatpush1.bf16.xpose.msra.mxu0 0
        %2013 = vmatprep.subr.bf16.mxu0 0
        %2014 = vmatpush1.bf16.xpose.msra.mxu0 0
        %2015 = vmatprep.mubr.bf16.mxu0 0
        %2016 = vmatmul.mubr.bf16.gmra.mrb[0].mxu0 %v1978
        %v2017 = vpop.f32.mrb[0].mxu0
        %v2018 = vadd.f32 0.0, %v2017
        %v2019 = vpop.f32.mrb[0].mxu0
        %v2020 = vpop.f32.mrb[0].mxu0
        %v2021 = vadd.f32 0.0, %v2020
        %v2022 = vpop.f32.mrb[0].mxu0
        %2023 = vdwg.mxu0
        %v2025 = vsel %vm1694, %v1597, 0
        %v2028 = vsel %vm1694, %v1645, 0
        %2030 = vmatprep.subr.bf16.mxu0 0
        %2031 = vmatpush1.bf16.xpose.msra.mxu0 %v2028
        %2032 = vmatprep.subr.bf16.mxu0 0
        %2033 = vmatpush1.bf16.xpose.msra.mxu0 0
        %2034 = vmatprep.subr.bf16.mxu0 0
        %2035 = vmatpush1.bf16.xpose.msra.mxu0 0
        %2036 = vmatprep.subr.bf16.mxu0 0
        %2037 = vmatpush1.bf16.xpose.msra.mxu0 0
        %2038 = vmatprep.subr.bf16.mxu0 0
        %2039 = vmatpush1.bf16.xpose.msra.mxu0 0
        %2040 = vmatprep.subr.bf16.mxu0 0
        %2041 = vmatpush1.bf16.xpose.msra.mxu0 0
        %2042 = vmatprep.subr.bf16.mxu0 0
        %2043 = vmatpush1.bf16.xpose.msra.mxu0 0
        %2044 = vmatprep.subr.bf16.mxu0 0
        %2045 = vmatpush1.bf16.xpose.msra.mxu0 0
        %2046 = vmatprep.subr.bf16.mxu0 0
        %2047 = vmatpush1.bf16.xpose.msra.mxu0 0
        %2048 = vmatprep.subr.bf16.mxu0 0
        %2049 = vmatpush1.bf16.xpose.msra.mxu0 0
        %2050 = vmatprep.subr.bf16.mxu0 0
        %2051 = vmatpush1.bf16.xpose.msra.mxu0 0
        %2052 = vmatprep.subr.bf16.mxu0 0
        %2053 = vmatpush1.bf16.xpose.msra.mxu0 0
        %2054 = vmatprep.subr.bf16.mxu0 0
        %2055 = vmatpush1.bf16.xpose.msra.mxu0 0
        %2056 = vmatprep.subr.bf16.mxu0 0
        %2057 = vmatpush1.bf16.xpose.msra.mxu0 0
        %2058 = vmatprep.subr.bf16.mxu0 0
        %2059 = vmatpush1.bf16.xpose.msra.mxu0 0
        %2060 = vmatprep.subr.bf16.mxu0 0
        %2061 = vmatpush1.bf16.xpose.msra.mxu0 0
        %2062 = vmatprep.mubr.bf16.mxu0 0
        %2063 = vmatmul.mubr.bf16.gmra.mrb[0].mxu0 %v2025
        %v2064 = vpop.f32.mrb[0].mxu0
        %v2065 = vadd.f32 0.0, %v2064
        %v2066 = vpop.f32.mrb[0].mxu0
        %v2067 = vpop.f32.mrb[0].mxu0
        %v2068 = vadd.f32 0.0, %v2067
        %v2069 = vpop.f32.mrb[0].mxu0
        %2070 = vdwg.mxu0
        %vm2071 = vcmask 80896
        %v2072 = vsel %vm2071, %v1736, -inf
        %2073 = vmax.xlane.f32.xlu0 %v2072
        %v2074 = vpop.xlane.xlu0 %2073
        %vm2075 = vcmask 74752
        %v2076 = vsel %vm2075, %v1739, -inf
        %2077 = vmax.xlane.f32.xlu0 %v2076
        %v2078 = vpop.xlane.xlu0 %2077
        %v2079 = vsel %vm2071, %v1783, -inf
        %2080 = vmax.xlane.f32.xlu0 %v2079
        %v2081 = vpop.xlane.xlu0 %2080
        %v2082 = vsel %vm2075, %v1786, -inf
        %2083 = vmax.xlane.f32.xlu0 %v2082
        %v2084 = vpop.xlane.xlu0 %2083
        %v2085 = vsel %vm2071, %v1830, -inf
        %2086 = vmax.xlane.f32.xlu0 %v2085
        %v2087 = vpop.xlane.xlu0 %2086
        %v2088 = vsel %vm2075, %v1833, -inf
        %2089 = vmax.xlane.f32.xlu0 %v2088
        %v2090 = vpop.xlane.xlu0 %2089
        %v2091 = vsel %vm2071, %v1877, -inf
        %2092 = vmax.xlane.f32.xlu0 %v2091
        %v2093 = vpop.xlane.xlu0 %2092
        %v2094 = vsel %vm2075, %v1880, -inf
        %2095 = vmax.xlane.f32.xlu0 %v2094
        %v2096 = vpop.xlane.xlu0 %2095
        %v2097 = vsel %vm2071, %v1924, -inf
        %2098 = vmax.xlane.f32.xlu0 %v2097
        %v2099 = vpop.xlane.xlu0 %2098
        %v2100 = vsel %vm2075, %v1927, -inf
        %2101 = vmax.xlane.f32.xlu0 %v2100
        %v2102 = vpop.xlane.xlu0 %2101
        %v2103 = vsel %vm2071, %v1971, -inf
        %2104 = vmax.xlane.f32.xlu0 %v2103
        %v2105 = vpop.xlane.xlu0 %2104
        %v2106 = vsel %vm2075, %v1974, -inf
        %2107 = vmax.xlane.f32.xlu0 %v2106
        %v2108 = vpop.xlane.xlu0 %2107
        %v2109 = vsel %vm2071, %v2018, -inf
        %2110 = vmax.xlane.f32.xlu0 %v2109
        %v2111 = vpop.xlane.xlu0 %2110
        %v2112 = vsel %vm2075, %v2021, -inf
        %2113 = vmax.xlane.f32.xlu0 %v2112
        %v2114 = vpop.xlane.xlu0 %2113
        %v2115 = vsel %vm2071, %v2065, -inf
        %2116 = vmax.xlane.f32.xlu0 %v2115
        %v2117 = vpop.xlane.xlu0 %2116
        %v2118 = vsel %vm2075, %v2068, -inf
        %2119 = vmax.xlane.f32.xlu0 %v2118
        %v2120 = vpop.xlane.xlu0 %2119
        %v2121 = vsub.f32 %v1736, %v2074
        %v2122 = vsub.f32 %v1739, %v2078
        %v2123 = vsub.f32 %v1783, %v2081
        %v2124 = vsub.f32 %v1786, %v2084
        %v2125 = vsub.f32 %v1830, %v2087
        %v2126 = vsub.f32 %v1833, %v2090
        %v2127 = vsub.f32 %v1877, %v2093
        %v2128 = vsub.f32 %v1880, %v2096
        %v2129 = vsub.f32 %v1924, %v2099
        %v2130 = vsub.f32 %v1927, %v2102
        %v2131 = vsub.f32 %v1971, %v2105
        %v2132 = vsub.f32 %v1974, %v2108
        %v2133 = vsub.f32 %v2018, %v2111
        %v2134 = vsub.f32 %v2021, %v2114
        %v2135 = vsub.f32 %v2065, %v2117
        %v2136 = vsub.f32 %v2068, %v2120
        %v2137 = vmul.f32 %v2121, 1.442695
        %v2138 = vpow.pop %v2137
        %v2139 = vmul.f32 %v2122, 1.442695
        %v2140 = vpow.pop %v2139
        %v2141 = vmul.f32 %v2123, 1.442695
        %v2142 = vpow.pop %v2141
        %v2143 = vmul.f32 %v2124, 1.442695
        %v2144 = vpow.pop %v2143
        %v2145 = vmul.f32 %v2125, 1.442695
        %v2146 = vpow.pop %v2145
        %v2147 = vmul.f32 %v2126, 1.442695
        %v2148 = vpow.pop %v2147
        %v2149 = vmul.f32 %v2127, 1.442695
        %v2150 = vpow.pop %v2149
        %v2151 = vmul.f32 %v2128, 1.442695
        %v2152 = vpow.pop %v2151
        %v2153 = vmul.f32 %v2129, 1.442695
        %v2154 = vpow.pop %v2153
        %v2155 = vmul.f32 %v2130, 1.442695
        %v2156 = vpow.pop %v2155
        %v2157 = vmul.f32 %v2131, 1.442695
        %v2158 = vpow.pop %v2157
        %v2159 = vmul.f32 %v2132, 1.442695
        %v2160 = vpow.pop %v2159
        %v2161 = vmul.f32 %v2133, 1.442695
        %v2162 = vpow.pop %v2161
        %v2163 = vmul.f32 %v2134, 1.442695
        %v2164 = vpow.pop %v2163
        %v2165 = vmul.f32 %v2135, 1.442695
        %v2166 = vpow.pop %v2165
        %v2167 = vmul.f32 %v2136, 1.442695
        %v2168 = vpow.pop %v2167
        %v2169 = vsel %vm2071, %v2138, 0.0
        %2170 = vadd.xlane.f32.xlu0 %v2169
        %v2171 = vpop.xlane.xlu0 %2170
        %v2172 = vsel %vm2075, %v2140, 0.0
        %2173 = vadd.xlane.f32.xlu0 %v2172
        %v2174 = vpop.xlane.xlu0 %2173
        %v2175 = vsel %vm2071, %v2142, 0.0
        %2176 = vadd.xlane.f32.xlu0 %v2175
        %v2177 = vpop.xlane.xlu0 %2176
        %v2178 = vsel %vm2075, %v2144, 0.0
        %2179 = vadd.xlane.f32.xlu0 %v2178
        %v2180 = vpop.xlane.xlu0 %2179
        %v2181 = vsel %vm2071, %v2146, 0.0
        %2182 = vadd.xlane.f32.xlu0 %v2181
        %v2183 = vpop.xlane.xlu0 %2182
        %v2184 = vsel %vm2075, %v2148, 0.0
        %2185 = vadd.xlane.f32.xlu0 %v2184
        %v2186 = vpop.xlane.xlu0 %2185
        %v2187 = vsel %vm2071, %v2150, 0.0
        %2188 = vadd.xlane.f32.xlu0 %v2187
        %v2189 = vpop.xlane.xlu0 %2188
        %v2190 = vsel %vm2075, %v2152, 0.0
        %2191 = vadd.xlane.f32.xlu0 %v2190
        %v2192 = vpop.xlane.xlu0 %2191
        %v2193 = vsel %vm2071, %v2154, 0.0
        %2194 = vadd.xlane.f32.xlu0 %v2193
        %v2195 = vpop.xlane.xlu0 %2194
        %v2196 = vsel %vm2075, %v2156, 0.0
        %2197 = vadd.xlane.f32.xlu0 %v2196
        %v2198 = vpop.xlane.xlu0 %2197
        %v2199 = vsel %vm2071, %v2158, 0.0
        %2200 = vadd.xlane.f32.xlu0 %v2199
        %v2201 = vpop.xlane.xlu0 %2200
        %v2202 = vsel %vm2075, %v2160, 0.0
        %2203 = vadd.xlane.f32.xlu0 %v2202
        %v2204 = vpop.xlane.xlu0 %2203
        %v2205 = vsel %vm2071, %v2162, 0.0
        %2206 = vadd.xlane.f32.xlu0 %v2205
        %v2207 = vpop.xlane.xlu0 %2206
        %v2208 = vsel %vm2075, %v2164, 0.0
        %2209 = vadd.xlane.f32.xlu0 %v2208
        %v2210 = vpop.xlane.xlu0 %2209
        %v2211 = vsel %vm2071, %v2166, 0.0
        %2212 = vadd.xlane.f32.xlu0 %v2211
        %v2213 = vpop.xlane.xlu0 %2212
        %v2214 = vsel %vm2075, %v2168, 0.0
        %2215 = vadd.xlane.f32.xlu0 %v2214
        %v2216 = vpop.xlane.xlu0 %2215
        %v2217 = vrcp.pop %v2171
        %v2218 = vrcp.pop %v2174
        %v2219 = vrcp.pop %v2177
        %v2220 = vrcp.pop %v2180
        %v2221 = vrcp.pop %v2183
        %v2222 = vrcp.pop %v2186
        %v2223 = vrcp.pop %v2189
        %v2224 = vrcp.pop %v2192
        %v2225 = vrcp.pop %v2195
        %v2226 = vrcp.pop %v2198
        %v2227 = vrcp.pop %v2201
        %v2228 = vrcp.pop %v2204
        %v2229 = vrcp.pop %v2207
        %v2230 = vrcp.pop %v2210
        %v2231 = vrcp.pop %v2213
        %v2232 = vrcp.pop %v2216
        %v2233 = vmul.f32 %v2138, %v2217
        %v2234 = vmul.f32 %v2140, %v2218
        %v2235 = vmul.f32 %v2142, %v2219
        %v2236 = vmul.f32 %v2144, %v2220
        %v2237 = vmul.f32 %v2146, %v2221
        %v2238 = vmul.f32 %v2148, %v2222
        %v2239 = vmul.f32 %v2150, %v2223
        %v2240 = vmul.f32 %v2152, %v2224
        %v2241 = vmul.f32 %v2154, %v2225
        %v2242 = vmul.f32 %v2156, %v2226
        %v2243 = vmul.f32 %v2158, %v2227
        %v2244 = vmul.f32 %v2160, %v2228
        %v2245 = vmul.f32 %v2162, %v2229
        %v2246 = vmul.f32 %v2164, %v2230
        %v2247 = vmul.f32 %v2166, %v2231
        %v2248 = vmul.f32 %v2168, %v2232
        %v2249 = vpack.c.bf16 %v2234, %v2233
        %v2250 = vpack.c.bf16 %v2236, %v2235
        %v2251 = vpack.c.bf16 %v2238, %v2237
        %v2252 = vpack.c.bf16 %v2240, %v2239
        %v2253 = vpack.c.bf16 %v2242, %v2241
        %v2254 = vpack.c.bf16 %v2244, %v2243
        %v2255 = vpack.c.bf16 %v2246, %v2245
        %v2256 = vpack.c.bf16 %v2248, %v2247
        %v2258 = vsel %vm2071, %v2249, 0
        %vm2260 = vcmask 1044480
        %v2262 = vsel %vm2260, %v1686, 0
        %2264 = vmatprep.subr.bf16.mxu0 0
        %2265 = vmatpush1.bf16.msra.mxu0 %v2262
        %2266 = vmatprep.subr.bf16.mxu0 0
        %2267 = vmatpush1.bf16.msra.mxu0 0
        %2268 = vmatprep.subr.bf16.mxu0 0
        %2269 = vmatpush1.bf16.msra.mxu0 0
        %2270 = vmatprep.subr.bf16.mxu0 0
        %2271 = vmatpush1.bf16.msra.mxu0 0
        %2272 = vmatprep.subr.bf16.mxu0 0
        %2273 = vmatpush1.bf16.msra.mxu0 0
        %2274 = vmatprep.subr.bf16.mxu0 0
        %2275 = vmatpush1.bf16.msra.mxu0 0
        %2276 = vmatprep.subr.bf16.mxu0 0
        %2277 = vmatpush1.bf16.msra.mxu0 0
        %2278 = vmatprep.subr.bf16.mxu0 0
        %2279 = vmatpush1.bf16.msra.mxu0 0
        %2280 = vmatprep.subr.bf16.mxu0 0
        %2281 = vmatpush1.bf16.msra.mxu0 0
        %2282 = vmatprep.subr.bf16.mxu0 0
        %2283 = vmatpush1.bf16.msra.mxu0 0
        %2284 = vmatprep.subr.bf16.mxu0 0
        %2285 = vmatpush1.bf16.msra.mxu0 0
        %2286 = vmatprep.subr.bf16.mxu0 0
        %2287 = vmatpush1.bf16.msra.mxu0 0
        %2288 = vmatprep.subr.bf16.mxu0 0
        %2289 = vmatpush1.bf16.msra.mxu0 0
        %2290 = vmatprep.subr.bf16.mxu0 0
        %2291 = vmatpush1.bf16.msra.mxu0 0
        %2292 = vmatprep.subr.bf16.mxu0 0
        %2293 = vmatpush1.bf16.msra.mxu0 0
        %2294 = vmatprep.subr.bf16.mxu0 0
        %2295 = vmatpush1.bf16.msra.mxu0 0
        %2296 = vmatprep.mubr.bf16.mxu0 0
        %2297 = vmatmul.mubr.bf16.gmra.mrb[0].mxu0 %v2258
        %v2298 = vpop.f32.mrb[0].mxu0
        %v2299 = vadd.f32 0.0, %v2298
        %v2300 = vpop.f32.mrb[0].mxu0
        %v2301 = vpop.f32.mrb[0].mxu0
        %v2302 = vadd.f32 0.0, %v2301
        %v2303 = vpop.f32.mrb[0].mxu0
        %2304 = vdwg.mxu0
        %v2306 = vsel %vm2071, %v2250, 0
        %v2309 = vsel %vm2260, %v1687, 0
        %2311 = vmatprep.subr.bf16.mxu0 0
        %2312 = vmatpush1.bf16.msra.mxu0 %v2309
        %2313 = vmatprep.subr.bf16.mxu0 0
        %2314 = vmatpush1.bf16.msra.mxu0 0
        %2315 = vmatprep.subr.bf16.mxu0 0
        %2316 = vmatpush1.bf16.msra.mxu0 0
        %2317 = vmatprep.subr.bf16.mxu0 0
        %2318 = vmatpush1.bf16.msra.mxu0 0
        %2319 = vmatprep.subr.bf16.mxu0 0
        %2320 = vmatpush1.bf16.msra.mxu0 0
        %2321 = vmatprep.subr.bf16.mxu0 0
        %2322 = vmatpush1.bf16.msra.mxu0 0
        %2323 = vmatprep.subr.bf16.mxu0 0
        %2324 = vmatpush1.bf16.msra.mxu0 0
        %2325 = vmatprep.subr.bf16.mxu0 0
        %2326 = vmatpush1.bf16.msra.mxu0 0
        %2327 = vmatprep.subr.bf16.mxu0 0
        %2328 = vmatpush1.bf16.msra.mxu0 0
        %2329 = vmatprep.subr.bf16.mxu0 0
        %2330 = vmatpush1.bf16.msra.mxu0 0
        %2331 = vmatprep.subr.bf16.mxu0 0
        %2332 = vmatpush1.bf16.msra.mxu0 0
        %2333 = vmatprep.subr.bf16.mxu0 0
        %2334 = vmatpush1.bf16.msra.mxu0 0
        %2335 = vmatprep.subr.bf16.mxu0 0
        %2336 = vmatpush1.bf16.msra.mxu0 0
        %2337 = vmatprep.subr.bf16.mxu0 0
        %2338 = vmatpush1.bf16.msra.mxu0 0
        %2339 = vmatprep.subr.bf16.mxu0 0
        %2340 = vmatpush1.bf16.msra.mxu0 0
        %2341 = vmatprep.subr.bf16.mxu0 0
        %2342 = vmatpush1.bf16.msra.mxu0 0
        %2343 = vmatprep.mubr.bf16.mxu0 0
        %2344 = vmatmul.mubr.bf16.gmra.mrb[0].mxu0 %v2306
        %v2345 = vpop.f32.mrb[0].mxu0
        %v2346 = vadd.f32 0.0, %v2345
        %v2347 = vpop.f32.mrb[0].mxu0
        %v2348 = vpop.f32.mrb[0].mxu0
        %v2349 = vadd.f32 0.0, %v2348
        %v2350 = vpop.f32.mrb[0].mxu0
        %2351 = vdwg.mxu0
        %v2353 = vsel %vm2071, %v2251, 0
        %v2356 = vsel %vm2260, %v1688, 0
        %2358 = vmatprep.subr.bf16.mxu0 0
        %2359 = vmatpush1.bf16.msra.mxu0 %v2356
        %2360 = vmatprep.subr.bf16.mxu0 0
        %2361 = vmatpush1.bf16.msra.mxu0 0
        %2362 = vmatprep.subr.bf16.mxu0 0
        %2363 = vmatpush1.bf16.msra.mxu0 0
        %2364 = vmatprep.subr.bf16.mxu0 0
        %2365 = vmatpush1.bf16.msra.mxu0 0
        %2366 = vmatprep.subr.bf16.mxu0 0
        %2367 = vmatpush1.bf16.msra.mxu0 0
        %2368 = vmatprep.subr.bf16.mxu0 0
        %2369 = vmatpush1.bf16.msra.mxu0 0
        %2370 = vmatprep.subr.bf16.mxu0 0
        %2371 = vmatpush1.bf16.msra.mxu0 0
        %2372 = vmatprep.subr.bf16.mxu0 0
        %2373 = vmatpush1.bf16.msra.mxu0 0
        %2374 = vmatprep.subr.bf16.mxu0 0
        %2375 = vmatpush1.bf16.msra.mxu0 0
        %2376 = vmatprep.subr.bf16.mxu0 0
        %2377 = vmatpush1.bf16.msra.mxu0 0
        %2378 = vmatprep.subr.bf16.mxu0 0
        %2379 = vmatpush1.bf16.msra.mxu0 0
        %2380 = vmatprep.subr.bf16.mxu0 0
        %2381 = vmatpush1.bf16.msra.mxu0 0
        %2382 = vmatprep.subr.bf16.mxu0 0
        %2383 = vmatpush1.bf16.msra.mxu0 0
        %2384 = vmatprep.subr.bf16.mxu0 0
        %2385 = vmatpush1.bf16.msra.mxu0 0
        %2386 = vmatprep.subr.bf16.mxu0 0
        %2387 = vmatpush1.bf16.msra.mxu0 0
        %2388 = vmatprep.subr.bf16.mxu0 0
        %2389 = vmatpush1.bf16.msra.mxu0 0
        %2390 = vmatprep.mubr.bf16.mxu0 0
        %2391 = vmatmul.mubr.bf16.gmra.mrb[0].mxu0 %v2353
        %v2392 = vpop.f32.mrb[0].mxu0
        %v2393 = vadd.f32 0.0, %v2392
        %v2394 = vpop.f32.mrb[0].mxu0
        %v2395 = vpop.f32.mrb[0].mxu0
        %v2396 = vadd.f32 0.0, %v2395
        %v2397 = vpop.f32.mrb[0].mxu0
        %2398 = vdwg.mxu0
        %v2400 = vsel %vm2071, %v2252, 0
        %v2403 = vsel %vm2260, %v1689, 0
        %2405 = vmatprep.subr.bf16.mxu0 0
        %2406 = vmatpush1.bf16.msra.mxu0 %v2403
        %2407 = vmatprep.subr.bf16.mxu0 0
        %2408 = vmatpush1.bf16.msra.mxu0 0
        %2409 = vmatprep.subr.bf16.mxu0 0
        %2410 = vmatpush1.bf16.msra.mxu0 0
        %2411 = vmatprep.subr.bf16.mxu0 0
        %2412 = vmatpush1.bf16.msra.mxu0 0
        %2413 = vmatprep.subr.bf16.mxu0 0
        %2414 = vmatpush1.bf16.msra.mxu0 0
        %2415 = vmatprep.subr.bf16.mxu0 0
        %2416 = vmatpush1.bf16.msra.mxu0 0
        %2417 = vmatprep.subr.bf16.mxu0 0
        %2418 = vmatpush1.bf16.msra.mxu0 0
        %2419 = vmatprep.subr.bf16.mxu0 0
        %2420 = vmatpush1.bf16.msra.mxu0 0
        %2421 = vmatprep.subr.bf16.mxu0 0
        %2422 = vmatpush1.bf16.msra.mxu0 0
        %2423 = vmatprep.subr.bf16.mxu0 0
        %2424 = vmatpush1.bf16.msra.mxu0 0
        %2425 = vmatprep.subr.bf16.mxu0 0
        %2426 = vmatpush1.bf16.msra.mxu0 0
        %2427 = vmatprep.subr.bf16.mxu0 0
        %2428 = vmatpush1.bf16.msra.mxu0 0
        %2429 = vmatprep.subr.bf16.mxu0 0
        %2430 = vmatpush1.bf16.msra.mxu0 0
        %2431 = vmatprep.subr.bf16.mxu0 0
        %2432 = vmatpush1.bf16.msra.mxu0 0
        %2433 = vmatprep.subr.bf16.mxu0 0
        %2434 = vmatpush1.bf16.msra.mxu0 0
        %2435 = vmatprep.subr.bf16.mxu0 0
        %2436 = vmatpush1.bf16.msra.mxu0 0
        %2437 = vmatprep.mubr.bf16.mxu0 0
        %2438 = vmatmul.mubr.bf16.gmra.mrb[0].mxu0 %v2400
        %v2439 = vpop.f32.mrb[0].mxu0
        %v2440 = vadd.f32 0.0, %v2439
        %v2441 = vpop.f32.mrb[0].mxu0
        %v2442 = vpop.f32.mrb[0].mxu0
        %v2443 = vadd.f32 0.0, %v2442
        %v2444 = vpop.f32.mrb[0].mxu0
        %2445 = vdwg.mxu0
        %v2447 = vsel %vm2071, %v2253, 0
        %v2450 = vsel %vm2260, %v1690, 0
        %2452 = vmatprep.subr.bf16.mxu0 0
        %2453 = vmatpush1.bf16.msra.mxu0 %v2450
        %2454 = vmatprep.subr.bf16.mxu0 0
        %2455 = vmatpush1.bf16.msra.mxu0 0
        %2456 = vmatprep.subr.bf16.mxu0 0
        %2457 = vmatpush1.bf16.msra.mxu0 0
        %2458 = vmatprep.subr.bf16.mxu0 0
        %2459 = vmatpush1.bf16.msra.mxu0 0
        %2460 = vmatprep.subr.bf16.mxu0 0
        %2461 = vmatpush1.bf16.msra.mxu0 0
        %2462 = vmatprep.subr.bf16.mxu0 0
        %2463 = vmatpush1.bf16.msra.mxu0 0
        %2464 = vmatprep.subr.bf16.mxu0 0
        %2465 = vmatpush1.bf16.msra.mxu0 0
        %2466 = vmatprep.subr.bf16.mxu0 0
        %2467 = vmatpush1.bf16.msra.mxu0 0
        %2468 = vmatprep.subr.bf16.mxu0 0
        %2469 = vmatpush1.bf16.msra.mxu0 0
        %2470 = vmatprep.subr.bf16.mxu0 0
        %2471 = vmatpush1.bf16.msra.mxu0 0
        %2472 = vmatprep.subr.bf16.mxu0 0
        %2473 = vmatpush1.bf16.msra.mxu0 0
        %2474 = vmatprep.subr.bf16.mxu0 0
        %2475 = vmatpush1.bf16.msra.mxu0 0
        %2476 = vmatprep.subr.bf16.mxu0 0
        %2477 = vmatpush1.bf16.msra.mxu0 0
        %2478 = vmatprep.subr.bf16.mxu0 0
        %2479 = vmatpush1.bf16.msra.mxu0 0
        %2480 = vmatprep.subr.bf16.mxu0 0
        %2481 = vmatpush1.bf16.msra.mxu0 0
        %2482 = vmatprep.subr.bf16.mxu0 0
        %2483 = vmatpush1.bf16.msra.mxu0 0
        %2484 = vmatprep.mubr.bf16.mxu0 0
        %2485 = vmatmul.mubr.bf16.gmra.mrb[0].mxu0 %v2447
        %v2486 = vpop.f32.mrb[0].mxu0
        %v2487 = vadd.f32 0.0, %v2486
        %v2488 = vpop.f32.mrb[0].mxu0
        %v2489 = vpop.f32.mrb[0].mxu0
        %v2490 = vadd.f32 0.0, %v2489
        %v2491 = vpop.f32.mrb[0].mxu0
        %2492 = vdwg.mxu0
        %v2494 = vsel %vm2071, %v2254, 0
        %v2497 = vsel %vm2260, %v1691, 0
        %2499 = vmatprep.subr.bf16.mxu0 0
        %2500 = vmatpush1.bf16.msra.mxu0 %v2497
        %2501 = vmatprep.subr.bf16.mxu0 0
        %2502 = vmatpush1.bf16.msra.mxu0 0
        %2503 = vmatprep.subr.bf16.mxu0 0
        %2504 = vmatpush1.bf16.msra.mxu0 0
        %2505 = vmatprep.subr.bf16.mxu0 0
        %2506 = vmatpush1.bf16.msra.mxu0 0
        %2507 = vmatprep.subr.bf16.mxu0 0
        %2508 = vmatpush1.bf16.msra.mxu0 0
        %2509 = vmatprep.subr.bf16.mxu0 0
        %2510 = vmatpush1.bf16.msra.mxu0 0
        %2511 = vmatprep.subr.bf16.mxu0 0
        %2512 = vmatpush1.bf16.msra.mxu0 0
        %2513 = vmatprep.subr.bf16.mxu0 0
        %2514 = vmatpush1.bf16.msra.mxu0 0
        %2515 = vmatprep.subr.bf16.mxu0 0
        %2516 = vmatpush1.bf16.msra.mxu0 0
        %2517 = vmatprep.subr.bf16.mxu0 0
        %2518 = vmatpush1.bf16.msra.mxu0 0
        %2519 = vmatprep.subr.bf16.mxu0 0
        %2520 = vmatpush1.bf16.msra.mxu0 0
        %2521 = vmatprep.subr.bf16.mxu0 0
        %2522 = vmatpush1.bf16.msra.mxu0 0
        %2523 = vmatprep.subr.bf16.mxu0 0
        %2524 = vmatpush1.bf16.msra.mxu0 0
        %2525 = vmatprep.subr.bf16.mxu0 0
        %2526 = vmatpush1.bf16.msra.mxu0 0
        %2527 = vmatprep.subr.bf16.mxu0 0
        %2528 = vmatpush1.bf16.msra.mxu0 0
        %2529 = vmatprep.subr.bf16.mxu0 0
        %2530 = vmatpush1.bf16.msra.mxu0 0
        %2531 = vmatprep.mubr.bf16.mxu0 0
        %2532 = vmatmul.mubr.bf16.gmra.mrb[0].mxu0 %v2494
        %v2533 = vpop.f32.mrb[0].mxu0
        %v2534 = vadd.f32 0.0, %v2533
        %v2535 = vpop.f32.mrb[0].mxu0
        %v2536 = vpop.f32.mrb[0].mxu0
        %v2537 = vadd.f32 0.0, %v2536
        %v2538 = vpop.f32.mrb[0].mxu0
        %2539 = vdwg.mxu0
        %v2541 = vsel %vm2071, %v2255, 0
        %v2544 = vsel %vm2260, %v1692, 0
        %2546 = vmatprep.subr.bf16.mxu0 0
        %2547 = vmatpush1.bf16.msra.mxu0 %v2544
        %2548 = vmatprep.subr.bf16.mxu0 0
        %2549 = vmatpush1.bf16.msra.mxu0 0
        %2550 = vmatprep.subr.bf16.mxu0 0
        %2551 = vmatpush1.bf16.msra.mxu0 0
        %2552 = vmatprep.subr.bf16.mxu0 0
        %2553 = vmatpush1.bf16.msra.mxu0 0
        %2554 = vmatprep.subr.bf16.mxu0 0
        %2555 = vmatpush1.bf16.msra.mxu0 0
        %2556 = vmatprep.subr.bf16.mxu0 0
        %2557 = vmatpush1.bf16.msra.mxu0 0
        %2558 = vmatprep.subr.bf16.mxu0 0
        %2559 = vmatpush1.bf16.msra.mxu0 0
        %2560 = vmatprep.subr.bf16.mxu0 0
        %2561 = vmatpush1.bf16.msra.mxu0 0
        %2562 = vmatprep.subr.bf16.mxu0 0
        %2563 = vmatpush1.bf16.msra.mxu0 0
        %2564 = vmatprep.subr.bf16.mxu0 0
        %2565 = vmatpush1.bf16.msra.mxu0 0
        %2566 = vmatprep.subr.bf16.mxu0 0
        %2567 = vmatpush1.bf16.msra.mxu0 0
        %2568 = vmatprep.subr.bf16.mxu0 0
        %2569 = vmatpush1.bf16.msra.mxu0 0
        %2570 = vmatprep.subr.bf16.mxu0 0
        %2571 = vmatpush1.bf16.msra.mxu0 0
        %2572 = vmatprep.subr.bf16.mxu0 0
        %2573 = vmatpush1.bf16.msra.mxu0 0
        %2574 = vmatprep.subr.bf16.mxu0 0
        %2575 = vmatpush1.bf16.msra.mxu0 0
        %2576 = vmatprep.subr.bf16.mxu0 0
        %2577 = vmatpush1.bf16.msra.mxu0 0
        %2578 = vmatprep.mubr.bf16.mxu0 0
        %2579 = vmatmul.mubr.bf16.gmra.mrb[0].mxu0 %v2541
        %v2580 = vpop.f32.mrb[0].mxu0
        %v2581 = vadd.f32 0.0, %v2580
        %v2582 = vpop.f32.mrb[0].mxu0
        %v2583 = vpop.f32.mrb[0].mxu0
        %v2584 = vadd.f32 0.0, %v2583
        %v2585 = vpop.f32.mrb[0].mxu0
        %2586 = vdwg.mxu0
        %v2588 = vsel %vm2071, %v2256, 0
        %v2591 = vsel %vm2260, %v1693, 0
        %2593 = vmatprep.subr.bf16.mxu0 0
        %2594 = vmatpush1.bf16.msra.mxu0 %v2591
        %2595 = vmatprep.subr.bf16.mxu0 0
        %2596 = vmatpush1.bf16.msra.mxu0 0
        %2597 = vmatprep.subr.bf16.mxu0 0
        %2598 = vmatpush1.bf16.msra.mxu0 0
        %2599 = vmatprep.subr.bf16.mxu0 0
        %2600 = vmatpush1.bf16.msra.mxu0 0
        %2601 = vmatprep.subr.bf16.mxu0 0
        %2602 = vmatpush1.bf16.msra.mxu0 0
        %2603 = vmatprep.subr.bf16.mxu0 0
        %2604 = vmatpush1.bf16.msra.mxu0 0
        %2605 = vmatprep.subr.bf16.mxu0 0
        %2606 = vmatpush1.bf16.msra.mxu0 0
        %2607 = vmatprep.subr.bf16.mxu0 0
        %2608 = vmatpush1.bf16.msra.mxu0 0
        %2609 = vmatprep.subr.bf16.mxu0 0
        %2610 = vmatpush1.bf16.msra.mxu0 0
        %2611 = vmatprep.subr.bf16.mxu0 0
        %2612 = vmatpush1.bf16.msra.mxu0 0
        %2613 = vmatprep.subr.bf16.mxu0 0
        %2614 = vmatpush1.bf16.msra.mxu0 0
        %2615 = vmatprep.subr.bf16.mxu0 0
        %2616 = vmatpush1.bf16.msra.mxu0 0
        %2617 = vmatprep.subr.bf16.mxu0 0
        %2618 = vmatpush1.bf16.msra.mxu0 0
        %2619 = vmatprep.subr.bf16.mxu0 0
        %2620 = vmatpush1.bf16.msra.mxu0 0
        %2621 = vmatprep.subr.bf16.mxu0 0
        %2622 = vmatpush1.bf16.msra.mxu0 0
        %2623 = vmatprep.subr.bf16.mxu0 0
        %2624 = vmatpush1.bf16.msra.mxu0 0
        %2625 = vmatprep.mubr.bf16.mxu0 0
        %2626 = vmatmul.mubr.bf16.gmra.mrb[0].mxu0 %v2588
        %v2627 = vpop.f32.mrb[0].mxu0
        %v2628 = vadd.f32 0.0, %v2627
        %v2629 = vpop.f32.mrb[0].mxu0
        %v2630 = vpop.f32.mrb[0].mxu0
        %v2631 = vadd.f32 0.0, %v2630
        %v2632 = vpop.f32.mrb[0].mxu0
        %2633 = vdwg.mxu0
        %2636 = vrot.lane.b32.xlu0 %v2346, 32
        %v2637 = vpop.permute.xlu0 %2636
        %2638 = vrot.lane.b32.xlu0 %v2349, 32
        %v2639 = vpop.permute.xlu0 %2638
        %2644 = vrot.lane.b32.xlu0 %v2393, 64
        %v2645 = vpop.permute.xlu0 %2644
        %2646 = vrot.lane.b32.xlu0 %v2396, 64
        %v2647 = vpop.permute.xlu0 %2646
        %2652 = vrot.lane.b32.xlu0 %v2440, 96
        %v2653 = vpop.permute.xlu0 %2652
        %2654 = vrot.lane.b32.xlu0 %v2443, 96
        %v2655 = vpop.permute.xlu0 %2654
        %2660 = vrot.lane.b32.xlu0 %v2534, 32
        %v2661 = vpop.permute.xlu0 %2660
        %2662 = vrot.lane.b32.xlu0 %v2537, 32
        %v2663 = vpop.permute.xlu0 %2662
        %2668 = vrot.lane.b32.xlu0 %v2581, 64
        %v2669 = vpop.permute.xlu0 %2668
        %2670 = vrot.lane.b32.xlu0 %v2584, 64
        %v2671 = vpop.permute.xlu0 %2670
        %2676 = vrot.lane.b32.xlu0 %v2628, 96
        %v2677 = vpop.permute.xlu0 %2676
        %2678 = vrot.lane.b32.xlu0 %v2631, 96
        %v2679 = vpop.permute.xlu0 %2678
        %v2682 = vsel %vm1694, %v2299, %v2637
        %v2683 = vsel %vm1694, %v2302, %v2639
        %vm2684 = vcmask 523264
        %v2685 = vsel %vm2684, %v2682, %v2645
        %v2686 = vsel %vm2684, %v2683, %v2647
        %vm2687 = vcmask 785408
        %v2688 = vsel %vm2687, %v2685, %v2653
        %v2689 = vsel %vm2687, %v2686, %v2655
        %v2690 = vsel %vm1694, %v2487, %v2661
        %v2691 = vsel %vm1694, %v2490, %v2663
        %v2692 = vsel %vm2684, %v2690, %v2669
        %v2693 = vsel %vm2684, %v2691, %v2671
        %v2694 = vsel %vm2687, %v2692, %v2677
        %v2695 = vsel %vm2687, %v2693, %v2679
        %v2696 = vld [vmem:[%s575] sm:$0xff]
        %v2697 = vld [vmem:[%s575 + $0x8] sm:$0xff]
        %v2698 = vld [vmem:[%s575 + $0x10] sm:$0xff]
        %v2699 = vld [vmem:[%s575 + $0x18] sm:$0xff]
        %v2700 = vld [vmem:[%s575 + $0x20] sm:$0xff]
        %v2701 = vld [vmem:[%s575 + $0x28] sm:$0xff]
        %v2702 = vld [vmem:[%s575 + $0x30] sm:$0xff]
        %v2703 = vld [vmem:[%s575 + $0x38] sm:$0xff]
        %v2704 = vld [vmem:[%s575 + $0x40] sm:$0xff]
        %v2705 = vld [vmem:[%s575 + $0x48] sm:$0xff]
        %v2706 = vld [vmem:[%s575 + $0x50] sm:$0xff]
        %v2707 = vld [vmem:[%s575 + $0x58] sm:$0xff]
        %v2708 = vld [vmem:[%s575 + $0x60] sm:$0xff]
        %v2709 = vld [vmem:[%s575 + $0x68] sm:$0xff]
        %v2710 = vld [vmem:[%s575 + $0x70] sm:$0xff]
        %v2711 = vld [vmem:[%s575 + $0x78] sm:$0xff]
        %v2712 = vld [vmem:[%s575 + $0x80] sm:$0xff]
        %v2713 = vld [vmem:[%s575 + $0x88] sm:$0xff]
        %v2714 = vld [vmem:[%s575 + $0x90] sm:$0xff]
        %v2715 = vld [vmem:[%s575 + $0x98] sm:$0xff]
        %v2716 = vld [vmem:[%s575 + $0xa0] sm:$0xff]
        %v2717 = vld [vmem:[%s575 + $0xa8] sm:$0xff]
        %v2718 = vld [vmem:[%s575 + $0xb0] sm:$0xff]
        %v2719 = vld [vmem:[%s575 + $0xb8] sm:$0xff]
        %v2720 = vld [vmem:[%s575 + $0xc0] sm:$0xff]
        %v2721 = vld [vmem:[%s575 + $0xc8] sm:$0xff]
        %v2722 = vld [vmem:[%s575 + $0xd0] sm:$0xff]
        %v2723 = vld [vmem:[%s575 + $0xd8] sm:$0xff]
        %v2724 = vld [vmem:[%s575 + $0xe0] sm:$0xff]
        %v2725 = vld [vmem:[%s575 + $0xe8] sm:$0xff]
        %v2726 = vld [vmem:[%s575 + $0xf0] sm:$0xff]
        %v2727 = vld [vmem:[%s575 + $0xf8] sm:$0xff]
        %v2728 = vld [vmem:[%s698] sm:$0x3]
        %v2729 = vpack.c.bf16 %v2689, %v2688
        %v2730 = vpack.c.bf16 %v2695, %v2694
        %v2732 = vlaneseq
        %v2733 = vshrl.u32 %v2732, 7
        %v2734 = vsub.s32 0, %v2733
        %v2735 = vrot.slane %v2728, %v2734
        %v2736 = vlaneseq
        %v2737 = vshrl.u32 %v2736, 7
        %v2738 = vsub.s32 1, %v2737
        %v2739 = vrot.slane %v2728, %v2738
        %v2774 = vunpack.c.l.b16 %v2696
        %v2775 = vunpack.c.h.b16 %v2696
        %v2776 = vunpack.c.l.b16 %v2697
        %v2777 = vunpack.c.h.b16 %v2697
        %v2778 = vunpack.c.l.b16 %v2698
        %v2779 = vunpack.c.h.b16 %v2698
        %v2780 = vunpack.c.l.b16 %v2699
        %v2781 = vunpack.c.h.b16 %v2699
        %v2782 = vunpack.c.l.b16 %v2700
        %v2783 = vunpack.c.h.b16 %v2700
        %v2784 = vunpack.c.l.b16 %v2701
        %v2785 = vunpack.c.h.b16 %v2701
        %v2786 = vunpack.c.l.b16 %v2702
        %v2787 = vunpack.c.h.b16 %v2702
        %v2788 = vunpack.c.l.b16 %v2703
        %v2789 = vunpack.c.h.b16 %v2703
        %v2790 = vunpack.c.l.b16 %v2704
        %v2791 = vunpack.c.h.b16 %v2704
        %v2792 = vunpack.c.l.b16 %v2705
        %v2793 = vunpack.c.h.b16 %v2705
        %v2794 = vunpack.c.l.b16 %v2706
        %v2795 = vunpack.c.h.b16 %v2706
        %v2796 = vunpack.c.l.b16 %v2707
        %v2797 = vunpack.c.h.b16 %v2707
        %v2798 = vunpack.c.l.b16 %v2708
        %v2799 = vunpack.c.h.b16 %v2708
        %v2800 = vunpack.c.l.b16 %v2709
        %v2801 = vunpack.c.h.b16 %v2709
        %v2802 = vunpack.c.l.b16 %v2710
        %v2803 = vunpack.c.h.b16 %v2710
        %v2804 = vunpack.c.l.b16 %v2711
        %v2805 = vunpack.c.h.b16 %v2711
        %v2806 = vunpack.c.l.b16 %v2712
        %v2807 = vunpack.c.h.b16 %v2712
        %v2808 = vunpack.c.l.b16 %v2713
        %v2809 = vunpack.c.h.b16 %v2713
        %v2810 = vunpack.c.l.b16 %v2714
        %v2811 = vunpack.c.h.b16 %v2714
        %v2812 = vunpack.c.l.b16 %v2715
        %v2813 = vunpack.c.h.b16 %v2715
        %v2814 = vunpack.c.l.b16 %v2716
        %v2815 = vunpack.c.h.b16 %v2716
        %v2816 = vunpack.c.l.b16 %v2717
        %v2817 = vunpack.c.h.b16 %v2717
        %v2818 = vunpack.c.l.b16 %v2718
        %v2819 = vunpack.c.h.b16 %v2718
        %v2820 = vunpack.c.l.b16 %v2719
        %v2821 = vunpack.c.h.b16 %v2719
        %v2822 = vunpack.c.l.b16 %v2720
        %v2823 = vunpack.c.h.b16 %v2720
        %v2824 = vunpack.c.l.b16 %v2721
        %v2825 = vunpack.c.h.b16 %v2721
        %v2826 = vunpack.c.l.b16 %v2722
        %v2827 = vunpack.c.h.b16 %v2722
        %v2828 = vunpack.c.l.b16 %v2723
        %v2829 = vunpack.c.h.b16 %v2723
        %v2830 = vunpack.c.l.b16 %v2724
        %v2831 = vunpack.c.h.b16 %v2724
        %v2832 = vunpack.c.l.b16 %v2725
        %v2833 = vunpack.c.h.b16 %v2725
        %v2834 = vunpack.c.l.b16 %v2726
        %v2835 = vunpack.c.h.b16 %v2726
        %v2836 = vunpack.c.l.b16 %v2727
        %v2837 = vunpack.c.h.b16 %v2727
        %v2838 = vpack.c.b16 %v2776, %v2774
        %v2839 = vpack.c.b16 %v2777, %v2775
        %v2840 = vpack.c.b16 %v2780, %v2778
        %v2841 = vpack.c.b16 %v2781, %v2779
        %v2842 = vpack.c.b16 %v2784, %v2782
        %v2843 = vpack.c.b16 %v2785, %v2783
        %v2844 = vpack.c.b16 %v2788, %v2786
        %v2845 = vpack.c.b16 %v2789, %v2787
        %v2846 = vpack.c.b16 %v2792, %v2790
        %v2847 = vpack.c.b16 %v2793, %v2791
        %v2848 = vpack.c.b16 %v2796, %v2794
        %v2849 = vpack.c.b16 %v2797, %v2795
        %v2850 = vpack.c.b16 %v2800, %v2798
        %v2851 = vpack.c.b16 %v2801, %v2799
        %v2852 = vpack.c.b16 %v2804, %v2802
        %v2853 = vpack.c.b16 %v2805, %v2803
        %v2854 = vpack.c.b16 %v2808, %v2806
        %v2855 = vpack.c.b16 %v2809, %v2807
        %v2856 = vpack.c.b16 %v2812, %v2810
        %v2857 = vpack.c.b16 %v2813, %v2811
        %v2858 = vpack.c.b16 %v2816, %v2814
        %v2859 = vpack.c.b16 %v2817, %v2815
        %v2860 = vpack.c.b16 %v2820, %v2818
        %v2861 = vpack.c.b16 %v2821, %v2819
        %v2862 = vpack.c.b16 %v2824, %v2822
        %v2863 = vpack.c.b16 %v2825, %v2823
        %v2864 = vpack.c.b16 %v2828, %v2826
        %v2865 = vpack.c.b16 %v2829, %v2827
        %v2866 = vpack.c.b16 %v2832, %v2830
        %v2867 = vpack.c.b16 %v2833, %v2831
        %v2868 = vpack.c.b16 %v2836, %v2834
        %v2869 = vpack.c.b16 %v2837, %v2835
        %2902 = vmatprep.subr.bf16.mxu0 %v2839
        %2903 = vmatpush1.bf16.msra.mxu0 %v2838
        %2904 = vmatprep.subr.bf16.mxu0 %v2841
        %2905 = vmatpush1.bf16.msra.mxu0 %v2840
        %2906 = vmatprep.subr.bf16.mxu0 %v2843
        %2907 = vmatpush1.bf16.msra.mxu0 %v2842
        %2908 = vmatprep.subr.bf16.mxu0 %v2845
        %2909 = vmatpush1.bf16.msra.mxu0 %v2844
        %2910 = vmatprep.subr.bf16.mxu0 %v2847
        %2911 = vmatpush1.bf16.msra.mxu0 %v2846
        %2912 = vmatprep.subr.bf16.mxu0 %v2849
        %2913 = vmatpush1.bf16.msra.mxu0 %v2848
        %2914 = vmatprep.subr.bf16.mxu0 %v2851
        %2915 = vmatpush1.bf16.msra.mxu0 %v2850
        %2916 = vmatprep.subr.bf16.mxu0 %v2853
        %2917 = vmatpush1.bf16.msra.mxu0 %v2852
        %2918 = vmatprep.subr.bf16.mxu0 %v2855
        %2919 = vmatpush1.bf16.msra.mxu0 %v2854
        %2920 = vmatprep.subr.bf16.mxu0 %v2857
        %2921 = vmatpush1.bf16.msra.mxu0 %v2856
        %2922 = vmatprep.subr.bf16.mxu0 %v2859
        %2923 = vmatpush1.bf16.msra.mxu0 %v2858
        %2924 = vmatprep.subr.bf16.mxu0 %v2861
        %2925 = vmatpush1.bf16.msra.mxu0 %v2860
        %2926 = vmatprep.subr.bf16.mxu0 %v2863
        %2927 = vmatpush1.bf16.msra.mxu0 %v2862
        %2928 = vmatprep.subr.bf16.mxu0 %v2865
        %2929 = vmatpush1.bf16.msra.mxu0 %v2864
        %2930 = vmatprep.subr.bf16.mxu0 %v2867
        %2931 = vmatpush1.bf16.msra.mxu0 %v2866
        %2932 = vmatprep.subr.bf16.mxu0 %v2869
        %2933 = vmatpush1.bf16.msra.mxu0 %v2868
        %2934 = vmatprep.mubr.bf16.mxu0 %v2730
        %2935 = vmatmul.mubr.bf16.gmra.mrb[0].mxu0 %v2729
        %v2936 = vpop.f32.mrb[0].mxu0
        %v2937 = vadd.f32 %v2735, %v2936
        %v2938 = vpop.f32.mrb[0].mxu0
        %v2939 = vadd.f32 %v2739, %v2938
        %v2940 = vpop.f32.mrb[0].mxu0
        %v2941 = vadd.f32 %v2735, %v2940
        %v2942 = vpop.f32.mrb[0].mxu0
        %v2943 = vadd.f32 %v2739, %v2942
        %2944 = vdwg.mxu0
        %v2945 = vadd.f32 %v737, %v2937
        %v2946 = vadd.f32 %v738, %v2939
        %v2947 = vadd.f32 %v739, %v2941
        %v2948 = vadd.f32 %v740, %v2943
        %v2949 = vld [vmem:[%s702] sm:$0x3]
        %v2950 = vld [vmem:[%s706] sm:$0x3]
        %v2951 = vadd.f32 %v2945, %v2946
        %2952 = vadd.xlane.f32.xlu0 %v2951
        %v2953 = vpop.xlane.xlu0 %2952
        %v2954 = vsel %vm746, %v2947, 0.0
        %v2955 = vsel %vm746, %v2948, 0.0
        %v2956 = vadd.f32 %v2954, %v2955
        %2957 = vadd.xlane.f32.xlu0 %v2956
        %v2958 = vpop.xlane.xlu0 %2957
        %v2959 = vmul.f32 %v2953, %v752
        %v2960 = vmul.f32 %v2958, %v752
        %v2961 = vsub.f32 %v2945, %v2959
        %v2962 = vsub.f32 %v2946, %v2959
        %v2963 = vsub.f32 %v2947, %v2960
        %v2964 = vsub.f32 %v2948, %v2960
        %v2965 = vmul.f32 %v2961, %v2961
        %v2966 = vmul.f32 %v2962, %v2962
        %v2967 = vmul.f32 %v2963, %v2963
        %v2968 = vmul.f32 %v2964, %v2964
        %v2969 = vadd.f32 %v2965, %v2966
        %2970 = vadd.xlane.f32.xlu0 %v2969
        %v2971 = vpop.xlane.xlu0 %2970
        %v2972 = vsel %vm746, %v2967, 0.0
        %v2973 = vsel %vm746, %v2968, 0.0
        %v2974 = vadd.f32 %v2972, %v2973
        %2975 = vadd.xlane.f32.xlu0 %v2974
        %v2976 = vpop.xlane.xlu0 %2975
        %v2977 = vmul.f32 %v2971, %v752
        %v2978 = vmul.f32 %v2976, %v752
        %v2979 = vadd.f32 %v2977, 1e-05
        %v2980 = vadd.f32 %v2978, 1e-05
        %v2981 = vrsqrt.pop %v2979
        %v2982 = vrsqrt.pop %v2980
        %v2983 = vmul.f32 %v2961, %v2981
        %v2984 = vmul.f32 %v2962, %v2981
        %v2985 = vmul.f32 %v2963, %v2982
        %v2986 = vmul.f32 %v2964, %v2982
        %v2988 = vlaneseq
        %v2989 = vshrl.u32 %v2988, 7
        %v2990 = vsub.s32 0, %v2989
        %v2991 = vrot.slane %v2949, %v2990
        %v2992 = vlaneseq
        %v2993 = vshrl.u32 %v2992, 7
        %v2994 = vsub.s32 1, %v2993
        %v2995 = vrot.slane %v2949, %v2994
        %v2998 = vmul.f32 %v2983, %v2991
        %v2999 = vmul.f32 %v2984, %v2995
        %v3000 = vmul.f32 %v2985, %v2991
        %v3001 = vmul.f32 %v2986, %v2995
        %v3003 = vlaneseq
        %v3004 = vshrl.u32 %v3003, 7
        %v3005 = vsub.s32 0, %v3004
        %v3006 = vrot.slane %v2950, %v3005
        %v3007 = vlaneseq
        %v3008 = vshrl.u32 %v3007, 7
        %v3009 = vsub.s32 1, %v3008
        %v3010 = vrot.slane %v2950, %v3009
        %v3013 = vadd.f32 %v2998, %v3006
        %v3014 = vadd.f32 %v2999, %v3010
        %v3015 = vadd.f32 %v3000, %v3006
        %v3016 = vadd.f32 %v3001, %v3010
        %v3017 = vld [vmem:[%s584] sm:$0xff]
        %v3018 = vld [vmem:[%s584 + $0x8] sm:$0xff]
        %v3019 = vld [vmem:[%s584 + $0x10] sm:$0xff]
        %v3020 = vld [vmem:[%s584 + $0x18] sm:$0xff]
        %v3021 = vld [vmem:[%s584 + $0x20] sm:$0xff]
        %v3022 = vld [vmem:[%s584 + $0x28] sm:$0xff]
        %v3023 = vld [vmem:[%s584 + $0x30] sm:$0xff]
        %v3024 = vld [vmem:[%s584 + $0x38] sm:$0xff]
        %v3025 = vld [vmem:[%s584 + $0x40] sm:$0xff]
        %v3026 = vld [vmem:[%s584 + $0x48] sm:$0xff]
        %v3027 = vld [vmem:[%s584 + $0x50] sm:$0xff]
        %v3028 = vld [vmem:[%s584 + $0x58] sm:$0xff]
        %v3029 = vld [vmem:[%s584 + $0x60] sm:$0xff]
        %v3030 = vld [vmem:[%s584 + $0x68] sm:$0xff]
        %v3031 = vld [vmem:[%s584 + $0x70] sm:$0xff]
        %v3032 = vld [vmem:[%s584 + $0x78] sm:$0xff]
        %v3033 = vld [vmem:[%s584 + $0x80] sm:$0xff]
        %v3034 = vld [vmem:[%s584 + $0x88] sm:$0xff]
        %v3035 = vld [vmem:[%s584 + $0x90] sm:$0xff]
        %v3036 = vld [vmem:[%s584 + $0x98] sm:$0xff]
        %v3037 = vld [vmem:[%s584 + $0xa0] sm:$0xff]
        %v3038 = vld [vmem:[%s584 + $0xa8] sm:$0xff]
        %v3039 = vld [vmem:[%s584 + $0xb0] sm:$0xff]
        %v3040 = vld [vmem:[%s584 + $0xb8] sm:$0xff]
        %v3041 = vld [vmem:[%s584 + $0xc0] sm:$0xff]
        %v3042 = vld [vmem:[%s584 + $0xc8] sm:$0xff]
        %v3043 = vld [vmem:[%s584 + $0xd0] sm:$0xff]
        %v3044 = vld [vmem:[%s584 + $0xd8] sm:$0xff]
        %v3045 = vld [vmem:[%s584 + $0xe0] sm:$0xff]
        %v3046 = vld [vmem:[%s584 + $0xe8] sm:$0xff]
        %v3047 = vld [vmem:[%s584 + $0xf0] sm:$0xff]
        %v3048 = vld [vmem:[%s584 + $0xf8] sm:$0xff]
        %v3049 = vld [vmem:[%s584 + $0x100] sm:$0xff]
        %v3050 = vld [vmem:[%s584 + $0x108] sm:$0xff]
        %v3051 = vld [vmem:[%s584 + $0x110] sm:$0xff]
        %v3052 = vld [vmem:[%s584 + $0x118] sm:$0xff]
        %v3053 = vld [vmem:[%s584 + $0x120] sm:$0xff]
        %v3054 = vld [vmem:[%s584 + $0x128] sm:$0xff]
        %v3055 = vld [vmem:[%s584 + $0x130] sm:$0xff]
        %v3056 = vld [vmem:[%s584 + $0x138] sm:$0xff]
        %v3057 = vld [vmem:[%s584 + $0x140] sm:$0xff]
        %v3058 = vld [vmem:[%s584 + $0x148] sm:$0xff]
        %v3059 = vld [vmem:[%s584 + $0x150] sm:$0xff]
        %v3060 = vld [vmem:[%s584 + $0x158] sm:$0xff]
        %v3061 = vld [vmem:[%s584 + $0x160] sm:$0xff]
        %v3062 = vld [vmem:[%s584 + $0x168] sm:$0xff]
        %v3063 = vld [vmem:[%s584 + $0x170] sm:$0xff]
        %v3064 = vld [vmem:[%s584 + $0x178] sm:$0xff]
        %v3065 = vld [vmem:[%s584 + $0x180] sm:$0xff]
        %v3066 = vld [vmem:[%s584 + $0x188] sm:$0xff]
        %v3067 = vld [vmem:[%s584 + $0x190] sm:$0xff]
        %v3068 = vld [vmem:[%s584 + $0x198] sm:$0xff]
        %v3069 = vld [vmem:[%s584 + $0x1a0] sm:$0xff]
        %v3070 = vld [vmem:[%s584 + $0x1a8] sm:$0xff]
        %v3071 = vld [vmem:[%s584 + $0x1b0] sm:$0xff]
        %v3072 = vld [vmem:[%s584 + $0x1b8] sm:$0xff]
        %v3073 = vld [vmem:[%s584 + $0x1c0] sm:$0xff]
        %v3074 = vld [vmem:[%s584 + $0x1c8] sm:$0xff]
        %v3075 = vld [vmem:[%s584 + $0x1d0] sm:$0xff]
        %v3076 = vld [vmem:[%s584 + $0x1d8] sm:$0xff]
        %v3077 = vld [vmem:[%s584 + $0x1e0] sm:$0xff]
        %v3078 = vld [vmem:[%s584 + $0x1e8] sm:$0xff]
        %v3079 = vld [vmem:[%s584 + $0x1f0] sm:$0xff]
        %v3080 = vld [vmem:[%s584 + $0x1f8] sm:$0xff]
        %v3081 = vld [vmem:[%s584 + $0x200] sm:$0xff]
        %v3082 = vld [vmem:[%s584 + $0x208] sm:$0xff]
        %v3083 = vld [vmem:[%s584 + $0x210] sm:$0xff]
        %v3084 = vld [vmem:[%s584 + $0x218] sm:$0xff]
        %v3085 = vld [vmem:[%s584 + $0x220] sm:$0xff]
        %v3086 = vld [vmem:[%s584 + $0x228] sm:$0xff]
        %v3087 = vld [vmem:[%s584 + $0x230] sm:$0xff]
        %v3088 = vld [vmem:[%s584 + $0x238] sm:$0xff]
        %v3089 = vld [vmem:[%s584 + $0x240] sm:$0xff]
        %v3090 = vld [vmem:[%s584 + $0x248] sm:$0xff]
        %v3091 = vld [vmem:[%s584 + $0x250] sm:$0xff]
        %v3092 = vld [vmem:[%s584 + $0x258] sm:$0xff]
        %v3093 = vld [vmem:[%s584 + $0x260] sm:$0xff]
        %v3094 = vld [vmem:[%s584 + $0x268] sm:$0xff]
        %v3095 = vld [vmem:[%s584 + $0x270] sm:$0xff]
        %v3096 = vld [vmem:[%s584 + $0x278] sm:$0xff]
        %v3097 = vld [vmem:[%s584 + $0x280] sm:$0xff]
        %v3098 = vld [vmem:[%s584 + $0x288] sm:$0xff]
        %v3099 = vld [vmem:[%s584 + $0x290] sm:$0xff]
        %v3100 = vld [vmem:[%s584 + $0x298] sm:$0xff]
        %v3101 = vld [vmem:[%s584 + $0x2a0] sm:$0xff]
        %v3102 = vld [vmem:[%s584 + $0x2a8] sm:$0xff]
        %v3103 = vld [vmem:[%s584 + $0x2b0] sm:$0xff]
        %v3104 = vld [vmem:[%s584 + $0x2b8] sm:$0xff]
        %v3105 = vld [vmem:[%s584 + $0x2c0] sm:$0xff]
        %v3106 = vld [vmem:[%s584 + $0x2c8] sm:$0xff]
        %v3107 = vld [vmem:[%s584 + $0x2d0] sm:$0xff]
        %v3108 = vld [vmem:[%s584 + $0x2d8] sm:$0xff]
        %v3109 = vld [vmem:[%s584 + $0x2e0] sm:$0xff]
        %v3110 = vld [vmem:[%s584 + $0x2e8] sm:$0xff]
        %v3111 = vld [vmem:[%s584 + $0x2f0] sm:$0xff]
        %v3112 = vld [vmem:[%s584 + $0x2f8] sm:$0xff]
        %v3113 = vld [vmem:[%s584 + $0x300] sm:$0xff]
        %v3114 = vld [vmem:[%s584 + $0x308] sm:$0xff]
        %v3115 = vld [vmem:[%s584 + $0x310] sm:$0xff]
        %v3116 = vld [vmem:[%s584 + $0x318] sm:$0xff]
        %v3117 = vld [vmem:[%s584 + $0x320] sm:$0xff]
        %v3118 = vld [vmem:[%s584 + $0x328] sm:$0xff]
        %v3119 = vld [vmem:[%s584 + $0x330] sm:$0xff]
        %v3120 = vld [vmem:[%s584 + $0x338] sm:$0xff]
        %v3121 = vld [vmem:[%s584 + $0x340] sm:$0xff]
        %v3122 = vld [vmem:[%s584 + $0x348] sm:$0xff]
        %v3123 = vld [vmem:[%s584 + $0x350] sm:$0xff]
        %v3124 = vld [vmem:[%s584 + $0x358] sm:$0xff]
        %v3125 = vld [vmem:[%s584 + $0x360] sm:$0xff]
        %v3126 = vld [vmem:[%s584 + $0x368] sm:$0xff]
        %v3127 = vld [vmem:[%s584 + $0x370] sm:$0xff]
        %v3128 = vld [vmem:[%s584 + $0x378] sm:$0xff]
        %v3129 = vld [vmem:[%s584 + $0x380] sm:$0xff]
        %v3130 = vld [vmem:[%s584 + $0x388] sm:$0xff]
        %v3131 = vld [vmem:[%s584 + $0x390] sm:$0xff]
        %v3132 = vld [vmem:[%s584 + $0x398] sm:$0xff]
        %v3133 = vld [vmem:[%s584 + $0x3a0] sm:$0xff]
        %v3134 = vld [vmem:[%s584 + $0x3a8] sm:$0xff]
        %v3135 = vld [vmem:[%s584 + $0x3b0] sm:$0xff]
        %v3136 = vld [vmem:[%s584 + $0x3b8] sm:$0xff]
        %v3137 = vld [vmem:[%s584 + $0x3c0] sm:$0xff]
        %v3138 = vld [vmem:[%s584 + $0x3c8] sm:$0xff]
        %v3139 = vld [vmem:[%s584 + $0x3d0] sm:$0xff]
        %v3140 = vld [vmem:[%s584 + $0x3d8] sm:$0xff]
        %v3141 = vld [vmem:[%s584 + $0x3e0] sm:$0xff]
        %v3142 = vld [vmem:[%s584 + $0x3e8] sm:$0xff]
        %v3143 = vld [vmem:[%s584 + $0x3f0] sm:$0xff]
        %v3144 = vld [vmem:[%s584 + $0x3f8] sm:$0xff]
        %v3145 = vld [vmem:[%s710] sm:$0xff]
        %v3146 = vpack.c.bf16 %v3015, %v3013
        %v3147 = vpack.c.bf16 %v3016, %v3014
        %v3149 = vlaneseq
        %v3150 = vshrl.u32 %v3149, 7
        %v3151 = vsub.s32 0, %v3150
        %v3152 = vrot.slane %v3145, %v3151
        %v3153 = vlaneseq
        %v3154 = vshrl.u32 %v3153, 7
        %v3155 = vsub.s32 1, %v3154
        %v3156 = vrot.slane %v3145, %v3155
        %v3157 = vlaneseq
        %v3158 = vshrl.u32 %v3157, 7
        %v3159 = vsub.s32 2, %v3158
        %v3160 = vrot.slane %v3145, %v3159
        %v3161 = vlaneseq
        %v3162 = vshrl.u32 %v3161, 7
        %v3163 = vsub.s32 3, %v3162
        %v3164 = vrot.slane %v3145, %v3163
        %v3165 = vlaneseq
        %v3166 = vshrl.u32 %v3165, 7
        %v3167 = vsub.s32 4, %v3166
        %v3168 = vrot.slane %v3145, %v3167
        %v3169 = vlaneseq
        %v3170 = vshrl.u32 %v3169, 7
        %v3171 = vsub.s32 5, %v3170
        %v3172 = vrot.slane %v3145, %v3171
        %v3173 = vlaneseq
        %v3174 = vshrl.u32 %v3173, 7
        %v3175 = vsub.s32 6, %v3174
        %v3176 = vrot.slane %v3145, %v3175
        %v3177 = vlaneseq
        %v3178 = vshrl.u32 %v3177, 7
        %v3179 = vsub.s32 7, %v3178
        %v3180 = vrot.slane %v3145, %v3179
        %v3317 = vunpack.c.l.b16 %v3017
        %v3318 = vunpack.c.h.b16 %v3017
        %v3319 = vunpack.c.l.b16 %v3018
        %v3320 = vunpack.c.h.b16 %v3018
        %v3321 = vunpack.c.l.b16 %v3019
        %v3322 = vunpack.c.h.b16 %v3019
        %v3323 = vunpack.c.l.b16 %v3020
        %v3324 = vunpack.c.h.b16 %v3020
        %v3325 = vunpack.c.l.b16 %v3021
        %v3326 = vunpack.c.h.b16 %v3021
        %v3327 = vunpack.c.l.b16 %v3022
        %v3328 = vunpack.c.h.b16 %v3022
        %v3329 = vunpack.c.l.b16 %v3023
        %v3330 = vunpack.c.h.b16 %v3023
        %v3331 = vunpack.c.l.b16 %v3024
        %v3332 = vunpack.c.h.b16 %v3024
        %v3333 = vunpack.c.l.b16 %v3025
        %v3334 = vunpack.c.h.b16 %v3025
        %v3335 = vunpack.c.l.b16 %v3026
        %v3336 = vunpack.c.h.b16 %v3026
        %v3337 = vunpack.c.l.b16 %v3027
        %v3338 = vunpack.c.h.b16 %v3027
        %v3339 = vunpack.c.l.b16 %v3028
        %v3340 = vunpack.c.h.b16 %v3028
        %v3341 = vunpack.c.l.b16 %v3029
        %v3342 = vunpack.c.h.b16 %v3029
        %v3343 = vunpack.c.l.b16 %v3030
        %v3344 = vunpack.c.h.b16 %v3030
        %v3345 = vunpack.c.l.b16 %v3031
        %v3346 = vunpack.c.h.b16 %v3031
        %v3347 = vunpack.c.l.b16 %v3032
        %v3348 = vunpack.c.h.b16 %v3032
        %v3349 = vunpack.c.l.b16 %v3033
        %v3350 = vunpack.c.h.b16 %v3033
        %v3351 = vunpack.c.l.b16 %v3034
        %v3352 = vunpack.c.h.b16 %v3034
        %v3353 = vunpack.c.l.b16 %v3035
        %v3354 = vunpack.c.h.b16 %v3035
        %v3355 = vunpack.c.l.b16 %v3036
        %v3356 = vunpack.c.h.b16 %v3036
        %v3357 = vunpack.c.l.b16 %v3037
        %v3358 = vunpack.c.h.b16 %v3037
        %v3359 = vunpack.c.l.b16 %v3038
        %v3360 = vunpack.c.h.b16 %v3038
        %v3361 = vunpack.c.l.b16 %v3039
        %v3362 = vunpack.c.h.b16 %v3039
        %v3363 = vunpack.c.l.b16 %v3040
        %v3364 = vunpack.c.h.b16 %v3040
        %v3365 = vunpack.c.l.b16 %v3041
        %v3366 = vunpack.c.h.b16 %v3041
        %v3367 = vunpack.c.l.b16 %v3042
        %v3368 = vunpack.c.h.b16 %v3042
        %v3369 = vunpack.c.l.b16 %v3043
        %v3370 = vunpack.c.h.b16 %v3043
        %v3371 = vunpack.c.l.b16 %v3044
        %v3372 = vunpack.c.h.b16 %v3044
        %v3373 = vunpack.c.l.b16 %v3045
        %v3374 = vunpack.c.h.b16 %v3045
        %v3375 = vunpack.c.l.b16 %v3046
        %v3376 = vunpack.c.h.b16 %v3046
        %v3377 = vunpack.c.l.b16 %v3047
        %v3378 = vunpack.c.h.b16 %v3047
        %v3379 = vunpack.c.l.b16 %v3048
        %v3380 = vunpack.c.h.b16 %v3048
        %v3381 = vunpack.c.l.b16 %v3049
        %v3382 = vunpack.c.h.b16 %v3049
        %v3383 = vunpack.c.l.b16 %v3050
        %v3384 = vunpack.c.h.b16 %v3050
        %v3385 = vunpack.c.l.b16 %v3051
        %v3386 = vunpack.c.h.b16 %v3051
        %v3387 = vunpack.c.l.b16 %v3052
        %v3388 = vunpack.c.h.b16 %v3052
        %v3389 = vunpack.c.l.b16 %v3053
        %v3390 = vunpack.c.h.b16 %v3053
        %v3391 = vunpack.c.l.b16 %v3054
        %v3392 = vunpack.c.h.b16 %v3054
        %v3393 = vunpack.c.l.b16 %v3055
        %v3394 = vunpack.c.h.b16 %v3055
        %v3395 = vunpack.c.l.b16 %v3056
        %v3396 = vunpack.c.h.b16 %v3056
        %v3397 = vunpack.c.l.b16 %v3057
        %v3398 = vunpack.c.h.b16 %v3057
        %v3399 = vunpack.c.l.b16 %v3058
        %v3400 = vunpack.c.h.b16 %v3058
        %v3401 = vunpack.c.l.b16 %v3059
        %v3402 = vunpack.c.h.b16 %v3059
        %v3403 = vunpack.c.l.b16 %v3060
        %v3404 = vunpack.c.h.b16 %v3060
        %v3405 = vunpack.c.l.b16 %v3061
        %v3406 = vunpack.c.h.b16 %v3061
        %v3407 = vunpack.c.l.b16 %v3062
        %v3408 = vunpack.c.h.b16 %v3062
        %v3409 = vunpack.c.l.b16 %v3063
        %v3410 = vunpack.c.h.b16 %v3063
        %v3411 = vunpack.c.l.b16 %v3064
        %v3412 = vunpack.c.h.b16 %v3064
        %v3413 = vunpack.c.l.b16 %v3065
        %v3414 = vunpack.c.h.b16 %v3065
        %v3415 = vunpack.c.l.b16 %v3066
        %v3416 = vunpack.c.h.b16 %v3066
        %v3417 = vunpack.c.l.b16 %v3067
        %v3418 = vunpack.c.h.b16 %v3067
        %v3419 = vunpack.c.l.b16 %v3068
        %v3420 = vunpack.c.h.b16 %v3068
        %v3421 = vunpack.c.l.b16 %v3069
        %v3422 = vunpack.c.h.b16 %v3069
        %v3423 = vunpack.c.l.b16 %v3070
        %v3424 = vunpack.c.h.b16 %v3070
        %v3425 = vunpack.c.l.b16 %v3071
        %v3426 = vunpack.c.h.b16 %v3071
        %v3427 = vunpack.c.l.b16 %v3072
        %v3428 = vunpack.c.h.b16 %v3072
        %v3429 = vunpack.c.l.b16 %v3073
        %v3430 = vunpack.c.h.b16 %v3073
        %v3431 = vunpack.c.l.b16 %v3074
        %v3432 = vunpack.c.h.b16 %v3074
        %v3433 = vunpack.c.l.b16 %v3075
        %v3434 = vunpack.c.h.b16 %v3075
        %v3435 = vunpack.c.l.b16 %v3076
        %v3436 = vunpack.c.h.b16 %v3076
        %v3437 = vunpack.c.l.b16 %v3077
        %v3438 = vunpack.c.h.b16 %v3077
        %v3439 = vunpack.c.l.b16 %v3078
        %v3440 = vunpack.c.h.b16 %v3078
        %v3441 = vunpack.c.l.b16 %v3079
        %v3442 = vunpack.c.h.b16 %v3079
        %v3443 = vunpack.c.l.b16 %v3080
        %v3444 = vunpack.c.h.b16 %v3080
        %v3445 = vunpack.c.l.b16 %v3081
        %v3446 = vunpack.c.h.b16 %v3081
        %v3447 = vunpack.c.l.b16 %v3082
        %v3448 = vunpack.c.h.b16 %v3082
        %v3449 = vunpack.c.l.b16 %v3083
        %v3450 = vunpack.c.h.b16 %v3083
        %v3451 = vunpack.c.l.b16 %v3084
        %v3452 = vunpack.c.h.b16 %v3084
        %v3453 = vunpack.c.l.b16 %v3085
        %v3454 = vunpack.c.h.b16 %v3085
        %v3455 = vunpack.c.l.b16 %v3086
        %v3456 = vunpack.c.h.b16 %v3086
        %v3457 = vunpack.c.l.b16 %v3087
        %v3458 = vunpack.c.h.b16 %v3087
        %v3459 = vunpack.c.l.b16 %v3088
        %v3460 = vunpack.c.h.b16 %v3088
        %v3461 = vunpack.c.l.b16 %v3089
        %v3462 = vunpack.c.h.b16 %v3089
        %v3463 = vunpack.c.l.b16 %v3090
        %v3464 = vunpack.c.h.b16 %v3090
        %v3465 = vunpack.c.l.b16 %v3091
        %v3466 = vunpack.c.h.b16 %v3091
        %v3467 = vunpack.c.l.b16 %v3092
        %v3468 = vunpack.c.h.b16 %v3092
        %v3469 = vunpack.c.l.b16 %v3093
        %v3470 = vunpack.c.h.b16 %v3093
        %v3471 = vunpack.c.l.b16 %v3094
        %v3472 = vunpack.c.h.b16 %v3094
        %v3473 = vunpack.c.l.b16 %v3095
        %v3474 = vunpack.c.h.b16 %v3095
        %v3475 = vunpack.c.l.b16 %v3096
        %v3476 = vunpack.c.h.b16 %v3096
        %v3477 = vunpack.c.l.b16 %v3097
        %v3478 = vunpack.c.h.b16 %v3097
        %v3479 = vunpack.c.l.b16 %v3098
        %v3480 = vunpack.c.h.b16 %v3098
        %v3481 = vunpack.c.l.b16 %v3099
        %v3482 = vunpack.c.h.b16 %v3099
        %v3483 = vunpack.c.l.b16 %v3100
        %v3484 = vunpack.c.h.b16 %v3100
        %v3485 = vunpack.c.l.b16 %v3101
        %v3486 = vunpack.c.h.b16 %v3101
        %v3487 = vunpack.c.l.b16 %v3102
        %v3488 = vunpack.c.h.b16 %v3102
        %v3489 = vunpack.c.l.b16 %v3103
        %v3490 = vunpack.c.h.b16 %v3103
        %v3491 = vunpack.c.l.b16 %v3104
        %v3492 = vunpack.c.h.b16 %v3104
        %v3493 = vunpack.c.l.b16 %v3105
        %v3494 = vunpack.c.h.b16 %v3105
        %v3495 = vunpack.c.l.b16 %v3106
        %v3496 = vunpack.c.h.b16 %v3106
        %v3497 = vunpack.c.l.b16 %v3107
        %v3498 = vunpack.c.h.b16 %v3107
        %v3499 = vunpack.c.l.b16 %v3108
        %v3500 = vunpack.c.h.b16 %v3108
        %v3501 = vunpack.c.l.b16 %v3109
        %v3502 = vunpack.c.h.b16 %v3109
        %v3503 = vunpack.c.l.b16 %v3110
        %v3504 = vunpack.c.h.b16 %v3110
        %v3505 = vunpack.c.l.b16 %v3111
        %v3506 = vunpack.c.h.b16 %v3111
        %v3507 = vunpack.c.l.b16 %v3112
        %v3508 = vunpack.c.h.b16 %v3112
        %v3509 = vunpack.c.l.b16 %v3113
        %v3510 = vunpack.c.h.b16 %v3113
        %v3511 = vunpack.c.l.b16 %v3114
        %v3512 = vunpack.c.h.b16 %v3114
        %v3513 = vunpack.c.l.b16 %v3115
        %v3514 = vunpack.c.h.b16 %v3115
        %v3515 = vunpack.c.l.b16 %v3116
        %v3516 = vunpack.c.h.b16 %v3116
        %v3517 = vunpack.c.l.b16 %v3117
        %v3518 = vunpack.c.h.b16 %v3117
        %v3519 = vunpack.c.l.b16 %v3118
        %v3520 = vunpack.c.h.b16 %v3118
        %v3521 = vunpack.c.l.b16 %v3119
        %v3522 = vunpack.c.h.b16 %v3119
        %v3523 = vunpack.c.l.b16 %v3120
        %v3524 = vunpack.c.h.b16 %v3120
        %v3525 = vunpack.c.l.b16 %v3121
        %v3526 = vunpack.c.h.b16 %v3121
        %v3527 = vunpack.c.l.b16 %v3122
        %v3528 = vunpack.c.h.b16 %v3122
        %v3529 = vunpack.c.l.b16 %v3123
        %v3530 = vunpack.c.h.b16 %v3123
        %v3531 = vunpack.c.l.b16 %v3124
        %v3532 = vunpack.c.h.b16 %v3124
        %v3533 = vunpack.c.l.b16 %v3125
        %v3534 = vunpack.c.h.b16 %v3125
        %v3535 = vunpack.c.l.b16 %v3126
        %v3536 = vunpack.c.h.b16 %v3126
        %v3537 = vunpack.c.l.b16 %v3127
        %v3538 = vunpack.c.h.b16 %v3127
        %v3539 = vunpack.c.l.b16 %v3128
        %v3540 = vunpack.c.h.b16 %v3128
        %v3541 = vunpack.c.l.b16 %v3129
        %v3542 = vunpack.c.h.b16 %v3129
        %v3543 = vunpack.c.l.b16 %v3130
        %v3544 = vunpack.c.h.b16 %v3130
        %v3545 = vunpack.c.l.b16 %v3131
        %v3546 = vunpack.c.h.b16 %v3131
        %v3547 = vunpack.c.l.b16 %v3132
        %v3548 = vunpack.c.h.b16 %v3132
        %v3549 = vunpack.c.l.b16 %v3133
        %v3550 = vunpack.c.h.b16 %v3133
        %v3551 = vunpack.c.l.b16 %v3134
        %v3552 = vunpack.c.h.b16 %v3134
        %v3553 = vunpack.c.l.b16 %v3135
        %v3554 = vunpack.c.h.b16 %v3135
        %v3555 = vunpack.c.l.b16 %v3136
        %v3556 = vunpack.c.h.b16 %v3136
        %v3557 = vunpack.c.l.b16 %v3137
        %v3558 = vunpack.c.h.b16 %v3137
        %v3559 = vunpack.c.l.b16 %v3138
        %v3560 = vunpack.c.h.b16 %v3138
        %v3561 = vunpack.c.l.b16 %v3139
        %v3562 = vunpack.c.h.b16 %v3139
        %v3563 = vunpack.c.l.b16 %v3140
        %v3564 = vunpack.c.h.b16 %v3140
        %v3565 = vunpack.c.l.b16 %v3141
        %v3566 = vunpack.c.h.b16 %v3141
        %v3567 = vunpack.c.l.b16 %v3142
        %v3568 = vunpack.c.h.b16 %v3142
        %v3569 = vunpack.c.l.b16 %v3143
        %v3570 = vunpack.c.h.b16 %v3143
        %v3571 = vunpack.c.l.b16 %v3144
        %v3572 = vunpack.c.h.b16 %v3144
        %v3573 = vpack.c.b16 %v3325, %v3317
        %v3574 = vpack.c.b16 %v3326, %v3318
        %v3575 = vpack.c.b16 %v3327, %v3319
        %v3576 = vpack.c.b16 %v3328, %v3320
        %v3577 = vpack.c.b16 %v3329, %v3321
        %v3578 = vpack.c.b16 %v3330, %v3322
        %v3579 = vpack.c.b16 %v3331, %v3323
        %v3580 = vpack.c.b16 %v3332, %v3324
        %v3581 = vpack.c.b16 %v3341, %v3333
        %v3582 = vpack.c.b16 %v3342, %v3334
        %v3583 = vpack.c.b16 %v3343, %v3335
        %v3584 = vpack.c.b16 %v3344, %v3336
        %v3585 = vpack.c.b16 %v3345, %v3337
        %v3586 = vpack.c.b16 %v3346, %v3338
        %v3587 = vpack.c.b16 %v3347, %v3339
        %v3588 = vpack.c.b16 %v3348, %v3340
        %v3589 = vpack.c.b16 %v3357, %v3349
        %v3590 = vpack.c.b16 %v3358, %v3350
        %v3591 = vpack.c.b16 %v3359, %v3351
        %v3592 = vpack.c.b16 %v3360, %v3352
        %v3593 = vpack.c.b16 %v3361, %v3353
        %v3594 = vpack.c.b16 %v3362, %v3354
        %v3595 = vpack.c.b16 %v3363, %v3355
        %v3596 = vpack.c.b16 %v3364, %v3356
        %v3597 = vpack.c.b16 %v3373, %v3365
        %v3598 = vpack.c.b16 %v3374, %v3366
        %v3599 = vpack.c.b16 %v3375, %v3367
        %v3600 = vpack.c.b16 %v3376, %v3368
        %v3601 = vpack.c.b16 %v3377, %v3369
        %v3602 = vpack.c.b16 %v3378, %v3370
        %v3603 = vpack.c.b16 %v3379, %v3371
        %v3604 = vpack.c.b16 %v3380, %v3372
        %v3605 = vpack.c.b16 %v3389, %v3381
        %v3606 = vpack.c.b16 %v3390, %v3382
        %v3607 = vpack.c.b16 %v3391, %v3383
        %v3608 = vpack.c.b16 %v3392, %v3384
        %v3609 = vpack.c.b16 %v3393, %v3385
        %v3610 = vpack.c.b16 %v3394, %v3386
        %v3611 = vpack.c.b16 %v3395, %v3387
        %v3612 = vpack.c.b16 %v3396, %v3388
        %v3613 = vpack.c.b16 %v3405, %v3397
        %v3614 = vpack.c.b16 %v3406, %v3398
        %v3615 = vpack.c.b16 %v3407, %v3399
        %v3616 = vpack.c.b16 %v3408, %v3400
        %v3617 = vpack.c.b16 %v3409, %v3401
        %v3618 = vpack.c.b16 %v3410, %v3402
        %v3619 = vpack.c.b16 %v3411, %v3403
        %v3620 = vpack.c.b16 %v3412, %v3404
        %v3621 = vpack.c.b16 %v3421, %v3413
        %v3622 = vpack.c.b16 %v3422, %v3414
        %v3623 = vpack.c.b16 %v3423, %v3415
        %v3624 = vpack.c.b16 %v3424, %v3416
        %v3625 = vpack.c.b16 %v3425, %v3417
        %v3626 = vpack.c.b16 %v3426, %v3418
        %v3627 = vpack.c.b16 %v3427, %v3419
        %v3628 = vpack.c.b16 %v3428, %v3420
        %v3629 = vpack.c.b16 %v3437, %v3429
        %v3630 = vpack.c.b16 %v3438, %v3430
        %v3631 = vpack.c.b16 %v3439, %v3431
        %v3632 = vpack.c.b16 %v3440, %v3432
        %v3633 = vpack.c.b16 %v3441, %v3433
        %v3634 = vpack.c.b16 %v3442, %v3434
        %v3635 = vpack.c.b16 %v3443, %v3435
        %v3636 = vpack.c.b16 %v3444, %v3436
        %v3637 = vpack.c.b16 %v3453, %v3445
        %v3638 = vpack.c.b16 %v3454, %v3446
        %v3639 = vpack.c.b16 %v3455, %v3447
        %v3640 = vpack.c.b16 %v3456, %v3448
        %v3641 = vpack.c.b16 %v3457, %v3449
        %v3642 = vpack.c.b16 %v3458, %v3450
        %v3643 = vpack.c.b16 %v3459, %v3451
        %v3644 = vpack.c.b16 %v3460, %v3452
        %v3645 = vpack.c.b16 %v3469, %v3461
        %v3646 = vpack.c.b16 %v3470, %v3462
        %v3647 = vpack.c.b16 %v3471, %v3463
        %v3648 = vpack.c.b16 %v3472, %v3464
        %v3649 = vpack.c.b16 %v3473, %v3465
        %v3650 = vpack.c.b16 %v3474, %v3466
        %v3651 = vpack.c.b16 %v3475, %v3467
        %v3652 = vpack.c.b16 %v3476, %v3468
        %v3653 = vpack.c.b16 %v3485, %v3477
        %v3654 = vpack.c.b16 %v3486, %v3478
        %v3655 = vpack.c.b16 %v3487, %v3479
        %v3656 = vpack.c.b16 %v3488, %v3480
        %v3657 = vpack.c.b16 %v3489, %v3481
        %v3658 = vpack.c.b16 %v3490, %v3482
        %v3659 = vpack.c.b16 %v3491, %v3483
        %v3660 = vpack.c.b16 %v3492, %v3484
        %v3661 = vpack.c.b16 %v3501, %v3493
        %v3662 = vpack.c.b16 %v3502, %v3494
        %v3663 = vpack.c.b16 %v3503, %v3495
        %v3664 = vpack.c.b16 %v3504, %v3496
        %v3665 = vpack.c.b16 %v3505, %v3497
        %v3666 = vpack.c.b16 %v3506, %v3498
        %v3667 = vpack.c.b16 %v3507, %v3499
        %v3668 = vpack.c.b16 %v3508, %v3500
        %v3669 = vpack.c.b16 %v3517, %v3509
        %v3670 = vpack.c.b16 %v3518, %v3510
        %v3671 = vpack.c.b16 %v3519, %v3511
        %v3672 = vpack.c.b16 %v3520, %v3512
        %v3673 = vpack.c.b16 %v3521, %v3513
        %v3674 = vpack.c.b16 %v3522, %v3514
        %v3675 = vpack.c.b16 %v3523, %v3515
        %v3676 = vpack.c.b16 %v3524, %v3516
        %v3677 = vpack.c.b16 %v3533, %v3525
        %v3678 = vpack.c.b16 %v3534, %v3526
        %v3679 = vpack.c.b16 %v3535, %v3527
        %v3680 = vpack.c.b16 %v3536, %v3528
        %v3681 = vpack.c.b16 %v3537, %v3529
        %v3682 = vpack.c.b16 %v3538, %v3530
        %v3683 = vpack.c.b16 %v3539, %v3531
        %v3684 = vpack.c.b16 %v3540, %v3532
        %v3685 = vpack.c.b16 %v3549, %v3541
        %v3686 = vpack.c.b16 %v3550, %v3542
        %v3687 = vpack.c.b16 %v3551, %v3543
        %v3688 = vpack.c.b16 %v3552, %v3544
        %v3689 = vpack.c.b16 %v3553, %v3545
        %v3690 = vpack.c.b16 %v3554, %v3546
        %v3691 = vpack.c.b16 %v3555, %v3547
        %v3692 = vpack.c.b16 %v3556, %v3548
        %v3693 = vpack.c.b16 %v3565, %v3557
        %v3694 = vpack.c.b16 %v3566, %v3558
        %v3695 = vpack.c.b16 %v3567, %v3559
        %v3696 = vpack.c.b16 %v3568, %v3560
        %v3697 = vpack.c.b16 %v3569, %v3561
        %v3698 = vpack.c.b16 %v3570, %v3562
        %v3699 = vpack.c.b16 %v3571, %v3563
        %v3700 = vpack.c.b16 %v3572, %v3564
        %3829 = vmatprep.subr.bf16.mxu0 %v3574
        %3830 = vmatpush1.bf16.msra.mxu0 %v3573
        %3831 = vmatprep.subr.bf16.mxu0 %v3582
        %3832 = vmatpush1.bf16.msra.mxu0 %v3581
        %3833 = vmatprep.subr.bf16.mxu0 %v3590
        %3834 = vmatpush1.bf16.msra.mxu0 %v3589
        %3835 = vmatprep.subr.bf16.mxu0 %v3598
        %3836 = vmatpush1.bf16.msra.mxu0 %v3597
        %3837 = vmatprep.subr.bf16.mxu0 %v3606
        %3838 = vmatpush1.bf16.msra.mxu0 %v3605
        %3839 = vmatprep.subr.bf16.mxu0 %v3614
        %3840 = vmatpush1.bf16.msra.mxu0 %v3613
        %3841 = vmatprep.subr.bf16.mxu0 %v3622
        %3842 = vmatpush1.bf16.msra.mxu0 %v3621
        %3843 = vmatprep.subr.bf16.mxu0 %v3630
        %3844 = vmatpush1.bf16.msra.mxu0 %v3629
        %3845 = vmatprep.subr.bf16.mxu0 %v3638
        %3846 = vmatpush1.bf16.msra.mxu0 %v3637
        %3847 = vmatprep.subr.bf16.mxu0 %v3646
        %3848 = vmatpush1.bf16.msra.mxu0 %v3645
        %3849 = vmatprep.subr.bf16.mxu0 %v3654
        %3850 = vmatpush1.bf16.msra.mxu0 %v3653
        %3851 = vmatprep.subr.bf16.mxu0 %v3662
        %3852 = vmatpush1.bf16.msra.mxu0 %v3661
        %3853 = vmatprep.subr.bf16.mxu0 %v3670
        %3854 = vmatpush1.bf16.msra.mxu0 %v3669
        %3855 = vmatprep.subr.bf16.mxu0 %v3678
        %3856 = vmatpush1.bf16.msra.mxu0 %v3677
        %3857 = vmatprep.subr.bf16.mxu0 %v3686
        %3858 = vmatpush1.bf16.msra.mxu0 %v3685
        %3859 = vmatprep.subr.bf16.mxu0 %v3694
        %3860 = vmatpush1.bf16.msra.mxu0 %v3693
        %3861 = vmatprep.mubr.bf16.mxu0 %v3147
        %3862 = vmatmul.mubr.bf16.gmra.mrb[0].mxu0 %v3146
        %v3863 = vpop.f32.mrb[0].mxu0
        %v3864 = vadd.f32 %v3152, %v3863
        %v3865 = vpop.f32.mrb[0].mxu0
        %v3866 = vadd.f32 %v3156, %v3865
        %v3867 = vpop.f32.mrb[0].mxu0
        %v3868 = vadd.f32 %v3152, %v3867
        %v3869 = vpop.f32.mrb[0].mxu0
        %v3870 = vadd.f32 %v3156, %v3869
        %3871 = vdwg.mxu0
        %3872 = vmatprep.subr.bf16.mxu0 %v3576
        %3873 = vmatpush1.bf16.msra.mxu0 %v3575
        %3874 = vmatprep.subr.bf16.mxu0 %v3584
        %3875 = vmatpush1.bf16.msra.mxu0 %v3583
        %3876 = vmatprep.subr.bf16.mxu0 %v3592
        %3877 = vmatpush1.bf16.msra.mxu0 %v3591
        %3878 = vmatprep.subr.bf16.mxu0 %v3600
        %3879 = vmatpush1.bf16.msra.mxu0 %v3599
        %3880 = vmatprep.subr.bf16.mxu0 %v3608
        %3881 = vmatpush1.bf16.msra.mxu0 %v3607
        %3882 = vmatprep.subr.bf16.mxu0 %v3616
        %3883 = vmatpush1.bf16.msra.mxu0 %v3615
        %3884 = vmatprep.subr.bf16.mxu0 %v3624
        %3885 = vmatpush1.bf16.msra.mxu0 %v3623
        %3886 = vmatprep.subr.bf16.mxu0 %v3632
        %3887 = vmatpush1.bf16.msra.mxu0 %v3631
        %3888 = vmatprep.subr.bf16.mxu0 %v3640
        %3889 = vmatpush1.bf16.msra.mxu0 %v3639
        %3890 = vmatprep.subr.bf16.mxu0 %v3648
        %3891 = vmatpush1.bf16.msra.mxu0 %v3647
        %3892 = vmatprep.subr.bf16.mxu0 %v3656
        %3893 = vmatpush1.bf16.msra.mxu0 %v3655
        %3894 = vmatprep.subr.bf16.mxu0 %v3664
        %3895 = vmatpush1.bf16.msra.mxu0 %v3663
        %3896 = vmatprep.subr.bf16.mxu0 %v3672
        %3897 = vmatpush1.bf16.msra.mxu0 %v3671
        %3898 = vmatprep.subr.bf16.mxu0 %v3680
        %3899 = vmatpush1.bf16.msra.mxu0 %v3679
        %3900 = vmatprep.subr.bf16.mxu0 %v3688
        %3901 = vmatpush1.bf16.msra.mxu0 %v3687
        %3902 = vmatprep.subr.bf16.mxu0 %v3696
        %3903 = vmatpush1.bf16.msra.mxu0 %v3695
        %3904 = vmatprep.mubr.bf16.mxu0 %v3147
        %3905 = vmatmul.mubr.bf16.gmra.mrb[0].mxu0 %v3146
        %v3906 = vpop.f32.mrb[0].mxu0
        %v3907 = vadd.f32 %v3160, %v3906
        %v3908 = vpop.f32.mrb[0].mxu0
        %v3909 = vadd.f32 %v3164, %v3908
        %v3910 = vpop.f32.mrb[0].mxu0
        %v3911 = vadd.f32 %v3160, %v3910
        %v3912 = vpop.f32.mrb[0].mxu0
        %v3913 = vadd.f32 %v3164, %v3912
        %3914 = vdwg.mxu0
        %3915 = vmatprep.subr.bf16.mxu0 %v3578
        %3916 = vmatpush1.bf16.msra.mxu0 %v3577
        %3917 = vmatprep.subr.bf16.mxu0 %v3586
        %3918 = vmatpush1.bf16.msra.mxu0 %v3585
        %3919 = vmatprep.subr.bf16.mxu0 %v3594
        %3920 = vmatpush1.bf16.msra.mxu0 %v3593
        %3921 = vmatprep.subr.bf16.mxu0 %v3602
        %3922 = vmatpush1.bf16.msra.mxu0 %v3601
        %3923 = vmatprep.subr.bf16.mxu0 %v3610
        %3924 = vmatpush1.bf16.msra.mxu0 %v3609
        %3925 = vmatprep.subr.bf16.mxu0 %v3618
        %3926 = vmatpush1.bf16.msra.mxu0 %v3617
        %3927 = vmatprep.subr.bf16.mxu0 %v3626
        %3928 = vmatpush1.bf16.msra.mxu0 %v3625
        %3929 = vmatprep.subr.bf16.mxu0 %v3634
        %3930 = vmatpush1.bf16.msra.mxu0 %v3633
        %3931 = vmatprep.subr.bf16.mxu0 %v3642
        %3932 = vmatpush1.bf16.msra.mxu0 %v3641
        %3933 = vmatprep.subr.bf16.mxu0 %v3650
        %3934 = vmatpush1.bf16.msra.mxu0 %v3649
        %3935 = vmatprep.subr.bf16.mxu0 %v3658
        %3936 = vmatpush1.bf16.msra.mxu0 %v3657
        %3937 = vmatprep.subr.bf16.mxu0 %v3666
        %3938 = vmatpush1.bf16.msra.mxu0 %v3665
        %3939 = vmatprep.subr.bf16.mxu0 %v3674
        %3940 = vmatpush1.bf16.msra.mxu0 %v3673
        %3941 = vmatprep.subr.bf16.mxu0 %v3682
        %3942 = vmatpush1.bf16.msra.mxu0 %v3681
        %3943 = vmatprep.subr.bf16.mxu0 %v3690
        %3944 = vmatpush1.bf16.msra.mxu0 %v3689
        %3945 = vmatprep.subr.bf16.mxu0 %v3698
        %3946 = vmatpush1.bf16.msra.mxu0 %v3697
        %3947 = vmatprep.mubr.bf16.mxu0 %v3147
        %3948 = vmatmul.mubr.bf16.gmra.mrb[0].mxu0 %v3146
        %v3949 = vpop.f32.mrb[0].mxu0
        %v3950 = vadd.f32 %v3168, %v3949
        %v3951 = vpop.f32.mrb[0].mxu0
        %v3952 = vadd.f32 %v3172, %v3951
        %v3953 = vpop.f32.mrb[0].mxu0
        %v3954 = vadd.f32 %v3168, %v3953
        %v3955 = vpop.f32.mrb[0].mxu0
        %v3956 = vadd.f32 %v3172, %v3955
        %3957 = vdwg.mxu0
        %3958 = vmatprep.subr.bf16.mxu0 %v3580
        %3959 = vmatpush1.bf16.msra.mxu0 %v3579
        %3960 = vmatprep.subr.bf16.mxu0 %v3588
        %3961 = vmatpush1.bf16.msra.mxu0 %v3587
        %3962 = vmatprep.subr.bf16.mxu0 %v3596
        %3963 = vmatpush1.bf16.msra.mxu0 %v3595
        %3964 = vmatprep.subr.bf16.mxu0 %v3604
        %3965 = vmatpush1.bf16.msra.mxu0 %v3603
        %3966 = vmatprep.subr.bf16.mxu0 %v3612
        %3967 = vmatpush1.bf16.msra.mxu0 %v3611
        %3968 = vmatprep.subr.bf16.mxu0 %v3620
        %3969 = vmatpush1.bf16.msra.mxu0 %v3619
        %3970 = vmatprep.subr.bf16.mxu0 %v3628
        %3971 = vmatpush1.bf16.msra.mxu0 %v3627
        %3972 = vmatprep.subr.bf16.mxu0 %v3636
        %3973 = vmatpush1.bf16.msra.mxu0 %v3635
        %3974 = vmatprep.subr.bf16.mxu0 %v3644
        %3975 = vmatpush1.bf16.msra.mxu0 %v3643
        %3976 = vmatprep.subr.bf16.mxu0 %v3652
        %3977 = vmatpush1.bf16.msra.mxu0 %v3651
        %3978 = vmatprep.subr.bf16.mxu0 %v3660
        %3979 = vmatpush1.bf16.msra.mxu0 %v3659
        %3980 = vmatprep.subr.bf16.mxu0 %v3668
        %3981 = vmatpush1.bf16.msra.mxu0 %v3667
        %3982 = vmatprep.subr.bf16.mxu0 %v3676
        %3983 = vmatpush1.bf16.msra.mxu0 %v3675
        %3984 = vmatprep.subr.bf16.mxu0 %v3684
        %3985 = vmatpush1.bf16.msra.mxu0 %v3683
        %3986 = vmatprep.subr.bf16.mxu0 %v3692
        %3987 = vmatpush1.bf16.msra.mxu0 %v3691
        %3988 = vmatprep.subr.bf16.mxu0 %v3700
        %3989 = vmatpush1.bf16.msra.mxu0 %v3699
        %3990 = vmatprep.mubr.bf16.mxu0 %v3147
        %3991 = vmatmul.mubr.bf16.gmra.mrb[0].mxu0 %v3146
        %v3992 = vpop.f32.mrb[0].mxu0
        %v3993 = vadd.f32 %v3176, %v3992
        %v3994 = vpop.f32.mrb[0].mxu0
        %v3995 = vadd.f32 %v3180, %v3994
        %v3996 = vpop.f32.mrb[0].mxu0
        %v3997 = vadd.f32 %v3176, %v3996
        %v3998 = vpop.f32.mrb[0].mxu0
        %v3999 = vadd.f32 %v3180, %v3998
        %4000 = vdwg.mxu0
        %v4001 = vxor.u32 %v3864, 2147483648
        %v4002 = vxor.u32 %v3866, 2147483648
        %v4003 = vxor.u32 %v3907, 2147483648
        %v4004 = vxor.u32 %v3909, 2147483648
        %v4005 = vxor.u32 %v3868, 2147483648
        %v4006 = vxor.u32 %v3870, 2147483648
        %v4007 = vxor.u32 %v3911, 2147483648
        %v4008 = vxor.u32 %v3913, 2147483648
        %v4009 = vmul.f32 %v4001, 1.442695
        %v4010 = vpow.pop %v4009
        %v4011 = vmul.f32 %v4002, 1.442695
        %v4012 = vpow.pop %v4011
        %v4013 = vmul.f32 %v4003, 1.442695
        %v4014 = vpow.pop %v4013
        %v4015 = vmul.f32 %v4004, 1.442695
        %v4016 = vpow.pop %v4015
        %v4017 = vmul.f32 %v4005, 1.442695
        %v4018 = vpow.pop %v4017
        %v4019 = vmul.f32 %v4006, 1.442695
        %v4020 = vpow.pop %v4019
        %v4021 = vmul.f32 %v4007, 1.442695
        %v4022 = vpow.pop %v4021
        %v4023 = vmul.f32 %v4008, 1.442695
        %v4024 = vpow.pop %v4023
        %v4025 = vadd.f32 %v4010, 1.0
        %v4026 = vadd.f32 %v4012, 1.0
        %v4027 = vadd.f32 %v4014, 1.0
        %v4028 = vadd.f32 %v4016, 1.0
        %v4029 = vadd.f32 %v4018, 1.0
        %v4030 = vadd.f32 %v4020, 1.0
        %v4031 = vadd.f32 %v4022, 1.0
        %v4032 = vadd.f32 %v4024, 1.0
        %v4033 = vrcp.pop %v4025
        %v4034 = vmul.f32 1.0, %v4033
        %v4035 = vrcp.pop %v4026
        %v4036 = vmul.f32 1.0, %v4035
        %v4037 = vrcp.pop %v4027
        %v4038 = vmul.f32 1.0, %v4037
        %v4039 = vrcp.pop %v4028
        %v4040 = vmul.f32 1.0, %v4039
        %v4041 = vrcp.pop %v4029
        %v4042 = vmul.f32 1.0, %v4041
        %v4043 = vrcp.pop %v4030
        %v4044 = vmul.f32 1.0, %v4043
        %v4045 = vrcp.pop %v4031
        %v4046 = vmul.f32 1.0, %v4045
        %v4047 = vrcp.pop %v4032
        %v4048 = vmul.f32 1.0, %v4047
        %v4049 = vmul.f32 %v3864, %v4034
        %v4050 = vmul.f32 %v3866, %v4036
        %v4051 = vmul.f32 %v3907, %v4038
        %v4052 = vmul.f32 %v3909, %v4040
        %v4053 = vmul.f32 %v3868, %v4042
        %v4054 = vmul.f32 %v3870, %v4044
        %v4055 = vmul.f32 %v3911, %v4046
        %v4056 = vmul.f32 %v3913, %v4048
        %v4057 = vmul.f32 %v4049, %v3950
        %v4058 = vmul.f32 %v4050, %v3952
        %v4059 = vmul.f32 %v4051, %v3993
        %v4060 = vmul.f32 %v4052, %v3995
        %v4061 = vmul.f32 %v4053, %v3954
        %v4062 = vmul.f32 %v4054, %v3956
        %v4063 = vmul.f32 %v4055, %v3997
        %v4064 = vmul.f32 %v4056, %v3999
        %v4065 = vld [vmem:[%s715] sm:$0xff]
        %v4066 = vld [vmem:[%s715 + $0x8] sm:$0xff]
        %v4067 = vld [vmem:[%s715 + $0x10] sm:$0xff]
        %v4068 = vld [vmem:[%s715 + $0x18] sm:$0xff]
        %v4069 = vld [vmem:[%s715 + $0x20] sm:$0xff]
        %v4070 = vld [vmem:[%s715 + $0x28] sm:$0xff]
        %v4071 = vld [vmem:[%s715 + $0x30] sm:$0xff]
        %v4072 = vld [vmem:[%s715 + $0x38] sm:$0xff]
        %v4073 = vld [vmem:[%s715 + $0x40] sm:$0xff]
        %v4074 = vld [vmem:[%s715 + $0x48] sm:$0xff]
        %v4075 = vld [vmem:[%s715 + $0x50] sm:$0xff]
        %v4076 = vld [vmem:[%s715 + $0x58] sm:$0xff]
        %v4077 = vld [vmem:[%s715 + $0x60] sm:$0xff]
        %v4078 = vld [vmem:[%s715 + $0x68] sm:$0xff]
        %v4079 = vld [vmem:[%s715 + $0x70] sm:$0xff]
        %v4080 = vld [vmem:[%s715 + $0x78] sm:$0xff]
        %v4081 = vld [vmem:[%s715 + $0x80] sm:$0xff]
        %v4082 = vld [vmem:[%s715 + $0x88] sm:$0xff]
        %v4083 = vld [vmem:[%s715 + $0x90] sm:$0xff]
        %v4084 = vld [vmem:[%s715 + $0x98] sm:$0xff]
        %v4085 = vld [vmem:[%s715 + $0xa0] sm:$0xff]
        %v4086 = vld [vmem:[%s715 + $0xa8] sm:$0xff]
        %v4087 = vld [vmem:[%s715 + $0xb0] sm:$0xff]
        %v4088 = vld [vmem:[%s715 + $0xb8] sm:$0xff]
        %v4089 = vld [vmem:[%s715 + $0xc0] sm:$0xff]
        %v4090 = vld [vmem:[%s715 + $0xc8] sm:$0xff]
        %v4091 = vld [vmem:[%s715 + $0xd0] sm:$0xff]
        %v4092 = vld [vmem:[%s715 + $0xd8] sm:$0xff]
        %v4093 = vld [vmem:[%s715 + $0xe0] sm:$0xff]
        %v4094 = vld [vmem:[%s715 + $0xe8] sm:$0xff]
        %v4095 = vld [vmem:[%s715 + $0xf0] sm:$0xff]
        %v4096 = vld [vmem:[%s715 + $0xf8] sm:$0xff]
        %v4097 = vld [vmem:[%s715 + $0x100] sm:$0xff]
        %v4098 = vld [vmem:[%s715 + $0x108] sm:$0xff]
        %v4099 = vld [vmem:[%s715 + $0x110] sm:$0xff]
        %v4100 = vld [vmem:[%s715 + $0x118] sm:$0xff]
        %v4101 = vld [vmem:[%s715 + $0x120] sm:$0xff]
        %v4102 = vld [vmem:[%s715 + $0x128] sm:$0xff]
        %v4103 = vld [vmem:[%s715 + $0x130] sm:$0xff]
        %v4104 = vld [vmem:[%s715 + $0x138] sm:$0xff]
        %v4105 = vld [vmem:[%s715 + $0x140] sm:$0xff]
        %v4106 = vld [vmem:[%s715 + $0x148] sm:$0xff]
        %v4107 = vld [vmem:[%s715 + $0x150] sm:$0xff]
        %v4108 = vld [vmem:[%s715 + $0x158] sm:$0xff]
        %v4109 = vld [vmem:[%s715 + $0x160] sm:$0xff]
        %v4110 = vld [vmem:[%s715 + $0x168] sm:$0xff]
        %v4111 = vld [vmem:[%s715 + $0x170] sm:$0xff]
        %v4112 = vld [vmem:[%s715 + $0x178] sm:$0xff]
        %v4113 = vld [vmem:[%s715 + $0x180] sm:$0xff]
        %v4114 = vld [vmem:[%s715 + $0x188] sm:$0xff]
        %v4115 = vld [vmem:[%s715 + $0x190] sm:$0xff]
        %v4116 = vld [vmem:[%s715 + $0x198] sm:$0xff]
        %v4117 = vld [vmem:[%s715 + $0x1a0] sm:$0xff]
        %v4118 = vld [vmem:[%s715 + $0x1a8] sm:$0xff]
        %v4119 = vld [vmem:[%s715 + $0x1b0] sm:$0xff]
        %v4120 = vld [vmem:[%s715 + $0x1b8] sm:$0xff]
        %v4121 = vld [vmem:[%s715 + $0x1c0] sm:$0xff]
        %v4122 = vld [vmem:[%s715 + $0x1c8] sm:$0xff]
        %v4123 = vld [vmem:[%s715 + $0x1d0] sm:$0xff]
        %v4124 = vld [vmem:[%s715 + $0x1d8] sm:$0xff]
        %v4125 = vld [vmem:[%s715 + $0x1e0] sm:$0xff]
        %v4126 = vld [vmem:[%s715 + $0x1e8] sm:$0xff]
        %v4127 = vld [vmem:[%s715 + $0x1f0] sm:$0xff]
        %v4128 = vld [vmem:[%s715 + $0x1f8] sm:$0xff]
        %v4129 = vld [vmem:[%s719] sm:$0x3]
        %v4130 = vpack.c.bf16 %v4061, %v4057
        %v4131 = vpack.c.bf16 %v4062, %v4058
        %v4132 = vpack.c.bf16 %v4063, %v4059
        %v4133 = vpack.c.bf16 %v4064, %v4060
        %v4135 = vlaneseq
        %v4136 = vshrl.u32 %v4135, 7
        %v4137 = vsub.s32 0, %v4136
        %v4138 = vrot.slane %v4129, %v4137
        %v4139 = vlaneseq
        %v4140 = vshrl.u32 %v4139, 7
        %v4141 = vsub.s32 1, %v4140
        %v4142 = vrot.slane %v4129, %v4141
        %v4209 = vunpack.c.l.b16 %v4065
        %v4210 = vunpack.c.h.b16 %v4065
        %v4211 = vunpack.c.l.b16 %v4066
        %v4212 = vunpack.c.h.b16 %v4066
        %v4213 = vunpack.c.l.b16 %v4067
        %v4214 = vunpack.c.h.b16 %v4067
        %v4215 = vunpack.c.l.b16 %v4068
        %v4216 = vunpack.c.h.b16 %v4068
        %v4217 = vunpack.c.l.b16 %v4069
        %v4218 = vunpack.c.h.b16 %v4069
        %v4219 = vunpack.c.l.b16 %v4070
        %v4220 = vunpack.c.h.b16 %v4070
        %v4221 = vunpack.c.l.b16 %v4071
        %v4222 = vunpack.c.h.b16 %v4071
        %v4223 = vunpack.c.l.b16 %v4072
        %v4224 = vunpack.c.h.b16 %v4072
        %v4225 = vunpack.c.l.b16 %v4073
        %v4226 = vunpack.c.h.b16 %v4073
        %v4227 = vunpack.c.l.b16 %v4074
        %v4228 = vunpack.c.h.b16 %v4074
        %v4229 = vunpack.c.l.b16 %v4075
        %v4230 = vunpack.c.h.b16 %v4075
        %v4231 = vunpack.c.l.b16 %v4076
        %v4232 = vunpack.c.h.b16 %v4076
        %v4233 = vunpack.c.l.b16 %v4077
        %v4234 = vunpack.c.h.b16 %v4077
        %v4235 = vunpack.c.l.b16 %v4078
        %v4236 = vunpack.c.h.b16 %v4078
        %v4237 = vunpack.c.l.b16 %v4079
        %v4238 = vunpack.c.h.b16 %v4079
        %v4239 = vunpack.c.l.b16 %v4080
        %v4240 = vunpack.c.h.b16 %v4080
        %v4241 = vunpack.c.l.b16 %v4081
        %v4242 = vunpack.c.h.b16 %v4081
        %v4243 = vunpack.c.l.b16 %v4082
        %v4244 = vunpack.c.h.b16 %v4082
        %v4245 = vunpack.c.l.b16 %v4083
        %v4246 = vunpack.c.h.b16 %v4083
        %v4247 = vunpack.c.l.b16 %v4084
        %v4248 = vunpack.c.h.b16 %v4084
        %v4249 = vunpack.c.l.b16 %v4085
        %v4250 = vunpack.c.h.b16 %v4085
        %v4251 = vunpack.c.l.b16 %v4086
        %v4252 = vunpack.c.h.b16 %v4086
        %v4253 = vunpack.c.l.b16 %v4087
        %v4254 = vunpack.c.h.b16 %v4087
        %v4255 = vunpack.c.l.b16 %v4088
        %v4256 = vunpack.c.h.b16 %v4088
        %v4257 = vunpack.c.l.b16 %v4089
        %v4258 = vunpack.c.h.b16 %v4089
        %v4259 = vunpack.c.l.b16 %v4090
        %v4260 = vunpack.c.h.b16 %v4090
        %v4261 = vunpack.c.l.b16 %v4091
        %v4262 = vunpack.c.h.b16 %v4091
        %v4263 = vunpack.c.l.b16 %v4092
        %v4264 = vunpack.c.h.b16 %v4092
        %v4265 = vunpack.c.l.b16 %v4093
        %v4266 = vunpack.c.h.b16 %v4093
        %v4267 = vunpack.c.l.b16 %v4094
        %v4268 = vunpack.c.h.b16 %v4094
        %v4269 = vunpack.c.l.b16 %v4095
        %v4270 = vunpack.c.h.b16 %v4095
        %v4271 = vunpack.c.l.b16 %v4096
        %v4272 = vunpack.c.h.b16 %v4096
        %v4273 = vunpack.c.l.b16 %v4097
        %v4274 = vunpack.c.h.b16 %v4097
        %v4275 = vunpack.c.l.b16 %v4098
        %v4276 = vunpack.c.h.b16 %v4098
        %v4277 = vunpack.c.l.b16 %v4099
        %v4278 = vunpack.c.h.b16 %v4099
        %v4279 = vunpack.c.l.b16 %v4100
        %v4280 = vunpack.c.h.b16 %v4100
        %v4281 = vunpack.c.l.b16 %v4101
        %v4282 = vunpack.c.h.b16 %v4101
        %v4283 = vunpack.c.l.b16 %v4102
        %v4284 = vunpack.c.h.b16 %v4102
        %v4285 = vunpack.c.l.b16 %v4103
        %v4286 = vunpack.c.h.b16 %v4103
        %v4287 = vunpack.c.l.b16 %v4104
        %v4288 = vunpack.c.h.b16 %v4104
        %v4289 = vunpack.c.l.b16 %v4105
        %v4290 = vunpack.c.h.b16 %v4105
        %v4291 = vunpack.c.l.b16 %v4106
        %v4292 = vunpack.c.h.b16 %v4106
        %v4293 = vunpack.c.l.b16 %v4107
        %v4294 = vunpack.c.h.b16 %v4107
        %v4295 = vunpack.c.l.b16 %v4108
        %v4296 = vunpack.c.h.b16 %v4108
        %v4297 = vunpack.c.l.b16 %v4109
        %v4298 = vunpack.c.h.b16 %v4109
        %v4299 = vunpack.c.l.b16 %v4110
        %v4300 = vunpack.c.h.b16 %v4110
        %v4301 = vunpack.c.l.b16 %v4111
        %v4302 = vunpack.c.h.b16 %v4111
        %v4303 = vunpack.c.l.b16 %v4112
        %v4304 = vunpack.c.h.b16 %v4112
        %v4305 = vunpack.c.l.b16 %v4113
        %v4306 = vunpack.c.h.b16 %v4113
        %v4307 = vunpack.c.l.b16 %v4114
        %v4308 = vunpack.c.h.b16 %v4114
        %v4309 = vunpack.c.l.b16 %v4115
        %v4310 = vunpack.c.h.b16 %v4115
        %v4311 = vunpack.c.l.b16 %v4116
        %v4312 = vunpack.c.h.b16 %v4116
        %v4313 = vunpack.c.l.b16 %v4117
        %v4314 = vunpack.c.h.b16 %v4117
        %v4315 = vunpack.c.l.b16 %v4118
        %v4316 = vunpack.c.h.b16 %v4118
        %v4317 = vunpack.c.l.b16 %v4119
        %v4318 = vunpack.c.h.b16 %v4119
        %v4319 = vunpack.c.l.b16 %v4120
        %v4320 = vunpack.c.h.b16 %v4120
        %v4321 = vunpack.c.l.b16 %v4121
        %v4322 = vunpack.c.h.b16 %v4121
        %v4323 = vunpack.c.l.b16 %v4122
        %v4324 = vunpack.c.h.b16 %v4122
        %v4325 = vunpack.c.l.b16 %v4123
        %v4326 = vunpack.c.h.b16 %v4123
        %v4327 = vunpack.c.l.b16 %v4124
        %v4328 = vunpack.c.h.b16 %v4124
        %v4329 = vunpack.c.l.b16 %v4125
        %v4330 = vunpack.c.h.b16 %v4125
        %v4331 = vunpack.c.l.b16 %v4126
        %v4332 = vunpack.c.h.b16 %v4126
        %v4333 = vunpack.c.l.b16 %v4127
        %v4334 = vunpack.c.h.b16 %v4127
        %v4335 = vunpack.c.l.b16 %v4128
        %v4336 = vunpack.c.h.b16 %v4128
        %v4337 = vpack.c.b16 %v4211, %v4209
        %v4338 = vpack.c.b16 %v4212, %v4210
        %v4339 = vpack.c.b16 %v4215, %v4213
        %v4340 = vpack.c.b16 %v4216, %v4214
        %v4341 = vpack.c.b16 %v4219, %v4217
        %v4342 = vpack.c.b16 %v4220, %v4218
        %v4343 = vpack.c.b16 %v4223, %v4221
        %v4344 = vpack.c.b16 %v4224, %v4222
        %v4345 = vpack.c.b16 %v4227, %v4225
        %v4346 = vpack.c.b16 %v4228, %v4226
        %v4347 = vpack.c.b16 %v4231, %v4229
        %v4348 = vpack.c.b16 %v4232, %v4230
        %v4349 = vpack.c.b16 %v4235, %v4233
        %v4350 = vpack.c.b16 %v4236, %v4234
        %v4351 = vpack.c.b16 %v4239, %v4237
        %v4352 = vpack.c.b16 %v4240, %v4238
        %v4353 = vpack.c.b16 %v4243, %v4241
        %v4354 = vpack.c.b16 %v4244, %v4242
        %v4355 = vpack.c.b16 %v4247, %v4245
        %v4356 = vpack.c.b16 %v4248, %v4246
        %v4357 = vpack.c.b16 %v4251, %v4249
        %v4358 = vpack.c.b16 %v4252, %v4250
        %v4359 = vpack.c.b16 %v4255, %v4253
        %v4360 = vpack.c.b16 %v4256, %v4254
        %v4361 = vpack.c.b16 %v4259, %v4257
        %v4362 = vpack.c.b16 %v4260, %v4258
        %v4363 = vpack.c.b16 %v4263, %v4261
        %v4364 = vpack.c.b16 %v4264, %v4262
        %v4365 = vpack.c.b16 %v4267, %v4265
        %v4366 = vpack.c.b16 %v4268, %v4266
        %v4367 = vpack.c.b16 %v4271, %v4269
        %v4368 = vpack.c.b16 %v4272, %v4270
        %v4369 = vpack.c.b16 %v4275, %v4273
        %v4370 = vpack.c.b16 %v4276, %v4274
        %v4371 = vpack.c.b16 %v4279, %v4277
        %v4372 = vpack.c.b16 %v4280, %v4278
        %v4373 = vpack.c.b16 %v4283, %v4281
        %v4374 = vpack.c.b16 %v4284, %v4282
        %v4375 = vpack.c.b16 %v4287, %v4285
        %v4376 = vpack.c.b16 %v4288, %v4286
        %v4377 = vpack.c.b16 %v4291, %v4289
        %v4378 = vpack.c.b16 %v4292, %v4290
        %v4379 = vpack.c.b16 %v4295, %v4293
        %v4380 = vpack.c.b16 %v4296, %v4294
        %v4381 = vpack.c.b16 %v4299, %v4297
        %v4382 = vpack.c.b16 %v4300, %v4298
        %v4383 = vpack.c.b16 %v4303, %v4301
        %v4384 = vpack.c.b16 %v4304, %v4302
        %v4385 = vpack.c.b16 %v4307, %v4305
        %v4386 = vpack.c.b16 %v4308, %v4306
        %v4387 = vpack.c.b16 %v4311, %v4309
        %v4388 = vpack.c.b16 %v4312, %v4310
        %v4389 = vpack.c.b16 %v4315, %v4313
        %v4390 = vpack.c.b16 %v4316, %v4314
        %v4391 = vpack.c.b16 %v4319, %v4317
        %v4392 = vpack.c.b16 %v4320, %v4318
        %v4393 = vpack.c.b16 %v4323, %v4321
        %v4394 = vpack.c.b16 %v4324, %v4322
        %v4395 = vpack.c.b16 %v4327, %v4325
        %v4396 = vpack.c.b16 %v4328, %v4326
        %v4397 = vpack.c.b16 %v4331, %v4329
        %v4398 = vpack.c.b16 %v4332, %v4330
        %v4399 = vpack.c.b16 %v4335, %v4333
        %v4400 = vpack.c.b16 %v4336, %v4334
        %4465 = vmatprep.subr.bf16.mxu0 %v4338
        %4466 = vmatpush1.bf16.msra.mxu0 %v4337
        %4467 = vmatprep.subr.bf16.mxu0 %v4340
        %4468 = vmatpush1.bf16.msra.mxu0 %v4339
        %4469 = vmatprep.subr.bf16.mxu0 %v4342
        %4470 = vmatpush1.bf16.msra.mxu0 %v4341
        %4471 = vmatprep.subr.bf16.mxu0 %v4344
        %4472 = vmatpush1.bf16.msra.mxu0 %v4343
        %4473 = vmatprep.subr.bf16.mxu0 %v4346
        %4474 = vmatpush1.bf16.msra.mxu0 %v4345
        %4475 = vmatprep.subr.bf16.mxu0 %v4348
        %4476 = vmatpush1.bf16.msra.mxu0 %v4347
        %4477 = vmatprep.subr.bf16.mxu0 %v4350
        %4478 = vmatpush1.bf16.msra.mxu0 %v4349
        %4479 = vmatprep.subr.bf16.mxu0 %v4352
        %4480 = vmatpush1.bf16.msra.mxu0 %v4351
        %4481 = vmatprep.subr.bf16.mxu0 %v4354
        %4482 = vmatpush1.bf16.msra.mxu0 %v4353
        %4483 = vmatprep.subr.bf16.mxu0 %v4356
        %4484 = vmatpush1.bf16.msra.mxu0 %v4355
        %4485 = vmatprep.subr.bf16.mxu0 %v4358
        %4486 = vmatpush1.bf16.msra.mxu0 %v4357
        %4487 = vmatprep.subr.bf16.mxu0 %v4360
        %4488 = vmatpush1.bf16.msra.mxu0 %v4359
        %4489 = vmatprep.subr.bf16.mxu0 %v4362
        %4490 = vmatpush1.bf16.msra.mxu0 %v4361
        %4491 = vmatprep.subr.bf16.mxu0 %v4364
        %4492 = vmatpush1.bf16.msra.mxu0 %v4363
        %4493 = vmatprep.subr.bf16.mxu0 %v4366
        %4494 = vmatpush1.bf16.msra.mxu0 %v4365
        %4495 = vmatprep.subr.bf16.mxu0 %v4368
        %4496 = vmatpush1.bf16.msra.mxu0 %v4367
        %4497 = vmatprep.mubr.bf16.mxu0 %v4131
        %4498 = vmatmul.mubr.bf16.gmra.mrb[0].mxu0 %v4130
        %v4499 = vpop.f32.mrb[0].mxu0
        %v4500 = vadd.f32 %v4138, %v4499
        %v4501 = vpop.f32.mrb[0].mxu0
        %v4502 = vadd.f32 %v4142, %v4501
        %v4503 = vpop.f32.mrb[0].mxu0
        %v4504 = vadd.f32 %v4138, %v4503
        %v4505 = vpop.f32.mrb[0].mxu0
        %v4506 = vadd.f32 %v4142, %v4505
        %4507 = vdwg.mxu0
        %4508 = vmatprep.subr.bf16.mxu0 %v4370
        %4509 = vmatpush1.bf16.msra.mxu0 %v4369
        %4510 = vmatprep.subr.bf16.mxu0 %v4372
        %4511 = vmatpush1.bf16.msra.mxu0 %v4371
        %4512 = vmatprep.subr.bf16.mxu0 %v4374
        %4513 = vmatpush1.bf16.msra.mxu0 %v4373
        %4514 = vmatprep.subr.bf16.mxu0 %v4376
        %4515 = vmatpush1.bf16.msra.mxu0 %v4375
        %4516 = vmatprep.subr.bf16.mxu0 %v4378
        %4517 = vmatpush1.bf16.msra.mxu0 %v4377
        %4518 = vmatprep.subr.bf16.mxu0 %v4380
        %4519 = vmatpush1.bf16.msra.mxu0 %v4379
        %4520 = vmatprep.subr.bf16.mxu0 %v4382
        %4521 = vmatpush1.bf16.msra.mxu0 %v4381
        %4522 = vmatprep.subr.bf16.mxu0 %v4384
        %4523 = vmatpush1.bf16.msra.mxu0 %v4383
        %4524 = vmatprep.subr.bf16.mxu0 %v4386
        %4525 = vmatpush1.bf16.msra.mxu0 %v4385
        %4526 = vmatprep.subr.bf16.mxu0 %v4388
        %4527 = vmatpush1.bf16.msra.mxu0 %v4387
        %4528 = vmatprep.subr.bf16.mxu0 %v4390
        %4529 = vmatpush1.bf16.msra.mxu0 %v4389
        %4530 = vmatprep.subr.bf16.mxu0 %v4392
        %4531 = vmatpush1.bf16.msra.mxu0 %v4391
        %4532 = vmatprep.subr.bf16.mxu0 %v4394
        %4533 = vmatpush1.bf16.msra.mxu0 %v4393
        %4534 = vmatprep.subr.bf16.mxu0 %v4396
        %4535 = vmatpush1.bf16.msra.mxu0 %v4395
        %4536 = vmatprep.subr.bf16.mxu0 %v4398
        %4537 = vmatpush1.bf16.msra.mxu0 %v4397
        %4538 = vmatprep.subr.bf16.mxu0 %v4400
        %4539 = vmatpush1.bf16.msra.mxu0 %v4399
        %4540 = vmatprep.mubr.bf16.mxu0 %v4133
        %4541 = vmatmul.mubr.bf16.gmra.mrb[0].mxu0 %v4132
        %v4542 = vpop.f32.mrb[0].mxu0
        %v4543 = vadd.f32 %v4500, %v4542
        %v4544 = vpop.f32.mrb[0].mxu0
        %v4545 = vadd.f32 %v4502, %v4544
        %v4546 = vpop.f32.mrb[0].mxu0
        %v4547 = vadd.f32 %v4504, %v4546
        %v4548 = vpop.f32.mrb[0].mxu0
        %v4549 = vadd.f32 %v4506, %v4548
        %4550 = vdwg.mxu0
        %v4551 = vadd.f32 %v2945, %v4543
        %v4552 = vadd.f32 %v2946, %v4545
        %v4553 = vadd.f32 %v2947, %v4547
        %v4554 = vadd.f32 %v2948, %v4549
        %4555 = vst [vmem:[#allocation2] sm:$0xff] %v4551
        %4556 = vst [vmem:[#allocation2 + $0x8] sm:$0xff] %v4552
        %4557 = vst [vmem:[#allocation2 + $0x10] sm:$0x3] %v4553
        %4558 = vst [vmem:[#allocation2 + $0x18] sm:$0x3] %v4554
        %p4559 = scmp.eq.s32.totalorder %s35, 1
        // Predicated region
        $region89: #{deepmsn_forward.4} parent=71 // pred_check
          %p4560 = pneg %p4559
        $region90: #{deepmsn_forward.4} parent=71 // pred_check_branch
          %4562 = sbr.rel (%p4560) target = $region92
        $region91: #{deepmsn_forward.4} parent=71 // pred_region
          %v4565 = vcombine.low %v4551, %v4552
          %v4567 = vunpack.c.l.s4 1966171168
          %v4568 = vunpack.c.0.s8 %v4567
          %v4569 = vlaneseq
          %v4570 = vshrl.u32 %v4569, 7
          %v4571 = vsub.s32 %v4568, %v4570
          %v4572 = vrot.slane %v4565, %v4571
          %v4574 = vunpack.c.l.s4 1966171168
          %v4575 = vunpack.c.0.s8 %v4574
          %v4576 = vlaneseq
          %v4577 = vshrl.u32 %v4576, 7
          %v4578 = vsub.s32 %v4575, %v4577
          %v4579 = vrot.slane %v4572, %v4578
          %v4581 = vlaneseq
          %vm4582 = vcmp.ge.s32.totalorder %v4581, 0
          %vm4583 = vcmp.lt.s32.totalorder %v4581, 256
          %vm4584 = vmand %vm4582, %vm4583
          %4585 = vst.msk [vmem:[%s723] sm:$0x3] %vm4584, %v4579
        $region92: #{deepmsn_forward.4} parent=71 // pred_fallthru
          _
        %p4586 = scmp.lt.s32.totalorder %s34, 1
        %s4587 = scalar_select %p4586, %s34, 1
        %s4588 = smul.addr %s4587, 2
        %s4589 = scalar_lea.vmem %s13, %s4588
        // Predicated region
        $region93: #{deepmsn_forward.4} parent=71 // pred_check
          %p4590 = pneg %p398
        $region94: #{deepmsn_forward.4} parent=71 // pred_check_branch
          %4592 = sbr.rel (%p4590) target = $region96
        $region95: #{deepmsn_forward.4} parent=71 // pred_region
          _
        $region96: #{deepmsn_forward.4} parent=71 // pred_fallthru
          _
      $region72: #{deepmsn_forward.4} parent=5 // pred_fallthru
        _
      %p4593 = scmp.le.s32.totalorder 2, %s25
      // Predicated region
      $region97: #{deepmsn_forward.4} parent=5 // pred_check
        %p4594 = pneg %p4593
      $region98: #{deepmsn_forward.4} parent=5 // pred_check_branch
        %4596 = sbr.rel (%p4594) target = $region100
      $region99: #{deepmsn_forward.4} parent=5 // pred_region
        %s4597 = ssub.s32 %s25, 2
        // Predicated region
        $region101: #{deepmsn_forward.4} parent=99 // pred_check
          %p4598 = pneg %p404
        $region102: #{deepmsn_forward.4} parent=99 // pred_check_branch
          %4600 = sbr.rel (%p4598) target = $region104
        $region103: #{deepmsn_forward.4} parent=99 // pred_region
          %p4601 = scmp.lt.s32.totalorder %s36, 1
          %s4602 = scalar_select %p4601, %s36, 1
          %s4603 = smul.addr %s4602, 2
          %s4604 = scalar_lea.vmem %s13, %s4603
        $region104: #{deepmsn_forward.4} parent=99 // pred_fallthru
          _
      $region100: #{deepmsn_forward.4} parent=5 // pred_fallthru
        _
    $region6: #{deepmsn_forward.4} parent=1 // loop_footer
      %s29 = sadd.s32 1, %s25
    $region7: #{deepmsn_forward.4} parent=1 // loop_footer_branch
      %24 = sbr.rel target = $region3
    $region8: #{deepmsn_forward.4} parent=1 // loop_exit
      _
    %4605 = vsyncpa [#allocation4], 1
    %s4606 = scalar_lea.sflag [#allocation4], 1
    %4607 = vsyncpa %s4606, 1
    %4608 = vsyncpa [#allocation6], 1
    %s4609 = scalar_lea.sflag [#allocation6], 1
    %4610 = vsyncpa %s4609, 1

// kernel: deepmsn_forward.5
$region0: #{deepmsn_forward.5}
  #allocation0 [shape = 'u32[]', space=smem, size = 0x4, offset = 0x4, fixed_abs, tag = 'smem constant byte address 0x4 - core index']
  #allocation1 [shape = 'u32[144,128]{1,0:T(1,128)}', space=vmem, size = 0x12000, scoped, tag = 'internal scratch']
  %s0 = inlined_call_operand.vmem [shape: f32[2,1,256], index: 0, kind: input, shape index: {}]
  %s1 = inlined_call_operand.vmem [shape: bf16[256,512], index: 1, kind: input, shape index: {}]
  %s2 = inlined_call_operand.vmem [shape: f32[1,512], index: 2, kind: input, shape index: {}]
  %s3 = inlined_call_operand.vmem [shape: bf16[512,512], index: 3, kind: input, shape index: {}]
  %s4 = inlined_call_operand.vmem [shape: f32[1,512], index: 4, kind: input, shape index: {}]
  %s5 = inlined_call_operand.vmem [shape: bf16[256,512], index: 5, kind: input, shape index: {}]
  %s6 = inlined_call_operand.vmem [shape: f32[1,512], index: 6, kind: input, shape index: {}]
  %s7 = inlined_call_operand.vmem [shape: bf16[512,512], index: 7, kind: input, shape index: {}]
  %s8 = inlined_call_operand.vmem [shape: f32[1,512], index: 8, kind: input, shape index: {}]
  %s9 = inlined_call_operand.vmem [shape: bf16[512,512], index: 9, kind: input, shape index: {}]
  %s10 = inlined_call_operand.vmem [shape: f32[1,512], index: 10, kind: input, shape index: {}]
  %s11 = inlined_call_operand.vmem [shape: bf16[512,3], index: 11, kind: input, shape index: {}]
  %s12 = inlined_call_operand.vmem [shape: f32[1,3], index: 12, kind: input, shape index: {}]
  %s13 = inlined_call_operand.hbm [shape: f32[2,3], index: 13, kind: output, shape index: {}]
  %s14 = sld [smem:[#allocation0]]
  $region62: #{deepmsn_forward.5} parent=0
    _
  %s16 = ssub.s32 1, %s14
  %s17 = scalar_select 0, %s16, %s14
  $region1: #{deepmsn_forward.5} parent=0
    #allocation2 [shape = 'u8[1024]{0}', space=vmem, size = 0x400, scoped, tag = 'output window, operand 0, single buffered']
    #allocation3 [shape = 's32[1]{0}', space=sflag, size = 0x4, scoped, tag = 'scoped memory for deepmsn_forward.5']
    %18 = vsyncpa [#allocation3], 0
    // Predicated region
    $region2: #{deepmsn_forward.5} parent=1 // pred_check
      _
    $region3: #{deepmsn_forward.5} parent=1 // pred_check_branch
      %20 = sbr.rel (0) target = $region5
    $region4: #{deepmsn_forward.5} parent=1 // pred_region
      _
    $region5: #{deepmsn_forward.5} parent=1 // pred_fallthru
      _
    // Predicated region
    $region6: #{deepmsn_forward.5} parent=1 // pred_check
      _
    $region7: #{deepmsn_forward.5} parent=1 // pred_check_branch
      %22 = sbr.rel (0) target = $region9
    $region8: #{deepmsn_forward.5} parent=1 // pred_region
      _
    $region9: #{deepmsn_forward.5} parent=1 // pred_fallthru
      _
    // Predicated region
    $region10: #{deepmsn_forward.5} parent=1 // pred_check
      _
    $region11: #{deepmsn_forward.5} parent=1 // pred_check_branch
      %24 = sbr.rel (0) target = $region13
    $region12: #{deepmsn_forward.5} parent=1 // pred_region
      _
    $region13: #{deepmsn_forward.5} parent=1 // pred_fallthru
      _
    // Predicated region
    $region14: #{deepmsn_forward.5} parent=1 // pred_check
      _
    $region15: #{deepmsn_forward.5} parent=1 // pred_check_branch
      %26 = sbr.rel (0) target = $region17
    $region16: #{deepmsn_forward.5} parent=1 // pred_region
      _
    $region17: #{deepmsn_forward.5} parent=1 // pred_fallthru
      _
    // Predicated region
    $region18: #{deepmsn_forward.5} parent=1 // pred_check
      _
    $region19: #{deepmsn_forward.5} parent=1 // pred_check_branch
      %28 = sbr.rel (0) target = $region21
    $region20: #{deepmsn_forward.5} parent=1 // pred_region
      _
    $region21: #{deepmsn_forward.5} parent=1 // pred_fallthru
      _
    // Predicated region
    $region22: #{deepmsn_forward.5} parent=1 // pred_check
      _
    $region23: #{deepmsn_forward.5} parent=1 // pred_check_branch
      %30 = sbr.rel (0) target = $region25
    $region24: #{deepmsn_forward.5} parent=1 // pred_region
      _
    $region25: #{deepmsn_forward.5} parent=1 // pred_fallthru
      _
    // Predicated region
    $region26: #{deepmsn_forward.5} parent=1 // pred_check
      _
    $region27: #{deepmsn_forward.5} parent=1 // pred_check_branch
      %32 = sbr.rel (0) target = $region29
    $region28: #{deepmsn_forward.5} parent=1 // pred_region
      _
    $region29: #{deepmsn_forward.5} parent=1 // pred_fallthru
      _
    // Predicated region
    $region30: #{deepmsn_forward.5} parent=1 // pred_check
      _
    $region31: #{deepmsn_forward.5} parent=1 // pred_check_branch
      %34 = sbr.rel (0) target = $region33
    $region32: #{deepmsn_forward.5} parent=1 // pred_region
      _
    $region33: #{deepmsn_forward.5} parent=1 // pred_fallthru
      _
    // Predicated region
    $region34: #{deepmsn_forward.5} parent=1 // pred_check
      _
    $region35: #{deepmsn_forward.5} parent=1 // pred_check_branch
      %36 = sbr.rel (0) target = $region37
    $region36: #{deepmsn_forward.5} parent=1 // pred_region
      _
    $region37: #{deepmsn_forward.5} parent=1 // pred_fallthru
      _
    // Predicated region
    $region38: #{deepmsn_forward.5} parent=1 // pred_check
      _
    $region39: #{deepmsn_forward.5} parent=1 // pred_check_branch
      %38 = sbr.rel (0) target = $region41
    $region40: #{deepmsn_forward.5} parent=1 // pred_region
      _
    $region41: #{deepmsn_forward.5} parent=1 // pred_fallthru
      _
    // Predicated region
    $region42: #{deepmsn_forward.5} parent=1 // pred_check
      _
    $region43: #{deepmsn_forward.5} parent=1 // pred_check_branch
      %40 = sbr.rel (0) target = $region45
    $region44: #{deepmsn_forward.5} parent=1 // pred_region
      _
    $region45: #{deepmsn_forward.5} parent=1 // pred_fallthru
      _
    // Predicated region
    $region46: #{deepmsn_forward.5} parent=1 // pred_check
      _
    $region47: #{deepmsn_forward.5} parent=1 // pred_check_branch
      %42 = sbr.rel (0) target = $region49
    $region48: #{deepmsn_forward.5} parent=1 // pred_region
      _
    $region49: #{deepmsn_forward.5} parent=1 // pred_fallthru
      _
    // Predicated region
    $region50: #{deepmsn_forward.5} parent=1 // pred_check
      _
    $region51: #{deepmsn_forward.5} parent=1 // pred_check_branch
      %44 = sbr.rel (0) target = $region53
    $region52: #{deepmsn_forward.5} parent=1 // pred_region
      _
    $region53: #{deepmsn_forward.5} parent=1 // pred_fallthru
      _
    %v46 = vld [vmem:[%s0] sm:$0x3]
    %v47 = vld [vmem:[%s0 + $0x2] sm:$0x3]
    %vm48 = vcmp.ge.f32.partialorder %v46, 0.0
    %vm49 = vcmp.ge.f32.partialorder %v47, 0.0
    %v50 = vmul.f32 %v46, 0.1
    %v51 = vmul.f32 %v47, 0.1
    %v52 = vsel %vm48, %v46, %v50
    %v53 = vsel %vm49, %v47, %v51
    %v54 = vld [vmem:[%s1] sm:$0xff]
    %v55 = vld [vmem:[%s1 + $0x8] sm:$0xff]
    %v56 = vld [vmem:[%s1 + $0x10] sm:$0xff]
    %v57 = vld [vmem:[%s1 + $0x18] sm:$0xff]
    %v58 = vld [vmem:[%s1 + $0x20] sm:$0xff]
    %v59 = vld [vmem:[%s1 + $0x28] sm:$0xff]
    %v60 = vld [vmem:[%s1 + $0x30] sm:$0xff]
    %v61 = vld [vmem:[%s1 + $0x38] sm:$0xff]
    %v62 = vld [vmem:[%s1 + $0x40] sm:$0xff]
    %v63 = vld [vmem:[%s1 + $0x48] sm:$0xff]
    %v64 = vld [vmem:[%s1 + $0x50] sm:$0xff]
    %v65 = vld [vmem:[%s1 + $0x58] sm:$0xff]
    %v66 = vld [vmem:[%s1 + $0x60] sm:$0xff]
    %v67 = vld [vmem:[%s1 + $0x68] sm:$0xff]
    %v68 = vld [vmem:[%s1 + $0x70] sm:$0xff]
    %v69 = vld [vmem:[%s1 + $0x78] sm:$0xff]
    %v70 = vld [vmem:[%s1 + $0x80] sm:$0xff]
    %v71 = vld [vmem:[%s1 + $0x88] sm:$0xff]
    %v72 = vld [vmem:[%s1 + $0x90] sm:$0xff]
    %v73 = vld [vmem:[%s1 + $0x98] sm:$0xff]
    %v74 = vld [vmem:[%s1 + $0xa0] sm:$0xff]
    %v75 = vld [vmem:[%s1 + $0xa8] sm:$0xff]
    %v76 = vld [vmem:[%s1 + $0xb0] sm:$0xff]
    %v77 = vld [vmem:[%s1 + $0xb8] sm:$0xff]
    %v78 = vld [vmem:[%s1 + $0xc0] sm:$0xff]
    %v79 = vld [vmem:[%s1 + $0xc8] sm:$0xff]
    %v80 = vld [vmem:[%s1 + $0xd0] sm:$0xff]
    %v81 = vld [vmem:[%s1 + $0xd8] sm:$0xff]
    %v82 = vld [vmem:[%s1 + $0xe0] sm:$0xff]
    %v83 = vld [vmem:[%s1 + $0xe8] sm:$0xff]
    %v84 = vld [vmem:[%s1 + $0xf0] sm:$0xff]
    %v85 = vld [vmem:[%s1 + $0xf8] sm:$0xff]
    %v86 = vld [vmem:[%s1 + $0x100] sm:$0xff]
    %v87 = vld [vmem:[%s1 + $0x108] sm:$0xff]
    %v88 = vld [vmem:[%s1 + $0x110] sm:$0xff]
    %v89 = vld [vmem:[%s1 + $0x118] sm:$0xff]
    %v90 = vld [vmem:[%s1 + $0x120] sm:$0xff]
    %v91 = vld [vmem:[%s1 + $0x128] sm:$0xff]
    %v92 = vld [vmem:[%s1 + $0x130] sm:$0xff]
    %v93 = vld [vmem:[%s1 + $0x138] sm:$0xff]
    %v94 = vld [vmem:[%s1 + $0x140] sm:$0xff]
    %v95 = vld [vmem:[%s1 + $0x148] sm:$0xff]
    %v96 = vld [vmem:[%s1 + $0x150] sm:$0xff]
    %v97 = vld [vmem:[%s1 + $0x158] sm:$0xff]
    %v98 = vld [vmem:[%s1 + $0x160] sm:$0xff]
    %v99 = vld [vmem:[%s1 + $0x168] sm:$0xff]
    %v100 = vld [vmem:[%s1 + $0x170] sm:$0xff]
    %v101 = vld [vmem:[%s1 + $0x178] sm:$0xff]
    %v102 = vld [vmem:[%s1 + $0x180] sm:$0xff]
    %v103 = vld [vmem:[%s1 + $0x188] sm:$0xff]
    %v104 = vld [vmem:[%s1 + $0x190] sm:$0xff]
    %v105 = vld [vmem:[%s1 + $0x198] sm:$0xff]
    %v106 = vld [vmem:[%s1 + $0x1a0] sm:$0xff]
    %v107 = vld [vmem:[%s1 + $0x1a8] sm:$0xff]
    %v108 = vld [vmem:[%s1 + $0x1b0] sm:$0xff]
    %v109 = vld [vmem:[%s1 + $0x1b8] sm:$0xff]
    %v110 = vld [vmem:[%s1 + $0x1c0] sm:$0xff]
    %v111 = vld [vmem:[%s1 + $0x1c8] sm:$0xff]
    %v112 = vld [vmem:[%s1 + $0x1d0] sm:$0xff]
    %v113 = vld [vmem:[%s1 + $0x1d8] sm:$0xff]
    %v114 = vld [vmem:[%s1 + $0x1e0] sm:$0xff]
    %v115 = vld [vmem:[%s1 + $0x1e8] sm:$0xff]
    %v116 = vld [vmem:[%s1 + $0x1f0] sm:$0xff]
    %v117 = vld [vmem:[%s1 + $0x1f8] sm:$0xff]
    %v118 = vld [vmem:[%s2] sm:$0xf]
    %v121 = vlaneseq
    %v122 = vshrl.u32 %v121, 7
    %v123 = vsub.s32 0, %v122
    %v124 = vrot.slane %v52, %v123
    %v125 = vlaneseq
    %v126 = vshrl.u32 %v125, 7
    %v127 = vsub.s32 1, %v126
    %v128 = vrot.slane %v52, %v127
    %v129 = vlaneseq
    %v130 = vshrl.u32 %v129, 7
    %v131 = vsub.s32 0, %v130
    %v132 = vrot.slane %v53, %v131
    %v133 = vlaneseq
    %v134 = vshrl.u32 %v133, 7
    %v135 = vsub.s32 1, %v134
    %v136 = vrot.slane %v53, %v135
    %v141 = vpack.c.bf16 %v124, %v124
    %v142 = vpack.c.bf16 %v128, %v128
    %v143 = vpack.c.bf16 %v132, %v132
    %v144 = vpack.c.bf16 %v136, %v136
    %v146 = vlaneseq
    %v147 = vshrl.u32 %v146, 7
    %v148 = vsub.s32 0, %v147
    %v149 = vrot.slane %v118, %v148
    %v150 = vlaneseq
    %v151 = vshrl.u32 %v150, 7
    %v152 = vsub.s32 1, %v151
    %v153 = vrot.slane %v118, %v152
    %v154 = vlaneseq
    %v155 = vshrl.u32 %v154, 7
    %v156 = vsub.s32 2, %v155
    %v157 = vrot.slane %v118, %v156
    %v158 = vlaneseq
    %v159 = vshrl.u32 %v158, 7
    %v160 = vsub.s32 3, %v159
    %v161 = vrot.slane %v118, %v160
    %v170 = vunpack.c.l.b16 %v141
    %v171 = vunpack.c.l.b16 %v142
    %v172 = vunpack.c.l.b16 %v143
    %v173 = vunpack.c.l.b16 %v144
    %v174 = vrot.slane %v172, 7
    %vm175 = vcmask 1041409
    %v176 = vsel %vm175, %v174, %v170
    %v177 = vrot.slane %v173, 7
    %v178 = vsel %vm175, %v177, %v171
    %v179 = vpack.c.b16 %v176, %v176
    %v180 = vpack.c.b16 %v178, %v178
    %v247 = vunpack.c.l.b16 %v54
    %v248 = vunpack.c.h.b16 %v54
    %v249 = vunpack.c.l.b16 %v55
    %v250 = vunpack.c.h.b16 %v55
    %v251 = vunpack.c.l.b16 %v56
    %v252 = vunpack.c.h.b16 %v56
    %v253 = vunpack.c.l.b16 %v57
    %v254 = vunpack.c.h.b16 %v57
    %v255 = vunpack.c.l.b16 %v58
    %v256 = vunpack.c.h.b16 %v58
    %v257 = vunpack.c.l.b16 %v59
    %v258 = vunpack.c.h.b16 %v59
    %v259 = vunpack.c.l.b16 %v60
    %v260 = vunpack.c.h.b16 %v60
    %v261 = vunpack.c.l.b16 %v61
    %v262 = vunpack.c.h.b16 %v61
    %v263 = vunpack.c.l.b16 %v62
    %v264 = vunpack.c.h.b16 %v62
    %v265 = vunpack.c.l.b16 %v63
    %v266 = vunpack.c.h.b16 %v63
    %v267 = vunpack.c.l.b16 %v64
    %v268 = vunpack.c.h.b16 %v64
    %v269 = vunpack.c.l.b16 %v65
    %v270 = vunpack.c.h.b16 %v65
    %v271 = vunpack.c.l.b16 %v66
    %v272 = vunpack.c.h.b16 %v66
    %v273 = vunpack.c.l.b16 %v67
    %v274 = vunpack.c.h.b16 %v67
    %v275 = vunpack.c.l.b16 %v68
    %v276 = vunpack.c.h.b16 %v68
    %v277 = vunpack.c.l.b16 %v69
    %v278 = vunpack.c.h.b16 %v69
    %v279 = vunpack.c.l.b16 %v70
    %v280 = vunpack.c.h.b16 %v70
    %v281 = vunpack.c.l.b16 %v71
    %v282 = vunpack.c.h.b16 %v71
    %v283 = vunpack.c.l.b16 %v72
    %v284 = vunpack.c.h.b16 %v72
    %v285 = vunpack.c.l.b16 %v73
    %v286 = vunpack.c.h.b16 %v73
    %v287 = vunpack.c.l.b16 %v74
    %v288 = vunpack.c.h.b16 %v74
    %v289 = vunpack.c.l.b16 %v75
    %v290 = vunpack.c.h.b16 %v75
    %v291 = vunpack.c.l.b16 %v76
    %v292 = vunpack.c.h.b16 %v76
    %v293 = vunpack.c.l.b16 %v77
    %v294 = vunpack.c.h.b16 %v77
    %v295 = vunpack.c.l.b16 %v78
    %v296 = vunpack.c.h.b16 %v78
    %v297 = vunpack.c.l.b16 %v79
    %v298 = vunpack.c.h.b16 %v79
    %v299 = vunpack.c.l.b16 %v80
    %v300 = vunpack.c.h.b16 %v80
    %v301 = vunpack.c.l.b16 %v81
    %v302 = vunpack.c.h.b16 %v81
    %v303 = vunpack.c.l.b16 %v82
    %v304 = vunpack.c.h.b16 %v82
    %v305 = vunpack.c.l.b16 %v83
    %v306 = vunpack.c.h.b16 %v83
    %v307 = vunpack.c.l.b16 %v84
    %v308 = vunpack.c.h.b16 %v84
    %v309 = vunpack.c.l.b16 %v85
    %v310 = vunpack.c.h.b16 %v85
    %v311 = vunpack.c.l.b16 %v86
    %v312 = vunpack.c.h.b16 %v86
    %v313 = vunpack.c.l.b16 %v87
    %v314 = vunpack.c.h.b16 %v87
    %v315 = vunpack.c.l.b16 %v88
    %v316 = vunpack.c.h.b16 %v88
    %v317 = vunpack.c.l.b16 %v89
    %v318 = vunpack.c.h.b16 %v89
    %v319 = vunpack.c.l.b16 %v90
    %v320 = vunpack.c.h.b16 %v90
    %v321 = vunpack.c.l.b16 %v91
    %v322 = vunpack.c.h.b16 %v91
    %v323 = vunpack.c.l.b16 %v92
    %v324 = vunpack.c.h.b16 %v92
    %v325 = vunpack.c.l.b16 %v93
    %v326 = vunpack.c.h.b16 %v93
    %v327 = vunpack.c.l.b16 %v94
    %v328 = vunpack.c.h.b16 %v94
    %v329 = vunpack.c.l.b16 %v95
    %v330 = vunpack.c.h.b16 %v95
    %v331 = vunpack.c.l.b16 %v96
    %v332 = vunpack.c.h.b16 %v96
    %v333 = vunpack.c.l.b16 %v97
    %v334 = vunpack.c.h.b16 %v97
    %v335 = vunpack.c.l.b16 %v98
    %v336 = vunpack.c.h.b16 %v98
    %v337 = vunpack.c.l.b16 %v99
    %v338 = vunpack.c.h.b16 %v99
    %v339 = vunpack.c.l.b16 %v100
    %v340 = vunpack.c.h.b16 %v100
    %v341 = vunpack.c.l.b16 %v101
    %v342 = vunpack.c.h.b16 %v101
    %v343 = vunpack.c.l.b16 %v102
    %v344 = vunpack.c.h.b16 %v102
    %v345 = vunpack.c.l.b16 %v103
    %v346 = vunpack.c.h.b16 %v103
    %v347 = vunpack.c.l.b16 %v104
    %v348 = vunpack.c.h.b16 %v104
    %v349 = vunpack.c.l.b16 %v105
    %v350 = vunpack.c.h.b16 %v105
    %v351 = vunpack.c.l.b16 %v106
    %v352 = vunpack.c.h.b16 %v106
    %v353 = vunpack.c.l.b16 %v107
    %v354 = vunpack.c.h.b16 %v107
    %v355 = vunpack.c.l.b16 %v108
    %v356 = vunpack.c.h.b16 %v108
    %v357 = vunpack.c.l.b16 %v109
    %v358 = vunpack.c.h.b16 %v109
    %v359 = vunpack.c.l.b16 %v110
    %v360 = vunpack.c.h.b16 %v110
    %v361 = vunpack.c.l.b16 %v111
    %v362 = vunpack.c.h.b16 %v111
    %v363 = vunpack.c.l.b16 %v112
    %v364 = vunpack.c.h.b16 %v112
    %v365 = vunpack.c.l.b16 %v113
    %v366 = vunpack.c.h.b16 %v113
    %v367 = vunpack.c.l.b16 %v114
    %v368 = vunpack.c.h.b16 %v114
    %v369 = vunpack.c.l.b16 %v115
    %v370 = vunpack.c.h.b16 %v115
    %v371 = vunpack.c.l.b16 %v116
    %v372 = vunpack.c.h.b16 %v116
    %v373 = vunpack.c.l.b16 %v117
    %v374 = vunpack.c.h.b16 %v117
    %v375 = vpack.c.b16 %v251, %v247
    %v376 = vpack.c.b16 %v252, %v248
    %v377 = vpack.c.b16 %v253, %v249
    %v378 = vpack.c.b16 %v254, %v250
    %v379 = vpack.c.b16 %v259, %v255
    %v380 = vpack.c.b16 %v260, %v256
    %v381 = vpack.c.b16 %v261, %v257
    %v382 = vpack.c.b16 %v262, %v258
    %v383 = vpack.c.b16 %v267, %v263
    %v384 = vpack.c.b16 %v268, %v264
    %v385 = vpack.c.b16 %v269, %v265
    %v386 = vpack.c.b16 %v270, %v266
    %v387 = vpack.c.b16 %v275, %v271
    %v388 = vpack.c.b16 %v276, %v272
    %v389 = vpack.c.b16 %v277, %v273
    %v390 = vpack.c.b16 %v278, %v274
    %v391 = vpack.c.b16 %v283, %v279
    %v392 = vpack.c.b16 %v284, %v280
    %v393 = vpack.c.b16 %v285, %v281
    %v394 = vpack.c.b16 %v286, %v282
    %v395 = vpack.c.b16 %v291, %v287
    %v396 = vpack.c.b16 %v292, %v288
    %v397 = vpack.c.b16 %v293, %v289
    %v398 = vpack.c.b16 %v294, %v290
    %v399 = vpack.c.b16 %v299, %v295
    %v400 = vpack.c.b16 %v300, %v296
    %v401 = vpack.c.b16 %v301, %v297
    %v402 = vpack.c.b16 %v302, %v298
    %v403 = vpack.c.b16 %v307, %v303
    %v404 = vpack.c.b16 %v308, %v304
    %v405 = vpack.c.b16 %v309, %v305
    %v406 = vpack.c.b16 %v310, %v306
    %v407 = vpack.c.b16 %v315, %v311
    %v408 = vpack.c.b16 %v316, %v312
    %v409 = vpack.c.b16 %v317, %v313
    %v410 = vpack.c.b16 %v318, %v314
    %v411 = vpack.c.b16 %v323, %v319
    %v412 = vpack.c.b16 %v324, %v320
    %v413 = vpack.c.b16 %v325, %v321
    %v414 = vpack.c.b16 %v326, %v322
    %v415 = vpack.c.b16 %v331, %v327
    %v416 = vpack.c.b16 %v332, %v328
    %v417 = vpack.c.b16 %v333, %v329
    %v418 = vpack.c.b16 %v334, %v330
    %v419 = vpack.c.b16 %v339, %v335
    %v420 = vpack.c.b16 %v340, %v336
    %v421 = vpack.c.b16 %v341, %v337
    %v422 = vpack.c.b16 %v342, %v338
    %v423 = vpack.c.b16 %v347, %v343
    %v424 = vpack.c.b16 %v348, %v344
    %v425 = vpack.c.b16 %v349, %v345
    %v426 = vpack.c.b16 %v350, %v346
    %v427 = vpack.c.b16 %v355, %v351
    %v428 = vpack.c.b16 %v356, %v352
    %v429 = vpack.c.b16 %v357, %v353
    %v430 = vpack.c.b16 %v358, %v354
    %v431 = vpack.c.b16 %v363, %v359
    %v432 = vpack.c.b16 %v364, %v360
    %v433 = vpack.c.b16 %v365, %v361
    %v434 = vpack.c.b16 %v366, %v362
    %v435 = vpack.c.b16 %v371, %v367
    %v436 = vpack.c.b16 %v372, %v368
    %v437 = vpack.c.b16 %v373, %v369
    %v438 = vpack.c.b16 %v374, %v370
    %503 = vmatprep.subr.bf16.mxu0 %v376
    %504 = vmatpush1.bf16.msra.mxu0 %v375
    %505 = vmatprep.subr.bf16.mxu0 %v380
    %506 = vmatpush1.bf16.msra.mxu0 %v379
    %507 = vmatprep.subr.bf16.mxu0 %v384
    %508 = vmatpush1.bf16.msra.mxu0 %v383
    %509 = vmatprep.subr.bf16.mxu0 %v388
    %510 = vmatpush1.bf16.msra.mxu0 %v387
    %511 = vmatprep.subr.bf16.mxu0 %v392
    %512 = vmatpush1.bf16.msra.mxu0 %v391
    %513 = vmatprep.subr.bf16.mxu0 %v396
    %514 = vmatpush1.bf16.msra.mxu0 %v395
    %515 = vmatprep.subr.bf16.mxu0 %v400
    %516 = vmatpush1.bf16.msra.mxu0 %v399
    %517 = vmatprep.subr.bf16.mxu0 %v404
    %518 = vmatpush1.bf16.msra.mxu0 %v403
    %519 = vmatprep.subr.bf16.mxu0 %v408
    %520 = vmatpush1.bf16.msra.mxu0 %v407
    %521 = vmatprep.subr.bf16.mxu0 %v412
    %522 = vmatpush1.bf16.msra.mxu0 %v411
    %523 = vmatprep.subr.bf16.mxu0 %v416
    %524 = vmatpush1.bf16.msra.mxu0 %v415
    %525 = vmatprep.subr.bf16.mxu0 %v420
    %526 = vmatpush1.bf16.msra.mxu0 %v419
    %527 = vmatprep.subr.bf16.mxu0 %v424
    %528 = vmatpush1.bf16.msra.mxu0 %v423
    %529 = vmatprep.subr.bf16.mxu0 %v428
    %530 = vmatpush1.bf16.msra.mxu0 %v427
    %531 = vmatprep.subr.bf16.mxu0 %v432
    %532 = vmatpush1.bf16.msra.mxu0 %v431
    %533 = vmatprep.subr.bf16.mxu0 %v436
    %534 = vmatpush1.bf16.msra.mxu0 %v435
    %535 = vmatprep.mubr.bf16.mxu0 %v180
    %536 = vmatmul.mubr.bf16.gmra.mrb[0].mxu0 %v179
    %v537 = vpop.f32.mrb[0].mxu0
    %v538 = vadd.f32 %v149, %v537
    %v539 = vpop.f32.mrb[0].mxu0
    %v540 = vadd.f32 %v153, %v539
    %v541 = vpop.f32.mrb[0].mxu0
    %v542 = vpop.f32.mrb[0].mxu0
    %543 = vdwg.mxu0
    %544 = vmatprep.subr.bf16.mxu0 %v378
    %545 = vmatpush1.bf16.msra.mxu0 %v377
    %546 = vmatprep.subr.bf16.mxu0 %v382
    %547 = vmatpush1.bf16.msra.mxu0 %v381
    %548 = vmatprep.subr.bf16.mxu0 %v386
    %549 = vmatpush1.bf16.msra.mxu0 %v385
    %550 = vmatprep.subr.bf16.mxu0 %v390
    %551 = vmatpush1.bf16.msra.mxu0 %v389
    %552 = vmatprep.subr.bf16.mxu0 %v394
    %553 = vmatpush1.bf16.msra.mxu0 %v393
    %554 = vmatprep.subr.bf16.mxu0 %v398
    %555 = vmatpush1.bf16.msra.mxu0 %v397
    %556 = vmatprep.subr.bf16.mxu0 %v402
    %557 = vmatpush1.bf16.msra.mxu0 %v401
    %558 = vmatprep.subr.bf16.mxu0 %v406
    %559 = vmatpush1.bf16.msra.mxu0 %v405
    %560 = vmatprep.subr.bf16.mxu0 %v410
    %561 = vmatpush1.bf16.msra.mxu0 %v409
    %562 = vmatprep.subr.bf16.mxu0 %v414
    %563 = vmatpush1.bf16.msra.mxu0 %v413
    %564 = vmatprep.subr.bf16.mxu0 %v418
    %565 = vmatpush1.bf16.msra.mxu0 %v417
    %566 = vmatprep.subr.bf16.mxu0 %v422
    %567 = vmatpush1.bf16.msra.mxu0 %v421
    %568 = vmatprep.subr.bf16.mxu0 %v426
    %569 = vmatpush1.bf16.msra.mxu0 %v425
    %570 = vmatprep.subr.bf16.mxu0 %v430
    %571 = vmatpush1.bf16.msra.mxu0 %v429
    %572 = vmatprep.subr.bf16.mxu0 %v434
    %573 = vmatpush1.bf16.msra.mxu0 %v433
    %574 = vmatprep.subr.bf16.mxu0 %v438
    %575 = vmatpush1.bf16.msra.mxu0 %v437
    %576 = vmatprep.mubr.bf16.mxu0 %v180
    %577 = vmatmul.mubr.bf16.gmra.mrb[0].mxu0 %v179
    %v578 = vpop.f32.mrb[0].mxu0
    %v579 = vadd.f32 %v157, %v578
    %v580 = vpop.f32.mrb[0].mxu0
    %v581 = vadd.f32 %v161, %v580
    %v582 = vpop.f32.mrb[0].mxu0
    %v583 = vpop.f32.mrb[0].mxu0
    %584 = vdwg.mxu0
    %vm585 = vcmp.ge.f32.partialorder %v538, 0.0
    %vm586 = vcmp.ge.f32.partialorder %v540, 0.0
    %vm587 = vcmp.ge.f32.partialorder %v579, 0.0
    %vm588 = vcmp.ge.f32.partialorder %v581, 0.0
    %v589 = vmul.f32 %v538, 0.1
    %v590 = vmul.f32 %v540, 0.1
    %v591 = vmul.f32 %v579, 0.1
    %v592 = vmul.f32 %v581, 0.1
    %v593 = vsel %vm585, %v538, %v589
    %v594 = vsel %vm586, %v540, %v590
    %v595 = vsel %vm587, %v579, %v591
    %v596 = vsel %vm588, %v581, %v592
    %v597 = vld [vmem:[%s3] sm:$0xff]
    %v598 = vld [vmem:[%s3 + $0x8] sm:$0xff]
    %v599 = vld [vmem:[%s3 + $0x10] sm:$0xff]
    %v600 = vld [vmem:[%s3 + $0x18] sm:$0xff]
    %v601 = vld [vmem:[%s3 + $0x20] sm:$0xff]
    %v602 = vld [vmem:[%s3 + $0x28] sm:$0xff]
    %v603 = vld [vmem:[%s3 + $0x30] sm:$0xff]
    %v604 = vld [vmem:[%s3 + $0x38] sm:$0xff]
    %v605 = vld [vmem:[%s3 + $0x40] sm:$0xff]
    %v606 = vld [vmem:[%s3 + $0x48] sm:$0xff]
    %v607 = vld [vmem:[%s3 + $0x50] sm:$0xff]
    %v608 = vld [vmem:[%s3 + $0x58] sm:$0xff]
    %v609 = vld [vmem:[%s3 + $0x60] sm:$0xff]
    %v610 = vld [vmem:[%s3 + $0x68] sm:$0xff]
    %v611 = vld [vmem:[%s3 + $0x70] sm:$0xff]
    %v612 = vld [vmem:[%s3 + $0x78] sm:$0xff]
    %v613 = vld [vmem:[%s3 + $0x80] sm:$0xff]
    %v614 = vld [vmem:[%s3 + $0x88] sm:$0xff]
    %v615 = vld [vmem:[%s3 + $0x90] sm:$0xff]
    %v616 = vld [vmem:[%s3 + $0x98] sm:$0xff]
    %v617 = vld [vmem:[%s3 + $0xa0] sm:$0xff]
    %v618 = vld [vmem:[%s3 + $0xa8] sm:$0xff]
    %v619 = vld [vmem:[%s3 + $0xb0] sm:$0xff]
    %v620 = vld [vmem:[%s3 + $0xb8] sm:$0xff]
    %v621 = vld [vmem:[%s3 + $0xc0] sm:$0xff]
    %v622 = vld [vmem:[%s3 + $0xc8] sm:$0xff]
    %v623 = vld [vmem:[%s3 + $0xd0] sm:$0xff]
    %v624 = vld [vmem:[%s3 + $0xd8] sm:$0xff]
    %v625 = vld [vmem:[%s3 + $0xe0] sm:$0xff]
    %v626 = vld [vmem:[%s3 + $0xe8] sm:$0xff]
    %v627 = vld [vmem:[%s3 + $0xf0] sm:$0xff]
    %v628 = vld [vmem:[%s3 + $0xf8] sm:$0xff]
    %v629 = vld [vmem:[%s3 + $0x100] sm:$0xff]
    %v630 = vld [vmem:[%s3 + $0x108] sm:$0xff]
    %v631 = vld [vmem:[%s3 + $0x110] sm:$0xff]
    %v632 = vld [vmem:[%s3 + $0x118] sm:$0xff]
    %v633 = vld [vmem:[%s3 + $0x120] sm:$0xff]
    %v634 = vld [vmem:[%s3 + $0x128] sm:$0xff]
    %v635 = vld [vmem:[%s3 + $0x130] sm:$0xff]
    %v636 = vld [vmem:[%s3 + $0x138] sm:$0xff]
    %v637 = vld [vmem:[%s3 + $0x140] sm:$0xff]
    %v638 = vld [vmem:[%s3 + $0x148] sm:$0xff]
    %v639 = vld [vmem:[%s3 + $0x150] sm:$0xff]
    %v640 = vld [vmem:[%s3 + $0x158] sm:$0xff]
    %v641 = vld [vmem:[%s3 + $0x160] sm:$0xff]
    %v642 = vld [vmem:[%s3 + $0x168] sm:$0xff]
    %v643 = vld [vmem:[%s3 + $0x170] sm:$0xff]
    %v644 = vld [vmem:[%s3 + $0x178] sm:$0xff]
    %v645 = vld [vmem:[%s3 + $0x180] sm:$0xff]
    %v646 = vld [vmem:[%s3 + $0x188] sm:$0xff]
    %v647 = vld [vmem:[%s3 + $0x190] sm:$0xff]
    %v648 = vld [vmem:[%s3 + $0x198] sm:$0xff]
    %v649 = vld [vmem:[%s3 + $0x1a0] sm:$0xff]
    %v650 = vld [vmem:[%s3 + $0x1a8] sm:$0xff]
    %v651 = vld [vmem:[%s3 + $0x1b0] sm:$0xff]
    %v652 = vld [vmem:[%s3 + $0x1b8] sm:$0xff]
    %v653 = vld [vmem:[%s3 + $0x1c0] sm:$0xff]
    %v654 = vld [vmem:[%s3 + $0x1c8] sm:$0xff]
    %v655 = vld [vmem:[%s3 + $0x1d0] sm:$0xff]
    %v656 = vld [vmem:[%s3 + $0x1d8] sm:$0xff]
    %v657 = vld [vmem:[%s3 + $0x1e0] sm:$0xff]
    %v658 = vld [vmem:[%s3 + $0x1e8] sm:$0xff]
    %v659 = vld [vmem:[%s3 + $0x1f0] sm:$0xff]
    %v660 = vld [vmem:[%s3 + $0x1f8] sm:$0xff]
    %v661 = vld [vmem:[%s3 + $0x200] sm:$0xff]
    %v662 = vld [vmem:[%s3 + $0x208] sm:$0xff]
    %v663 = vld [vmem:[%s3 + $0x210] sm:$0xff]
    %v664 = vld [vmem:[%s3 + $0x218] sm:$0xff]
    %v665 = vld [vmem:[%s3 + $0x220] sm:$0xff]
    %v666 = vld [vmem:[%s3 + $0x228] sm:$0xff]
    %v667 = vld [vmem:[%s3 + $0x230] sm:$0xff]
    %v668 = vld [vmem:[%s3 + $0x238] sm:$0xff]
    %v669 = vld [vmem:[%s3 + $0x240] sm:$0xff]
    %v670 = vld [vmem:[%s3 + $0x248] sm:$0xff]
    %v671 = vld [vmem:[%s3 + $0x250] sm:$0xff]
    %v672 = vld [vmem:[%s3 + $0x258] sm:$0xff]
    %v673 = vld [vmem:[%s3 + $0x260] sm:$0xff]
    %v674 = vld [vmem:[%s3 + $0x268] sm:$0xff]
    %v675 = vld [vmem:[%s3 + $0x270] sm:$0xff]
    %v676 = vld [vmem:[%s3 + $0x278] sm:$0xff]
    %v677 = vld [vmem:[%s3 + $0x280] sm:$0xff]
    %v678 = vld [vmem:[%s3 + $0x288] sm:$0xff]
    %v679 = vld [vmem:[%s3 + $0x290] sm:$0xff]
    %v680 = vld [vmem:[%s3 + $0x298] sm:$0xff]
    %v681 = vld [vmem:[%s3 + $0x2a0] sm:$0xff]
    %v682 = vld [vmem:[%s3 + $0x2a8] sm:$0xff]
    %v683 = vld [vmem:[%s3 + $0x2b0] sm:$0xff]
    %v684 = vld [vmem:[%s3 + $0x2b8] sm:$0xff]
    %v685 = vld [vmem:[%s3 + $0x2c0] sm:$0xff]
    %v686 = vld [vmem:[%s3 + $0x2c8] sm:$0xff]
    %v687 = vld [vmem:[%s3 + $0x2d0] sm:$0xff]
    %v688 = vld [vmem:[%s3 + $0x2d8] sm:$0xff]
    %v689 = vld [vmem:[%s3 + $0x2e0] sm:$0xff]
    %v690 = vld [vmem:[%s3 + $0x2e8] sm:$0xff]
    %v691 = vld [vmem:[%s3 + $0x2f0] sm:$0xff]
    %v692 = vld [vmem:[%s3 + $0x2f8] sm:$0xff]
    %v693 = vld [vmem:[%s3 + $0x300] sm:$0xff]
    %v694 = vld [vmem:[%s3 + $0x308] sm:$0xff]
    %v695 = vld [vmem:[%s3 + $0x310] sm:$0xff]
    %v696 = vld [vmem:[%s3 + $0x318] sm:$0xff]
    %v697 = vld [vmem:[%s3 + $0x320] sm:$0xff]
    %v698 = vld [vmem:[%s3 + $0x328] sm:$0xff]
    %v699 = vld [vmem:[%s3 + $0x330] sm:$0xff]
    %v700 = vld [vmem:[%s3 + $0x338] sm:$0xff]
    %v701 = vld [vmem:[%s3 + $0x340] sm:$0xff]
    %v702 = vld [vmem:[%s3 + $0x348] sm:$0xff]
    %v703 = vld [vmem:[%s3 + $0x350] sm:$0xff]
    %v704 = vld [vmem:[%s3 + $0x358] sm:$0xff]
    %v705 = vld [vmem:[%s3 + $0x360] sm:$0xff]
    %v706 = vld [vmem:[%s3 + $0x368] sm:$0xff]
    %v707 = vld [vmem:[%s3 + $0x370] sm:$0xff]
    %v708 = vld [vmem:[%s3 + $0x378] sm:$0xff]
    %v709 = vld [vmem:[%s3 + $0x380] sm:$0xff]
    %v710 = vld [vmem:[%s3 + $0x388] sm:$0xff]
    %v711 = vld [vmem:[%s3 + $0x390] sm:$0xff]
    %v712 = vld [vmem:[%s3 + $0x398] sm:$0xff]
    %v713 = vld [vmem:[%s3 + $0x3a0] sm:$0xff]
    %v714 = vld [vmem:[%s3 + $0x3a8] sm:$0xff]
    %v715 = vld [vmem:[%s3 + $0x3b0] sm:$0xff]
    %v716 = vld [vmem:[%s3 + $0x3b8] sm:$0xff]
    %v717 = vld [vmem:[%s3 + $0x3c0] sm:$0xff]
    %v718 = vld [vmem:[%s3 + $0x3c8] sm:$0xff]
    %v719 = vld [vmem:[%s3 + $0x3d0] sm:$0xff]
    %v720 = vld [vmem:[%s3 + $0x3d8] sm:$0xff]
    %v721 = vld [vmem:[%s3 + $0x3e0] sm:$0xff]
    %v722 = vld [vmem:[%s3 + $0x3e8] sm:$0xff]
    %v723 = vld [vmem:[%s3 + $0x3f0] sm:$0xff]
    %v724 = vld [vmem:[%s3 + $0x3f8] sm:$0xff]
    %v725 = vld [vmem:[%s4] sm:$0xf]
    %v726 = vpack.c.bf16 %v593, %v593
    %v727 = vpack.c.bf16 %v594, %v594
    %v728 = vpack.c.bf16 %v595, %v595
    %v729 = vpack.c.bf16 %v596, %v596
    %v731 = vlaneseq
    %v732 = vshrl.u32 %v731, 7
    %v733 = vsub.s32 0, %v732
    %v734 = vrot.slane %v725, %v733
    %v735 = vlaneseq
    %v736 = vshrl.u32 %v735, 7
    %v737 = vsub.s32 1, %v736
    %v738 = vrot.slane %v725, %v737
    %v739 = vlaneseq
    %v740 = vshrl.u32 %v739, 7
    %v741 = vsub.s32 2, %v740
    %v742 = vrot.slane %v725, %v741
    %v743 = vlaneseq
    %v744 = vshrl.u32 %v743, 7
    %v745 = vsub.s32 3, %v744
    %v746 = vrot.slane %v725, %v745
    %v879 = vunpack.c.l.b16 %v597
    %v880 = vunpack.c.h.b16 %v597
    %v881 = vunpack.c.l.b16 %v598
    %v882 = vunpack.c.h.b16 %v598
    %v883 = vunpack.c.l.b16 %v599
    %v884 = vunpack.c.h.b16 %v599
    %v885 = vunpack.c.l.b16 %v600
    %v886 = vunpack.c.h.b16 %v600
    %v887 = vunpack.c.l.b16 %v601
    %v888 = vunpack.c.h.b16 %v601
    %v889 = vunpack.c.l.b16 %v602
    %v890 = vunpack.c.h.b16 %v602
    %v891 = vunpack.c.l.b16 %v603
    %v892 = vunpack.c.h.b16 %v603
    %v893 = vunpack.c.l.b16 %v604
    %v894 = vunpack.c.h.b16 %v604
    %v895 = vunpack.c.l.b16 %v605
    %v896 = vunpack.c.h.b16 %v605
    %v897 = vunpack.c.l.b16 %v606
    %v898 = vunpack.c.h.b16 %v606
    %v899 = vunpack.c.l.b16 %v607
    %v900 = vunpack.c.h.b16 %v607
    %v901 = vunpack.c.l.b16 %v608
    %v902 = vunpack.c.h.b16 %v608
    %v903 = vunpack.c.l.b16 %v609
    %v904 = vunpack.c.h.b16 %v609
    %v905 = vunpack.c.l.b16 %v610
    %v906 = vunpack.c.h.b16 %v610
    %v907 = vunpack.c.l.b16 %v611
    %v908 = vunpack.c.h.b16 %v611
    %v909 = vunpack.c.l.b16 %v612
    %v910 = vunpack.c.h.b16 %v612
    %v911 = vunpack.c.l.b16 %v613
    %v912 = vunpack.c.h.b16 %v613
    %v913 = vunpack.c.l.b16 %v614
    %v914 = vunpack.c.h.b16 %v614
    %v915 = vunpack.c.l.b16 %v615
    %v916 = vunpack.c.h.b16 %v615
    %v917 = vunpack.c.l.b16 %v616
    %v918 = vunpack.c.h.b16 %v616
    %v919 = vunpack.c.l.b16 %v617
    %v920 = vunpack.c.h.b16 %v617
    %v921 = vunpack.c.l.b16 %v618
    %v922 = vunpack.c.h.b16 %v618
    %v923 = vunpack.c.l.b16 %v619
    %v924 = vunpack.c.h.b16 %v619
    %v925 = vunpack.c.l.b16 %v620
    %v926 = vunpack.c.h.b16 %v620
    %v927 = vunpack.c.l.b16 %v621
    %v928 = vunpack.c.h.b16 %v621
    %v929 = vunpack.c.l.b16 %v622
    %v930 = vunpack.c.h.b16 %v622
    %v931 = vunpack.c.l.b16 %v623
    %v932 = vunpack.c.h.b16 %v623
    %v933 = vunpack.c.l.b16 %v624
    %v934 = vunpack.c.h.b16 %v624
    %v935 = vunpack.c.l.b16 %v625
    %v936 = vunpack.c.h.b16 %v625
    %v937 = vunpack.c.l.b16 %v626
    %v938 = vunpack.c.h.b16 %v626
    %v939 = vunpack.c.l.b16 %v627
    %v940 = vunpack.c.h.b16 %v627
    %v941 = vunpack.c.l.b16 %v628
    %v942 = vunpack.c.h.b16 %v628
    %v943 = vunpack.c.l.b16 %v629
    %v944 = vunpack.c.h.b16 %v629
    %v945 = vunpack.c.l.b16 %v630
    %v946 = vunpack.c.h.b16 %v630
    %v947 = vunpack.c.l.b16 %v631
    %v948 = vunpack.c.h.b16 %v631
    %v949 = vunpack.c.l.b16 %v632
    %v950 = vunpack.c.h.b16 %v632
    %v951 = vunpack.c.l.b16 %v633
    %v952 = vunpack.c.h.b16 %v633
    %v953 = vunpack.c.l.b16 %v634
    %v954 = vunpack.c.h.b16 %v634
    %v955 = vunpack.c.l.b16 %v635
    %v956 = vunpack.c.h.b16 %v635
    %v957 = vunpack.c.l.b16 %v636
    %v958 = vunpack.c.h.b16 %v636
    %v959 = vunpack.c.l.b16 %v637
    %v960 = vunpack.c.h.b16 %v637
    %v961 = vunpack.c.l.b16 %v638
    %v962 = vunpack.c.h.b16 %v638
    %v963 = vunpack.c.l.b16 %v639
    %v964 = vunpack.c.h.b16 %v639
    %v965 = vunpack.c.l.b16 %v640
    %v966 = vunpack.c.h.b16 %v640
    %v967 = vunpack.c.l.b16 %v641
    %v968 = vunpack.c.h.b16 %v641
    %v969 = vunpack.c.l.b16 %v642
    %v970 = vunpack.c.h.b16 %v642
    %v971 = vunpack.c.l.b16 %v643
    %v972 = vunpack.c.h.b16 %v643
    %v973 = vunpack.c.l.b16 %v644
    %v974 = vunpack.c.h.b16 %v644
    %v975 = vunpack.c.l.b16 %v645
    %v976 = vunpack.c.h.b16 %v645
    %v977 = vunpack.c.l.b16 %v646
    %v978 = vunpack.c.h.b16 %v646
    %v979 = vunpack.c.l.b16 %v647
    %v980 = vunpack.c.h.b16 %v647
    %v981 = vunpack.c.l.b16 %v648
    %v982 = vunpack.c.h.b16 %v648
    %v983 = vunpack.c.l.b16 %v649
    %v984 = vunpack.c.h.b16 %v649
    %v985 = vunpack.c.l.b16 %v650
    %v986 = vunpack.c.h.b16 %v650
    %v987 = vunpack.c.l.b16 %v651
    %v988 = vunpack.c.h.b16 %v651
    %v989 = vunpack.c.l.b16 %v652
    %v990 = vunpack.c.h.b16 %v652
    %v991 = vunpack.c.l.b16 %v653
    %v992 = vunpack.c.h.b16 %v653
    %v993 = vunpack.c.l.b16 %v654
    %v994 = vunpack.c.h.b16 %v654
    %v995 = vunpack.c.l.b16 %v655
    %v996 = vunpack.c.h.b16 %v655
    %v997 = vunpack.c.l.b16 %v656
    %v998 = vunpack.c.h.b16 %v656
    %v999 = vunpack.c.l.b16 %v657
    %v1000 = vunpack.c.h.b16 %v657
    %v1001 = vunpack.c.l.b16 %v658
    %v1002 = vunpack.c.h.b16 %v658
    %v1003 = vunpack.c.l.b16 %v659
    %v1004 = vunpack.c.h.b16 %v659
    %v1005 = vunpack.c.l.b16 %v660
    %v1006 = vunpack.c.h.b16 %v660
    %v1007 = vunpack.c.l.b16 %v661
    %v1008 = vunpack.c.h.b16 %v661
    %v1009 = vunpack.c.l.b16 %v662
    %v1010 = vunpack.c.h.b16 %v662
    %v1011 = vunpack.c.l.b16 %v663
    %v1012 = vunpack.c.h.b16 %v663
    %v1013 = vunpack.c.l.b16 %v664
    %v1014 = vunpack.c.h.b16 %v664
    %v1015 = vunpack.c.l.b16 %v665
    %v1016 = vunpack.c.h.b16 %v665
    %v1017 = vunpack.c.l.b16 %v666
    %v1018 = vunpack.c.h.b16 %v666
    %v1019 = vunpack.c.l.b16 %v667
    %v1020 = vunpack.c.h.b16 %v667
    %v1021 = vunpack.c.l.b16 %v668
    %v1022 = vunpack.c.h.b16 %v668
    %v1023 = vunpack.c.l.b16 %v669
    %v1024 = vunpack.c.h.b16 %v669
    %v1025 = vunpack.c.l.b16 %v670
    %v1026 = vunpack.c.h.b16 %v670
    %v1027 = vunpack.c.l.b16 %v671
    %v1028 = vunpack.c.h.b16 %v671
    %v1029 = vunpack.c.l.b16 %v672
    %v1030 = vunpack.c.h.b16 %v672
    %v1031 = vunpack.c.l.b16 %v673
    %v1032 = vunpack.c.h.b16 %v673
    %v1033 = vunpack.c.l.b16 %v674
    %v1034 = vunpack.c.h.b16 %v674
    %v1035 = vunpack.c.l.b16 %v675
    %v1036 = vunpack.c.h.b16 %v675
    %v1037 = vunpack.c.l.b16 %v676
    %v1038 = vunpack.c.h.b16 %v676
    %v1039 = vunpack.c.l.b16 %v677
    %v1040 = vunpack.c.h.b16 %v677
    %v1041 = vunpack.c.l.b16 %v678
    %v1042 = vunpack.c.h.b16 %v678
    %v1043 = vunpack.c.l.b16 %v679
    %v1044 = vunpack.c.h.b16 %v679
    %v1045 = vunpack.c.l.b16 %v680
    %v1046 = vunpack.c.h.b16 %v680
    %v1047 = vunpack.c.l.b16 %v681
    %v1048 = vunpack.c.h.b16 %v681
    %v1049 = vunpack.c.l.b16 %v682
    %v1050 = vunpack.c.h.b16 %v682
    %v1051 = vunpack.c.l.b16 %v683
    %v1052 = vunpack.c.h.b16 %v683
    %v1053 = vunpack.c.l.b16 %v684
    %v1054 = vunpack.c.h.b16 %v684
    %v1055 = vunpack.c.l.b16 %v685
    %v1056 = vunpack.c.h.b16 %v685
    %v1057 = vunpack.c.l.b16 %v686
    %v1058 = vunpack.c.h.b16 %v686
    %v1059 = vunpack.c.l.b16 %v687
    %v1060 = vunpack.c.h.b16 %v687
    %v1061 = vunpack.c.l.b16 %v688
    %v1062 = vunpack.c.h.b16 %v688
    %v1063 = vunpack.c.l.b16 %v689
    %v1064 = vunpack.c.h.b16 %v689
    %v1065 = vunpack.c.l.b16 %v690
    %v1066 = vunpack.c.h.b16 %v690
    %v1067 = vunpack.c.l.b16 %v691
    %v1068 = vunpack.c.h.b16 %v691
    %v1069 = vunpack.c.l.b16 %v692
    %v1070 = vunpack.c.h.b16 %v692
    %v1071 = vunpack.c.l.b16 %v693
    %v1072 = vunpack.c.h.b16 %v693
    %v1073 = vunpack.c.l.b16 %v694
    %v1074 = vunpack.c.h.b16 %v694
    %v1075 = vunpack.c.l.b16 %v695
    %v1076 = vunpack.c.h.b16 %v695
    %v1077 = vunpack.c.l.b16 %v696
    %v1078 = vunpack.c.h.b16 %v696
    %v1079 = vunpack.c.l.b16 %v697
    %v1080 = vunpack.c.h.b16 %v697
    %v1081 = vunpack.c.l.b16 %v698
    %v1082 = vunpack.c.h.b16 %v698
    %v1083 = vunpack.c.l.b16 %v699
    %v1084 = vunpack.c.h.b16 %v699
    %v1085 = vunpack.c.l.b16 %v700
    %v1086 = vunpack.c.h.b16 %v700
    %v1087 = vunpack.c.l.b16 %v701
    %v1088 = vunpack.c.h.b16 %v701
    %v1089 = vunpack.c.l.b16 %v702
    %v1090 = vunpack.c.h.b16 %v702
    %v1091 = vunpack.c.l.b16 %v703
    %v1092 = vunpack.c.h.b16 %v703
    %v1093 = vunpack.c.l.b16 %v704
    %v1094 = vunpack.c.h.b16 %v704
    %v1095 = vunpack.c.l.b16 %v705
    %v1096 = vunpack.c.h.b16 %v705
    %v1097 = vunpack.c.l.b16 %v706
    %v1098 = vunpack.c.h.b16 %v706
    %v1099 = vunpack.c.l.b16 %v707
    %v1100 = vunpack.c.h.b16 %v707
    %v1101 = vunpack.c.l.b16 %v708
    %v1102 = vunpack.c.h.b16 %v708
    %v1103 = vunpack.c.l.b16 %v709
    %v1104 = vunpack.c.h.b16 %v709
    %v1105 = vunpack.c.l.b16 %v710
    %v1106 = vunpack.c.h.b16 %v710
    %v1107 = vunpack.c.l.b16 %v711
    %v1108 = vunpack.c.h.b16 %v711
    %v1109 = vunpack.c.l.b16 %v712
    %v1110 = vunpack.c.h.b16 %v712
    %v1111 = vunpack.c.l.b16 %v713
    %v1112 = vunpack.c.h.b16 %v713
    %v1113 = vunpack.c.l.b16 %v714
    %v1114 = vunpack.c.h.b16 %v714
    %v1115 = vunpack.c.l.b16 %v715
    %v1116 = vunpack.c.h.b16 %v715
    %v1117 = vunpack.c.l.b16 %v716
    %v1118 = vunpack.c.h.b16 %v716
    %v1119 = vunpack.c.l.b16 %v717
    %v1120 = vunpack.c.h.b16 %v717
    %v1121 = vunpack.c.l.b16 %v718
    %v1122 = vunpack.c.h.b16 %v718
    %v1123 = vunpack.c.l.b16 %v719
    %v1124 = vunpack.c.h.b16 %v719
    %v1125 = vunpack.c.l.b16 %v720
    %v1126 = vunpack.c.h.b16 %v720
    %v1127 = vunpack.c.l.b16 %v721
    %v1128 = vunpack.c.h.b16 %v721
    %v1129 = vunpack.c.l.b16 %v722
    %v1130 = vunpack.c.h.b16 %v722
    %v1131 = vunpack.c.l.b16 %v723
    %v1132 = vunpack.c.h.b16 %v723
    %v1133 = vunpack.c.l.b16 %v724
    %v1134 = vunpack.c.h.b16 %v724
    %v1135 = vpack.c.b16 %v883, %v879
    %v1136 = vpack.c.b16 %v884, %v880
    %v1137 = vpack.c.b16 %v885, %v881
    %v1138 = vpack.c.b16 %v886, %v882
    %v1139 = vpack.c.b16 %v891, %v887
    %v1140 = vpack.c.b16 %v892, %v888
    %v1141 = vpack.c.b16 %v893, %v889
    %v1142 = vpack.c.b16 %v894, %v890
    %v1143 = vpack.c.b16 %v899, %v895
    %v1144 = vpack.c.b16 %v900, %v896
    %v1145 = vpack.c.b16 %v901, %v897
    %v1146 = vpack.c.b16 %v902, %v898
    %v1147 = vpack.c.b16 %v907, %v903
    %v1148 = vpack.c.b16 %v908, %v904
    %v1149 = vpack.c.b16 %v909, %v905
    %v1150 = vpack.c.b16 %v910, %v906
    %v1151 = vpack.c.b16 %v915, %v911
    %v1152 = vpack.c.b16 %v916, %v912
    %v1153 = vpack.c.b16 %v917, %v913
    %v1154 = vpack.c.b16 %v918, %v914
    %v1155 = vpack.c.b16 %v923, %v919
    %v1156 = vpack.c.b16 %v924, %v920
    %v1157 = vpack.c.b16 %v925, %v921
    %v1158 = vpack.c.b16 %v926, %v922
    %v1159 = vpack.c.b16 %v931, %v927
    %v1160 = vpack.c.b16 %v932, %v928
    %v1161 = vpack.c.b16 %v933, %v929
    %v1162 = vpack.c.b16 %v934, %v930
    %v1163 = vpack.c.b16 %v939, %v935
    %v1164 = vpack.c.b16 %v940, %v936
    %v1165 = vpack.c.b16 %v941, %v937
    %v1166 = vpack.c.b16 %v942, %v938
    %v1167 = vpack.c.b16 %v947, %v943
    %v1168 = vpack.c.b16 %v948, %v944
    %v1169 = vpack.c.b16 %v949, %v945
    %v1170 = vpack.c.b16 %v950, %v946
    %v1171 = vpack.c.b16 %v955, %v951
    %v1172 = vpack.c.b16 %v956, %v952
    %v1173 = vpack.c.b16 %v957, %v953
    %v1174 = vpack.c.b16 %v958, %v954
    %v1175 = vpack.c.b16 %v963, %v959
    %v1176 = vpack.c.b16 %v964, %v960
    %v1177 = vpack.c.b16 %v965, %v961
    %v1178 = vpack.c.b16 %v966, %v962
    %v1179 = vpack.c.b16 %v971, %v967
    %v1180 = vpack.c.b16 %v972, %v968
    %v1181 = vpack.c.b16 %v973, %v969
    %v1182 = vpack.c.b16 %v974, %v970
    %v1183 = vpack.c.b16 %v979, %v975
    %v1184 = vpack.c.b16 %v980, %v976
    %v1185 = vpack.c.b16 %v981, %v977
    %v1186 = vpack.c.b16 %v982, %v978
    %v1187 = vpack.c.b16 %v987, %v983
    %v1188 = vpack.c.b16 %v988, %v984
    %v1189 = vpack.c.b16 %v989, %v985
    %v1190 = vpack.c.b16 %v990, %v986
    %v1191 = vpack.c.b16 %v995, %v991
    %v1192 = vpack.c.b16 %v996, %v992
    %v1193 = vpack.c.b16 %v997, %v993
    %v1194 = vpack.c.b16 %v998, %v994
    %v1195 = vpack.c.b16 %v1003, %v999
    %v1196 = vpack.c.b16 %v1004, %v1000
    %v1197 = vpack.c.b16 %v1005, %v1001
    %v1198 = vpack.c.b16 %v1006, %v1002
    %v1199 = vpack.c.b16 %v1011, %v1007
    %v1200 = vpack.c.b16 %v1012, %v1008
    %v1201 = vpack.c.b16 %v1013, %v1009
    %v1202 = vpack.c.b16 %v1014, %v1010
    %v1203 = vpack.c.b16 %v1019, %v1015
    %v1204 = vpack.c.b16 %v1020, %v1016
    %v1205 = vpack.c.b16 %v1021, %v1017
    %v1206 = vpack.c.b16 %v1022, %v1018
    %v1207 = vpack.c.b16 %v1027, %v1023
    %v1208 = vpack.c.b16 %v1028, %v1024
    %v1209 = vpack.c.b16 %v1029, %v1025
    %v1210 = vpack.c.b16 %v1030, %v1026
    %v1211 = vpack.c.b16 %v1035, %v1031
    %v1212 = vpack.c.b16 %v1036, %v1032
    %v1213 = vpack.c.b16 %v1037, %v1033
    %v1214 = vpack.c.b16 %v1038, %v1034
    %v1215 = vpack.c.b16 %v1043, %v1039
    %v1216 = vpack.c.b16 %v1044, %v1040
    %v1217 = vpack.c.b16 %v1045, %v1041
    %v1218 = vpack.c.b16 %v1046, %v1042
    %v1219 = vpack.c.b16 %v1051, %v1047
    %v1220 = vpack.c.b16 %v1052, %v1048
    %v1221 = vpack.c.b16 %v1053, %v1049
    %v1222 = vpack.c.b16 %v1054, %v1050
    %v1223 = vpack.c.b16 %v1059, %v1055
    %v1224 = vpack.c.b16 %v1060, %v1056
    %v1225 = vpack.c.b16 %v1061, %v1057
    %v1226 = vpack.c.b16 %v1062, %v1058
    %v1227 = vpack.c.b16 %v1067, %v1063
    %v1228 = vpack.c.b16 %v1068, %v1064
    %v1229 = vpack.c.b16 %v1069, %v1065
    %v1230 = vpack.c.b16 %v1070, %v1066
    %v1231 = vpack.c.b16 %v1075, %v1071
    %v1232 = vpack.c.b16 %v1076, %v1072
    %v1233 = vpack.c.b16 %v1077, %v1073
    %v1234 = vpack.c.b16 %v1078, %v1074
    %v1235 = vpack.c.b16 %v1083, %v1079
    %v1236 = vpack.c.b16 %v1084, %v1080
    %v1237 = vpack.c.b16 %v1085, %v1081
    %v1238 = vpack.c.b16 %v1086, %v1082
    %v1239 = vpack.c.b16 %v1091, %v1087
    %v1240 = vpack.c.b16 %v1092, %v1088
    %v1241 = vpack.c.b16 %v1093, %v1089
    %v1242 = vpack.c.b16 %v1094, %v1090
    %v1243 = vpack.c.b16 %v1099, %v1095
    %v1244 = vpack.c.b16 %v1100, %v1096
    %v1245 = vpack.c.b16 %v1101, %v1097
    %v1246 = vpack.c.b16 %v1102, %v1098
    %v1247 = vpack.c.b16 %v1107, %v1103
    %v1248 = vpack.c.b16 %v1108, %v1104
    %v1249 = vpack.c.b16 %v1109, %v1105
    %v1250 = vpack.c.b16 %v1110, %v1106
    %v1251 = vpack.c.b16 %v1115, %v1111
    %v1252 = vpack.c.b16 %v1116, %v1112
    %v1253 = vpack.c.b16 %v1117, %v1113
    %v1254 = vpack.c.b16 %v1118, %v1114
    %v1255 = vpack.c.b16 %v1123, %v1119
    %v1256 = vpack.c.b16 %v1124, %v1120
    %v1257 = vpack.c.b16 %v1125, %v1121
    %v1258 = vpack.c.b16 %v1126, %v1122
    %v1259 = vpack.c.b16 %v1131, %v1127
    %v1260 = vpack.c.b16 %v1132, %v1128
    %v1261 = vpack.c.b16 %v1133, %v1129
    %v1262 = vpack.c.b16 %v1134, %v1130
    %1391 = vmatprep.subr.bf16.mxu0 %v1136
    %1392 = vmatpush1.bf16.msra.mxu0 %v1135
    %1393 = vmatprep.subr.bf16.mxu0 %v1140
    %1394 = vmatpush1.bf16.msra.mxu0 %v1139
    %1395 = vmatprep.subr.bf16.mxu0 %v1144
    %1396 = vmatpush1.bf16.msra.mxu0 %v1143
    %1397 = vmatprep.subr.bf16.mxu0 %v1148
    %1398 = vmatpush1.bf16.msra.mxu0 %v1147
    %1399 = vmatprep.subr.bf16.mxu0 %v1152
    %1400 = vmatpush1.bf16.msra.mxu0 %v1151
    %1401 = vmatprep.subr.bf16.mxu0 %v1156
    %1402 = vmatpush1.bf16.msra.mxu0 %v1155
    %1403 = vmatprep.subr.bf16.mxu0 %v1160
    %1404 = vmatpush1.bf16.msra.mxu0 %v1159
    %1405 = vmatprep.subr.bf16.mxu0 %v1164
    %1406 = vmatpush1.bf16.msra.mxu0 %v1163
    %1407 = vmatprep.subr.bf16.mxu0 %v1168
    %1408 = vmatpush1.bf16.msra.mxu0 %v1167
    %1409 = vmatprep.subr.bf16.mxu0 %v1172
    %1410 = vmatpush1.bf16.msra.mxu0 %v1171
    %1411 = vmatprep.subr.bf16.mxu0 %v1176
    %1412 = vmatpush1.bf16.msra.mxu0 %v1175
    %1413 = vmatprep.subr.bf16.mxu0 %v1180
    %1414 = vmatpush1.bf16.msra.mxu0 %v1179
    %1415 = vmatprep.subr.bf16.mxu0 %v1184
    %1416 = vmatpush1.bf16.msra.mxu0 %v1183
    %1417 = vmatprep.subr.bf16.mxu0 %v1188
    %1418 = vmatpush1.bf16.msra.mxu0 %v1187
    %1419 = vmatprep.subr.bf16.mxu0 %v1192
    %1420 = vmatpush1.bf16.msra.mxu0 %v1191
    %1421 = vmatprep.subr.bf16.mxu0 %v1196
    %1422 = vmatpush1.bf16.msra.mxu0 %v1195
    %1423 = vmatprep.mubr.bf16.mxu0 %v727
    %1424 = vmatmul.mubr.bf16.gmra.mrb[0].mxu0 %v726
    %v1425 = vpop.f32.mrb[0].mxu0
    %v1426 = vadd.f32 %v734, %v1425
    %v1427 = vpop.f32.mrb[0].mxu0
    %v1428 = vadd.f32 %v738, %v1427
    %v1429 = vpop.f32.mrb[0].mxu0
    %v1430 = vpop.f32.mrb[0].mxu0
    %1431 = vdwg.mxu0
    %1432 = vmatprep.subr.bf16.mxu0 %v1200
    %1433 = vmatpush1.bf16.msra.mxu0 %v1199
    %1434 = vmatprep.subr.bf16.mxu0 %v1204
    %1435 = vmatpush1.bf16.msra.mxu0 %v1203
    %1436 = vmatprep.subr.bf16.mxu0 %v1208
    %1437 = vmatpush1.bf16.msra.mxu0 %v1207
    %1438 = vmatprep.subr.bf16.mxu0 %v1212
    %1439 = vmatpush1.bf16.msra.mxu0 %v1211
    %1440 = vmatprep.subr.bf16.mxu0 %v1216
    %1441 = vmatpush1.bf16.msra.mxu0 %v1215
    %1442 = vmatprep.subr.bf16.mxu0 %v1220
    %1443 = vmatpush1.bf16.msra.mxu0 %v1219
    %1444 = vmatprep.subr.bf16.mxu0 %v1224
    %1445 = vmatpush1.bf16.msra.mxu0 %v1223
    %1446 = vmatprep.subr.bf16.mxu0 %v1228
    %1447 = vmatpush1.bf16.msra.mxu0 %v1227
    %1448 = vmatprep.subr.bf16.mxu0 %v1232
    %1449 = vmatpush1.bf16.msra.mxu0 %v1231
    %1450 = vmatprep.subr.bf16.mxu0 %v1236
    %1451 = vmatpush1.bf16.msra.mxu0 %v1235
    %1452 = vmatprep.subr.bf16.mxu0 %v1240
    %1453 = vmatpush1.bf16.msra.mxu0 %v1239
    %1454 = vmatprep.subr.bf16.mxu0 %v1244
    %1455 = vmatpush1.bf16.msra.mxu0 %v1243
    %1456 = vmatprep.subr.bf16.mxu0 %v1248
    %1457 = vmatpush1.bf16.msra.mxu0 %v1247
    %1458 = vmatprep.subr.bf16.mxu0 %v1252
    %1459 = vmatpush1.bf16.msra.mxu0 %v1251
    %1460 = vmatprep.subr.bf16.mxu0 %v1256
    %1461 = vmatpush1.bf16.msra.mxu0 %v1255
    %1462 = vmatprep.subr.bf16.mxu0 %v1260
    %1463 = vmatpush1.bf16.msra.mxu0 %v1259
    %1464 = vmatprep.mubr.bf16.mxu0 %v729
    %1465 = vmatmul.mubr.bf16.gmra.mrb[0].mxu0 %v728
    %v1466 = vpop.f32.mrb[0].mxu0
    %v1467 = vadd.f32 %v1426, %v1466
    %v1468 = vpop.f32.mrb[0].mxu0
    %v1469 = vadd.f32 %v1428, %v1468
    %v1470 = vpop.f32.mrb[0].mxu0
    %v1471 = vpop.f32.mrb[0].mxu0
    %1472 = vdwg.mxu0
    %1473 = vmatprep.subr.bf16.mxu0 %v1138
    %1474 = vmatpush1.bf16.msra.mxu0 %v1137
    %1475 = vmatprep.subr.bf16.mxu0 %v1142
    %1476 = vmatpush1.bf16.msra.mxu0 %v1141
    %1477 = vmatprep.subr.bf16.mxu0 %v1146
    %1478 = vmatpush1.bf16.msra.mxu0 %v1145
    %1479 = vmatprep.subr.bf16.mxu0 %v1150
    %1480 = vmatpush1.bf16.msra.mxu0 %v1149
    %1481 = vmatprep.subr.bf16.mxu0 %v1154
    %1482 = vmatpush1.bf16.msra.mxu0 %v1153
    %1483 = vmatprep.subr.bf16.mxu0 %v1158
    %1484 = vmatpush1.bf16.msra.mxu0 %v1157
    %1485 = vmatprep.subr.bf16.mxu0 %v1162
    %1486 = vmatpush1.bf16.msra.mxu0 %v1161
    %1487 = vmatprep.subr.bf16.mxu0 %v1166
    %1488 = vmatpush1.bf16.msra.mxu0 %v1165
    %1489 = vmatprep.subr.bf16.mxu0 %v1170
    %1490 = vmatpush1.bf16.msra.mxu0 %v1169
    %1491 = vmatprep.subr.bf16.mxu0 %v1174
    %1492 = vmatpush1.bf16.msra.mxu0 %v1173
    %1493 = vmatprep.subr.bf16.mxu0 %v1178
    %1494 = vmatpush1.bf16.msra.mxu0 %v1177
    %1495 = vmatprep.subr.bf16.mxu0 %v1182
    %1496 = vmatpush1.bf16.msra.mxu0 %v1181
    %1497 = vmatprep.subr.bf16.mxu0 %v1186
    %1498 = vmatpush1.bf16.msra.mxu0 %v1185
    %1499 = vmatprep.subr.bf16.mxu0 %v1190
    %1500 = vmatpush1.bf16.msra.mxu0 %v1189
    %1501 = vmatprep.subr.bf16.mxu0 %v1194
    %1502 = vmatpush1.bf16.msra.mxu0 %v1193
    %1503 = vmatprep.subr.bf16.mxu0 %v1198
    %1504 = vmatpush1.bf16.msra.mxu0 %v1197
    %1505 = vmatprep.mubr.bf16.mxu0 %v727
    %1506 = vmatmul.mubr.bf16.gmra.mrb[0].mxu0 %v726
    %v1507 = vpop.f32.mrb[0].mxu0
    %v1508 = vadd.f32 %v742, %v1507
    %v1509 = vpop.f32.mrb[0].mxu0
    %v1510 = vadd.f32 %v746, %v1509
    %v1511 = vpop.f32.mrb[0].mxu0
    %v1512 = vpop.f32.mrb[0].mxu0
    %1513 = vdwg.mxu0
    %1514 = vmatprep.subr.bf16.mxu0 %v1202
    %1515 = vmatpush1.bf16.msra.mxu0 %v1201
    %1516 = vmatprep.subr.bf16.mxu0 %v1206
    %1517 = vmatpush1.bf16.msra.mxu0 %v1205
    %1518 = vmatprep.subr.bf16.mxu0 %v1210
    %1519 = vmatpush1.bf16.msra.mxu0 %v1209
    %1520 = vmatprep.subr.bf16.mxu0 %v1214
    %1521 = vmatpush1.bf16.msra.mxu0 %v1213
    %1522 = vmatprep.subr.bf16.mxu0 %v1218
    %1523 = vmatpush1.bf16.msra.mxu0 %v1217
    %1524 = vmatprep.subr.bf16.mxu0 %v1222
    %1525 = vmatpush1.bf16.msra.mxu0 %v1221
    %1526 = vmatprep.subr.bf16.mxu0 %v1226
    %1527 = vmatpush1.bf16.msra.mxu0 %v1225
    %1528 = vmatprep.subr.bf16.mxu0 %v1230
    %1529 = vmatpush1.bf16.msra.mxu0 %v1229
    %1530 = vmatprep.subr.bf16.mxu0 %v1234
    %1531 = vmatpush1.bf16.msra.mxu0 %v1233
    %1532 = vmatprep.subr.bf16.mxu0 %v1238
    %1533 = vmatpush1.bf16.msra.mxu0 %v1237
    %1534 = vmatprep.subr.bf16.mxu0 %v1242
    %1535 = vmatpush1.bf16.msra.mxu0 %v1241
    %1536 = vmatprep.subr.bf16.mxu0 %v1246
    %1537 = vmatpush1.bf16.msra.mxu0 %v1245
    %1538 = vmatprep.subr.bf16.mxu0 %v1250
    %1539 = vmatpush1.bf16.msra.mxu0 %v1249
    %1540 = vmatprep.subr.bf16.mxu0 %v1254
    %1541 = vmatpush1.bf16.msra.mxu0 %v1253
    %1542 = vmatprep.subr.bf16.mxu0 %v1258
    %1543 = vmatpush1.bf16.msra.mxu0 %v1257
    %1544 = vmatprep.subr.bf16.mxu0 %v1262
    %1545 = vmatpush1.bf16.msra.mxu0 %v1261
    %1546 = vmatprep.mubr.bf16.mxu0 %v729
    %1547 = vmatmul.mubr.bf16.gmra.mrb[0].mxu0 %v728
    %v1548 = vpop.f32.mrb[0].mxu0
    %v1549 = vadd.f32 %v1508, %v1548
    %v1550 = vpop.f32.mrb[0].mxu0
    %v1551 = vadd.f32 %v1510, %v1550
    %v1552 = vpop.f32.mrb[0].mxu0
    %v1553 = vpop.f32.mrb[0].mxu0
    %1554 = vdwg.mxu0
    %v1555 = vld [vmem:[%s5] sm:$0xff]
    %v1556 = vld [vmem:[%s5 + $0x8] sm:$0xff]
    %v1557 = vld [vmem:[%s5 + $0x10] sm:$0xff]
    %v1558 = vld [vmem:[%s5 + $0x18] sm:$0xff]
    %v1559 = vld [vmem:[%s5 + $0x20] sm:$0xff]
    %v1560 = vld [vmem:[%s5 + $0x28] sm:$0xff]
    %v1561 = vld [vmem:[%s5 + $0x30] sm:$0xff]
    %v1562 = vld [vmem:[%s5 + $0x38] sm:$0xff]
    %v1563 = vld [vmem:[%s5 + $0x40] sm:$0xff]
    %v1564 = vld [vmem:[%s5 + $0x48] sm:$0xff]
    %v1565 = vld [vmem:[%s5 + $0x50] sm:$0xff]
    %v1566 = vld [vmem:[%s5 + $0x58] sm:$0xff]
    %v1567 = vld [vmem:[%s5 + $0x60] sm:$0xff]
    %v1568 = vld [vmem:[%s5 + $0x68] sm:$0xff]
    %v1569 = vld [vmem:[%s5 + $0x70] sm:$0xff]
    %v1570 = vld [vmem:[%s5 + $0x78] sm:$0xff]
    %v1571 = vld [vmem:[%s5 + $0x80] sm:$0xff]
    %v1572 = vld [vmem:[%s5 + $0x88] sm:$0xff]
    %v1573 = vld [vmem:[%s5 + $0x90] sm:$0xff]
    %v1574 = vld [vmem:[%s5 + $0x98] sm:$0xff]
    %v1575 = vld [vmem:[%s5 + $0xa0] sm:$0xff]
    %v1576 = vld [vmem:[%s5 + $0xa8] sm:$0xff]
    %v1577 = vld [vmem:[%s5 + $0xb0] sm:$0xff]
    %v1578 = vld [vmem:[%s5 + $0xb8] sm:$0xff]
    %v1579 = vld [vmem:[%s5 + $0xc0] sm:$0xff]
    %v1580 = vld [vmem:[%s5 + $0xc8] sm:$0xff]
    %v1581 = vld [vmem:[%s5 + $0xd0] sm:$0xff]
    %v1582 = vld [vmem:[%s5 + $0xd8] sm:$0xff]
    %v1583 = vld [vmem:[%s5 + $0xe0] sm:$0xff]
    %v1584 = vld [vmem:[%s5 + $0xe8] sm:$0xff]
    %v1585 = vld [vmem:[%s5 + $0xf0] sm:$0xff]
    %v1586 = vld [vmem:[%s5 + $0xf8] sm:$0xff]
    %v1587 = vld [vmem:[%s5 + $0x100] sm:$0xff]
    %v1588 = vld [vmem:[%s5 + $0x108] sm:$0xff]
    %v1589 = vld [vmem:[%s5 + $0x110] sm:$0xff]
    %v1590 = vld [vmem:[%s5 + $0x118] sm:$0xff]
    %v1591 = vld [vmem:[%s5 + $0x120] sm:$0xff]
    %v1592 = vld [vmem:[%s5 + $0x128] sm:$0xff]
    %v1593 = vld [vmem:[%s5 + $0x130] sm:$0xff]
    %v1594 = vld [vmem:[%s5 + $0x138] sm:$0xff]
    %v1595 = vld [vmem:[%s5 + $0x140] sm:$0xff]
    %v1596 = vld [vmem:[%s5 + $0x148] sm:$0xff]
    %v1597 = vld [vmem:[%s5 + $0x150] sm:$0xff]
    %v1598 = vld [vmem:[%s5 + $0x158] sm:$0xff]
    %v1599 = vld [vmem:[%s5 + $0x160] sm:$0xff]
    %v1600 = vld [vmem:[%s5 + $0x168] sm:$0xff]
    %v1601 = vld [vmem:[%s5 + $0x170] sm:$0xff]
    %v1602 = vld [vmem:[%s5 + $0x178] sm:$0xff]
    %v1603 = vld [vmem:[%s5 + $0x180] sm:$0xff]
    %v1604 = vld [vmem:[%s5 + $0x188] sm:$0xff]
    %v1605 = vld [vmem:[%s5 + $0x190] sm:$0xff]
    %v1606 = vld [vmem:[%s5 + $0x198] sm:$0xff]
    %v1607 = vld [vmem:[%s5 + $0x1a0] sm:$0xff]
    %v1608 = vld [vmem:[%s5 + $0x1a8] sm:$0xff]
    %v1609 = vld [vmem:[%s5 + $0x1b0] sm:$0xff]
    %v1610 = vld [vmem:[%s5 + $0x1b8] sm:$0xff]
    %v1611 = vld [vmem:[%s5 + $0x1c0] sm:$0xff]
    %v1612 = vld [vmem:[%s5 + $0x1c8] sm:$0xff]
    %v1613 = vld [vmem:[%s5 + $0x1d0] sm:$0xff]
    %v1614 = vld [vmem:[%s5 + $0x1d8] sm:$0xff]
    %v1615 = vld [vmem:[%s5 + $0x1e0] sm:$0xff]
    %v1616 = vld [vmem:[%s5 + $0x1e8] sm:$0xff]
    %v1617 = vld [vmem:[%s5 + $0x1f0] sm:$0xff]
    %v1618 = vld [vmem:[%s5 + $0x1f8] sm:$0xff]
    %v1619 = vld [vmem:[%s6] sm:$0xf]
    %v1622 = vlaneseq
    %v1623 = vshrl.u32 %v1622, 7
    %v1624 = vsub.s32 0, %v1623
    %v1625 = vrot.slane %v46, %v1624
    %v1626 = vlaneseq
    %v1627 = vshrl.u32 %v1626, 7
    %v1628 = vsub.s32 1, %v1627
    %v1629 = vrot.slane %v46, %v1628
    %v1630 = vlaneseq
    %v1631 = vshrl.u32 %v1630, 7
    %v1632 = vsub.s32 0, %v1631
    %v1633 = vrot.slane %v47, %v1632
    %v1634 = vlaneseq
    %v1635 = vshrl.u32 %v1634, 7
    %v1636 = vsub.s32 1, %v1635
    %v1637 = vrot.slane %v47, %v1636
    %v1642 = vpack.c.bf16 %v1625, %v1625
    %v1643 = vpack.c.bf16 %v1629, %v1629
    %v1644 = vpack.c.bf16 %v1633, %v1633
    %v1645 = vpack.c.bf16 %v1637, %v1637
    %v1647 = vlaneseq
    %v1648 = vshrl.u32 %v1647, 7
    %v1649 = vsub.s32 0, %v1648
    %v1650 = vrot.slane %v1619, %v1649
    %v1651 = vlaneseq
    %v1652 = vshrl.u32 %v1651, 7
    %v1653 = vsub.s32 1, %v1652
    %v1654 = vrot.slane %v1619, %v1653
    %v1655 = vlaneseq
    %v1656 = vshrl.u32 %v1655, 7
    %v1657 = vsub.s32 2, %v1656
    %v1658 = vrot.slane %v1619, %v1657
    %v1659 = vlaneseq
    %v1660 = vshrl.u32 %v1659, 7
    %v1661 = vsub.s32 3, %v1660
    %v1662 = vrot.slane %v1619, %v1661
    %v1671 = vunpack.c.l.b16 %v1642
    %v1672 = vunpack.c.l.b16 %v1643
    %v1673 = vunpack.c.l.b16 %v1644
    %v1674 = vunpack.c.l.b16 %v1645
    %v1675 = vrot.slane %v1673, 7
    %v1676 = vsel %vm175, %v1675, %v1671
    %v1677 = vrot.slane %v1674, 7
    %v1678 = vsel %vm175, %v1677, %v1672
    %v1679 = vpack.c.b16 %v1676, %v1676
    %v1680 = vpack.c.b16 %v1678, %v1678
    %v1747 = vunpack.c.l.b16 %v1555
    %v1748 = vunpack.c.h.b16 %v1555
    %v1749 = vunpack.c.l.b16 %v1556
    %v1750 = vunpack.c.h.b16 %v1556
    %v1751 = vunpack.c.l.b16 %v1557
    %v1752 = vunpack.c.h.b16 %v1557
    %v1753 = vunpack.c.l.b16 %v1558
    %v1754 = vunpack.c.h.b16 %v1558
    %v1755 = vunpack.c.l.b16 %v1559
    %v1756 = vunpack.c.h.b16 %v1559
    %v1757 = vunpack.c.l.b16 %v1560
    %v1758 = vunpack.c.h.b16 %v1560
    %v1759 = vunpack.c.l.b16 %v1561
    %v1760 = vunpack.c.h.b16 %v1561
    %v1761 = vunpack.c.l.b16 %v1562
    %v1762 = vunpack.c.h.b16 %v1562
    %v1763 = vunpack.c.l.b16 %v1563
    %v1764 = vunpack.c.h.b16 %v1563
    %v1765 = vunpack.c.l.b16 %v1564
    %v1766 = vunpack.c.h.b16 %v1564
    %v1767 = vunpack.c.l.b16 %v1565
    %v1768 = vunpack.c.h.b16 %v1565
    %v1769 = vunpack.c.l.b16 %v1566
    %v1770 = vunpack.c.h.b16 %v1566
    %v1771 = vunpack.c.l.b16 %v1567
    %v1772 = vunpack.c.h.b16 %v1567
    %v1773 = vunpack.c.l.b16 %v1568
    %v1774 = vunpack.c.h.b16 %v1568
    %v1775 = vunpack.c.l.b16 %v1569
    %v1776 = vunpack.c.h.b16 %v1569
    %v1777 = vunpack.c.l.b16 %v1570
    %v1778 = vunpack.c.h.b16 %v1570
    %v1779 = vunpack.c.l.b16 %v1571
    %v1780 = vunpack.c.h.b16 %v1571
    %v1781 = vunpack.c.l.b16 %v1572
    %v1782 = vunpack.c.h.b16 %v1572
    %v1783 = vunpack.c.l.b16 %v1573
    %v1784 = vunpack.c.h.b16 %v1573
    %v1785 = vunpack.c.l.b16 %v1574
    %v1786 = vunpack.c.h.b16 %v1574
    %v1787 = vunpack.c.l.b16 %v1575
    %v1788 = vunpack.c.h.b16 %v1575
    %v1789 = vunpack.c.l.b16 %v1576
    %v1790 = vunpack.c.h.b16 %v1576
    %v1791 = vunpack.c.l.b16 %v1577
    %v1792 = vunpack.c.h.b16 %v1577
    %v1793 = vunpack.c.l.b16 %v1578
    %v1794 = vunpack.c.h.b16 %v1578
    %v1795 = vunpack.c.l.b16 %v1579
    %v1796 = vunpack.c.h.b16 %v1579
    %v1797 = vunpack.c.l.b16 %v1580
    %v1798 = vunpack.c.h.b16 %v1580
    %v1799 = vunpack.c.l.b16 %v1581
    %v1800 = vunpack.c.h.b16 %v1581
    %v1801 = vunpack.c.l.b16 %v1582
    %v1802 = vunpack.c.h.b16 %v1582
    %v1803 = vunpack.c.l.b16 %v1583
    %v1804 = vunpack.c.h.b16 %v1583
    %v1805 = vunpack.c.l.b16 %v1584
    %v1806 = vunpack.c.h.b16 %v1584
    %v1807 = vunpack.c.l.b16 %v1585
    %v1808 = vunpack.c.h.b16 %v1585
    %v1809 = vunpack.c.l.b16 %v1586
    %v1810 = vunpack.c.h.b16 %v1586
    %v1811 = vunpack.c.l.b16 %v1587
    %v1812 = vunpack.c.h.b16 %v1587
    %v1813 = vunpack.c.l.b16 %v1588
    %v1814 = vunpack.c.h.b16 %v1588
    %v1815 = vunpack.c.l.b16 %v1589
    %v1816 = vunpack.c.h.b16 %v1589
    %v1817 = vunpack.c.l.b16 %v1590
    %v1818 = vunpack.c.h.b16 %v1590
    %v1819 = vunpack.c.l.b16 %v1591
    %v1820 = vunpack.c.h.b16 %v1591
    %v1821 = vunpack.c.l.b16 %v1592
    %v1822 = vunpack.c.h.b16 %v1592
    %v1823 = vunpack.c.l.b16 %v1593
    %v1824 = vunpack.c.h.b16 %v1593
    %v1825 = vunpack.c.l.b16 %v1594
    %v1826 = vunpack.c.h.b16 %v1594
    %v1827 = vunpack.c.l.b16 %v1595
    %v1828 = vunpack.c.h.b16 %v1595
    %v1829 = vunpack.c.l.b16 %v1596
    %v1830 = vunpack.c.h.b16 %v1596
    %v1831 = vunpack.c.l.b16 %v1597
    %v1832 = vunpack.c.h.b16 %v1597
    %v1833 = vunpack.c.l.b16 %v1598
    %v1834 = vunpack.c.h.b16 %v1598
    %v1835 = vunpack.c.l.b16 %v1599
    %v1836 = vunpack.c.h.b16 %v1599
    %v1837 = vunpack.c.l.b16 %v1600
    %v1838 = vunpack.c.h.b16 %v1600
    %v1839 = vunpack.c.l.b16 %v1601
    %v1840 = vunpack.c.h.b16 %v1601
    %v1841 = vunpack.c.l.b16 %v1602
    %v1842 = vunpack.c.h.b16 %v1602
    %v1843 = vunpack.c.l.b16 %v1603
    %v1844 = vunpack.c.h.b16 %v1603
    %v1845 = vunpack.c.l.b16 %v1604
    %v1846 = vunpack.c.h.b16 %v1604
    %v1847 = vunpack.c.l.b16 %v1605
    %v1848 = vunpack.c.h.b16 %v1605
    %v1849 = vunpack.c.l.b16 %v1606
    %v1850 = vunpack.c.h.b16 %v1606
    %v1851 = vunpack.c.l.b16 %v1607
    %v1852 = vunpack.c.h.b16 %v1607
    %v1853 = vunpack.c.l.b16 %v1608
    %v1854 = vunpack.c.h.b16 %v1608
    %v1855 = vunpack.c.l.b16 %v1609
    %v1856 = vunpack.c.h.b16 %v1609
    %v1857 = vunpack.c.l.b16 %v1610
    %v1858 = vunpack.c.h.b16 %v1610
    %v1859 = vunpack.c.l.b16 %v1611
    %v1860 = vunpack.c.h.b16 %v1611
    %v1861 = vunpack.c.l.b16 %v1612
    %v1862 = vunpack.c.h.b16 %v1612
    %v1863 = vunpack.c.l.b16 %v1613
    %v1864 = vunpack.c.h.b16 %v1613
    %v1865 = vunpack.c.l.b16 %v1614
    %v1866 = vunpack.c.h.b16 %v1614
    %v1867 = vunpack.c.l.b16 %v1615
    %v1868 = vunpack.c.h.b16 %v1615
    %v1869 = vunpack.c.l.b16 %v1616
    %v1870 = vunpack.c.h.b16 %v1616
    %v1871 = vunpack.c.l.b16 %v1617
    %v1872 = vunpack.c.h.b16 %v1617
    %v1873 = vunpack.c.l.b16 %v1618
    %v1874 = vunpack.c.h.b16 %v1618
    %v1875 = vpack.c.b16 %v1751, %v1747
    %v1876 = vpack.c.b16 %v1752, %v1748
    %v1877 = vpack.c.b16 %v1753, %v1749
    %v1878 = vpack.c.b16 %v1754, %v1750
    %v1879 = vpack.c.b16 %v1759, %v1755
    %v1880 = vpack.c.b16 %v1760, %v1756
    %v1881 = vpack.c.b16 %v1761, %v1757
    %v1882 = vpack.c.b16 %v1762, %v1758
    %v1883 = vpack.c.b16 %v1767, %v1763
    %v1884 = vpack.c.b16 %v1768, %v1764
    %v1885 = vpack.c.b16 %v1769, %v1765
    %v1886 = vpack.c.b16 %v1770, %v1766
    %v1887 = vpack.c.b16 %v1775, %v1771
    %v1888 = vpack.c.b16 %v1776, %v1772
    %v1889 = vpack.c.b16 %v1777, %v1773
    %v1890 = vpack.c.b16 %v1778, %v1774
    %v1891 = vpack.c.b16 %v1783, %v1779
    %v1892 = vpack.c.b16 %v1784, %v1780
    %v1893 = vpack.c.b16 %v1785, %v1781
    %v1894 = vpack.c.b16 %v1786, %v1782
    %v1895 = vpack.c.b16 %v1791, %v1787
    %v1896 = vpack.c.b16 %v1792, %v1788
    %v1897 = vpack.c.b16 %v1793, %v1789
    %v1898 = vpack.c.b16 %v1794, %v1790
    %v1899 = vpack.c.b16 %v1799, %v1795
    %v1900 = vpack.c.b16 %v1800, %v1796
    %v1901 = vpack.c.b16 %v1801, %v1797
    %v1902 = vpack.c.b16 %v1802, %v1798
    %v1903 = vpack.c.b16 %v1807, %v1803
    %v1904 = vpack.c.b16 %v1808, %v1804
    %v1905 = vpack.c.b16 %v1809, %v1805
    %v1906 = vpack.c.b16 %v1810, %v1806
    %v1907 = vpack.c.b16 %v1815, %v1811
    %v1908 = vpack.c.b16 %v1816, %v1812
    %v1909 = vpack.c.b16 %v1817, %v1813
    %v1910 = vpack.c.b16 %v1818, %v1814
    %v1911 = vpack.c.b16 %v1823, %v1819
    %v1912 = vpack.c.b16 %v1824, %v1820
    %v1913 = vpack.c.b16 %v1825, %v1821
    %v1914 = vpack.c.b16 %v1826, %v1822
    %v1915 = vpack.c.b16 %v1831, %v1827
    %v1916 = vpack.c.b16 %v1832, %v1828
    %v1917 = vpack.c.b16 %v1833, %v1829
    %v1918 = vpack.c.b16 %v1834, %v1830
    %v1919 = vpack.c.b16 %v1839, %v1835
    %v1920 = vpack.c.b16 %v1840, %v1836
    %v1921 = vpack.c.b16 %v1841, %v1837
    %v1922 = vpack.c.b16 %v1842, %v1838
    %v1923 = vpack.c.b16 %v1847, %v1843
    %v1924 = vpack.c.b16 %v1848, %v1844
    %v1925 = vpack.c.b16 %v1849, %v1845
    %v1926 = vpack.c.b16 %v1850, %v1846
    %v1927 = vpack.c.b16 %v1855, %v1851
    %v1928 = vpack.c.b16 %v1856, %v1852
    %v1929 = vpack.c.b16 %v1857, %v1853
    %v1930 = vpack.c.b16 %v1858, %v1854
    %v1931 = vpack.c.b16 %v1863, %v1859
    %v1932 = vpack.c.b16 %v1864, %v1860
    %v1933 = vpack.c.b16 %v1865, %v1861
    %v1934 = vpack.c.b16 %v1866, %v1862
    %v1935 = vpack.c.b16 %v1871, %v1867
    %v1936 = vpack.c.b16 %v1872, %v1868
    %v1937 = vpack.c.b16 %v1873, %v1869
    %v1938 = vpack.c.b16 %v1874, %v1870
    %2003 = vmatprep.subr.bf16.mxu0 %v1876
    %2004 = vmatpush1.bf16.msra.mxu0 %v1875
    %2005 = vmatprep.subr.bf16.mxu0 %v1880
    %2006 = vmatpush1.bf16.msra.mxu0 %v1879
    %2007 = vmatprep.subr.bf16.mxu0 %v1884
    %2008 = vmatpush1.bf16.msra.mxu0 %v1883
    %2009 = vmatprep.subr.bf16.mxu0 %v1888
    %2010 = vmatpush1.bf16.msra.mxu0 %v1887
    %2011 = vmatprep.subr.bf16.mxu0 %v1892
    %2012 = vmatpush1.bf16.msra.mxu0 %v1891
    %2013 = vmatprep.subr.bf16.mxu0 %v1896
    %2014 = vmatpush1.bf16.msra.mxu0 %v1895
    %2015 = vmatprep.subr.bf16.mxu0 %v1900
    %2016 = vmatpush1.bf16.msra.mxu0 %v1899
    %2017 = vmatprep.subr.bf16.mxu0 %v1904
    %2018 = vmatpush1.bf16.msra.mxu0 %v1903
    %2019 = vmatprep.subr.bf16.mxu0 %v1908
    %2020 = vmatpush1.bf16.msra.mxu0 %v1907
    %2021 = vmatprep.subr.bf16.mxu0 %v1912
    %2022 = vmatpush1.bf16.msra.mxu0 %v1911
    %2023 = vmatprep.subr.bf16.mxu0 %v1916
    %2024 = vmatpush1.bf16.msra.mxu0 %v1915
    %2025 = vmatprep.subr.bf16.mxu0 %v1920
    %2026 = vmatpush1.bf16.msra.mxu0 %v1919
    %2027 = vmatprep.subr.bf16.mxu0 %v1924
    %2028 = vmatpush1.bf16.msra.mxu0 %v1923
    %2029 = vmatprep.subr.bf16.mxu0 %v1928
    %2030 = vmatpush1.bf16.msra.mxu0 %v1927
    %2031 = vmatprep.subr.bf16.mxu0 %v1932
    %2032 = vmatpush1.bf16.msra.mxu0 %v1931
    %2033 = vmatprep.subr.bf16.mxu0 %v1936
    %2034 = vmatpush1.bf16.msra.mxu0 %v1935
    %2035 = vmatprep.mubr.bf16.mxu0 %v1680
    %2036 = vmatmul.mubr.bf16.gmra.mrb[0].mxu0 %v1679
    %v2037 = vpop.f32.mrb[0].mxu0
    %v2038 = vadd.f32 %v1650, %v2037
    %v2039 = vpop.f32.mrb[0].mxu0
    %v2040 = vadd.f32 %v1654, %v2039
    %v2041 = vpop.f32.mrb[0].mxu0
    %v2042 = vpop.f32.mrb[0].mxu0
    %2043 = vdwg.mxu0
    %2044 = vmatprep.subr.bf16.mxu0 %v1878
    %2045 = vmatpush1.bf16.msra.mxu0 %v1877
    %2046 = vmatprep.subr.bf16.mxu0 %v1882
    %2047 = vmatpush1.bf16.msra.mxu0 %v1881
    %2048 = vmatprep.subr.bf16.mxu0 %v1886
    %2049 = vmatpush1.bf16.msra.mxu0 %v1885
    %2050 = vmatprep.subr.bf16.mxu0 %v1890
    %2051 = vmatpush1.bf16.msra.mxu0 %v1889
    %2052 = vmatprep.subr.bf16.mxu0 %v1894
    %2053 = vmatpush1.bf16.msra.mxu0 %v1893
    %2054 = vmatprep.subr.bf16.mxu0 %v1898
    %2055 = vmatpush1.bf16.msra.mxu0 %v1897
    %2056 = vmatprep.subr.bf16.mxu0 %v1902
    %2057 = vmatpush1.bf16.msra.mxu0 %v1901
    %2058 = vmatprep.subr.bf16.mxu0 %v1906
    %2059 = vmatpush1.bf16.msra.mxu0 %v1905
    %2060 = vmatprep.subr.bf16.mxu0 %v1910
    %2061 = vmatpush1.bf16.msra.mxu0 %v1909
    %2062 = vmatprep.subr.bf16.mxu0 %v1914
    %2063 = vmatpush1.bf16.msra.mxu0 %v1913
    %2064 = vmatprep.subr.bf16.mxu0 %v1918
    %2065 = vmatpush1.bf16.msra.mxu0 %v1917
    %2066 = vmatprep.subr.bf16.mxu0 %v1922
    %2067 = vmatpush1.bf16.msra.mxu0 %v1921
    %2068 = vmatprep.subr.bf16.mxu0 %v1926
    %2069 = vmatpush1.bf16.msra.mxu0 %v1925
    %2070 = vmatprep.subr.bf16.mxu0 %v1930
    %2071 = vmatpush1.bf16.msra.mxu0 %v1929
    %2072 = vmatprep.subr.bf16.mxu0 %v1934
    %2073 = vmatpush1.bf16.msra.mxu0 %v1933
    %2074 = vmatprep.subr.bf16.mxu0 %v1938
    %2075 = vmatpush1.bf16.msra.mxu0 %v1937
    %2076 = vmatprep.mubr.bf16.mxu0 %v1680
    %2077 = vmatmul.mubr.bf16.gmra.mrb[0].mxu0 %v1679
    %v2078 = vpop.f32.mrb[0].mxu0
    %v2079 = vadd.f32 %v1658, %v2078
    %v2080 = vpop.f32.mrb[0].mxu0
    %v2081 = vadd.f32 %v1662, %v2080
    %v2082 = vpop.f32.mrb[0].mxu0
    %v2083 = vpop.f32.mrb[0].mxu0
    %2084 = vdwg.mxu0
    %v2085 = vadd.f32 %v1467, %v2038
    %v2086 = vadd.f32 %v1469, %v2040
    %v2087 = vadd.f32 %v1549, %v2079
    %v2088 = vadd.f32 %v1551, %v2081
    %vm2089 = vcmp.ge.f32.partialorder %v2085, 0.0
    %vm2090 = vcmp.ge.f32.partialorder %v2086, 0.0
    %vm2091 = vcmp.ge.f32.partialorder %v2087, 0.0
    %vm2092 = vcmp.ge.f32.partialorder %v2088, 0.0
    %v2093 = vmul.f32 %v2085, 0.1
    %v2094 = vmul.f32 %v2086, 0.1
    %v2095 = vmul.f32 %v2087, 0.1
    %v2096 = vmul.f32 %v2088, 0.1
    %v2097 = vsel %vm2089, %v2085, %v2093
    %v2098 = vsel %vm2090, %v2086, %v2094
    %v2099 = vsel %vm2091, %v2087, %v2095
    %v2100 = vsel %vm2092, %v2088, %v2096
    %v2101 = vld [vmem:[%s7] sm:$0xff]
    %v2102 = vld [vmem:[%s7 + $0x8] sm:$0xff]
    %v2103 = vld [vmem:[%s7 + $0x10] sm:$0xff]
    %v2104 = vld [vmem:[%s7 + $0x18] sm:$0xff]
    %v2105 = vld [vmem:[%s7 + $0x20] sm:$0xff]
    %v2106 = vld [vmem:[%s7 + $0x28] sm:$0xff]
    %v2107 = vld [vmem:[%s7 + $0x30] sm:$0xff]
    %v2108 = vld [vmem:[%s7 + $0x38] sm:$0xff]
    %v2109 = vld [vmem:[%s7 + $0x40] sm:$0xff]
    %v2110 = vld [vmem:[%s7 + $0x48] sm:$0xff]
    %v2111 = vld [vmem:[%s7 + $0x50] sm:$0xff]
    %v2112 = vld [vmem:[%s7 + $0x58] sm:$0xff]
    %v2113 = vld [vmem:[%s7 + $0x60] sm:$0xff]
    %v2114 = vld [vmem:[%s7 + $0x68] sm:$0xff]
    %v2115 = vld [vmem:[%s7 + $0x70] sm:$0xff]
    %v2116 = vld [vmem:[%s7 + $0x78] sm:$0xff]
    %v2117 = vld [vmem:[%s7 + $0x80] sm:$0xff]
    %v2118 = vld [vmem:[%s7 + $0x88] sm:$0xff]
    %v2119 = vld [vmem:[%s7 + $0x90] sm:$0xff]
    %v2120 = vld [vmem:[%s7 + $0x98] sm:$0xff]
    %v2121 = vld [vmem:[%s7 + $0xa0] sm:$0xff]
    %v2122 = vld [vmem:[%s7 + $0xa8] sm:$0xff]
    %v2123 = vld [vmem:[%s7 + $0xb0] sm:$0xff]
    %v2124 = vld [vmem:[%s7 + $0xb8] sm:$0xff]
    %v2125 = vld [vmem:[%s7 + $0xc0] sm:$0xff]
    %v2126 = vld [vmem:[%s7 + $0xc8] sm:$0xff]
    %v2127 = vld [vmem:[%s7 + $0xd0] sm:$0xff]
    %v2128 = vld [vmem:[%s7 + $0xd8] sm:$0xff]
    %v2129 = vld [vmem:[%s7 + $0xe0] sm:$0xff]
    %v2130 = vld [vmem:[%s7 + $0xe8] sm:$0xff]
    %v2131 = vld [vmem:[%s7 + $0xf0] sm:$0xff]
    %v2132 = vld [vmem:[%s7 + $0xf8] sm:$0xff]
    %v2133 = vld [vmem:[%s7 + $0x100] sm:$0xff]
    %v2134 = vld [vmem:[%s7 + $0x108] sm:$0xff]
    %v2135 = vld [vmem:[%s7 + $0x110] sm:$0xff]
    %v2136 = vld [vmem:[%s7 + $0x118] sm:$0xff]
    %v2137 = vld [vmem:[%s7 + $0x120] sm:$0xff]
    %v2138 = vld [vmem:[%s7 + $0x128] sm:$0xff]
    %v2139 = vld [vmem:[%s7 + $0x130] sm:$0xff]
    %v2140 = vld [vmem:[%s7 + $0x138] sm:$0xff]
    %v2141 = vld [vmem:[%s7 + $0x140] sm:$0xff]
    %v2142 = vld [vmem:[%s7 + $0x148] sm:$0xff]
    %v2143 = vld [vmem:[%s7 + $0x150] sm:$0xff]
    %v2144 = vld [vmem:[%s7 + $0x158] sm:$0xff]
    %v2145 = vld [vmem:[%s7 + $0x160] sm:$0xff]
    %v2146 = vld [vmem:[%s7 + $0x168] sm:$0xff]
    %v2147 = vld [vmem:[%s7 + $0x170] sm:$0xff]
    %v2148 = vld [vmem:[%s7 + $0x178] sm:$0xff]
    %v2149 = vld [vmem:[%s7 + $0x180] sm:$0xff]
    %v2150 = vld [vmem:[%s7 + $0x188] sm:$0xff]
    %v2151 = vld [vmem:[%s7 + $0x190] sm:$0xff]
    %v2152 = vld [vmem:[%s7 + $0x198] sm:$0xff]
    %v2153 = vld [vmem:[%s7 + $0x1a0] sm:$0xff]
    %v2154 = vld [vmem:[%s7 + $0x1a8] sm:$0xff]
    %v2155 = vld [vmem:[%s7 + $0x1b0] sm:$0xff]
    %v2156 = vld [vmem:[%s7 + $0x1b8] sm:$0xff]
    %v2157 = vld [vmem:[%s7 + $0x1c0] sm:$0xff]
    %v2158 = vld [vmem:[%s7 + $0x1c8] sm:$0xff]
    %v2159 = vld [vmem:[%s7 + $0x1d0] sm:$0xff]
    %v2160 = vld [vmem:[%s7 + $0x1d8] sm:$0xff]
    %v2161 = vld [vmem:[%s7 + $0x1e0] sm:$0xff]
    %v2162 = vld [vmem:[%s7 + $0x1e8] sm:$0xff]
    %v2163 = vld [vmem:[%s7 + $0x1f0] sm:$0xff]
    %v2164 = vld [vmem:[%s7 + $0x1f8] sm:$0xff]
    %v2165 = vld [vmem:[%s7 + $0x200] sm:$0xff]
    %v2166 = vld [vmem:[%s7 + $0x208] sm:$0xff]
    %v2167 = vld [vmem:[%s7 + $0x210] sm:$0xff]
    %v2168 = vld [vmem:[%s7 + $0x218] sm:$0xff]
    %v2169 = vld [vmem:[%s7 + $0x220] sm:$0xff]
    %v2170 = vld [vmem:[%s7 + $0x228] sm:$0xff]
    %v2171 = vld [vmem:[%s7 + $0x230] sm:$0xff]
    %v2172 = vld [vmem:[%s7 + $0x238] sm:$0xff]
    %v2173 = vld [vmem:[%s7 + $0x240] sm:$0xff]
    %v2174 = vld [vmem:[%s7 + $0x248] sm:$0xff]
    %v2175 = vld [vmem:[%s7 + $0x250] sm:$0xff]
    %v2176 = vld [vmem:[%s7 + $0x258] sm:$0xff]
    %v2177 = vld [vmem:[%s7 + $0x260] sm:$0xff]
    %v2178 = vld [vmem:[%s7 + $0x268] sm:$0xff]
    %v2179 = vld [vmem:[%s7 + $0x270] sm:$0xff]
    %v2180 = vld [vmem:[%s7 + $0x278] sm:$0xff]
    %v2181 = vld [vmem:[%s7 + $0x280] sm:$0xff]
    %v2182 = vld [vmem:[%s7 + $0x288] sm:$0xff]
    %v2183 = vld [vmem:[%s7 + $0x290] sm:$0xff]
    %v2184 = vld [vmem:[%s7 + $0x298] sm:$0xff]
    %v2185 = vld [vmem:[%s7 + $0x2a0] sm:$0xff]
    %v2186 = vld [vmem:[%s7 + $0x2a8] sm:$0xff]
    %v2187 = vld [vmem:[%s7 + $0x2b0] sm:$0xff]
    %v2188 = vld [vmem:[%s7 + $0x2b8] sm:$0xff]
    %v2189 = vld [vmem:[%s7 + $0x2c0] sm:$0xff]
    %v2190 = vld [vmem:[%s7 + $0x2c8] sm:$0xff]
    %v2191 = vld [vmem:[%s7 + $0x2d0] sm:$0xff]
    %v2192 = vld [vmem:[%s7 + $0x2d8] sm:$0xff]
    %v2193 = vld [vmem:[%s7 + $0x2e0] sm:$0xff]
    %v2194 = vld [vmem:[%s7 + $0x2e8] sm:$0xff]
    %v2195 = vld [vmem:[%s7 + $0x2f0] sm:$0xff]
    %v2196 = vld [vmem:[%s7 + $0x2f8] sm:$0xff]
    %v2197 = vld [vmem:[%s7 + $0x300] sm:$0xff]
    %v2198 = vld [vmem:[%s7 + $0x308] sm:$0xff]
    %v2199 = vld [vmem:[%s7 + $0x310] sm:$0xff]
    %v2200 = vld [vmem:[%s7 + $0x318] sm:$0xff]
    %v2201 = vld [vmem:[%s7 + $0x320] sm:$0xff]
    %v2202 = vld [vmem:[%s7 + $0x328] sm:$0xff]
    %v2203 = vld [vmem:[%s7 + $0x330] sm:$0xff]
    %v2204 = vld [vmem:[%s7 + $0x338] sm:$0xff]
    %v2205 = vld [vmem:[%s7 + $0x340] sm:$0xff]
    %v2206 = vld [vmem:[%s7 + $0x348] sm:$0xff]
    %v2207 = vld [vmem:[%s7 + $0x350] sm:$0xff]
    %v2208 = vld [vmem:[%s7 + $0x358] sm:$0xff]
    %v2209 = vld [vmem:[%s7 + $0x360] sm:$0xff]
    %v2210 = vld [vmem:[%s7 + $0x368] sm:$0xff]
    %v2211 = vld [vmem:[%s7 + $0x370] sm:$0xff]
    %v2212 = vld [vmem:[%s7 + $0x378] sm:$0xff]
    %v2213 = vld [vmem:[%s7 + $0x380] sm:$0xff]
    %v2214 = vld [vmem:[%s7 + $0x388] sm:$0xff]
    %v2215 = vld [vmem:[%s7 + $0x390] sm:$0xff]
    %v2216 = vld [vmem:[%s7 + $0x398] sm:$0xff]
    %v2217 = vld [vmem:[%s7 + $0x3a0] sm:$0xff]
    %v2218 = vld [vmem:[%s7 + $0x3a8] sm:$0xff]
    %v2219 = vld [vmem:[%s7 + $0x3b0] sm:$0xff]
    %v2220 = vld [vmem:[%s7 + $0x3b8] sm:$0xff]
    %v2221 = vld [vmem:[%s7 + $0x3c0] sm:$0xff]
    %v2222 = vld [vmem:[%s7 + $0x3c8] sm:$0xff]
    %v2223 = vld [vmem:[%s7 + $0x3d0] sm:$0xff]
    %v2224 = vld [vmem:[%s7 + $0x3d8] sm:$0xff]
    %v2225 = vld [vmem:[%s7 + $0x3e0] sm:$0xff]
    %v2226 = vld [vmem:[%s7 + $0x3e8] sm:$0xff]
    %v2227 = vld [vmem:[%s7 + $0x3f0] sm:$0xff]
    %v2228 = vld [vmem:[%s7 + $0x3f8] sm:$0xff]
    %v2229 = vld [vmem:[%s8] sm:$0xf]
    %v2230 = vpack.c.bf16 %v2097, %v2097
    %v2231 = vpack.c.bf16 %v2098, %v2098
    %v2232 = vpack.c.bf16 %v2099, %v2099
    %v2233 = vpack.c.bf16 %v2100, %v2100
    %v2235 = vlaneseq
    %v2236 = vshrl.u32 %v2235, 7
    %v2237 = vsub.s32 0, %v2236
    %v2238 = vrot.slane %v2229, %v2237
    %v2239 = vlaneseq
    %v2240 = vshrl.u32 %v2239, 7
    %v2241 = vsub.s32 1, %v2240
    %v2242 = vrot.slane %v2229, %v2241
    %v2243 = vlaneseq
    %v2244 = vshrl.u32 %v2243, 7
    %v2245 = vsub.s32 2, %v2244
    %v2246 = vrot.slane %v2229, %v2245
    %v2247 = vlaneseq
    %v2248 = vshrl.u32 %v2247, 7
    %v2249 = vsub.s32 3, %v2248
    %v2250 = vrot.slane %v2229, %v2249
    %v2383 = vunpack.c.l.b16 %v2101
    %v2384 = vunpack.c.h.b16 %v2101
    %v2385 = vunpack.c.l.b16 %v2102
    %v2386 = vunpack.c.h.b16 %v2102
    %v2387 = vunpack.c.l.b16 %v2103
    %v2388 = vunpack.c.h.b16 %v2103
    %v2389 = vunpack.c.l.b16 %v2104
    %v2390 = vunpack.c.h.b16 %v2104
    %v2391 = vunpack.c.l.b16 %v2105
    %v2392 = vunpack.c.h.b16 %v2105
    %v2393 = vunpack.c.l.b16 %v2106
    %v2394 = vunpack.c.h.b16 %v2106
    %v2395 = vunpack.c.l.b16 %v2107
    %v2396 = vunpack.c.h.b16 %v2107
    %v2397 = vunpack.c.l.b16 %v2108
    %v2398 = vunpack.c.h.b16 %v2108
    %v2399 = vunpack.c.l.b16 %v2109
    %v2400 = vunpack.c.h.b16 %v2109
    %v2401 = vunpack.c.l.b16 %v2110
    %v2402 = vunpack.c.h.b16 %v2110
    %v2403 = vunpack.c.l.b16 %v2111
    %v2404 = vunpack.c.h.b16 %v2111
    %v2405 = vunpack.c.l.b16 %v2112
    %v2406 = vunpack.c.h.b16 %v2112
    %v2407 = vunpack.c.l.b16 %v2113
    %v2408 = vunpack.c.h.b16 %v2113
    %v2409 = vunpack.c.l.b16 %v2114
    %v2410 = vunpack.c.h.b16 %v2114
    %v2411 = vunpack.c.l.b16 %v2115
    %v2412 = vunpack.c.h.b16 %v2115
    %v2413 = vunpack.c.l.b16 %v2116
    %v2414 = vunpack.c.h.b16 %v2116
    %v2415 = vunpack.c.l.b16 %v2117
    %v2416 = vunpack.c.h.b16 %v2117
    %v2417 = vunpack.c.l.b16 %v2118
    %v2418 = vunpack.c.h.b16 %v2118
    %v2419 = vunpack.c.l.b16 %v2119
    %v2420 = vunpack.c.h.b16 %v2119
    %v2421 = vunpack.c.l.b16 %v2120
    %v2422 = vunpack.c.h.b16 %v2120
    %v2423 = vunpack.c.l.b16 %v2121
    %v2424 = vunpack.c.h.b16 %v2121
    %v2425 = vunpack.c.l.b16 %v2122
    %v2426 = vunpack.c.h.b16 %v2122
    %v2427 = vunpack.c.l.b16 %v2123
    %v2428 = vunpack.c.h.b16 %v2123
    %v2429 = vunpack.c.l.b16 %v2124
    %v2430 = vunpack.c.h.b16 %v2124
    %v2431 = vunpack.c.l.b16 %v2125
    %v2432 = vunpack.c.h.b16 %v2125
    %v2433 = vunpack.c.l.b16 %v2126
    %v2434 = vunpack.c.h.b16 %v2126
    %v2435 = vunpack.c.l.b16 %v2127
    %v2436 = vunpack.c.h.b16 %v2127
    %v2437 = vunpack.c.l.b16 %v2128
    %v2438 = vunpack.c.h.b16 %v2128
    %v2439 = vunpack.c.l.b16 %v2129
    %v2440 = vunpack.c.h.b16 %v2129
    %v2441 = vunpack.c.l.b16 %v2130
    %v2442 = vunpack.c.h.b16 %v2130
    %v2443 = vunpack.c.l.b16 %v2131
    %v2444 = vunpack.c.h.b16 %v2131
    %v2445 = vunpack.c.l.b16 %v2132
    %v2446 = vunpack.c.h.b16 %v2132
    %v2447 = vunpack.c.l.b16 %v2133
    %v2448 = vunpack.c.h.b16 %v2133
    %v2449 = vunpack.c.l.b16 %v2134
    %v2450 = vunpack.c.h.b16 %v2134
    %v2451 = vunpack.c.l.b16 %v2135
    %v2452 = vunpack.c.h.b16 %v2135
    %v2453 = vunpack.c.l.b16 %v2136
    %v2454 = vunpack.c.h.b16 %v2136
    %v2455 = vunpack.c.l.b16 %v2137
    %v2456 = vunpack.c.h.b16 %v2137
    %v2457 = vunpack.c.l.b16 %v2138
    %v2458 = vunpack.c.h.b16 %v2138
    %v2459 = vunpack.c.l.b16 %v2139
    %v2460 = vunpack.c.h.b16 %v2139
    %v2461 = vunpack.c.l.b16 %v2140
    %v2462 = vunpack.c.h.b16 %v2140
    %v2463 = vunpack.c.l.b16 %v2141
    %v2464 = vunpack.c.h.b16 %v2141
    %v2465 = vunpack.c.l.b16 %v2142
    %v2466 = vunpack.c.h.b16 %v2142
    %v2467 = vunpack.c.l.b16 %v2143
    %v2468 = vunpack.c.h.b16 %v2143
    %v2469 = vunpack.c.l.b16 %v2144
    %v2470 = vunpack.c.h.b16 %v2144
    %v2471 = vunpack.c.l.b16 %v2145
    %v2472 = vunpack.c.h.b16 %v2145
    %v2473 = vunpack.c.l.b16 %v2146
    %v2474 = vunpack.c.h.b16 %v2146
    %v2475 = vunpack.c.l.b16 %v2147
    %v2476 = vunpack.c.h.b16 %v2147
    %v2477 = vunpack.c.l.b16 %v2148
    %v2478 = vunpack.c.h.b16 %v2148
    %v2479 = vunpack.c.l.b16 %v2149
    %v2480 = vunpack.c.h.b16 %v2149
    %v2481 = vunpack.c.l.b16 %v2150
    %v2482 = vunpack.c.h.b16 %v2150
    %v2483 = vunpack.c.l.b16 %v2151
    %v2484 = vunpack.c.h.b16 %v2151
    %v2485 = vunpack.c.l.b16 %v2152
    %v2486 = vunpack.c.h.b16 %v2152
    %v2487 = vunpack.c.l.b16 %v2153
    %v2488 = vunpack.c.h.b16 %v2153
    %v2489 = vunpack.c.l.b16 %v2154
    %v2490 = vunpack.c.h.b16 %v2154
    %v2491 = vunpack.c.l.b16 %v2155
    %v2492 = vunpack.c.h.b16 %v2155
    %v2493 = vunpack.c.l.b16 %v2156
    %v2494 = vunpack.c.h.b16 %v2156
    %v2495 = vunpack.c.l.b16 %v2157
    %v2496 = vunpack.c.h.b16 %v2157
    %v2497 = vunpack.c.l.b16 %v2158
    %v2498 = vunpack.c.h.b16 %v2158
    %v2499 = vunpack.c.l.b16 %v2159
    %v2500 = vunpack.c.h.b16 %v2159
    %v2501 = vunpack.c.l.b16 %v2160
    %v2502 = vunpack.c.h.b16 %v2160
    %v2503 = vunpack.c.l.b16 %v2161
    %v2504 = vunpack.c.h.b16 %v2161
    %v2505 = vunpack.c.l.b16 %v2162
    %v2506 = vunpack.c.h.b16 %v2162
    %v2507 = vunpack.c.l.b16 %v2163
    %v2508 = vunpack.c.h.b16 %v2163
    %v2509 = vunpack.c.l.b16 %v2164
    %v2510 = vunpack.c.h.b16 %v2164
    %v2511 = vunpack.c.l.b16 %v2165
    %v2512 = vunpack.c.h.b16 %v2165
    %v2513 = vunpack.c.l.b16 %v2166
    %v2514 = vunpack.c.h.b16 %v2166
    %v2515 = vunpack.c.l.b16 %v2167
    %v2516 = vunpack.c.h.b16 %v2167
    %v2517 = vunpack.c.l.b16 %v2168
    %v2518 = vunpack.c.h.b16 %v2168
    %v2519 = vunpack.c.l.b16 %v2169
    %v2520 = vunpack.c.h.b16 %v2169
    %v2521 = vunpack.c.l.b16 %v2170
    %v2522 = vunpack.c.h.b16 %v2170
    %v2523 = vunpack.c.l.b16 %v2171
    %v2524 = vunpack.c.h.b16 %v2171
    %v2525 = vunpack.c.l.b16 %v2172
    %v2526 = vunpack.c.h.b16 %v2172
    %v2527 = vunpack.c.l.b16 %v2173
    %v2528 = vunpack.c.h.b16 %v2173
    %v2529 = vunpack.c.l.b16 %v2174
    %v2530 = vunpack.c.h.b16 %v2174
    %v2531 = vunpack.c.l.b16 %v2175
    %v2532 = vunpack.c.h.b16 %v2175
    %v2533 = vunpack.c.l.b16 %v2176
    %v2534 = vunpack.c.h.b16 %v2176
    %v2535 = vunpack.c.l.b16 %v2177
    %v2536 = vunpack.c.h.b16 %v2177
    %v2537 = vunpack.c.l.b16 %v2178
    %v2538 = vunpack.c.h.b16 %v2178
    %v2539 = vunpack.c.l.b16 %v2179
    %v2540 = vunpack.c.h.b16 %v2179
    %v2541 = vunpack.c.l.b16 %v2180
    %v2542 = vunpack.c.h.b16 %v2180
    %v2543 = vunpack.c.l.b16 %v2181
    %v2544 = vunpack.c.h.b16 %v2181
    %v2545 = vunpack.c.l.b16 %v2182
    %v2546 = vunpack.c.h.b16 %v2182
    %v2547 = vunpack.c.l.b16 %v2183
    %v2548 = vunpack.c.h.b16 %v2183
    %v2549 = vunpack.c.l.b16 %v2184
    %v2550 = vunpack.c.h.b16 %v2184
    %v2551 = vunpack.c.l.b16 %v2185
    %v2552 = vunpack.c.h.b16 %v2185
    %v2553 = vunpack.c.l.b16 %v2186
    %v2554 = vunpack.c.h.b16 %v2186
    %v2555 = vunpack.c.l.b16 %v2187
    %v2556 = vunpack.c.h.b16 %v2187
    %v2557 = vunpack.c.l.b16 %v2188
    %v2558 = vunpack.c.h.b16 %v2188
    %v2559 = vunpack.c.l.b16 %v2189
    %v2560 = vunpack.c.h.b16 %v2189
    %v2561 = vunpack.c.l.b16 %v2190
    %v2562 = vunpack.c.h.b16 %v2190
    %v2563 = vunpack.c.l.b16 %v2191
    %v2564 = vunpack.c.h.b16 %v2191
    %v2565 = vunpack.c.l.b16 %v2192
    %v2566 = vunpack.c.h.b16 %v2192
    %v2567 = vunpack.c.l.b16 %v2193
    %v2568 = vunpack.c.h.b16 %v2193
    %v2569 = vunpack.c.l.b16 %v2194
    %v2570 = vunpack.c.h.b16 %v2194
    %v2571 = vunpack.c.l.b16 %v2195
    %v2572 = vunpack.c.h.b16 %v2195
    %v2573 = vunpack.c.l.b16 %v2196
    %v2574 = vunpack.c.h.b16 %v2196
    %v2575 = vunpack.c.l.b16 %v2197
    %v2576 = vunpack.c.h.b16 %v2197
    %v2577 = vunpack.c.l.b16 %v2198
    %v2578 = vunpack.c.h.b16 %v2198
    %v2579 = vunpack.c.l.b16 %v2199
    %v2580 = vunpack.c.h.b16 %v2199
    %v2581 = vunpack.c.l.b16 %v2200
    %v2582 = vunpack.c.h.b16 %v2200
    %v2583 = vunpack.c.l.b16 %v2201
    %v2584 = vunpack.c.h.b16 %v2201
    %v2585 = vunpack.c.l.b16 %v2202
    %v2586 = vunpack.c.h.b16 %v2202
    %v2587 = vunpack.c.l.b16 %v2203
    %v2588 = vunpack.c.h.b16 %v2203
    %v2589 = vunpack.c.l.b16 %v2204
    %v2590 = vunpack.c.h.b16 %v2204
    %v2591 = vunpack.c.l.b16 %v2205
    %v2592 = vunpack.c.h.b16 %v2205
    %v2593 = vunpack.c.l.b16 %v2206
    %v2594 = vunpack.c.h.b16 %v2206
    %v2595 = vunpack.c.l.b16 %v2207
    %v2596 = vunpack.c.h.b16 %v2207
    %v2597 = vunpack.c.l.b16 %v2208
    %v2598 = vunpack.c.h.b16 %v2208
    %v2599 = vunpack.c.l.b16 %v2209
    %v2600 = vunpack.c.h.b16 %v2209
    %v2601 = vunpack.c.l.b16 %v2210
    %v2602 = vunpack.c.h.b16 %v2210
    %v2603 = vunpack.c.l.b16 %v2211
    %v2604 = vunpack.c.h.b16 %v2211
    %v2605 = vunpack.c.l.b16 %v2212
    %v2606 = vunpack.c.h.b16 %v2212
    %v2607 = vunpack.c.l.b16 %v2213
    %v2608 = vunpack.c.h.b16 %v2213
    %v2609 = vunpack.c.l.b16 %v2214
    %v2610 = vunpack.c.h.b16 %v2214
    %v2611 = vunpack.c.l.b16 %v2215
    %v2612 = vunpack.c.h.b16 %v2215
    %v2613 = vunpack.c.l.b16 %v2216
    %v2614 = vunpack.c.h.b16 %v2216
    %v2615 = vunpack.c.l.b16 %v2217
    %v2616 = vunpack.c.h.b16 %v2217
    %v2617 = vunpack.c.l.b16 %v2218
    %v2618 = vunpack.c.h.b16 %v2218
    %v2619 = vunpack.c.l.b16 %v2219
    %v2620 = vunpack.c.h.b16 %v2219
    %v2621 = vunpack.c.l.b16 %v2220
    %v2622 = vunpack.c.h.b16 %v2220
    %v2623 = vunpack.c.l.b16 %v2221
    %v2624 = vunpack.c.h.b16 %v2221
    %v2625 = vunpack.c.l.b16 %v2222
    %v2626 = vunpack.c.h.b16 %v2222
    %v2627 = vunpack.c.l.b16 %v2223
    %v2628 = vunpack.c.h.b16 %v2223
    %v2629 = vunpack.c.l.b16 %v2224
    %v2630 = vunpack.c.h.b16 %v2224
    %v2631 = vunpack.c.l.b16 %v2225
    %v2632 = vunpack.c.h.b16 %v2225
    %v2633 = vunpack.c.l.b16 %v2226
    %v2634 = vunpack.c.h.b16 %v2226
    %v2635 = vunpack.c.l.b16 %v2227
    %v2636 = vunpack.c.h.b16 %v2227
    %v2637 = vunpack.c.l.b16 %v2228
    %v2638 = vunpack.c.h.b16 %v2228
    %v2639 = vpack.c.b16 %v2387, %v2383
    %v2640 = vpack.c.b16 %v2388, %v2384
    %v2641 = vpack.c.b16 %v2389, %v2385
    %v2642 = vpack.c.b16 %v2390, %v2386
    %v2643 = vpack.c.b16 %v2395, %v2391
    %v2644 = vpack.c.b16 %v2396, %v2392
    %v2645 = vpack.c.b16 %v2397, %v2393
    %v2646 = vpack.c.b16 %v2398, %v2394
    %v2647 = vpack.c.b16 %v2403, %v2399
    %v2648 = vpack.c.b16 %v2404, %v2400
    %v2649 = vpack.c.b16 %v2405, %v2401
    %v2650 = vpack.c.b16 %v2406, %v2402
    %v2651 = vpack.c.b16 %v2411, %v2407
    %v2652 = vpack.c.b16 %v2412, %v2408
    %v2653 = vpack.c.b16 %v2413, %v2409
    %v2654 = vpack.c.b16 %v2414, %v2410
    %v2655 = vpack.c.b16 %v2419, %v2415
    %v2656 = vpack.c.b16 %v2420, %v2416
    %v2657 = vpack.c.b16 %v2421, %v2417
    %v2658 = vpack.c.b16 %v2422, %v2418
    %v2659 = vpack.c.b16 %v2427, %v2423
    %v2660 = vpack.c.b16 %v2428, %v2424
    %v2661 = vpack.c.b16 %v2429, %v2425
    %v2662 = vpack.c.b16 %v2430, %v2426
    %v2663 = vpack.c.b16 %v2435, %v2431
    %v2664 = vpack.c.b16 %v2436, %v2432
    %v2665 = vpack.c.b16 %v2437, %v2433
    %v2666 = vpack.c.b16 %v2438, %v2434
    %v2667 = vpack.c.b16 %v2443, %v2439
    %v2668 = vpack.c.b16 %v2444, %v2440
    %v2669 = vpack.c.b16 %v2445, %v2441
    %v2670 = vpack.c.b16 %v2446, %v2442
    %v2671 = vpack.c.b16 %v2451, %v2447
    %v2672 = vpack.c.b16 %v2452, %v2448
    %v2673 = vpack.c.b16 %v2453, %v2449
    %v2674 = vpack.c.b16 %v2454, %v2450
    %v2675 = vpack.c.b16 %v2459, %v2455
    %v2676 = vpack.c.b16 %v2460, %v2456
    %v2677 = vpack.c.b16 %v2461, %v2457
    %v2678 = vpack.c.b16 %v2462, %v2458
    %v2679 = vpack.c.b16 %v2467, %v2463
    %v2680 = vpack.c.b16 %v2468, %v2464
    %v2681 = vpack.c.b16 %v2469, %v2465
    %v2682 = vpack.c.b16 %v2470, %v2466
    %v2683 = vpack.c.b16 %v2475, %v2471
    %v2684 = vpack.c.b16 %v2476, %v2472
    %v2685 = vpack.c.b16 %v2477, %v2473
    %v2686 = vpack.c.b16 %v2478, %v2474
    %v2687 = vpack.c.b16 %v2483, %v2479
    %v2688 = vpack.c.b16 %v2484, %v2480
    %v2689 = vpack.c.b16 %v2485, %v2481
    %v2690 = vpack.c.b16 %v2486, %v2482
    %v2691 = vpack.c.b16 %v2491, %v2487
    %v2692 = vpack.c.b16 %v2492, %v2488
    %v2693 = vpack.c.b16 %v2493, %v2489
    %v2694 = vpack.c.b16 %v2494, %v2490
    %v2695 = vpack.c.b16 %v2499, %v2495
    %v2696 = vpack.c.b16 %v2500, %v2496
    %v2697 = vpack.c.b16 %v2501, %v2497
    %v2698 = vpack.c.b16 %v2502, %v2498
    %v2699 = vpack.c.b16 %v2507, %v2503
    %v2700 = vpack.c.b16 %v2508, %v2504
    %v2701 = vpack.c.b16 %v2509, %v2505
    %v2702 = vpack.c.b16 %v2510, %v2506
    %v2703 = vpack.c.b16 %v2515, %v2511
    %v2704 = vpack.c.b16 %v2516, %v2512
    %v2705 = vpack.c.b16 %v2517, %v2513
    %v2706 = vpack.c.b16 %v2518, %v2514
    %v2707 = vpack.c.b16 %v2523, %v2519
    %v2708 = vpack.c.b16 %v2524, %v2520
    %v2709 = vpack.c.b16 %v2525, %v2521
    %v2710 = vpack.c.b16 %v2526, %v2522
    %v2711 = vpack.c.b16 %v2531, %v2527
    %v2712 = vpack.c.b16 %v2532, %v2528
    %v2713 = vpack.c.b16 %v2533, %v2529
    %v2714 = vpack.c.b16 %v2534, %v2530
    %v2715 = vpack.c.b16 %v2539, %v2535
    %v2716 = vpack.c.b16 %v2540, %v2536
    %v2717 = vpack.c.b16 %v2541, %v2537
    %v2718 = vpack.c.b16 %v2542, %v2538
    %v2719 = vpack.c.b16 %v2547, %v2543
    %v2720 = vpack.c.b16 %v2548, %v2544
    %v2721 = vpack.c.b16 %v2549, %v2545
    %v2722 = vpack.c.b16 %v2550, %v2546
    %v2723 = vpack.c.b16 %v2555, %v2551
    %v2724 = vpack.c.b16 %v2556, %v2552
    %v2725 = vpack.c.b16 %v2557, %v2553
    %v2726 = vpack.c.b16 %v2558, %v2554
    %v2727 = vpack.c.b16 %v2563, %v2559
    %v2728 = vpack.c.b16 %v2564, %v2560
    %v2729 = vpack.c.b16 %v2565, %v2561
    %v2730 = vpack.c.b16 %v2566, %v2562
    %v2731 = vpack.c.b16 %v2571, %v2567
    %v2732 = vpack.c.b16 %v2572, %v2568
    %v2733 = vpack.c.b16 %v2573, %v2569
    %v2734 = vpack.c.b16 %v2574, %v2570
    %v2735 = vpack.c.b16 %v2579, %v2575
    %v2736 = vpack.c.b16 %v2580, %v2576
    %v2737 = vpack.c.b16 %v2581, %v2577
    %v2738 = vpack.c.b16 %v2582, %v2578
    %v2739 = vpack.c.b16 %v2587, %v2583
    %v2740 = vpack.c.b16 %v2588, %v2584
    %v2741 = vpack.c.b16 %v2589, %v2585
    %v2742 = vpack.c.b16 %v2590, %v2586
    %v2743 = vpack.c.b16 %v2595, %v2591
    %v2744 = vpack.c.b16 %v2596, %v2592
    %v2745 = vpack.c.b16 %v2597, %v2593
    %v2746 = vpack.c.b16 %v2598, %v2594
    %v2747 = vpack.c.b16 %v2603, %v2599
    %v2748 = vpack.c.b16 %v2604, %v2600
    %v2749 = vpack.c.b16 %v2605, %v2601
    %v2750 = vpack.c.b16 %v2606, %v2602
    %v2751 = vpack.c.b16 %v2611, %v2607
    %v2752 = vpack.c.b16 %v2612, %v2608
    %v2753 = vpack.c.b16 %v2613, %v2609
    %v2754 = vpack.c.b16 %v2614, %v2610
    %v2755 = vpack.c.b16 %v2619, %v2615
    %v2756 = vpack.c.b16 %v2620, %v2616
    %v2757 = vpack.c.b16 %v2621, %v2617
    %v2758 = vpack.c.b16 %v2622, %v2618
    %v2759 = vpack.c.b16 %v2627, %v2623
    %v2760 = vpack.c.b16 %v2628, %v2624
    %v2761 = vpack.c.b16 %v2629, %v2625
    %v2762 = vpack.c.b16 %v2630, %v2626
    %v2763 = vpack.c.b16 %v2635, %v2631
    %v2764 = vpack.c.b16 %v2636, %v2632
    %v2765 = vpack.c.b16 %v2637, %v2633
    %v2766 = vpack.c.b16 %v2638, %v2634
    %2895 = vmatprep.subr.bf16.mxu0 %v2640
    %2896 = vmatpush1.bf16.msra.mxu0 %v2639
    %2897 = vmatprep.subr.bf16.mxu0 %v2644
    %2898 = vmatpush1.bf16.msra.mxu0 %v2643
    %2899 = vmatprep.subr.bf16.mxu0 %v2648
    %2900 = vmatpush1.bf16.msra.mxu0 %v2647
    %2901 = vmatprep.subr.bf16.mxu0 %v2652
    %2902 = vmatpush1.bf16.msra.mxu0 %v2651
    %2903 = vmatprep.subr.bf16.mxu0 %v2656
    %2904 = vmatpush1.bf16.msra.mxu0 %v2655
    %2905 = vmatprep.subr.bf16.mxu0 %v2660
    %2906 = vmatpush1.bf16.msra.mxu0 %v2659
    %2907 = vmatprep.subr.bf16.mxu0 %v2664
    %2908 = vmatpush1.bf16.msra.mxu0 %v2663
    %2909 = vmatprep.subr.bf16.mxu0 %v2668
    %2910 = vmatpush1.bf16.msra.mxu0 %v2667
    %2911 = vmatprep.subr.bf16.mxu0 %v2672
    %2912 = vmatpush1.bf16.msra.mxu0 %v2671
    %2913 = vmatprep.subr.bf16.mxu0 %v2676
    %2914 = vmatpush1.bf16.msra.mxu0 %v2675
    %2915 = vmatprep.subr.bf16.mxu0 %v2680
    %2916 = vmatpush1.bf16.msra.mxu0 %v2679
    %2917 = vmatprep.subr.bf16.mxu0 %v2684
    %2918 = vmatpush1.bf16.msra.mxu0 %v2683
    %2919 = vmatprep.subr.bf16.mxu0 %v2688
    %2920 = vmatpush1.bf16.msra.mxu0 %v2687
    %2921 = vmatprep.subr.bf16.mxu0 %v2692
    %2922 = vmatpush1.bf16.msra.mxu0 %v2691
    %2923 = vmatprep.subr.bf16.mxu0 %v2696
    %2924 = vmatpush1.bf16.msra.mxu0 %v2695
    %2925 = vmatprep.subr.bf16.mxu0 %v2700
    %2926 = vmatpush1.bf16.msra.mxu0 %v2699
    %2927 = vmatprep.mubr.bf16.mxu0 %v2231
    %2928 = vmatmul.mubr.bf16.gmra.mrb[0].mxu0 %v2230
    %v2929 = vpop.f32.mrb[0].mxu0
    %v2930 = vadd.f32 %v2238, %v2929
    %v2931 = vpop.f32.mrb[0].mxu0
    %v2932 = vadd.f32 %v2242, %v2931
    %v2933 = vpop.f32.mrb[0].mxu0
    %v2934 = vpop.f32.mrb[0].mxu0
    %2935 = vdwg.mxu0
    %2936 = vmatprep.subr.bf16.mxu0 %v2704
    %2937 = vmatpush1.bf16.msra.mxu0 %v2703
    %2938 = vmatprep.subr.bf16.mxu0 %v2708
    %2939 = vmatpush1.bf16.msra.mxu0 %v2707
    %2940 = vmatprep.subr.bf16.mxu0 %v2712
    %2941 = vmatpush1.bf16.msra.mxu0 %v2711
    %2942 = vmatprep.subr.bf16.mxu0 %v2716
    %2943 = vmatpush1.bf16.msra.mxu0 %v2715
    %2944 = vmatprep.subr.bf16.mxu0 %v2720
    %2945 = vmatpush1.bf16.msra.mxu0 %v2719
    %2946 = vmatprep.subr.bf16.mxu0 %v2724
    %2947 = vmatpush1.bf16.msra.mxu0 %v2723
    %2948 = vmatprep.subr.bf16.mxu0 %v2728
    %2949 = vmatpush1.bf16.msra.mxu0 %v2727
    %2950 = vmatprep.subr.bf16.mxu0 %v2732
    %2951 = vmatpush1.bf16.msra.mxu0 %v2731
    %2952 = vmatprep.subr.bf16.mxu0 %v2736
    %2953 = vmatpush1.bf16.msra.mxu0 %v2735
    %2954 = vmatprep.subr.bf16.mxu0 %v2740
    %2955 = vmatpush1.bf16.msra.mxu0 %v2739
    %2956 = vmatprep.subr.bf16.mxu0 %v2744
    %2957 = vmatpush1.bf16.msra.mxu0 %v2743
    %2958 = vmatprep.subr.bf16.mxu0 %v2748
    %2959 = vmatpush1.bf16.msra.mxu0 %v2747
    %2960 = vmatprep.subr.bf16.mxu0 %v2752
    %2961 = vmatpush1.bf16.msra.mxu0 %v2751
    %2962 = vmatprep.subr.bf16.mxu0 %v2756
    %2963 = vmatpush1.bf16.msra.mxu0 %v2755
    %2964 = vmatprep.subr.bf16.mxu0 %v2760
    %2965 = vmatpush1.bf16.msra.mxu0 %v2759
    %2966 = vmatprep.subr.bf16.mxu0 %v2764
    %2967 = vmatpush1.bf16.msra.mxu0 %v2763
    %2968 = vmatprep.mubr.bf16.mxu0 %v2233
    %2969 = vmatmul.mubr.bf16.gmra.mrb[0].mxu0 %v2232
    %v2970 = vpop.f32.mrb[0].mxu0
    %v2971 = vadd.f32 %v2930, %v2970
    %v2972 = vpop.f32.mrb[0].mxu0
    %v2973 = vadd.f32 %v2932, %v2972
    %v2974 = vpop.f32.mrb[0].mxu0
    %v2975 = vpop.f32.mrb[0].mxu0
    %2976 = vdwg.mxu0
    %2977 = vmatprep.subr.bf16.mxu0 %v2642
    %2978 = vmatpush1.bf16.msra.mxu0 %v2641
    %2979 = vmatprep.subr.bf16.mxu0 %v2646
    %2980 = vmatpush1.bf16.msra.mxu0 %v2645
    %2981 = vmatprep.subr.bf16.mxu0 %v2650
    %2982 = vmatpush1.bf16.msra.mxu0 %v2649
    %2983 = vmatprep.subr.bf16.mxu0 %v2654
    %2984 = vmatpush1.bf16.msra.mxu0 %v2653
    %2985 = vmatprep.subr.bf16.mxu0 %v2658
    %2986 = vmatpush1.bf16.msra.mxu0 %v2657
    %2987 = vmatprep.subr.bf16.mxu0 %v2662
    %2988 = vmatpush1.bf16.msra.mxu0 %v2661
    %2989 = vmatprep.subr.bf16.mxu0 %v2666
    %2990 = vmatpush1.bf16.msra.mxu0 %v2665
    %2991 = vmatprep.subr.bf16.mxu0 %v2670
    %2992 = vmatpush1.bf16.msra.mxu0 %v2669
    %2993 = vmatprep.subr.bf16.mxu0 %v2674
    %2994 = vmatpush1.bf16.msra.mxu0 %v2673
    %2995 = vmatprep.subr.bf16.mxu0 %v2678
    %2996 = vmatpush1.bf16.msra.mxu0 %v2677
    %2997 = vmatprep.subr.bf16.mxu0 %v2682
    %2998 = vmatpush1.bf16.msra.mxu0 %v2681
    %2999 = vmatprep.subr.bf16.mxu0 %v2686
    %3000 = vmatpush1.bf16.msra.mxu0 %v2685
    %3001 = vmatprep.subr.bf16.mxu0 %v2690
    %3002 = vmatpush1.bf16.msra.mxu0 %v2689
    %3003 = vmatprep.subr.bf16.mxu0 %v2694
    %3004 = vmatpush1.bf16.msra.mxu0 %v2693
    %3005 = vmatprep.subr.bf16.mxu0 %v2698
    %3006 = vmatpush1.bf16.msra.mxu0 %v2697
    %3007 = vmatprep.subr.bf16.mxu0 %v2702
    %3008 = vmatpush1.bf16.msra.mxu0 %v2701
    %3009 = vmatprep.mubr.bf16.mxu0 %v2231
    %3010 = vmatmul.mubr.bf16.gmra.mrb[0].mxu0 %v2230
    %v3011 = vpop.f32.mrb[0].mxu0
    %v3012 = vadd.f32 %v2246, %v3011
    %v3013 = vpop.f32.mrb[0].mxu0
    %v3014 = vadd.f32 %v2250, %v3013
    %v3015 = vpop.f32.mrb[0].mxu0
    %v3016 = vpop.f32.mrb[0].mxu0
    %3017 = vdwg.mxu0
    %3018 = vmatprep.subr.bf16.mxu0 %v2706
    %3019 = vmatpush1.bf16.msra.mxu0 %v2705
    %3020 = vmatprep.subr.bf16.mxu0 %v2710
    %3021 = vmatpush1.bf16.msra.mxu0 %v2709
    %3022 = vmatprep.subr.bf16.mxu0 %v2714
    %3023 = vmatpush1.bf16.msra.mxu0 %v2713
    %3024 = vmatprep.subr.bf16.mxu0 %v2718
    %3025 = vmatpush1.bf16.msra.mxu0 %v2717
    %3026 = vmatprep.subr.bf16.mxu0 %v2722
    %3027 = vmatpush1.bf16.msra.mxu0 %v2721
    %3028 = vmatprep.subr.bf16.mxu0 %v2726
    %3029 = vmatpush1.bf16.msra.mxu0 %v2725
    %3030 = vmatprep.subr.bf16.mxu0 %v2730
    %3031 = vmatpush1.bf16.msra.mxu0 %v2729
    %3032 = vmatprep.subr.bf16.mxu0 %v2734
    %3033 = vmatpush1.bf16.msra.mxu0 %v2733
    %3034 = vmatprep.subr.bf16.mxu0 %v2738
    %3035 = vmatpush1.bf16.msra.mxu0 %v2737
    %3036 = vmatprep.subr.bf16.mxu0 %v2742
    %3037 = vmatpush1.bf16.msra.mxu0 %v2741
    %3038 = vmatprep.subr.bf16.mxu0 %v2746
    %3039 = vmatpush1.bf16.msra.mxu0 %v2745
    %3040 = vmatprep.subr.bf16.mxu0 %v2750
    %3041 = vmatpush1.bf16.msra.mxu0 %v2749
    %3042 = vmatprep.subr.bf16.mxu0 %v2754
    %3043 = vmatpush1.bf16.msra.mxu0 %v2753
    %3044 = vmatprep.subr.bf16.mxu0 %v2758
    %3045 = vmatpush1.bf16.msra.mxu0 %v2757
    %3046 = vmatprep.subr.bf16.mxu0 %v2762
    %3047 = vmatpush1.bf16.msra.mxu0 %v2761
    %3048 = vmatprep.subr.bf16.mxu0 %v2766
    %3049 = vmatpush1.bf16.msra.mxu0 %v2765
    %3050 = vmatprep.mubr.bf16.mxu0 %v2233
    %3051 = vmatmul.mubr.bf16.gmra.mrb[0].mxu0 %v2232
    %v3052 = vpop.f32.mrb[0].mxu0
    %v3053 = vadd.f32 %v3012, %v3052
    %v3054 = vpop.f32.mrb[0].mxu0
    %v3055 = vadd.f32 %v3014, %v3054
    %v3056 = vpop.f32.mrb[0].mxu0
    %v3057 = vpop.f32.mrb[0].mxu0
    %3058 = vdwg.mxu0
    %vm3059 = vcmp.ge.f32.partialorder %v2971, 0.0
    %vm3060 = vcmp.ge.f32.partialorder %v2973, 0.0
    %vm3061 = vcmp.ge.f32.partialorder %v3053, 0.0
    %vm3062 = vcmp.ge.f32.partialorder %v3055, 0.0
    %v3063 = vmul.f32 %v2971, 0.1
    %v3064 = vmul.f32 %v2973, 0.1
    %v3065 = vmul.f32 %v3053, 0.1
    %v3066 = vmul.f32 %v3055, 0.1
    %v3067 = vsel %vm3059, %v2971, %v3063
    %v3068 = vsel %vm3060, %v2973, %v3064
    %v3069 = vsel %vm3061, %v3053, %v3065
    %v3070 = vsel %vm3062, %v3055, %v3066
    %v3071 = vld [vmem:[%s9] sm:$0xff]
    %v3072 = vld [vmem:[%s9 + $0x8] sm:$0xff]
    %v3073 = vld [vmem:[%s9 + $0x10] sm:$0xff]
    %v3074 = vld [vmem:[%s9 + $0x18] sm:$0xff]
    %v3075 = vld [vmem:[%s9 + $0x20] sm:$0xff]
    %v3076 = vld [vmem:[%s9 + $0x28] sm:$0xff]
    %v3077 = vld [vmem:[%s9 + $0x30] sm:$0xff]
    %v3078 = vld [vmem:[%s9 + $0x38] sm:$0xff]
    %v3079 = vld [vmem:[%s9 + $0x40] sm:$0xff]
    %v3080 = vld [vmem:[%s9 + $0x48] sm:$0xff]
    %v3081 = vld [vmem:[%s9 + $0x50] sm:$0xff]
    %v3082 = vld [vmem:[%s9 + $0x58] sm:$0xff]
    %v3083 = vld [vmem:[%s9 + $0x60] sm:$0xff]
    %v3084 = vld [vmem:[%s9 + $0x68] sm:$0xff]
    %v3085 = vld [vmem:[%s9 + $0x70] sm:$0xff]
    %v3086 = vld [vmem:[%s9 + $0x78] sm:$0xff]
    %v3087 = vld [vmem:[%s9 + $0x80] sm:$0xff]
    %v3088 = vld [vmem:[%s9 + $0x88] sm:$0xff]
    %v3089 = vld [vmem:[%s9 + $0x90] sm:$0xff]
    %v3090 = vld [vmem:[%s9 + $0x98] sm:$0xff]
    %v3091 = vld [vmem:[%s9 + $0xa0] sm:$0xff]
    %v3092 = vld [vmem:[%s9 + $0xa8] sm:$0xff]
    %v3093 = vld [vmem:[%s9 + $0xb0] sm:$0xff]
    %v3094 = vld [vmem:[%s9 + $0xb8] sm:$0xff]
    %v3095 = vld [vmem:[%s9 + $0xc0] sm:$0xff]
    %v3096 = vld [vmem:[%s9 + $0xc8] sm:$0xff]
    %v3097 = vld [vmem:[%s9 + $0xd0] sm:$0xff]
    %v3098 = vld [vmem:[%s9 + $0xd8] sm:$0xff]
    %v3099 = vld [vmem:[%s9 + $0xe0] sm:$0xff]
    %v3100 = vld [vmem:[%s9 + $0xe8] sm:$0xff]
    %v3101 = vld [vmem:[%s9 + $0xf0] sm:$0xff]
    %v3102 = vld [vmem:[%s9 + $0xf8] sm:$0xff]
    %v3103 = vld [vmem:[%s9 + $0x100] sm:$0xff]
    %v3104 = vld [vmem:[%s9 + $0x108] sm:$0xff]
    %v3105 = vld [vmem:[%s9 + $0x110] sm:$0xff]
    %v3106 = vld [vmem:[%s9 + $0x118] sm:$0xff]
    %v3107 = vld [vmem:[%s9 + $0x120] sm:$0xff]
    %v3108 = vld [vmem:[%s9 + $0x128] sm:$0xff]
    %v3109 = vld [vmem:[%s9 + $0x130] sm:$0xff]
    %v3110 = vld [vmem:[%s9 + $0x138] sm:$0xff]
    %v3111 = vld [vmem:[%s9 + $0x140] sm:$0xff]
    %v3112 = vld [vmem:[%s9 + $0x148] sm:$0xff]
    %v3113 = vld [vmem:[%s9 + $0x150] sm:$0xff]
    %v3114 = vld [vmem:[%s9 + $0x158] sm:$0xff]
    %v3115 = vld [vmem:[%s9 + $0x160] sm:$0xff]
    %v3116 = vld [vmem:[%s9 + $0x168] sm:$0xff]
    %v3117 = vld [vmem:[%s9 + $0x170] sm:$0xff]
    %v3118 = vld [vmem:[%s9 + $0x178] sm:$0xff]
    %v3119 = vld [vmem:[%s9 + $0x180] sm:$0xff]
    %v3120 = vld [vmem:[%s9 + $0x188] sm:$0xff]
    %v3121 = vld [vmem:[%s9 + $0x190] sm:$0xff]
    %v3122 = vld [vmem:[%s9 + $0x198] sm:$0xff]
    %v3123 = vld [vmem:[%s9 + $0x1a0] sm:$0xff]
    %v3124 = vld [vmem:[%s9 + $0x1a8] sm:$0xff]
    %v3125 = vld [vmem:[%s9 + $0x1b0] sm:$0xff]
    %v3126 = vld [vmem:[%s9 + $0x1b8] sm:$0xff]
    %v3127 = vld [vmem:[%s9 + $0x1c0] sm:$0xff]
    %v3128 = vld [vmem:[%s9 + $0x1c8] sm:$0xff]
    %v3129 = vld [vmem:[%s9 + $0x1d0] sm:$0xff]
    %v3130 = vld [vmem:[%s9 + $0x1d8] sm:$0xff]
    %v3131 = vld [vmem:[%s9 + $0x1e0] sm:$0xff]
    %v3132 = vld [vmem:[%s9 + $0x1e8] sm:$0xff]
    %v3133 = vld [vmem:[%s9 + $0x1f0] sm:$0xff]
    %v3134 = vld [vmem:[%s9 + $0x1f8] sm:$0xff]
    %v3135 = vld [vmem:[%s9 + $0x200] sm:$0xff]
    %v3136 = vld [vmem:[%s9 + $0x208] sm:$0xff]
    %v3137 = vld [vmem:[%s9 + $0x210] sm:$0xff]
    %v3138 = vld [vmem:[%s9 + $0x218] sm:$0xff]
    %v3139 = vld [vmem:[%s9 + $0x220] sm:$0xff]
    %v3140 = vld [vmem:[%s9 + $0x228] sm:$0xff]
    %v3141 = vld [vmem:[%s9 + $0x230] sm:$0xff]
    %v3142 = vld [vmem:[%s9 + $0x238] sm:$0xff]
    %v3143 = vld [vmem:[%s9 + $0x240] sm:$0xff]
    %v3144 = vld [vmem:[%s9 + $0x248] sm:$0xff]
    %v3145 = vld [vmem:[%s9 + $0x250] sm:$0xff]
    %v3146 = vld [vmem:[%s9 + $0x258] sm:$0xff]
    %v3147 = vld [vmem:[%s9 + $0x260] sm:$0xff]
    %v3148 = vld [vmem:[%s9 + $0x268] sm:$0xff]
    %v3149 = vld [vmem:[%s9 + $0x270] sm:$0xff]
    %v3150 = vld [vmem:[%s9 + $0x278] sm:$0xff]
    %v3151 = vld [vmem:[%s9 + $0x280] sm:$0xff]
    %v3152 = vld [vmem:[%s9 + $0x288] sm:$0xff]
    %v3153 = vld [vmem:[%s9 + $0x290] sm:$0xff]
    %v3154 = vld [vmem:[%s9 + $0x298] sm:$0xff]
    %v3155 = vld [vmem:[%s9 + $0x2a0] sm:$0xff]
    %v3156 = vld [vmem:[%s9 + $0x2a8] sm:$0xff]
    %v3157 = vld [vmem:[%s9 + $0x2b0] sm:$0xff]
    %v3158 = vld [vmem:[%s9 + $0x2b8] sm:$0xff]
    %v3159 = vld [vmem:[%s9 + $0x2c0] sm:$0xff]
    %v3160 = vld [vmem:[%s9 + $0x2c8] sm:$0xff]
    %v3161 = vld [vmem:[%s9 + $0x2d0] sm:$0xff]
    %v3162 = vld [vmem:[%s9 + $0x2d8] sm:$0xff]
    %v3163 = vld [vmem:[%s9 + $0x2e0] sm:$0xff]
    %v3164 = vld [vmem:[%s9 + $0x2e8] sm:$0xff]
    %v3165 = vld [vmem:[%s9 + $0x2f0] sm:$0xff]
    %v3166 = vld [vmem:[%s9 + $0x2f8] sm:$0xff]
    %v3167 = vld [vmem:[%s9 + $0x300] sm:$0xff]
    %v3168 = vld [vmem:[%s9 + $0x308] sm:$0xff]
    %v3169 = vld [vmem:[%s9 + $0x310] sm:$0xff]
    %v3170 = vld [vmem:[%s9 + $0x318] sm:$0xff]
    %v3171 = vld [vmem:[%s9 + $0x320] sm:$0xff]
    %v3172 = vld [vmem:[%s9 + $0x328] sm:$0xff]
    %v3173 = vld [vmem:[%s9 + $0x330] sm:$0xff]
    %v3174 = vld [vmem:[%s9 + $0x338] sm:$0xff]
    %v3175 = vld [vmem:[%s9 + $0x340] sm:$0xff]
    %v3176 = vld [vmem:[%s9 + $0x348] sm:$0xff]
    %v3177 = vld [vmem:[%s9 + $0x350] sm:$0xff]
    %v3178 = vld [vmem:[%s9 + $0x358] sm:$0xff]
    %v3179 = vld [vmem:[%s9 + $0x360] sm:$0xff]
    %v3180 = vld [vmem:[%s9 + $0x368] sm:$0xff]
    %v3181 = vld [vmem:[%s9 + $0x370] sm:$0xff]
    %v3182 = vld [vmem:[%s9 + $0x378] sm:$0xff]
    %v3183 = vld [vmem:[%s9 + $0x380] sm:$0xff]
    %v3184 = vld [vmem:[%s9 + $0x388] sm:$0xff]
    %v3185 = vld [vmem:[%s9 + $0x390] sm:$0xff]
    %v3186 = vld [vmem:[%s9 + $0x398] sm:$0xff]
    %v3187 = vld [vmem:[%s9 + $0x3a0] sm:$0xff]
    %v3188 = vld [vmem:[%s9 + $0x3a8] sm:$0xff]
    %v3189 = vld [vmem:[%s9 + $0x3b0] sm:$0xff]
    %v3190 = vld [vmem:[%s9 + $0x3b8] sm:$0xff]
    %v3191 = vld [vmem:[%s9 + $0x3c0] sm:$0xff]
    %v3192 = vld [vmem:[%s9 + $0x3c8] sm:$0xff]
    %v3193 = vld [vmem:[%s9 + $0x3d0] sm:$0xff]
    %v3194 = vld [vmem:[%s9 + $0x3d8] sm:$0xff]
    %v3195 = vld [vmem:[%s9 + $0x3e0] sm:$0xff]
    %v3196 = vld [vmem:[%s9 + $0x3e8] sm:$0xff]
    %v3197 = vld [vmem:[%s9 + $0x3f0] sm:$0xff]
    %v3198 = vld [vmem:[%s9 + $0x3f8] sm:$0xff]
    %v3199 = vld [vmem:[%s10] sm:$0xf]
    %v3200 = vpack.c.bf16 %v3067, %v3067
    %v3201 = vpack.c.bf16 %v3068, %v3068
    %v3202 = vpack.c.bf16 %v3069, %v3069
    %v3203 = vpack.c.bf16 %v3070, %v3070
    %v3205 = vlaneseq
    %v3206 = vshrl.u32 %v3205, 7
    %v3207 = vsub.s32 0, %v3206
    %v3208 = vrot.slane %v3199, %v3207
    %v3209 = vlaneseq
    %v3210 = vshrl.u32 %v3209, 7
    %v3211 = vsub.s32 1, %v3210
    %v3212 = vrot.slane %v3199, %v3211
    %v3213 = vlaneseq
    %v3214 = vshrl.u32 %v3213, 7
    %v3215 = vsub.s32 2, %v3214
    %v3216 = vrot.slane %v3199, %v3215
    %v3217 = vlaneseq
    %v3218 = vshrl.u32 %v3217, 7
    %v3219 = vsub.s32 3, %v3218
    %v3220 = vrot.slane %v3199, %v3219
    %v3353 = vunpack.c.l.b16 %v3071
    %v3354 = vunpack.c.h.b16 %v3071
    %v3355 = vunpack.c.l.b16 %v3072
    %v3356 = vunpack.c.h.b16 %v3072
    %v3357 = vunpack.c.l.b16 %v3073
    %v3358 = vunpack.c.h.b16 %v3073
    %v3359 = vunpack.c.l.b16 %v3074
    %v3360 = vunpack.c.h.b16 %v3074
    %v3361 = vunpack.c.l.b16 %v3075
    %v3362 = vunpack.c.h.b16 %v3075
    %v3363 = vunpack.c.l.b16 %v3076
    %v3364 = vunpack.c.h.b16 %v3076
    %v3365 = vunpack.c.l.b16 %v3077
    %v3366 = vunpack.c.h.b16 %v3077
    %v3367 = vunpack.c.l.b16 %v3078
    %v3368 = vunpack.c.h.b16 %v3078
    %v3369 = vunpack.c.l.b16 %v3079
    %v3370 = vunpack.c.h.b16 %v3079
    %v3371 = vunpack.c.l.b16 %v3080
    %v3372 = vunpack.c.h.b16 %v3080
    %v3373 = vunpack.c.l.b16 %v3081
    %v3374 = vunpack.c.h.b16 %v3081
    %v3375 = vunpack.c.l.b16 %v3082
    %v3376 = vunpack.c.h.b16 %v3082
    %v3377 = vunpack.c.l.b16 %v3083
    %v3378 = vunpack.c.h.b16 %v3083
    %v3379 = vunpack.c.l.b16 %v3084
    %v3380 = vunpack.c.h.b16 %v3084
    %v3381 = vunpack.c.l.b16 %v3085
    %v3382 = vunpack.c.h.b16 %v3085
    %v3383 = vunpack.c.l.b16 %v3086
    %v3384 = vunpack.c.h.b16 %v3086
    %v3385 = vunpack.c.l.b16 %v3087
    %v3386 = vunpack.c.h.b16 %v3087
    %v3387 = vunpack.c.l.b16 %v3088
    %v3388 = vunpack.c.h.b16 %v3088
    %v3389 = vunpack.c.l.b16 %v3089
    %v3390 = vunpack.c.h.b16 %v3089
    %v3391 = vunpack.c.l.b16 %v3090
    %v3392 = vunpack.c.h.b16 %v3090
    %v3393 = vunpack.c.l.b16 %v3091
    %v3394 = vunpack.c.h.b16 %v3091
    %v3395 = vunpack.c.l.b16 %v3092
    %v3396 = vunpack.c.h.b16 %v3092
    %v3397 = vunpack.c.l.b16 %v3093
    %v3398 = vunpack.c.h.b16 %v3093
    %v3399 = vunpack.c.l.b16 %v3094
    %v3400 = vunpack.c.h.b16 %v3094
    %v3401 = vunpack.c.l.b16 %v3095
    %v3402 = vunpack.c.h.b16 %v3095
    %v3403 = vunpack.c.l.b16 %v3096
    %v3404 = vunpack.c.h.b16 %v3096
    %v3405 = vunpack.c.l.b16 %v3097
    %v3406 = vunpack.c.h.b16 %v3097
    %v3407 = vunpack.c.l.b16 %v3098
    %v3408 = vunpack.c.h.b16 %v3098
    %v3409 = vunpack.c.l.b16 %v3099
    %v3410 = vunpack.c.h.b16 %v3099
    %v3411 = vunpack.c.l.b16 %v3100
    %v3412 = vunpack.c.h.b16 %v3100
    %v3413 = vunpack.c.l.b16 %v3101
    %v3414 = vunpack.c.h.b16 %v3101
    %v3415 = vunpack.c.l.b16 %v3102
    %v3416 = vunpack.c.h.b16 %v3102
    %v3417 = vunpack.c.l.b16 %v3103
    %v3418 = vunpack.c.h.b16 %v3103
    %v3419 = vunpack.c.l.b16 %v3104
    %v3420 = vunpack.c.h.b16 %v3104
    %v3421 = vunpack.c.l.b16 %v3105
    %v3422 = vunpack.c.h.b16 %v3105
    %v3423 = vunpack.c.l.b16 %v3106
    %v3424 = vunpack.c.h.b16 %v3106
    %v3425 = vunpack.c.l.b16 %v3107
    %v3426 = vunpack.c.h.b16 %v3107
    %v3427 = vunpack.c.l.b16 %v3108
    %v3428 = vunpack.c.h.b16 %v3108
    %v3429 = vunpack.c.l.b16 %v3109
    %v3430 = vunpack.c.h.b16 %v3109
    %v3431 = vunpack.c.l.b16 %v3110
    %v3432 = vunpack.c.h.b16 %v3110
    %v3433 = vunpack.c.l.b16 %v3111
    %v3434 = vunpack.c.h.b16 %v3111
    %v3435 = vunpack.c.l.b16 %v3112
    %v3436 = vunpack.c.h.b16 %v3112
    %v3437 = vunpack.c.l.b16 %v3113
    %v3438 = vunpack.c.h.b16 %v3113
    %v3439 = vunpack.c.l.b16 %v3114
    %v3440 = vunpack.c.h.b16 %v3114
    %v3441 = vunpack.c.l.b16 %v3115
    %v3442 = vunpack.c.h.b16 %v3115
    %v3443 = vunpack.c.l.b16 %v3116
    %v3444 = vunpack.c.h.b16 %v3116
    %v3445 = vunpack.c.l.b16 %v3117
    %v3446 = vunpack.c.h.b16 %v3117
    %v3447 = vunpack.c.l.b16 %v3118
    %v3448 = vunpack.c.h.b16 %v3118
    %v3449 = vunpack.c.l.b16 %v3119
    %v3450 = vunpack.c.h.b16 %v3119
    %v3451 = vunpack.c.l.b16 %v3120
    %v3452 = vunpack.c.h.b16 %v3120
    %v3453 = vunpack.c.l.b16 %v3121
    %v3454 = vunpack.c.h.b16 %v3121
    %v3455 = vunpack.c.l.b16 %v3122
    %v3456 = vunpack.c.h.b16 %v3122
    %v3457 = vunpack.c.l.b16 %v3123
    %v3458 = vunpack.c.h.b16 %v3123
    %v3459 = vunpack.c.l.b16 %v3124
    %v3460 = vunpack.c.h.b16 %v3124
    %v3461 = vunpack.c.l.b16 %v3125
    %v3462 = vunpack.c.h.b16 %v3125
    %v3463 = vunpack.c.l.b16 %v3126
    %v3464 = vunpack.c.h.b16 %v3126
    %v3465 = vunpack.c.l.b16 %v3127
    %v3466 = vunpack.c.h.b16 %v3127
    %v3467 = vunpack.c.l.b16 %v3128
    %v3468 = vunpack.c.h.b16 %v3128
    %v3469 = vunpack.c.l.b16 %v3129
    %v3470 = vunpack.c.h.b16 %v3129
    %v3471 = vunpack.c.l.b16 %v3130
    %v3472 = vunpack.c.h.b16 %v3130
    %v3473 = vunpack.c.l.b16 %v3131
    %v3474 = vunpack.c.h.b16 %v3131
    %v3475 = vunpack.c.l.b16 %v3132
    %v3476 = vunpack.c.h.b16 %v3132
    %v3477 = vunpack.c.l.b16 %v3133
    %v3478 = vunpack.c.h.b16 %v3133
    %v3479 = vunpack.c.l.b16 %v3134
    %v3480 = vunpack.c.h.b16 %v3134
    %v3481 = vunpack.c.l.b16 %v3135
    %v3482 = vunpack.c.h.b16 %v3135
    %v3483 = vunpack.c.l.b16 %v3136
    %v3484 = vunpack.c.h.b16 %v3136
    %v3485 = vunpack.c.l.b16 %v3137
    %v3486 = vunpack.c.h.b16 %v3137
    %v3487 = vunpack.c.l.b16 %v3138
    %v3488 = vunpack.c.h.b16 %v3138
    %v3489 = vunpack.c.l.b16 %v3139
    %v3490 = vunpack.c.h.b16 %v3139
    %v3491 = vunpack.c.l.b16 %v3140
    %v3492 = vunpack.c.h.b16 %v3140
    %v3493 = vunpack.c.l.b16 %v3141
    %v3494 = vunpack.c.h.b16 %v3141
    %v3495 = vunpack.c.l.b16 %v3142
    %v3496 = vunpack.c.h.b16 %v3142
    %v3497 = vunpack.c.l.b16 %v3143
    %v3498 = vunpack.c.h.b16 %v3143
    %v3499 = vunpack.c.l.b16 %v3144
    %v3500 = vunpack.c.h.b16 %v3144
    %v3501 = vunpack.c.l.b16 %v3145
    %v3502 = vunpack.c.h.b16 %v3145
    %v3503 = vunpack.c.l.b16 %v3146
    %v3504 = vunpack.c.h.b16 %v3146
    %v3505 = vunpack.c.l.b16 %v3147
    %v3506 = vunpack.c.h.b16 %v3147
    %v3507 = vunpack.c.l.b16 %v3148
    %v3508 = vunpack.c.h.b16 %v3148
    %v3509 = vunpack.c.l.b16 %v3149
    %v3510 = vunpack.c.h.b16 %v3149
    %v3511 = vunpack.c.l.b16 %v3150
    %v3512 = vunpack.c.h.b16 %v3150
    %v3513 = vunpack.c.l.b16 %v3151
    %v3514 = vunpack.c.h.b16 %v3151
    %v3515 = vunpack.c.l.b16 %v3152
    %v3516 = vunpack.c.h.b16 %v3152
    %v3517 = vunpack.c.l.b16 %v3153
    %v3518 = vunpack.c.h.b16 %v3153
    %v3519 = vunpack.c.l.b16 %v3154
    %v3520 = vunpack.c.h.b16 %v3154
    %v3521 = vunpack.c.l.b16 %v3155
    %v3522 = vunpack.c.h.b16 %v3155
    %v3523 = vunpack.c.l.b16 %v3156
    %v3524 = vunpack.c.h.b16 %v3156
    %v3525 = vunpack.c.l.b16 %v3157
    %v3526 = vunpack.c.h.b16 %v3157
    %v3527 = vunpack.c.l.b16 %v3158
    %v3528 = vunpack.c.h.b16 %v3158
    %v3529 = vunpack.c.l.b16 %v3159
    %v3530 = vunpack.c.h.b16 %v3159
    %v3531 = vunpack.c.l.b16 %v3160
    %v3532 = vunpack.c.h.b16 %v3160
    %v3533 = vunpack.c.l.b16 %v3161
    %v3534 = vunpack.c.h.b16 %v3161
    %v3535 = vunpack.c.l.b16 %v3162
    %v3536 = vunpack.c.h.b16 %v3162
    %v3537 = vunpack.c.l.b16 %v3163
    %v3538 = vunpack.c.h.b16 %v3163
    %v3539 = vunpack.c.l.b16 %v3164
    %v3540 = vunpack.c.h.b16 %v3164
    %v3541 = vunpack.c.l.b16 %v3165
    %v3542 = vunpack.c.h.b16 %v3165
    %v3543 = vunpack.c.l.b16 %v3166
    %v3544 = vunpack.c.h.b16 %v3166
    %v3545 = vunpack.c.l.b16 %v3167
    %v3546 = vunpack.c.h.b16 %v3167
    %v3547 = vunpack.c.l.b16 %v3168
    %v3548 = vunpack.c.h.b16 %v3168
    %v3549 = vunpack.c.l.b16 %v3169
    %v3550 = vunpack.c.h.b16 %v3169
    %v3551 = vunpack.c.l.b16 %v3170
    %v3552 = vunpack.c.h.b16 %v3170
    %v3553 = vunpack.c.l.b16 %v3171
    %v3554 = vunpack.c.h.b16 %v3171
    %v3555 = vunpack.c.l.b16 %v3172
    %v3556 = vunpack.c.h.b16 %v3172
    %v3557 = vunpack.c.l.b16 %v3173
    %v3558 = vunpack.c.h.b16 %v3173
    %v3559 = vunpack.c.l.b16 %v3174
    %v3560 = vunpack.c.h.b16 %v3174
    %v3561 = vunpack.c.l.b16 %v3175
    %v3562 = vunpack.c.h.b16 %v3175
    %v3563 = vunpack.c.l.b16 %v3176
    %v3564 = vunpack.c.h.b16 %v3176
    %v3565 = vunpack.c.l.b16 %v3177
    %v3566 = vunpack.c.h.b16 %v3177
    %v3567 = vunpack.c.l.b16 %v3178
    %v3568 = vunpack.c.h.b16 %v3178
    %v3569 = vunpack.c.l.b16 %v3179
    %v3570 = vunpack.c.h.b16 %v3179
    %v3571 = vunpack.c.l.b16 %v3180
    %v3572 = vunpack.c.h.b16 %v3180
    %v3573 = vunpack.c.l.b16 %v3181
    %v3574 = vunpack.c.h.b16 %v3181
    %v3575 = vunpack.c.l.b16 %v3182
    %v3576 = vunpack.c.h.b16 %v3182
    %v3577 = vunpack.c.l.b16 %v3183
    %v3578 = vunpack.c.h.b16 %v3183
    %v3579 = vunpack.c.l.b16 %v3184
    %v3580 = vunpack.c.h.b16 %v3184
    %v3581 = vunpack.c.l.b16 %v3185
    %v3582 = vunpack.c.h.b16 %v3185
    %v3583 = vunpack.c.l.b16 %v3186
    %v3584 = vunpack.c.h.b16 %v3186
    %v3585 = vunpack.c.l.b16 %v3187
    %v3586 = vunpack.c.h.b16 %v3187
    %v3587 = vunpack.c.l.b16 %v3188
    %v3588 = vunpack.c.h.b16 %v3188
    %v3589 = vunpack.c.l.b16 %v3189
    %v3590 = vunpack.c.h.b16 %v3189
    %v3591 = vunpack.c.l.b16 %v3190
    %v3592 = vunpack.c.h.b16 %v3190
    %v3593 = vunpack.c.l.b16 %v3191
    %v3594 = vunpack.c.h.b16 %v3191
    %v3595 = vunpack.c.l.b16 %v3192
    %v3596 = vunpack.c.h.b16 %v3192
    %v3597 = vunpack.c.l.b16 %v3193
    %v3598 = vunpack.c.h.b16 %v3193
    %v3599 = vunpack.c.l.b16 %v3194
    %v3600 = vunpack.c.h.b16 %v3194
    %v3601 = vunpack.c.l.b16 %v3195
    %v3602 = vunpack.c.h.b16 %v3195
    %v3603 = vunpack.c.l.b16 %v3196
    %v3604 = vunpack.c.h.b16 %v3196
    %v3605 = vunpack.c.l.b16 %v3197
    %v3606 = vunpack.c.h.b16 %v3197
    %v3607 = vunpack.c.l.b16 %v3198
    %v3608 = vunpack.c.h.b16 %v3198
    %v3609 = vpack.c.b16 %v3357, %v3353
    %v3610 = vpack.c.b16 %v3358, %v3354
    %v3611 = vpack.c.b16 %v3359, %v3355
    %v3612 = vpack.c.b16 %v3360, %v3356
    %v3613 = vpack.c.b16 %v3365, %v3361
    %v3614 = vpack.c.b16 %v3366, %v3362
    %v3615 = vpack.c.b16 %v3367, %v3363
    %v3616 = vpack.c.b16 %v3368, %v3364
    %v3617 = vpack.c.b16 %v3373, %v3369
    %v3618 = vpack.c.b16 %v3374, %v3370
    %v3619 = vpack.c.b16 %v3375, %v3371
    %v3620 = vpack.c.b16 %v3376, %v3372
    %v3621 = vpack.c.b16 %v3381, %v3377
    %v3622 = vpack.c.b16 %v3382, %v3378
    %v3623 = vpack.c.b16 %v3383, %v3379
    %v3624 = vpack.c.b16 %v3384, %v3380
    %v3625 = vpack.c.b16 %v3389, %v3385
    %v3626 = vpack.c.b16 %v3390, %v3386
    %v3627 = vpack.c.b16 %v3391, %v3387
    %v3628 = vpack.c.b16 %v3392, %v3388
    %v3629 = vpack.c.b16 %v3397, %v3393
    %v3630 = vpack.c.b16 %v3398, %v3394
    %v3631 = vpack.c.b16 %v3399, %v3395
    %v3632 = vpack.c.b16 %v3400, %v3396
    %v3633 = vpack.c.b16 %v3405, %v3401
    %v3634 = vpack.c.b16 %v3406, %v3402
    %v3635 = vpack.c.b16 %v3407, %v3403
    %v3636 = vpack.c.b16 %v3408, %v3404
    %v3637 = vpack.c.b16 %v3413, %v3409
    %v3638 = vpack.c.b16 %v3414, %v3410
    %v3639 = vpack.c.b16 %v3415, %v3411
    %v3640 = vpack.c.b16 %v3416, %v3412
    %v3641 = vpack.c.b16 %v3421, %v3417
    %v3642 = vpack.c.b16 %v3422, %v3418
    %v3643 = vpack.c.b16 %v3423, %v3419
    %v3644 = vpack.c.b16 %v3424, %v3420
    %v3645 = vpack.c.b16 %v3429, %v3425
    %v3646 = vpack.c.b16 %v3430, %v3426
    %v3647 = vpack.c.b16 %v3431, %v3427
    %v3648 = vpack.c.b16 %v3432, %v3428
    %v3649 = vpack.c.b16 %v3437, %v3433
    %v3650 = vpack.c.b16 %v3438, %v3434
    %v3651 = vpack.c.b16 %v3439, %v3435
    %v3652 = vpack.c.b16 %v3440, %v3436
    %v3653 = vpack.c.b16 %v3445, %v3441
    %v3654 = vpack.c.b16 %v3446, %v3442
    %v3655 = vpack.c.b16 %v3447, %v3443
    %v3656 = vpack.c.b16 %v3448, %v3444
    %v3657 = vpack.c.b16 %v3453, %v3449
    %v3658 = vpack.c.b16 %v3454, %v3450
    %v3659 = vpack.c.b16 %v3455, %v3451
    %v3660 = vpack.c.b16 %v3456, %v3452
    %v3661 = vpack.c.b16 %v3461, %v3457
    %v3662 = vpack.c.b16 %v3462, %v3458
    %v3663 = vpack.c.b16 %v3463, %v3459
    %v3664 = vpack.c.b16 %v3464, %v3460
    %v3665 = vpack.c.b16 %v3469, %v3465
    %v3666 = vpack.c.b16 %v3470, %v3466
    %v3667 = vpack.c.b16 %v3471, %v3467
    %v3668 = vpack.c.b16 %v3472, %v3468
    %v3669 = vpack.c.b16 %v3477, %v3473
    %v3670 = vpack.c.b16 %v3478, %v3474
    %v3671 = vpack.c.b16 %v3479, %v3475
    %v3672 = vpack.c.b16 %v3480, %v3476
    %v3673 = vpack.c.b16 %v3485, %v3481
    %v3674 = vpack.c.b16 %v3486, %v3482
    %v3675 = vpack.c.b16 %v3487, %v3483
    %v3676 = vpack.c.b16 %v3488, %v3484
    %v3677 = vpack.c.b16 %v3493, %v3489
    %v3678 = vpack.c.b16 %v3494, %v3490
    %v3679 = vpack.c.b16 %v3495, %v3491
    %v3680 = vpack.c.b16 %v3496, %v3492
    %v3681 = vpack.c.b16 %v3501, %v3497
    %v3682 = vpack.c.b16 %v3502, %v3498
    %v3683 = vpack.c.b16 %v3503, %v3499
    %v3684 = vpack.c.b16 %v3504, %v3500
    %v3685 = vpack.c.b16 %v3509, %v3505
    %v3686 = vpack.c.b16 %v3510, %v3506
    %v3687 = vpack.c.b16 %v3511, %v3507
    %v3688 = vpack.c.b16 %v3512, %v3508
    %v3689 = vpack.c.b16 %v3517, %v3513
    %v3690 = vpack.c.b16 %v3518, %v3514
    %v3691 = vpack.c.b16 %v3519, %v3515
    %v3692 = vpack.c.b16 %v3520, %v3516
    %v3693 = vpack.c.b16 %v3525, %v3521
    %v3694 = vpack.c.b16 %v3526, %v3522
    %v3695 = vpack.c.b16 %v3527, %v3523
    %v3696 = vpack.c.b16 %v3528, %v3524
    %v3697 = vpack.c.b16 %v3533, %v3529
    %v3698 = vpack.c.b16 %v3534, %v3530
    %v3699 = vpack.c.b16 %v3535, %v3531
    %v3700 = vpack.c.b16 %v3536, %v3532
    %v3701 = vpack.c.b16 %v3541, %v3537
    %v3702 = vpack.c.b16 %v3542, %v3538
    %v3703 = vpack.c.b16 %v3543, %v3539
    %v3704 = vpack.c.b16 %v3544, %v3540
    %v3705 = vpack.c.b16 %v3549, %v3545
    %v3706 = vpack.c.b16 %v3550, %v3546
    %v3707 = vpack.c.b16 %v3551, %v3547
    %v3708 = vpack.c.b16 %v3552, %v3548
    %v3709 = vpack.c.b16 %v3557, %v3553
    %v3710 = vpack.c.b16 %v3558, %v3554
    %v3711 = vpack.c.b16 %v3559, %v3555
    %v3712 = vpack.c.b16 %v3560, %v3556
    %v3713 = vpack.c.b16 %v3565, %v3561
    %v3714 = vpack.c.b16 %v3566, %v3562
    %v3715 = vpack.c.b16 %v3567, %v3563
    %v3716 = vpack.c.b16 %v3568, %v3564
    %v3717 = vpack.c.b16 %v3573, %v3569
    %v3718 = vpack.c.b16 %v3574, %v3570
    %v3719 = vpack.c.b16 %v3575, %v3571
    %v3720 = vpack.c.b16 %v3576, %v3572
    %v3721 = vpack.c.b16 %v3581, %v3577
    %v3722 = vpack.c.b16 %v3582, %v3578
    %v3723 = vpack.c.b16 %v3583, %v3579
    %v3724 = vpack.c.b16 %v3584, %v3580
    %v3725 = vpack.c.b16 %v3589, %v3585
    %v3726 = vpack.c.b16 %v3590, %v3586
    %v3727 = vpack.c.b16 %v3591, %v3587
    %v3728 = vpack.c.b16 %v3592, %v3588
    %v3729 = vpack.c.b16 %v3597, %v3593
    %v3730 = vpack.c.b16 %v3598, %v3594
    %v3731 = vpack.c.b16 %v3599, %v3595
    %v3732 = vpack.c.b16 %v3600, %v3596
    %v3733 = vpack.c.b16 %v3605, %v3601
    %v3734 = vpack.c.b16 %v3606, %v3602
    %v3735 = vpack.c.b16 %v3607, %v3603
    %v3736 = vpack.c.b16 %v3608, %v3604
    %3865 = vmatprep.subr.bf16.mxu0 %v3610
    %3866 = vmatpush1.bf16.msra.mxu0 %v3609
    %3867 = vmatprep.subr.bf16.mxu0 %v3614
    %3868 = vmatpush1.bf16.msra.mxu0 %v3613
    %3869 = vmatprep.subr.bf16.mxu0 %v3618
    %3870 = vmatpush1.bf16.msra.mxu0 %v3617
    %3871 = vmatprep.subr.bf16.mxu0 %v3622
    %3872 = vmatpush1.bf16.msra.mxu0 %v3621
    %3873 = vmatprep.subr.bf16.mxu0 %v3626
    %3874 = vmatpush1.bf16.msra.mxu0 %v3625
    %3875 = vmatprep.subr.bf16.mxu0 %v3630
    %3876 = vmatpush1.bf16.msra.mxu0 %v3629
    %3877 = vmatprep.subr.bf16.mxu0 %v3634
    %3878 = vmatpush1.bf16.msra.mxu0 %v3633
    %3879 = vmatprep.subr.bf16.mxu0 %v3638
    %3880 = vmatpush1.bf16.msra.mxu0 %v3637
    %3881 = vmatprep.subr.bf16.mxu0 %v3642
    %3882 = vmatpush1.bf16.msra.mxu0 %v3641
    %3883 = vmatprep.subr.bf16.mxu0 %v3646
    %3884 = vmatpush1.bf16.msra.mxu0 %v3645
    %3885 = vmatprep.subr.bf16.mxu0 %v3650
    %3886 = vmatpush1.bf16.msra.mxu0 %v3649
    %3887 = vmatprep.subr.bf16.mxu0 %v3654
    %3888 = vmatpush1.bf16.msra.mxu0 %v3653
    %3889 = vmatprep.subr.bf16.mxu0 %v3658
    %3890 = vmatpush1.bf16.msra.mxu0 %v3657
    %3891 = vmatprep.subr.bf16.mxu0 %v3662
    %3892 = vmatpush1.bf16.msra.mxu0 %v3661
    %3893 = vmatprep.subr.bf16.mxu0 %v3666
    %3894 = vmatpush1.bf16.msra.mxu0 %v3665
    %3895 = vmatprep.subr.bf16.mxu0 %v3670
    %3896 = vmatpush1.bf16.msra.mxu0 %v3669
    %3897 = vmatprep.mubr.bf16.mxu0 %v3201
    %3898 = vmatmul.mubr.bf16.gmra.mrb[0].mxu0 %v3200
    %v3899 = vpop.f32.mrb[0].mxu0
    %v3900 = vadd.f32 %v3208, %v3899
    %v3901 = vpop.f32.mrb[0].mxu0
    %v3902 = vadd.f32 %v3212, %v3901
    %v3903 = vpop.f32.mrb[0].mxu0
    %v3904 = vpop.f32.mrb[0].mxu0
    %3905 = vdwg.mxu0
    %3906 = vmatprep.subr.bf16.mxu0 %v3674
    %3907 = vmatpush1.bf16.msra.mxu0 %v3673
    %3908 = vmatprep.subr.bf16.mxu0 %v3678
    %3909 = vmatpush1.bf16.msra.mxu0 %v3677
    %3910 = vmatprep.subr.bf16.mxu0 %v3682
    %3911 = vmatpush1.bf16.msra.mxu0 %v3681
    %3912 = vmatprep.subr.bf16.mxu0 %v3686
    %3913 = vmatpush1.bf16.msra.mxu0 %v3685
    %3914 = vmatprep.subr.bf16.mxu0 %v3690
    %3915 = vmatpush1.bf16.msra.mxu0 %v3689
    %3916 = vmatprep.subr.bf16.mxu0 %v3694
    %3917 = vmatpush1.bf16.msra.mxu0 %v3693
    %3918 = vmatprep.subr.bf16.mxu0 %v3698
    %3919 = vmatpush1.bf16.msra.mxu0 %v3697
    %3920 = vmatprep.subr.bf16.mxu0 %v3702
    %3921 = vmatpush1.bf16.msra.mxu0 %v3701
    %3922 = vmatprep.subr.bf16.mxu0 %v3706
    %3923 = vmatpush1.bf16.msra.mxu0 %v3705
    %3924 = vmatprep.subr.bf16.mxu0 %v3710
    %3925 = vmatpush1.bf16.msra.mxu0 %v3709
    %3926 = vmatprep.subr.bf16.mxu0 %v3714
    %3927 = vmatpush1.bf16.msra.mxu0 %v3713
    %3928 = vmatprep.subr.bf16.mxu0 %v3718
    %3929 = vmatpush1.bf16.msra.mxu0 %v3717
    %3930 = vmatprep.subr.bf16.mxu0 %v3722
    %3931 = vmatpush1.bf16.msra.mxu0 %v3721
    %3932 = vmatprep.subr.bf16.mxu0 %v3726
    %3933 = vmatpush1.bf16.msra.mxu0 %v3725
    %3934 = vmatprep.subr.bf16.mxu0 %v3730
    %3935 = vmatpush1.bf16.msra.mxu0 %v3729
    %3936 = vmatprep.subr.bf16.mxu0 %v3734
    %3937 = vmatpush1.bf16.msra.mxu0 %v3733
    %3938 = vmatprep.mubr.bf16.mxu0 %v3203
    %3939 = vmatmul.mubr.bf16.gmra.mrb[0].mxu0 %v3202
    %v3940 = vpop.f32.mrb[0].mxu0
    %v3941 = vadd.f32 %v3900, %v3940
    %v3942 = vpop.f32.mrb[0].mxu0
    %v3943 = vadd.f32 %v3902, %v3942
    %v3944 = vpop.f32.mrb[0].mxu0
    %v3945 = vpop.f32.mrb[0].mxu0
    %3946 = vdwg.mxu0
    %3947 = vmatprep.subr.bf16.mxu0 %v3612
    %3948 = vmatpush1.bf16.msra.mxu0 %v3611
    %3949 = vmatprep.subr.bf16.mxu0 %v3616
    %3950 = vmatpush1.bf16.msra.mxu0 %v3615
    %3951 = vmatprep.subr.bf16.mxu0 %v3620
    %3952 = vmatpush1.bf16.msra.mxu0 %v3619
    %3953 = vmatprep.subr.bf16.mxu0 %v3624
    %3954 = vmatpush1.bf16.msra.mxu0 %v3623
    %3955 = vmatprep.subr.bf16.mxu0 %v3628
    %3956 = vmatpush1.bf16.msra.mxu0 %v3627
    %3957 = vmatprep.subr.bf16.mxu0 %v3632
    %3958 = vmatpush1.bf16.msra.mxu0 %v3631
    %3959 = vmatprep.subr.bf16.mxu0 %v3636
    %3960 = vmatpush1.bf16.msra.mxu0 %v3635
    %3961 = vmatprep.subr.bf16.mxu0 %v3640
    %3962 = vmatpush1.bf16.msra.mxu0 %v3639
    %3963 = vmatprep.subr.bf16.mxu0 %v3644
    %3964 = vmatpush1.bf16.msra.mxu0 %v3643
    %3965 = vmatprep.subr.bf16.mxu0 %v3648
    %3966 = vmatpush1.bf16.msra.mxu0 %v3647
    %3967 = vmatprep.subr.bf16.mxu0 %v3652
    %3968 = vmatpush1.bf16.msra.mxu0 %v3651
    %3969 = vmatprep.subr.bf16.mxu0 %v3656
    %3970 = vmatpush1.bf16.msra.mxu0 %v3655
    %3971 = vmatprep.subr.bf16.mxu0 %v3660
    %3972 = vmatpush1.bf16.msra.mxu0 %v3659
    %3973 = vmatprep.subr.bf16.mxu0 %v3664
    %3974 = vmatpush1.bf16.msra.mxu0 %v3663
    %3975 = vmatprep.subr.bf16.mxu0 %v3668
    %3976 = vmatpush1.bf16.msra.mxu0 %v3667
    %3977 = vmatprep.subr.bf16.mxu0 %v3672
    %3978 = vmatpush1.bf16.msra.mxu0 %v3671
    %3979 = vmatprep.mubr.bf16.mxu0 %v3201
    %3980 = vmatmul.mubr.bf16.gmra.mrb[0].mxu0 %v3200
    %v3981 = vpop.f32.mrb[0].mxu0
    %v3982 = vadd.f32 %v3216, %v3981
    %v3983 = vpop.f32.mrb[0].mxu0
    %v3984 = vadd.f32 %v3220, %v3983
    %v3985 = vpop.f32.mrb[0].mxu0
    %v3986 = vpop.f32.mrb[0].mxu0
    %3987 = vdwg.mxu0
    %3988 = vmatprep.subr.bf16.mxu0 %v3676
    %3989 = vmatpush1.bf16.msra.mxu0 %v3675
    %3990 = vmatprep.subr.bf16.mxu0 %v3680
    %3991 = vmatpush1.bf16.msra.mxu0 %v3679
    %3992 = vmatprep.subr.bf16.mxu0 %v3684
    %3993 = vmatpush1.bf16.msra.mxu0 %v3683
    %3994 = vmatprep.subr.bf16.mxu0 %v3688
    %3995 = vmatpush1.bf16.msra.mxu0 %v3687
    %3996 = vmatprep.subr.bf16.mxu0 %v3692
    %3997 = vmatpush1.bf16.msra.mxu0 %v3691
    %3998 = vmatprep.subr.bf16.mxu0 %v3696
    %3999 = vmatpush1.bf16.msra.mxu0 %v3695
    %4000 = vmatprep.subr.bf16.mxu0 %v3700
    %4001 = vmatpush1.bf16.msra.mxu0 %v3699
    %4002 = vmatprep.subr.bf16.mxu0 %v3704
    %4003 = vmatpush1.bf16.msra.mxu0 %v3703
    %4004 = vmatprep.subr.bf16.mxu0 %v3708
    %4005 = vmatpush1.bf16.msra.mxu0 %v3707
    %4006 = vmatprep.subr.bf16.mxu0 %v3712
    %4007 = vmatpush1.bf16.msra.mxu0 %v3711
    %4008 = vmatprep.subr.bf16.mxu0 %v3716
    %4009 = vmatpush1.bf16.msra.mxu0 %v3715
    %4010 = vmatprep.subr.bf16.mxu0 %v3720
    %4011 = vmatpush1.bf16.msra.mxu0 %v3719
    %4012 = vmatprep.subr.bf16.mxu0 %v3724
    %4013 = vmatpush1.bf16.msra.mxu0 %v3723
    %4014 = vmatprep.subr.bf16.mxu0 %v3728
    %4015 = vmatpush1.bf16.msra.mxu0 %v3727
    %4016 = vmatprep.subr.bf16.mxu0 %v3732
    %4017 = vmatpush1.bf16.msra.mxu0 %v3731
    %4018 = vmatprep.subr.bf16.mxu0 %v3736
    %4019 = vmatpush1.bf16.msra.mxu0 %v3735
    %4020 = vmatprep.mubr.bf16.mxu0 %v3203
    %4021 = vmatmul.mubr.bf16.gmra.mrb[0].mxu0 %v3202
    %v4022 = vpop.f32.mrb[0].mxu0
    %v4023 = vadd.f32 %v3982, %v4022
    %v4024 = vpop.f32.mrb[0].mxu0
    %v4025 = vadd.f32 %v3984, %v4024
    %v4026 = vpop.f32.mrb[0].mxu0
    %v4027 = vpop.f32.mrb[0].mxu0
    %4028 = vdwg.mxu0
    %v4029 = vadd.f32 %v3941, %v2085
    %v4030 = vadd.f32 %v3943, %v2086
    %v4031 = vadd.f32 %v4023, %v2087
    %v4032 = vadd.f32 %v4025, %v2088
    %v4033 = vld [vmem:[%s11] sm:$0xf]
    %v4034 = vld [vmem:[%s11 + $0x4] sm:$0xf]
    %v4035 = vld [vmem:[%s11 + $0x8] sm:$0xf]
    %v4036 = vld [vmem:[%s11 + $0xc] sm:$0xf]
    %v4037 = vld [vmem:[%s11 + $0x10] sm:$0xf]
    %v4038 = vld [vmem:[%s11 + $0x14] sm:$0xf]
    %v4039 = vld [vmem:[%s11 + $0x18] sm:$0xf]
    %v4040 = vld [vmem:[%s11 + $0x1c] sm:$0xf]
    %v4041 = vld [vmem:[%s11 + $0x20] sm:$0xf]
    %v4042 = vld [vmem:[%s11 + $0x24] sm:$0xf]
    %v4043 = vld [vmem:[%s11 + $0x28] sm:$0xf]
    %v4044 = vld [vmem:[%s11 + $0x2c] sm:$0xf]
    %v4045 = vld [vmem:[%s11 + $0x30] sm:$0xf]
    %v4046 = vld [vmem:[%s11 + $0x34] sm:$0xf]
    %v4047 = vld [vmem:[%s11 + $0x38] sm:$0xf]
    %v4048 = vld [vmem:[%s11 + $0x3c] sm:$0xf]
    %v4049 = vld [vmem:[%s11 + $0x40] sm:$0xf]
    %v4050 = vld [vmem:[%s11 + $0x44] sm:$0xf]
    %v4051 = vld [vmem:[%s11 + $0x48] sm:$0xf]
    %v4052 = vld [vmem:[%s11 + $0x4c] sm:$0xf]
    %v4053 = vld [vmem:[%s11 + $0x50] sm:$0xf]
    %v4054 = vld [vmem:[%s11 + $0x54] sm:$0xf]
    %v4055 = vld [vmem:[%s11 + $0x58] sm:$0xf]
    %v4056 = vld [vmem:[%s11 + $0x5c] sm:$0xf]
    %v4057 = vld [vmem:[%s11 + $0x60] sm:$0xf]
    %v4058 = vld [vmem:[%s11 + $0x64] sm:$0xf]
    %v4059 = vld [vmem:[%s11 + $0x68] sm:$0xf]
    %v4060 = vld [vmem:[%s11 + $0x6c] sm:$0xf]
    %v4061 = vld [vmem:[%s11 + $0x70] sm:$0xf]
    %v4062 = vld [vmem:[%s11 + $0x74] sm:$0xf]
    %v4063 = vld [vmem:[%s11 + $0x78] sm:$0xf]
    %v4064 = vld [vmem:[%s11 + $0x7c] sm:$0xf]
    %v4065 = vld [vmem:[%s11 + $0x80] sm:$0xf]
    %v4066 = vld [vmem:[%s11 + $0x84] sm:$0xf]
    %v4067 = vld [vmem:[%s11 + $0x88] sm:$0xf]
    %v4068 = vld [vmem:[%s11 + $0x8c] sm:$0xf]
    %v4069 = vld [vmem:[%s11 + $0x90] sm:$0xf]
    %v4070 = vld [vmem:[%s11 + $0x94] sm:$0xf]
    %v4071 = vld [vmem:[%s11 + $0x98] sm:$0xf]
    %v4072 = vld [vmem:[%s11 + $0x9c] sm:$0xf]
    %v4073 = vld [vmem:[%s11 + $0xa0] sm:$0xf]
    %v4074 = vld [vmem:[%s11 + $0xa4] sm:$0xf]
    %v4075 = vld [vmem:[%s11 + $0xa8] sm:$0xf]
    %v4076 = vld [vmem:[%s11 + $0xac] sm:$0xf]
    %v4077 = vld [vmem:[%s11 + $0xb0] sm:$0xf]
    %v4078 = vld [vmem:[%s11 + $0xb4] sm:$0xf]
    %v4079 = vld [vmem:[%s11 + $0xb8] sm:$0xf]
    %v4080 = vld [vmem:[%s11 + $0xbc] sm:$0xf]
    %v4081 = vld [vmem:[%s11 + $0xc0] sm:$0xf]
    %v4082 = vld [vmem:[%s11 + $0xc4] sm:$0xf]
    %v4083 = vld [vmem:[%s11 + $0xc8] sm:$0xf]
    %v4084 = vld [vmem:[%s11 + $0xcc] sm:$0xf]
    %v4085 = vld [vmem:[%s11 + $0xd0] sm:$0xf]
    %v4086 = vld [vmem:[%s11 + $0xd4] sm:$0xf]
    %v4087 = vld [vmem:[%s11 + $0xd8] sm:$0xf]
    %v4088 = vld [vmem:[%s11 + $0xdc] sm:$0xf]
    %v4089 = vld [vmem:[%s11 + $0xe0] sm:$0xf]
    %v4090 = vld [vmem:[%s11 + $0xe4] sm:$0xf]
    %v4091 = vld [vmem:[%s11 + $0xe8] sm:$0xf]
    %v4092 = vld [vmem:[%s11 + $0xec] sm:$0xf]
    %v4093 = vld [vmem:[%s11 + $0xf0] sm:$0xf]
    %v4094 = vld [vmem:[%s11 + $0xf4] sm:$0xf]
    %v4095 = vld [vmem:[%s11 + $0xf8] sm:$0xf]
    %v4096 = vld [vmem:[%s11 + $0xfc] sm:$0xf]
    %v4097 = vld [vmem:[%s12] sm:$0x1]
    %v4098 = vpack.c.bf16 %v4029, %v4029
    %v4099 = vpack.c.bf16 %v4030, %v4030
    %v4100 = vpack.c.bf16 %v4031, %v4031
    %v4101 = vpack.c.bf16 %v4032, %v4032
    %v4103 = vlaneseq
    %v4104 = vshrl.u32 %v4103, 7
    %v4105 = vsub.s32 0, %v4104
    %v4106 = vrot.slane %v4097, %v4105
    %v4172 = vunpack.c.l.b16 %v4033
    %v4173 = vunpack.c.l.b16 %v4034
    %v4174 = vunpack.c.l.b16 %v4035
    %v4175 = vunpack.c.l.b16 %v4036
    %v4176 = vunpack.c.l.b16 %v4037
    %v4177 = vunpack.c.l.b16 %v4038
    %v4178 = vunpack.c.l.b16 %v4039
    %v4179 = vunpack.c.l.b16 %v4040
    %v4180 = vunpack.c.l.b16 %v4041
    %v4181 = vunpack.c.l.b16 %v4042
    %v4182 = vunpack.c.l.b16 %v4043
    %v4183 = vunpack.c.l.b16 %v4044
    %v4184 = vunpack.c.l.b16 %v4045
    %v4185 = vunpack.c.l.b16 %v4046
    %v4186 = vunpack.c.l.b16 %v4047
    %v4187 = vunpack.c.l.b16 %v4048
    %v4188 = vunpack.c.l.b16 %v4049
    %v4189 = vunpack.c.l.b16 %v4050
    %v4190 = vunpack.c.l.b16 %v4051
    %v4191 = vunpack.c.l.b16 %v4052
    %v4192 = vunpack.c.l.b16 %v4053
    %v4193 = vunpack.c.l.b16 %v4054
    %v4194 = vunpack.c.l.b16 %v4055
    %v4195 = vunpack.c.l.b16 %v4056
    %v4196 = vunpack.c.l.b16 %v4057
    %v4197 = vunpack.c.l.b16 %v4058
    %v4198 = vunpack.c.l.b16 %v4059
    %v4199 = vunpack.c.l.b16 %v4060
    %v4200 = vunpack.c.l.b16 %v4061
    %v4201 = vunpack.c.l.b16 %v4062
    %v4202 = vunpack.c.l.b16 %v4063
    %v4203 = vunpack.c.l.b16 %v4064
    %v4204 = vunpack.c.l.b16 %v4065
    %v4205 = vunpack.c.l.b16 %v4066
    %v4206 = vunpack.c.l.b16 %v4067
    %v4207 = vunpack.c.l.b16 %v4068
    %v4208 = vunpack.c.l.b16 %v4069
    %v4209 = vunpack.c.l.b16 %v4070
    %v4210 = vunpack.c.l.b16 %v4071
    %v4211 = vunpack.c.l.b16 %v4072
    %v4212 = vunpack.c.l.b16 %v4073
    %v4213 = vunpack.c.l.b16 %v4074
    %v4214 = vunpack.c.l.b16 %v4075
    %v4215 = vunpack.c.l.b16 %v4076
    %v4216 = vunpack.c.l.b16 %v4077
    %v4217 = vunpack.c.l.b16 %v4078
    %v4218 = vunpack.c.l.b16 %v4079
    %v4219 = vunpack.c.l.b16 %v4080
    %v4220 = vunpack.c.l.b16 %v4081
    %v4221 = vunpack.c.l.b16 %v4082
    %v4222 = vunpack.c.l.b16 %v4083
    %v4223 = vunpack.c.l.b16 %v4084
    %v4224 = vunpack.c.l.b16 %v4085
    %v4225 = vunpack.c.l.b16 %v4086
    %v4226 = vunpack.c.l.b16 %v4087
    %v4227 = vunpack.c.l.b16 %v4088
    %v4228 = vunpack.c.l.b16 %v4089
    %v4229 = vunpack.c.l.b16 %v4090
    %v4230 = vunpack.c.l.b16 %v4091
    %v4231 = vunpack.c.l.b16 %v4092
    %v4232 = vunpack.c.l.b16 %v4093
    %v4233 = vunpack.c.l.b16 %v4094
    %v4234 = vunpack.c.l.b16 %v4095
    %v4235 = vunpack.c.l.b16 %v4096
    %v4236 = vpack.c.b16 %v4173, %v4172
    %v4237 = vpack.c.b16 %v4175, %v4174
    %v4238 = vpack.c.b16 %v4177, %v4176
    %v4239 = vpack.c.b16 %v4179, %v4178
    %v4240 = vpack.c.b16 %v4181, %v4180
    %v4241 = vpack.c.b16 %v4183, %v4182
    %v4242 = vpack.c.b16 %v4185, %v4184
    %v4243 = vpack.c.b16 %v4187, %v4186
    %v4244 = vpack.c.b16 %v4189, %v4188
    %v4245 = vpack.c.b16 %v4191, %v4190
    %v4246 = vpack.c.b16 %v4193, %v4192
    %v4247 = vpack.c.b16 %v4195, %v4194
    %v4248 = vpack.c.b16 %v4197, %v4196
    %v4249 = vpack.c.b16 %v4199, %v4198
    %v4250 = vpack.c.b16 %v4201, %v4200
    %v4251 = vpack.c.b16 %v4203, %v4202
    %v4252 = vpack.c.b16 %v4205, %v4204
    %v4253 = vpack.c.b16 %v4207, %v4206
    %v4254 = vpack.c.b16 %v4209, %v4208
    %v4255 = vpack.c.b16 %v4211, %v4210
    %v4256 = vpack.c.b16 %v4213, %v4212
    %v4257 = vpack.c.b16 %v4215, %v4214
    %v4258 = vpack.c.b16 %v4217, %v4216
    %v4259 = vpack.c.b16 %v4219, %v4218
    %v4260 = vpack.c.b16 %v4221, %v4220
    %v4261 = vpack.c.b16 %v4223, %v4222
    %v4262 = vpack.c.b16 %v4225, %v4224
    %v4263 = vpack.c.b16 %v4227, %v4226
    %v4264 = vpack.c.b16 %v4229, %v4228
    %v4265 = vpack.c.b16 %v4231, %v4230
    %v4266 = vpack.c.b16 %v4233, %v4232
    %v4267 = vpack.c.b16 %v4235, %v4234
    %4300 = vmatprep.subr.bf16.mxu0 0
    %4301 = vmatpush1.bf16.msra.mxu0 %v4236
    %4302 = vmatprep.subr.bf16.mxu0 0
    %4303 = vmatpush1.bf16.msra.mxu0 %v4237
    %4304 = vmatprep.subr.bf16.mxu0 0
    %4305 = vmatpush1.bf16.msra.mxu0 %v4238
    %4306 = vmatprep.subr.bf16.mxu0 0
    %4307 = vmatpush1.bf16.msra.mxu0 %v4239
    %4308 = vmatprep.subr.bf16.mxu0 0
    %4309 = vmatpush1.bf16.msra.mxu0 %v4240
    %4310 = vmatprep.subr.bf16.mxu0 0
    %4311 = vmatpush1.bf16.msra.mxu0 %v4241
    %4312 = vmatprep.subr.bf16.mxu0 0
    %4313 = vmatpush1.bf16.msra.mxu0 %v4242
    %4314 = vmatprep.subr.bf16.mxu0 0
    %4315 = vmatpush1.bf16.msra.mxu0 %v4243
    %4316 = vmatprep.subr.bf16.mxu0 0
    %4317 = vmatpush1.bf16.msra.mxu0 %v4244
    %4318 = vmatprep.subr.bf16.mxu0 0
    %4319 = vmatpush1.bf16.msra.mxu0 %v4245
    %4320 = vmatprep.subr.bf16.mxu0 0
    %4321 = vmatpush1.bf16.msra.mxu0 %v4246
    %4322 = vmatprep.subr.bf16.mxu0 0
    %4323 = vmatpush1.bf16.msra.mxu0 %v4247
    %4324 = vmatprep.subr.bf16.mxu0 0
    %4325 = vmatpush1.bf16.msra.mxu0 %v4248
    %4326 = vmatprep.subr.bf16.mxu0 0
    %4327 = vmatpush1.bf16.msra.mxu0 %v4249
    %4328 = vmatprep.subr.bf16.mxu0 0
    %4329 = vmatpush1.bf16.msra.mxu0 %v4250
    %4330 = vmatprep.subr.bf16.mxu0 0
    %4331 = vmatpush1.bf16.msra.mxu0 %v4251
    %4332 = vmatprep.mubr.bf16.mxu0 %v4099
    %4333 = vmatmul.mubr.bf16.gmra.mrb[0].mxu0 %v4098
    %v4334 = vpop.f32.mrb[0].mxu0
    %v4335 = vadd.f32 %v4106, %v4334
    %v4336 = vpop.f32.mrb[0].mxu0
    %v4337 = vpop.f32.mrb[0].mxu0
    %v4338 = vpop.f32.mrb[0].mxu0
    %4339 = vdwg.mxu0
    %4340 = vmatprep.subr.bf16.mxu0 0
    %4341 = vmatpush1.bf16.msra.mxu0 %v4252
    %4342 = vmatprep.subr.bf16.mxu0 0
    %4343 = vmatpush1.bf16.msra.mxu0 %v4253
    %4344 = vmatprep.subr.bf16.mxu0 0
    %4345 = vmatpush1.bf16.msra.mxu0 %v4254
    %4346 = vmatprep.subr.bf16.mxu0 0
    %4347 = vmatpush1.bf16.msra.mxu0 %v4255
    %4348 = vmatprep.subr.bf16.mxu0 0
    %4349 = vmatpush1.bf16.msra.mxu0 %v4256
    %4350 = vmatprep.subr.bf16.mxu0 0
    %4351 = vmatpush1.bf16.msra.mxu0 %v4257
    %4352 = vmatprep.subr.bf16.mxu0 0
    %4353 = vmatpush1.bf16.msra.mxu0 %v4258
    %4354 = vmatprep.subr.bf16.mxu0 0
    %4355 = vmatpush1.bf16.msra.mxu0 %v4259
    %4356 = vmatprep.subr.bf16.mxu0 0
    %4357 = vmatpush1.bf16.msra.mxu0 %v4260
    %4358 = vmatprep.subr.bf16.mxu0 0
    %4359 = vmatpush1.bf16.msra.mxu0 %v4261
    %4360 = vmatprep.subr.bf16.mxu0 0
    %4361 = vmatpush1.bf16.msra.mxu0 %v4262
    %4362 = vmatprep.subr.bf16.mxu0 0
    %4363 = vmatpush1.bf16.msra.mxu0 %v4263
    %4364 = vmatprep.subr.bf16.mxu0 0
    %4365 = vmatpush1.bf16.msra.mxu0 %v4264
    %4366 = vmatprep.subr.bf16.mxu0 0
    %4367 = vmatpush1.bf16.msra.mxu0 %v4265
    %4368 = vmatprep.subr.bf16.mxu0 0
    %4369 = vmatpush1.bf16.msra.mxu0 %v4266
    %4370 = vmatprep.subr.bf16.mxu0 0
    %4371 = vmatpush1.bf16.msra.mxu0 %v4267
    %4372 = vmatprep.mubr.bf16.mxu0 %v4101
    %4373 = vmatmul.mubr.bf16.gmra.mrb[0].mxu0 %v4100
    %v4374 = vpop.f32.mrb[0].mxu0
    %v4375 = vadd.f32 %v4335, %v4374
    %v4376 = vpop.f32.mrb[0].mxu0
    %v4377 = vpop.f32.mrb[0].mxu0
    %v4378 = vpop.f32.mrb[0].mxu0
    %4379 = vdwg.mxu0
    %vm4380 = vcmask 17408
    %4381 = vst.msk [vmem:[#allocation2] sm:$0x3] %vm4380, %v4375
    // Predicated region
    $region54: #{deepmsn_forward.5} parent=1 // pred_check
      _
    $region55: #{deepmsn_forward.5} parent=1 // pred_check_branch
      %4383 = sbr.rel (0) target = $region57
    $region56: #{deepmsn_forward.5} parent=1 // pred_region
      %s4385 = ssub.s32 32, 32
      %4386 = vsyncadd [#allocation3], %s4385
      %s4388 = sshll.u32 [#allocation2], 4
      %s4389 = int_to_ptr.vmem [resolvable:$true] %s4388
      %4391 = dma.vmem_to_hbm [thread:$0]  %s4389, 32, %s13, [#allocation3]
    $region57: #{deepmsn_forward.5} parent=1 // pred_fallthru
      _
    // Predicated region
    $region58: #{deepmsn_forward.5} parent=1 // pred_check
      _
    $region59: #{deepmsn_forward.5} parent=1 // pred_check_branch
      %4393 = sbr.rel (0) target = $region61
    $region60: #{deepmsn_forward.5} parent=1 // pred_region
      %4394 = dma.done [#allocation3], 32
    $region61: #{deepmsn_forward.5} parent=1 // pred_fallthru
      _
    %4395 = vsyncpa [#allocation3], 1

</llo_original>
